<compile_context>
chip_gen: v5e
topology: v5e:2x2
jax: 0.10.0
libtpu: 0.0.40
codegen_flags: <defaults>
</compile_context>

<pallas_src>
import functools

import numpy as np

import jax
import jax.numpy as jnp
from jax.experimental import pallas as pl
from jax.experimental.pallas import tpu as pltpu

HEADS = 4
NEG_SLOPE = 0.2


def _full_spec(shape):
    # single-block spec: block == full array, grid=(1,)
    return pl.BlockSpec(shape, lambda i: (0,) * len(shape))


# --------------------------- fused network kernel ---------------------------
def _net_kernel(xcat_ref, wcat_ref, adj_ref,
                gw_ref, gattn_ref, gb_ref,
                bn1s_ref, bn1h_ref, bn2s_ref, bn2h_ref,
                fcw1_ref, fcw2_ref, fcb_ref,
                o_ref, *, heads, channels, neg_slope):
    N = xcat_ref.shape[0]
    C = channels

    # ---- input projection + folded batch_0_a (applied to BOTH streams,
    #      preserving the reference bug) + per-stream bias columns + ReLU ----
    gf0 = jnp.maximum(
        jnp.dot(xcat_ref[...], wcat_ref[...], preferred_element_type=jnp.float32),
        0.0)

    # ---- adjacency-derived quantities (computed once, reused by 3 layers each) ----
    adjs, neg_bias, row_has = [], [], []
    for k in range(3):
        a = adj_ref[k]                                        # [N, N] edge counts
        adjs.append(a)
        neg_bias.append(jnp.where(a > 0.0, 0.0, -1e30))       # additive mask
        row_has.append(jnp.sum(a, axis=-1, keepdims=True) > 0.0)   # [N, 1]

    # ---- dense GATConv (heads=4, concat=False, no self loops) ----
    def gat(x, li, ai):
        w = gw_ref[li]                                        # [C, H*C]
        wattn = gattn_ref[li]                                 # [H*C, 2H] block-diag
        bias = gb_ref[li]                                     # [1, C]
        adj, nb, has = adjs[ai], neg_bias[ai], row_has[ai]

        xp = jnp.dot(x, w, preferred_element_type=jnp.float32)          # [N, H*C]
        a_all = jnp.dot(xp, wattn, preferred_element_type=jnp.float32)  # [N, 2H]

        acc = jnp.zeros((N, C), jnp.float32)
        for h in range(heads):
            a_s = a_all[:, h:h + 1]                           # [N, 1] source score
            a_d = a_all[:, heads + h:heads + h + 1]           # [N, 1] dest score
            e = a_d + a_s.T                                   # e[i,j] = a_d[i]+a_s[j]
            e = jnp.where(e > 0.0, e, neg_slope * e)          # leaky_relu
            em = e + nb                                       # mask BEFORE exp
            rmax = jnp.where(has, jnp.max(em, axis=-1, keepdims=True), 0.0)
            z = adj * jnp.exp(em - rmax)                      # adj = edge multiplicity
            denom = jnp.sum(z, axis=-1, keepdims=True)
            inv = pl.reciprocal(jnp.where(denom > 0.0, denom, 1.0), approx=True)
            acc = acc + jnp.dot(z * inv, xp[:, h * C:(h + 1) * C],
                                preferred_element_type=jnp.float32)
        return acc * (1.0 / heads) + bias

    # block 1
    g11 = gat(gf0, 0, 0)
    g12 = gat(gf0, 1, 1)
    g12 = gat(g12, 2, 2)
    gf1 = jnp.maximum((g11 + g12 + gf0) * bn1s_ref[...] + bn1h_ref[...], 0.0)
    # TODO(synk): nn.Dropout(0.2) (feature + attention dropout) treated as
    #             inference-mode identity.

    # block 2
    g21 = gat(gf1, 3, 0)
    g22 = gat(gf1, 4, 1)
    g22 = gat(g22, 5, 2)
    gf2 = jnp.maximum((g21 + g22 + gf1) * bn2s_ref[...] + bn2h_ref[...], 0.0)

    # block 3 (no BN / ReLU)
    g31 = gat(gf2, 6, 0)
    g32 = gat(gf2, 7, 1)
    g32 = gat(g32, 8, 2)
    gf3 = g31 + g32 + gf2

    # fused fc heads: cols 0:2 = fc(gf3), 2:4 = fc_a(gf0), 4:6 = fc_v(gf0)
    o_ref[...] = (jnp.dot(gf3, fcw1_ref[...], preferred_element_type=jnp.float32)
                  + jnp.dot(gf0, fcw2_ref[...], preferred_element_type=jnp.float32)
                  + fcb_ref[...])


def fused_forward(xcat, wcat, adj3, gat_w, gat_attn, gat_b,
                  bn1s, bn1h, bn2s, bn2h, fcw1, fcw2, fcb,
                  *, heads, channels):
    N = xcat.shape[0]
    kernel = functools.partial(_net_kernel, heads=heads, channels=channels,
                               neg_slope=NEG_SLOPE)
    args = (xcat, wcat, adj3, gat_w, gat_attn, gat_b,
            bn1s, bn1h, bn2s, bn2h, fcw1, fcw2, fcb)
    return pl.pallas_call(
        kernel,
        out_shape=jax.ShapeDtypeStruct((N, 8), jnp.float32),
        grid=(1,),
        in_specs=[_full_spec(a.shape) for a in args],
        out_specs=_full_spec((N, 8)),
        compiler_params=pltpu.CompilerParams(
            dimension_semantics=("arbitrary",)),
    )(*args)


# --------------------------------- params -----------------------------------
def init_params(key, in_a, in_v, channels, heads=HEADS):
    keys = iter(jax.random.split(key, 64))

    def nrm(shape, scale=0.1):
        return jax.random.normal(next(keys), shape, jnp.float32) * scale

    def bn():
        weight = 1.0 + nrm((1, channels))
        bias = nrm((1, channels))
        mean = nrm((1, channels))
        var = 1.0 + jnp.abs(nrm((1, channels)))
        scale = weight / jnp.sqrt(var + 1e-5)
        shift = bias - mean * scale
        return scale, shift

    eye = jnp.eye(heads, dtype=jnp.float32)

    def gat_layer():
        w = nrm((channels, heads * channels))
        att_src = nrm((heads, channels))
        att_dst = nrm((heads, channels))
        bias = nrm((1, channels))
        # block-diagonal [H*C, H] so xp @ wattn yields per-head scores on MXU
        wsrc = (eye[:, None, :] * att_src[:, :, None]).reshape(heads * channels, heads)
        wdst = (eye[:, None, :] * att_dst[:, :, None]).reshape(heads * channels, heads)
        wattn = jnp.concatenate([wsrc, wdst], axis=1)         # [H*C, 2H]
        return w, wattn, bias

    p = {}
    w0a = nrm((in_a, channels)); b0a = nrm((1, channels))
    w0v = nrm((in_v, channels)); b0v = nrm((1, channels))
    bn0_scale, bn0_shift = bn()   # batch_0_a (reference applies it to both streams)
    # Fold batch_0_a into the projection; per-stream biases become two extra
    # rows selected by indicator columns appended to the packed input.
    p['wcat'] = jnp.concatenate(
        [w0a * bn0_scale, w0v * bn0_scale,
         b0a * bn0_scale + bn0_shift, b0v * bn0_scale + bn0_shift],
        axis=0)                                               # [in_a+in_v+2, C]

    gw, gattn, gb = [], [], []
    for _ in range(9):   # order: l11,l121,l122, l21,l221,l222, l31,l321,l322
        w, wa, b = gat_layer()
        gw.append(w); gattn.append(wa); gb.append(b)
    p['gat_w'] = jnp.stack(gw)        # [9, C, H*C]
    p['gat_attn'] = jnp.stack(gattn)  # [9, H*C, 2H]
    p['gat_bias'] = jnp.stack(gb)     # [9, 1, C]

    p['bn1_scale'], p['bn1_shift'] = bn()
    p['bn2_scale'], p['bn2_shift'] = bn()

    fc_w = nrm((channels, 2));  fc_b = nrm((1, 2))
    fca_w = nrm((channels, 2)); fca_b = nrm((1, 2))
    fcv_w = nrm((channels, 2)); fcv_b = nrm((1, 2))
    z2 = jnp.zeros((channels, 2), jnp.float32)
    p['fc_w1'] = jnp.concatenate([fc_w, z2, z2, z2], axis=1)       # [C, 8] (gf3 path)
    p['fc_w2'] = jnp.concatenate([z2, fca_w, fcv_w, z2], axis=1)   # [C, 8] (gf0 path)
    p['fc_b'] = jnp.concatenate([fc_b, fca_b, fcv_b, jnp.zeros((1, 2), jnp.float32)],
                                axis=1)                            # [1, 8]
    return p


# -------------------------------- forward -----------------------------------
@functools.partial(jax.jit, static_argnames=("in_a", "in_v", "channels", "heads"))
def _forward_jit(p, x, edge_index, edge_delta, edge_self, amask_f,
                 audio_idx, video_idx, *, in_a, in_v, channels, heads):
    N = x.shape[0]
    xa = x[:, 0, :in_a]
    xv = x[:, 1, :in_v]
    # pack both streams + bias indicator columns so a single matmul handles
    # audio rows, video rows and their (BN-folded) biases
    xcat = jnp.concatenate([xa * amask_f, xv * (1.0 - amask_f),
                            amask_f, 1.0 - amask_f], axis=1)   # [N, in_a+in_v+2]

    src = edge_index[0]
    dst = edge_index[1]
    d1 = edge_delta < 1
    d2 = ((edge_delta >= 1) & (edge_delta < 11)) | (edge_self == 1)
    # Faithful to reference operator precedence:
    # `edge_delta >= 11 | (edge_self == 1)` == `edge_delta >= (11 | (edge_self==1))`
    d3 = edge_delta >= (11 | (edge_self == 1).astype(jnp.int32))

    def build_adj(m):
        return jnp.zeros((N, N), jnp.float32).at[dst, src].add(m.astype(jnp.float32))

    adj3 = jnp.stack([build_adj(d1), build_adj(d2), build_adj(d3)])   # [3, N, N]

    out_all = fused_forward(xcat, p['wcat'], adj3,
                            p['gat_w'], p['gat_attn'], p['gat_bias'],
                            p['bn1_scale'], p['bn1_shift'],
                            p['bn2_scale'], p['bn2_shift'],
                            p['fc_w1'], p['fc_w2'], p['fc_b'],
                            heads=heads, channels=channels)

    out = out_all[:, 0:2]
    audio_out = out_all[audio_idx, 2:4]   # static-shape gather (jit-safe)
    video_out = out_all[video_idx, 4:6]
    return out, audio_out, video_out


def forward(p, cfg, x, edge_index, edge_delta, edge_self, audio_node_mask):
    amask_np = np.asarray(audio_node_mask, dtype=bool)
    audio_idx = jnp.asarray(np.flatnonzero(amask_np), jnp.int32)
    video_idx = jnp.asarray(np.flatnonzero(~amask_np), jnp.int32)
    amask_f = jnp.asarray(amask_np, jnp.float32)[:, None]
    return _forward_jit(p, x, edge_index, edge_delta, edge_self, amask_f,
                        audio_idx, video_idx,
                        in_a=cfg['in_a'], in_v=cfg['in_v'],
                        channels=cfg['channels'], heads=cfg['heads'])


# ---------------------------------- main -------------------------------------
if __name__ == "__main__":
    key = jax.random.PRNGKey(0)
    N, in_a, in_v, in_vf, C = 16, 24, 40, 16, 32
    F = max(in_a, in_v)
    k1, k2, k3, k4, kp = jax.random.split(key, 5)

    x = jax.random.normal(k1, (N, 2, F), jnp.float32)
    E = 48
    src = jax.random.randint(k2, (E,), 0, N)
    dst = jax.random.randint(k3, (E,), 0, N)
    edge_index = jnp.stack([src, dst])                 # [2, E]: row 0 = src, row 1 = dst
    edge_delta = jax.random.randint(k4, (E,), 0, 20)
    edge_self = (src == dst).astype(jnp.int32)
    audio_node_mask = [i % 2 == 0 for i in range(N)]

    cfg = dict(in_a=in_a, in_v=in_v, channels=C, heads=HEADS)
    params = init_params(kp, in_a, in_v, C, heads=HEADS)

    out, audio_out, video_out = forward(params, cfg, x, edge_index, edge_delta,
                                        edge_self, audio_node_mask)
    jax.block_until_ready((out, audio_out, video_out))

    assert out.shape == (N, 2)
    assert audio_out.shape == (sum(audio_node_mask), 2)
    assert video_out.shape == (N - sum(audio_node_mask), 2)
    print("KERNEL_OK")
</pallas_src>

<mosaic_0001>
module attributes {stable_mosaic.version = 11 : i64} {
  func.func @_net_kernel(%arg0: i32, %arg1: memref<16x66xf32, #tpu.memory_space<vmem>>, %arg2: memref<66x32xf32, #tpu.memory_space<vmem>>, %arg3: memref<3x16x16xf32, #tpu.memory_space<vmem>>, %arg4: memref<9x32x128xf32, #tpu.memory_space<vmem>>, %arg5: memref<9x128x8xf32, #tpu.memory_space<vmem>>, %arg6: memref<9x1x32xf32, #tpu.memory_space<vmem>>, %arg7: memref<1x32xf32, #tpu.memory_space<vmem>>, %arg8: memref<1x32xf32, #tpu.memory_space<vmem>>, %arg9: memref<1x32xf32, #tpu.memory_space<vmem>>, %arg10: memref<1x32xf32, #tpu.memory_space<vmem>>, %arg11: memref<32x8xf32, #tpu.memory_space<vmem>>, %arg12: memref<32x8xf32, #tpu.memory_space<vmem>>, %arg13: memref<1x8xf32, #tpu.memory_space<vmem>>, %arg14: memref<16x8xf32, #tpu.memory_space<vmem>>) attributes {dimension_semantics = [#tpu.dimension_semantics<arbitrary>], iteration_bounds = array<i64: 1>, scalar_prefetch = 0 : i64, scratch_operands = 0 : i64, tpu.core_type = #tpu.core_type<tc>, window_params = [{pipeline_mode = #tpu.pipeline_mode<synchronous>, transform_indices = @transform_0, window_bounds = array<i64: 16, 66>}, {pipeline_mode = #tpu.pipeline_mode<synchronous>, transform_indices = @transform_1, window_bounds = array<i64: 66, 32>}, {pipeline_mode = #tpu.pipeline_mode<synchronous>, transform_indices = @transform_2, window_bounds = array<i64: 3, 16, 16>}, {pipeline_mode = #tpu.pipeline_mode<synchronous>, transform_indices = @transform_3, window_bounds = array<i64: 9, 32, 128>}, {pipeline_mode = #tpu.pipeline_mode<synchronous>, transform_indices = @transform_4, window_bounds = array<i64: 9, 128, 8>}, {pipeline_mode = #tpu.pipeline_mode<synchronous>, transform_indices = @transform_5, window_bounds = array<i64: 9, 1, 32>}, {pipeline_mode = #tpu.pipeline_mode<synchronous>, transform_indices = @transform_6, window_bounds = array<i64: 1, 32>}, {pipeline_mode = #tpu.pipeline_mode<synchronous>, transform_indices = @transform_7, window_bounds = array<i64: 1, 32>}, {pipeline_mode = #tpu.pipeline_mode<synchronous>, transform_indices = @transform_8, window_bounds = array<i64: 1, 32>}, {pipeline_mode = #tpu.pipeline_mode<synchronous>, transform_indices = @transform_9, window_bounds = array<i64: 1, 32>}, {pipeline_mode = #tpu.pipeline_mode<synchronous>, transform_indices = @transform_10, window_bounds = array<i64: 32, 8>}, {pipeline_mode = #tpu.pipeline_mode<synchronous>, transform_indices = @transform_11, window_bounds = array<i64: 32, 8>}, {pipeline_mode = #tpu.pipeline_mode<synchronous>, transform_indices = @transform_12, window_bounds = array<i64: 1, 8>}, {pipeline_mode = #tpu.pipeline_mode<synchronous>, transform_indices = @transform_13, window_bounds = array<i64: 16, 8>}]} {
    %c0 = arith.constant 0 : index
    %c0_0 = arith.constant 0 : index
    %0 = vector.load %arg1[%c0, %c0_0] : memref<16x66xf32, #tpu.memory_space<vmem>>, vector<16x66xf32>
    %c0_1 = arith.constant 0 : index
    %c0_2 = arith.constant 0 : index
    %1 = vector.load %arg2[%c0_1, %c0_2] : memref<66x32xf32, #tpu.memory_space<vmem>>, vector<66x32xf32>
    %cst = arith.constant dense<0.000000e+00> : vector<16x32xf32>
    %2 = tpu.matmul %0, %1, %cst {dimension_numbers = #tpu.dot_dimension_numbers<[1], [0], [0], [1], [0, 0, 1, 1], [], []>} : vector<16x66xf32>, vector<66x32xf32>, vector<16x32xf32> -> vector<16x32xf32>
    %cst_3 = arith.constant 0.000000e+00 : f32
    %3 = vector.broadcast %cst_3 : f32 to vector<16x32xf32>
    %4 = arith.maximumf %2, %3 : vector<16x32xf32>
    %c0_4 = arith.constant 0 : index
    %c0_5 = arith.constant 0 : index
    %c0_6 = arith.constant 0 : index
    %5 = vector.load %arg3[%c0_4, %c0_5, %c0_6] : memref<3x16x16xf32, #tpu.memory_space<vmem>>, vector<1x16x16xf32>
    %6 = vector.shape_cast %5 : vector<1x16x16xf32> to vector<16x16xf32>
    %cst_7 = arith.constant 0.000000e+00 : f32
    %7 = vector.broadcast %cst_7 : f32 to vector<16x16xf32>
    %8 = arith.cmpf ogt, %6, %7 : vector<16x16xf32>
    %cst_8 = arith.constant 0.000000e+00 : f32
    %cst_9 = arith.constant -1.000000e+30 : f32
    %9 = vector.broadcast %cst_8 : f32 to vector<16x16xf32>
    %10 = vector.broadcast %cst_9 : f32 to vector<16x16xf32>
    %11 = arith.select %8, %9, %10 : vector<16x16xi1>, vector<16x16xf32>
    %cst_10 = arith.constant dense<0.000000e+00> : vector<16xf32>
    %12 = vector.multi_reduction <add>, %6, %cst_10 [1] : vector<16x16xf32> to vector<16xf32>
    %13 = vector.shape_cast %12 : vector<16xf32> to vector<16x1xf32>
    %cst_11 = arith.constant 0.000000e+00 : f32
    %14 = vector.broadcast %cst_11 : f32 to vector<16x1xf32>
    %15 = arith.cmpf ogt, %13, %14 : vector<16x1xf32>
    %c1 = arith.constant 1 : index
    %c0_12 = arith.constant 0 : index
    %c0_13 = arith.constant 0 : index
    %16 = vector.load %arg3[%c1, %c0_12, %c0_13] : memref<3x16x16xf32, #tpu.memory_space<vmem>>, vector<1x16x16xf32>
    %17 = vector.shape_cast %16 : vector<1x16x16xf32> to vector<16x16xf32>
    %cst_14 = arith.constant 0.000000e+00 : f32
    %18 = vector.broadcast %cst_14 : f32 to vector<16x16xf32>
    %19 = arith.cmpf ogt, %17, %18 : vector<16x16xf32>
    %cst_15 = arith.constant 0.000000e+00 : f32
    %cst_16 = arith.constant -1.000000e+30 : f32
    %20 = vector.broadcast %cst_15 : f32 to vector<16x16xf32>
    %21 = vector.broadcast %cst_16 : f32 to vector<16x16xf32>
    %22 = arith.select %19, %20, %21 : vector<16x16xi1>, vector<16x16xf32>
    %cst_17 = arith.constant dense<0.000000e+00> : vector<16xf32>
    %23 = vector.multi_reduction <add>, %17, %cst_17 [1] : vector<16x16xf32> to vector<16xf32>
    %24 = vector.shape_cast %23 : vector<16xf32> to vector<16x1xf32>
    %cst_18 = arith.constant 0.000000e+00 : f32
    %25 = vector.broadcast %cst_18 : f32 to vector<16x1xf32>
    %26 = arith.cmpf ogt, %24, %25 : vector<16x1xf32>
    %c2 = arith.constant 2 : index
    %c0_19 = arith.constant 0 : index
    %c0_20 = arith.constant 0 : index
    %27 = vector.load %arg3[%c2, %c0_19, %c0_20] : memref<3x16x16xf32, #tpu.memory_space<vmem>>, vector<1x16x16xf32>
    %28 = vector.shape_cast %27 : vector<1x16x16xf32> to vector<16x16xf32>
    %cst_21 = arith.constant 0.000000e+00 : f32
    %29 = vector.broadcast %cst_21 : f32 to vector<16x16xf32>
    %30 = arith.cmpf ogt, %28, %29 : vector<16x16xf32>
    %cst_22 = arith.constant 0.000000e+00 : f32
    %cst_23 = arith.constant -1.000000e+30 : f32
    %31 = vector.broadcast %cst_22 : f32 to vector<16x16xf32>
    %32 = vector.broadcast %cst_23 : f32 to vector<16x16xf32>
    %33 = arith.select %30, %31, %32 : vector<16x16xi1>, vector<16x16xf32>
    %cst_24 = arith.constant dense<0.000000e+00> : vector<16xf32>
    %34 = vector.multi_reduction <add>, %28, %cst_24 [1] : vector<16x16xf32> to vector<16xf32>
    %35 = vector.shape_cast %34 : vector<16xf32> to vector<16x1xf32>
    %cst_25 = arith.constant 0.000000e+00 : f32
    %36 = vector.broadcast %cst_25 : f32 to vector<16x1xf32>
    %37 = arith.cmpf ogt, %35, %36 : vector<16x1xf32>
    %c0_26 = arith.constant 0 : index
    %c0_27 = arith.constant 0 : index
    %c0_28 = arith.constant 0 : index
    %38 = vector.load %arg4[%c0_26, %c0_27, %c0_28] : memref<9x32x128xf32, #tpu.memory_space<vmem>>, vector<1x32x128xf32>
    %39 = vector.shape_cast %38 : vector<1x32x128xf32> to vector<32x128xf32>
    %c0_29 = arith.constant 0 : index
    %c0_30 = arith.constant 0 : index
    %c0_31 = arith.constant 0 : index
    %40 = vector.load %arg5[%c0_29, %c0_30, %c0_31] : memref<9x128x8xf32, #tpu.memory_space<vmem>>, vector<1x128x8xf32>
    %41 = vector.shape_cast %40 : vector<1x128x8xf32> to vector<128x8xf32>
    %c0_32 = arith.constant 0 : index
    %c0_33 = arith.constant 0 : index
    %c0_34 = arith.constant 0 : index
    %42 = vector.load %arg6[%c0_32, %c0_33, %c0_34] : memref<9x1x32xf32, #tpu.memory_space<vmem>>, vector<1x1x32xf32>
    %43 = vector.shape_cast %42 : vector<1x1x32xf32> to vector<1x32xf32>
    %cst_35 = arith.constant dense<0.000000e+00> : vector<16x128xf32>
    %44 = tpu.matmul %4, %39, %cst_35 {dimension_numbers = #tpu.dot_dimension_numbers<[1], [0], [0], [1], [0, 0, 1, 1], [], []>} : vector<16x32xf32>, vector<32x128xf32>, vector<16x128xf32> -> vector<16x128xf32>
    %cst_36 = arith.constant dense<0.000000e+00> : vector<16x8xf32>
    %45 = tpu.matmul %44, %41, %cst_36 {dimension_numbers = #tpu.dot_dimension_numbers<[1], [0], [0], [1], [0, 0, 1, 1], [], []>} : vector<16x128xf32>, vector<128x8xf32>, vector<16x8xf32> -> vector<16x8xf32>
    %cst_37 = arith.constant 0.000000e+00 : f32
    %46 = vector.broadcast %cst_37 : f32 to vector<16x32xf32>
    %47 = vector.extract_strided_slice %45 {offsets = [0, 0], sizes = [16, 1], strides = [1, 1]} : vector<16x8xf32> to vector<16x1xf32>
    %48 = vector.extract_strided_slice %45 {offsets = [0, 4], sizes = [16, 1], strides = [1, 1]} : vector<16x8xf32> to vector<16x1xf32>
    %49 = tpu.transpose %47, [1, 0] : vector<16x1xf32> -> vector<1x16xf32>
    %50 = vector.broadcast %48 : vector<16x1xf32> to vector<16x16xf32>
    %51 = vector.broadcast %49 : vector<1x16xf32> to vector<16x16xf32>
    %52 = arith.addf %50, %51 : vector<16x16xf32>
    %cst_38 = arith.constant 0.000000e+00 : f32
    %53 = vector.broadcast %cst_38 : f32 to vector<16x16xf32>
    %54 = arith.cmpf ogt, %52, %53 : vector<16x16xf32>
    %cst_39 = arith.constant 2.000000e-01 : f32
    %55 = vector.broadcast %cst_39 : f32 to vector<16x16xf32>
    %56 = arith.mulf %55, %52 : vector<16x16xf32>
    %57 = arith.select %54, %52, %56 : vector<16x16xi1>, vector<16x16xf32>
    %58 = arith.addf %57, %11 : vector<16x16xf32>
    %cst_40 = arith.constant dense<0xFF800000> : vector<16xf32>
    %59 = vector.multi_reduction <maximumf>, %58, %cst_40 [1] : vector<16x16xf32> to vector<16xf32>
    %60 = vector.shape_cast %59 : vector<16xf32> to vector<16x1xf32>
    %cst_41 = arith.constant 0.000000e+00 : f32
    %61 = vector.broadcast %cst_41 : f32 to vector<16x1xf32>
    %62 = arith.select %15, %60, %61 : vector<16x1xi1>, vector<16x1xf32>
    %63 = vector.broadcast %62 : vector<16x1xf32> to vector<16x16xf32>
    %64 = arith.subf %58, %63 : vector<16x16xf32>
    %65 = math.exp %64 : vector<16x16xf32>
    %66 = arith.mulf %6, %65 : vector<16x16xf32>
    %cst_42 = arith.constant dense<0.000000e+00> : vector<16xf32>
    %67 = vector.multi_reduction <add>, %66, %cst_42 [1] : vector<16x16xf32> to vector<16xf32>
    %68 = vector.shape_cast %67 : vector<16xf32> to vector<16x1xf32>
    %cst_43 = arith.constant 0.000000e+00 : f32
    %69 = vector.broadcast %cst_43 : f32 to vector<16x1xf32>
    %70 = arith.cmpf ogt, %68, %69 : vector<16x1xf32>
    %cst_44 = arith.constant 1.000000e+00 : f32
    %71 = vector.broadcast %cst_44 : f32 to vector<16x1xf32>
    %72 = arith.select %70, %68, %71 : vector<16x1xi1>, vector<16x1xf32>
    %73 = tpu.reciprocal %72 {approx = true} : vector<16x1xf32> -> vector<16x1xf32>
    %74 = vector.broadcast %73 : vector<16x1xf32> to vector<16x16xf32>
    %75 = arith.mulf %66, %74 : vector<16x16xf32>
    %76 = vector.extract_strided_slice %44 {offsets = [0, 0], sizes = [16, 32], strides = [1, 1]} : vector<16x128xf32> to vector<16x32xf32>
    %cst_45 = arith.constant dense<0.000000e+00> : vector<16x32xf32>
    %77 = tpu.matmul %75, %76, %cst_45 {dimension_numbers = #tpu.dot_dimension_numbers<[1], [0], [0], [1], [0, 0, 1, 1], [], []>} : vector<16x16xf32>, vector<16x32xf32>, vector<16x32xf32> -> vector<16x32xf32>
    %78 = arith.addf %46, %77 : vector<16x32xf32>
    %79 = vector.extract_strided_slice %45 {offsets = [0, 1], sizes = [16, 1], strides = [1, 1]} : vector<16x8xf32> to vector<16x1xf32>
    %80 = vector.extract_strided_slice %45 {offsets = [0, 5], sizes = [16, 1], strides = [1, 1]} : vector<16x8xf32> to vector<16x1xf32>
    %81 = tpu.transpose %79, [1, 0] : vector<16x1xf32> -> vector<1x16xf32>
    %82 = vector.broadcast %80 : vector<16x1xf32> to vector<16x16xf32>
    %83 = vector.broadcast %81 : vector<1x16xf32> to vector<16x16xf32>
    %84 = arith.addf %82, %83 : vector<16x16xf32>
    %cst_46 = arith.constant 0.000000e+00 : f32
    %85 = vector.broadcast %cst_46 : f32 to vector<16x16xf32>
    %86 = arith.cmpf ogt, %84, %85 : vector<16x16xf32>
    %cst_47 = arith.constant 2.000000e-01 : f32
    %87 = vector.broadcast %cst_47 : f32 to vector<16x16xf32>
    %88 = arith.mulf %87, %84 : vector<16x16xf32>
    %89 = arith.select %86, %84, %88 : vector<16x16xi1>, vector<16x16xf32>
    %90 = arith.addf %89, %11 : vector<16x16xf32>
    %cst_48 = arith.constant dense<0xFF800000> : vector<16xf32>
    %91 = vector.multi_reduction <maximumf>, %90, %cst_48 [1] : vector<16x16xf32> to vector<16xf32>
    %92 = vector.shape_cast %91 : vector<16xf32> to vector<16x1xf32>
    %cst_49 = arith.constant 0.000000e+00 : f32
    %93 = vector.broadcast %cst_49 : f32 to vector<16x1xf32>
    %94 = arith.select %15, %92, %93 : vector<16x1xi1>, vector<16x1xf32>
    %95 = vector.broadcast %94 : vector<16x1xf32> to vector<16x16xf32>
    %96 = arith.subf %90, %95 : vector<16x16xf32>
    %97 = math.exp %96 : vector<16x16xf32>
    %98 = arith.mulf %6, %97 : vector<16x16xf32>
    %cst_50 = arith.constant dense<0.000000e+00> : vector<16xf32>
    %99 = vector.multi_reduction <add>, %98, %cst_50 [1] : vector<16x16xf32> to vector<16xf32>
    %100 = vector.shape_cast %99 : vector<16xf32> to vector<16x1xf32>
    %cst_51 = arith.constant 0.000000e+00 : f32
    %101 = vector.broadcast %cst_51 : f32 to vector<16x1xf32>
    %102 = arith.cmpf ogt, %100, %101 : vector<16x1xf32>
    %cst_52 = arith.constant 1.000000e+00 : f32
    %103 = vector.broadcast %cst_52 : f32 to vector<16x1xf32>
    %104 = arith.select %102, %100, %103 : vector<16x1xi1>, vector<16x1xf32>
    %105 = tpu.reciprocal %104 {approx = true} : vector<16x1xf32> -> vector<16x1xf32>
    %106 = vector.broadcast %105 : vector<16x1xf32> to vector<16x16xf32>
    %107 = arith.mulf %98, %106 : vector<16x16xf32>
    %108 = vector.extract_strided_slice %44 {offsets = [0, 32], sizes = [16, 32], strides = [1, 1]} : vector<16x128xf32> to vector<16x32xf32>
    %cst_53 = arith.constant dense<0.000000e+00> : vector<16x32xf32>
    %109 = tpu.matmul %107, %108, %cst_53 {dimension_numbers = #tpu.dot_dimension_numbers<[1], [0], [0], [1], [0, 0, 1, 1], [], []>} : vector<16x16xf32>, vector<16x32xf32>, vector<16x32xf32> -> vector<16x32xf32>
    %110 = arith.addf %78, %109 : vector<16x32xf32>
    %111 = vector.extract_strided_slice %45 {offsets = [0, 2], sizes = [16, 1], strides = [1, 1]} : vector<16x8xf32> to vector<16x1xf32>
    %112 = vector.extract_strided_slice %45 {offsets = [0, 6], sizes = [16, 1], strides = [1, 1]} : vector<16x8xf32> to vector<16x1xf32>
    %113 = tpu.transpose %111, [1, 0] : vector<16x1xf32> -> vector<1x16xf32>
    %114 = vector.broadcast %112 : vector<16x1xf32> to vector<16x16xf32>
    %115 = vector.broadcast %113 : vector<1x16xf32> to vector<16x16xf32>
    %116 = arith.addf %114, %115 : vector<16x16xf32>
    %cst_54 = arith.constant 0.000000e+00 : f32
    %117 = vector.broadcast %cst_54 : f32 to vector<16x16xf32>
    %118 = arith.cmpf ogt, %116, %117 : vector<16x16xf32>
    %cst_55 = arith.constant 2.000000e-01 : f32
    %119 = vector.broadcast %cst_55 : f32 to vector<16x16xf32>
    %120 = arith.mulf %119, %116 : vector<16x16xf32>
    %121 = arith.select %118, %116, %120 : vector<16x16xi1>, vector<16x16xf32>
    %122 = arith.addf %121, %11 : vector<16x16xf32>
    %cst_56 = arith.constant dense<0xFF800000> : vector<16xf32>
    %123 = vector.multi_reduction <maximumf>, %122, %cst_56 [1] : vector<16x16xf32> to vector<16xf32>
    %124 = vector.shape_cast %123 : vector<16xf32> to vector<16x1xf32>
    %cst_57 = arith.constant 0.000000e+00 : f32
    %125 = vector.broadcast %cst_57 : f32 to vector<16x1xf32>
    %126 = arith.select %15, %124, %125 : vector<16x1xi1>, vector<16x1xf32>
    %127 = vector.broadcast %126 : vector<16x1xf32> to vector<16x16xf32>
    %128 = arith.subf %122, %127 : vector<16x16xf32>
    %129 = math.exp %128 : vector<16x16xf32>
    %130 = arith.mulf %6, %129 : vector<16x16xf32>
    %cst_58 = arith.constant dense<0.000000e+00> : vector<16xf32>
    %131 = vector.multi_reduction <add>, %130, %cst_58 [1] : vector<16x16xf32> to vector<16xf32>
    %132 = vector.shape_cast %131 : vector<16xf32> to vector<16x1xf32>
    %cst_59 = arith.constant 0.000000e+00 : f32
    %133 = vector.broadcast %cst_59 : f32 to vector<16x1xf32>
    %134 = arith.cmpf ogt, %132, %133 : vector<16x1xf32>
    %cst_60 = arith.constant 1.000000e+00 : f32
    %135 = vector.broadcast %cst_60 : f32 to vector<16x1xf32>
    %136 = arith.select %134, %132, %135 : vector<16x1xi1>, vector<16x1xf32>
    %137 = tpu.reciprocal %136 {approx = true} : vector<16x1xf32> -> vector<16x1xf32>
    %138 = vector.broadcast %137 : vector<16x1xf32> to vector<16x16xf32>
    %139 = arith.mulf %130, %138 : vector<16x16xf32>
    %140 = vector.extract_strided_slice %44 {offsets = [0, 64], sizes = [16, 32], strides = [1, 1]} : vector<16x128xf32> to vector<16x32xf32>
    %cst_61 = arith.constant dense<0.000000e+00> : vector<16x32xf32>
    %141 = tpu.matmul %139, %140, %cst_61 {dimension_numbers = #tpu.dot_dimension_numbers<[1], [0], [0], [1], [0, 0, 1, 1], [], []>} : vector<16x16xf32>, vector<16x32xf32>, vector<16x32xf32> -> vector<16x32xf32>
    %142 = arith.addf %110, %141 : vector<16x32xf32>
    %143 = vector.extract_strided_slice %45 {offsets = [0, 3], sizes = [16, 1], strides = [1, 1]} : vector<16x8xf32> to vector<16x1xf32>
    %144 = vector.extract_strided_slice %45 {offsets = [0, 7], sizes = [16, 1], strides = [1, 1]} : vector<16x8xf32> to vector<16x1xf32>
    %145 = tpu.transpose %143, [1, 0] : vector<16x1xf32> -> vector<1x16xf32>
    %146 = vector.broadcast %144 : vector<16x1xf32> to vector<16x16xf32>
    %147 = vector.broadcast %145 : vector<1x16xf32> to vector<16x16xf32>
    %148 = arith.addf %146, %147 : vector<16x16xf32>
    %cst_62 = arith.constant 0.000000e+00 : f32
    %149 = vector.broadcast %cst_62 : f32 to vector<16x16xf32>
    %150 = arith.cmpf ogt, %148, %149 : vector<16x16xf32>
    %cst_63 = arith.constant 2.000000e-01 : f32
    %151 = vector.broadcast %cst_63 : f32 to vector<16x16xf32>
    %152 = arith.mulf %151, %148 : vector<16x16xf32>
    %153 = arith.select %150, %148, %152 : vector<16x16xi1>, vector<16x16xf32>
    %154 = arith.addf %153, %11 : vector<16x16xf32>
    %cst_64 = arith.constant dense<0xFF800000> : vector<16xf32>
    %155 = vector.multi_reduction <maximumf>, %154, %cst_64 [1] : vector<16x16xf32> to vector<16xf32>
    %156 = vector.shape_cast %155 : vector<16xf32> to vector<16x1xf32>
    %cst_65 = arith.constant 0.000000e+00 : f32
    %157 = vector.broadcast %cst_65 : f32 to vector<16x1xf32>
    %158 = arith.select %15, %156, %157 : vector<16x1xi1>, vector<16x1xf32>
    %159 = vector.broadcast %158 : vector<16x1xf32> to vector<16x16xf32>
    %160 = arith.subf %154, %159 : vector<16x16xf32>
    %161 = math.exp %160 : vector<16x16xf32>
    %162 = arith.mulf %6, %161 : vector<16x16xf32>
    %cst_66 = arith.constant dense<0.000000e+00> : vector<16xf32>
    %163 = vector.multi_reduction <add>, %162, %cst_66 [1] : vector<16x16xf32> to vector<16xf32>
    %164 = vector.shape_cast %163 : vector<16xf32> to vector<16x1xf32>
    %cst_67 = arith.constant 0.000000e+00 : f32
    %165 = vector.broadcast %cst_67 : f32 to vector<16x1xf32>
    %166 = arith.cmpf ogt, %164, %165 : vector<16x1xf32>
    %cst_68 = arith.constant 1.000000e+00 : f32
    %167 = vector.broadcast %cst_68 : f32 to vector<16x1xf32>
    %168 = arith.select %166, %164, %167 : vector<16x1xi1>, vector<16x1xf32>
    %169 = tpu.reciprocal %168 {approx = true} : vector<16x1xf32> -> vector<16x1xf32>
    %170 = vector.broadcast %169 : vector<16x1xf32> to vector<16x16xf32>
    %171 = arith.mulf %162, %170 : vector<16x16xf32>
    %172 = vector.extract_strided_slice %44 {offsets = [0, 96], sizes = [16, 32], strides = [1, 1]} : vector<16x128xf32> to vector<16x32xf32>
    %cst_69 = arith.constant dense<0.000000e+00> : vector<16x32xf32>
    %173 = tpu.matmul %171, %172, %cst_69 {dimension_numbers = #tpu.dot_dimension_numbers<[1], [0], [0], [1], [0, 0, 1, 1], [], []>} : vector<16x16xf32>, vector<16x32xf32>, vector<16x32xf32> -> vector<16x32xf32>
    %174 = arith.addf %142, %173 : vector<16x32xf32>
    %cst_70 = arith.constant 2.500000e-01 : f32
    %175 = vector.broadcast %cst_70 : f32 to vector<16x32xf32>
    %176 = arith.mulf %174, %175 : vector<16x32xf32>
    %177 = vector.broadcast %43 : vector<1x32xf32> to vector<16x32xf32>
    %178 = arith.addf %176, %177 : vector<16x32xf32>
    %c1_71 = arith.constant 1 : index
    %c0_72 = arith.constant 0 : index
    %c0_73 = arith.constant 0 : index
    %179 = vector.load %arg4[%c1_71, %c0_72, %c0_73] : memref<9x32x128xf32, #tpu.memory_space<vmem>>, vector<1x32x128xf32>
    %180 = vector.shape_cast %179 : vector<1x32x128xf32> to vector<32x128xf32>
    %c1_74 = arith.constant 1 : index
    %c0_75 = arith.constant 0 : index
    %c0_76 = arith.constant 0 : index
    %181 = vector.load %arg5[%c1_74, %c0_75, %c0_76] : memref<9x128x8xf32, #tpu.memory_space<vmem>>, vector<1x128x8xf32>
    %182 = vector.shape_cast %181 : vector<1x128x8xf32> to vector<128x8xf32>
    %c1_77 = arith.constant 1 : index
    %c0_78 = arith.constant 0 : index
    %c0_79 = arith.constant 0 : index
    %183 = vector.load %arg6[%c1_77, %c0_78, %c0_79] : memref<9x1x32xf32, #tpu.memory_space<vmem>>, vector<1x1x32xf32>
    %184 = vector.shape_cast %183 : vector<1x1x32xf32> to vector<1x32xf32>
    %cst_80 = arith.constant dense<0.000000e+00> : vector<16x128xf32>
    %185 = tpu.matmul %4, %180, %cst_80 {dimension_numbers = #tpu.dot_dimension_numbers<[1], [0], [0], [1], [0, 0, 1, 1], [], []>} : vector<16x32xf32>, vector<32x128xf32>, vector<16x128xf32> -> vector<16x128xf32>
    %cst_81 = arith.constant dense<0.000000e+00> : vector<16x8xf32>
    %186 = tpu.matmul %185, %182, %cst_81 {dimension_numbers = #tpu.dot_dimension_numbers<[1], [0], [0], [1], [0, 0, 1, 1], [], []>} : vector<16x128xf32>, vector<128x8xf32>, vector<16x8xf32> -> vector<16x8xf32>
    %cst_82 = arith.constant 0.000000e+00 : f32
    %187 = vector.broadcast %cst_82 : f32 to vector<16x32xf32>
    %188 = vector.extract_strided_slice %186 {offsets = [0, 0], sizes = [16, 1], strides = [1, 1]} : vector<16x8xf32> to vector<16x1xf32>
    %189 = vector.extract_strided_slice %186 {offsets = [0, 4], sizes = [16, 1], strides = [1, 1]} : vector<16x8xf32> to vector<16x1xf32>
    %190 = tpu.transpose %188, [1, 0] : vector<16x1xf32> -> vector<1x16xf32>
    %191 = vector.broadcast %189 : vector<16x1xf32> to vector<16x16xf32>
    %192 = vector.broadcast %190 : vector<1x16xf32> to vector<16x16xf32>
    %193 = arith.addf %191, %192 : vector<16x16xf32>
    %cst_83 = arith.constant 0.000000e+00 : f32
    %194 = vector.broadcast %cst_83 : f32 to vector<16x16xf32>
    %195 = arith.cmpf ogt, %193, %194 : vector<16x16xf32>
    %cst_84 = arith.constant 2.000000e-01 : f32
    %196 = vector.broadcast %cst_84 : f32 to vector<16x16xf32>
    %197 = arith.mulf %196, %193 : vector<16x16xf32>
    %198 = arith.select %195, %193, %197 : vector<16x16xi1>, vector<16x16xf32>
    %199 = arith.addf %198, %22 : vector<16x16xf32>
    %cst_85 = arith.constant dense<0xFF800000> : vector<16xf32>
    %200 = vector.multi_reduction <maximumf>, %199, %cst_85 [1] : vector<16x16xf32> to vector<16xf32>
    %201 = vector.shape_cast %200 : vector<16xf32> to vector<16x1xf32>
    %cst_86 = arith.constant 0.000000e+00 : f32
    %202 = vector.broadcast %cst_86 : f32 to vector<16x1xf32>
    %203 = arith.select %26, %201, %202 : vector<16x1xi1>, vector<16x1xf32>
    %204 = vector.broadcast %203 : vector<16x1xf32> to vector<16x16xf32>
    %205 = arith.subf %199, %204 : vector<16x16xf32>
    %206 = math.exp %205 : vector<16x16xf32>
    %207 = arith.mulf %17, %206 : vector<16x16xf32>
    %cst_87 = arith.constant dense<0.000000e+00> : vector<16xf32>
    %208 = vector.multi_reduction <add>, %207, %cst_87 [1] : vector<16x16xf32> to vector<16xf32>
    %209 = vector.shape_cast %208 : vector<16xf32> to vector<16x1xf32>
    %cst_88 = arith.constant 0.000000e+00 : f32
    %210 = vector.broadcast %cst_88 : f32 to vector<16x1xf32>
    %211 = arith.cmpf ogt, %209, %210 : vector<16x1xf32>
    %cst_89 = arith.constant 1.000000e+00 : f32
    %212 = vector.broadcast %cst_89 : f32 to vector<16x1xf32>
    %213 = arith.select %211, %209, %212 : vector<16x1xi1>, vector<16x1xf32>
    %214 = tpu.reciprocal %213 {approx = true} : vector<16x1xf32> -> vector<16x1xf32>
    %215 = vector.broadcast %214 : vector<16x1xf32> to vector<16x16xf32>
    %216 = arith.mulf %207, %215 : vector<16x16xf32>
    %217 = vector.extract_strided_slice %185 {offsets = [0, 0], sizes = [16, 32], strides = [1, 1]} : vector<16x128xf32> to vector<16x32xf32>
    %cst_90 = arith.constant dense<0.000000e+00> : vector<16x32xf32>
    %218 = tpu.matmul %216, %217, %cst_90 {dimension_numbers = #tpu.dot_dimension_numbers<[1], [0], [0], [1], [0, 0, 1, 1], [], []>} : vector<16x16xf32>, vector<16x32xf32>, vector<16x32xf32> -> vector<16x32xf32>
    %219 = arith.addf %187, %218 : vector<16x32xf32>
    %220 = vector.extract_strided_slice %186 {offsets = [0, 1], sizes = [16, 1], strides = [1, 1]} : vector<16x8xf32> to vector<16x1xf32>
    %221 = vector.extract_strided_slice %186 {offsets = [0, 5], sizes = [16, 1], strides = [1, 1]} : vector<16x8xf32> to vector<16x1xf32>
    %222 = tpu.transpose %220, [1, 0] : vector<16x1xf32> -> vector<1x16xf32>
    %223 = vector.broadcast %221 : vector<16x1xf32> to vector<16x16xf32>
    %224 = vector.broadcast %222 : vector<1x16xf32> to vector<16x16xf32>
    %225 = arith.addf %223, %224 : vector<16x16xf32>
    %cst_91 = arith.constant 0.000000e+00 : f32
    %226 = vector.broadcast %cst_91 : f32 to vector<16x16xf32>
    %227 = arith.cmpf ogt, %225, %226 : vector<16x16xf32>
    %cst_92 = arith.constant 2.000000e-01 : f32
    %228 = vector.broadcast %cst_92 : f32 to vector<16x16xf32>
    %229 = arith.mulf %228, %225 : vector<16x16xf32>
    %230 = arith.select %227, %225, %229 : vector<16x16xi1>, vector<16x16xf32>
    %231 = arith.addf %230, %22 : vector<16x16xf32>
    %cst_93 = arith.constant dense<0xFF800000> : vector<16xf32>
    %232 = vector.multi_reduction <maximumf>, %231, %cst_93 [1] : vector<16x16xf32> to vector<16xf32>
    %233 = vector.shape_cast %232 : vector<16xf32> to vector<16x1xf32>
    %cst_94 = arith.constant 0.000000e+00 : f32
    %234 = vector.broadcast %cst_94 : f32 to vector<16x1xf32>
    %235 = arith.select %26, %233, %234 : vector<16x1xi1>, vector<16x1xf32>
    %236 = vector.broadcast %235 : vector<16x1xf32> to vector<16x16xf32>
    %237 = arith.subf %231, %236 : vector<16x16xf32>
    %238 = math.exp %237 : vector<16x16xf32>
    %239 = arith.mulf %17, %238 : vector<16x16xf32>
    %cst_95 = arith.constant dense<0.000000e+00> : vector<16xf32>
    %240 = vector.multi_reduction <add>, %239, %cst_95 [1] : vector<16x16xf32> to vector<16xf32>
    %241 = vector.shape_cast %240 : vector<16xf32> to vector<16x1xf32>
    %cst_96 = arith.constant 0.000000e+00 : f32
    %242 = vector.broadcast %cst_96 : f32 to vector<16x1xf32>
    %243 = arith.cmpf ogt, %241, %242 : vector<16x1xf32>
    %cst_97 = arith.constant 1.000000e+00 : f32
    %244 = vector.broadcast %cst_97 : f32 to vector<16x1xf32>
    %245 = arith.select %243, %241, %244 : vector<16x1xi1>, vector<16x1xf32>
    %246 = tpu.reciprocal %245 {approx = true} : vector<16x1xf32> -> vector<16x1xf32>
    %247 = vector.broadcast %246 : vector<16x1xf32> to vector<16x16xf32>
    %248 = arith.mulf %239, %247 : vector<16x16xf32>
    %249 = vector.extract_strided_slice %185 {offsets = [0, 32], sizes = [16, 32], strides = [1, 1]} : vector<16x128xf32> to vector<16x32xf32>
    %cst_98 = arith.constant dense<0.000000e+00> : vector<16x32xf32>
    %250 = tpu.matmul %248, %249, %cst_98 {dimension_numbers = #tpu.dot_dimension_numbers<[1], [0], [0], [1], [0, 0, 1, 1], [], []>} : vector<16x16xf32>, vector<16x32xf32>, vector<16x32xf32> -> vector<16x32xf32>
    %251 = arith.addf %219, %250 : vector<16x32xf32>
    %252 = vector.extract_strided_slice %186 {offsets = [0, 2], sizes = [16, 1], strides = [1, 1]} : vector<16x8xf32> to vector<16x1xf32>
    %253 = vector.extract_strided_slice %186 {offsets = [0, 6], sizes = [16, 1], strides = [1, 1]} : vector<16x8xf32> to vector<16x1xf32>
    %254 = tpu.transpose %252, [1, 0] : vector<16x1xf32> -> vector<1x16xf32>
    %255 = vector.broadcast %253 : vector<16x1xf32> to vector<16x16xf32>
    %256 = vector.broadcast %254 : vector<1x16xf32> to vector<16x16xf32>
    %257 = arith.addf %255, %256 : vector<16x16xf32>
    %cst_99 = arith.constant 0.000000e+00 : f32
    %258 = vector.broadcast %cst_99 : f32 to vector<16x16xf32>
    %259 = arith.cmpf ogt, %257, %258 : vector<16x16xf32>
    %cst_100 = arith.constant 2.000000e-01 : f32
    %260 = vector.broadcast %cst_100 : f32 to vector<16x16xf32>
    %261 = arith.mulf %260, %257 : vector<16x16xf32>
    %262 = arith.select %259, %257, %261 : vector<16x16xi1>, vector<16x16xf32>
    %263 = arith.addf %262, %22 : vector<16x16xf32>
    %cst_101 = arith.constant dense<0xFF800000> : vector<16xf32>
    %264 = vector.multi_reduction <maximumf>, %263, %cst_101 [1] : vector<16x16xf32> to vector<16xf32>
    %265 = vector.shape_cast %264 : vector<16xf32> to vector<16x1xf32>
    %cst_102 = arith.constant 0.000000e+00 : f32
    %266 = vector.broadcast %cst_102 : f32 to vector<16x1xf32>
    %267 = arith.select %26, %265, %266 : vector<16x1xi1>, vector<16x1xf32>
    %268 = vector.broadcast %267 : vector<16x1xf32> to vector<16x16xf32>
    %269 = arith.subf %263, %268 : vector<16x16xf32>
    %270 = math.exp %269 : vector<16x16xf32>
    %271 = arith.mulf %17, %270 : vector<16x16xf32>
    %cst_103 = arith.constant dense<0.000000e+00> : vector<16xf32>
    %272 = vector.multi_reduction <add>, %271, %cst_103 [1] : vector<16x16xf32> to vector<16xf32>
    %273 = vector.shape_cast %272 : vector<16xf32> to vector<16x1xf32>
    %cst_104 = arith.constant 0.000000e+00 : f32
    %274 = vector.broadcast %cst_104 : f32 to vector<16x1xf32>
    %275 = arith.cmpf ogt, %273, %274 : vector<16x1xf32>
    %cst_105 = arith.constant 1.000000e+00 : f32
    %276 = vector.broadcast %cst_105 : f32 to vector<16x1xf32>
    %277 = arith.select %275, %273, %276 : vector<16x1xi1>, vector<16x1xf32>
    %278 = tpu.reciprocal %277 {approx = true} : vector<16x1xf32> -> vector<16x1xf32>
    %279 = vector.broadcast %278 : vector<16x1xf32> to vector<16x16xf32>
    %280 = arith.mulf %271, %279 : vector<16x16xf32>
    %281 = vector.extract_strided_slice %185 {offsets = [0, 64], sizes = [16, 32], strides = [1, 1]} : vector<16x128xf32> to vector<16x32xf32>
    %cst_106 = arith.constant dense<0.000000e+00> : vector<16x32xf32>
    %282 = tpu.matmul %280, %281, %cst_106 {dimension_numbers = #tpu.dot_dimension_numbers<[1], [0], [0], [1], [0, 0, 1, 1], [], []>} : vector<16x16xf32>, vector<16x32xf32>, vector<16x32xf32> -> vector<16x32xf32>
    %283 = arith.addf %251, %282 : vector<16x32xf32>
    %284 = vector.extract_strided_slice %186 {offsets = [0, 3], sizes = [16, 1], strides = [1, 1]} : vector<16x8xf32> to vector<16x1xf32>
    %285 = vector.extract_strided_slice %186 {offsets = [0, 7], sizes = [16, 1], strides = [1, 1]} : vector<16x8xf32> to vector<16x1xf32>
    %286 = tpu.transpose %284, [1, 0] : vector<16x1xf32> -> vector<1x16xf32>
    %287 = vector.broadcast %285 : vector<16x1xf32> to vector<16x16xf32>
    %288 = vector.broadcast %286 : vector<1x16xf32> to vector<16x16xf32>
    %289 = arith.addf %287, %288 : vector<16x16xf32>
    %cst_107 = arith.constant 0.000000e+00 : f32
    %290 = vector.broadcast %cst_107 : f32 to vector<16x16xf32>
    %291 = arith.cmpf ogt, %289, %290 : vector<16x16xf32>
    %cst_108 = arith.constant 2.000000e-01 : f32
    %292 = vector.broadcast %cst_108 : f32 to vector<16x16xf32>
    %293 = arith.mulf %292, %289 : vector<16x16xf32>
    %294 = arith.select %291, %289, %293 : vector<16x16xi1>, vector<16x16xf32>
    %295 = arith.addf %294, %22 : vector<16x16xf32>
    %cst_109 = arith.constant dense<0xFF800000> : vector<16xf32>
    %296 = vector.multi_reduction <maximumf>, %295, %cst_109 [1] : vector<16x16xf32> to vector<16xf32>
    %297 = vector.shape_cast %296 : vector<16xf32> to vector<16x1xf32>
    %cst_110 = arith.constant 0.000000e+00 : f32
    %298 = vector.broadcast %cst_110 : f32 to vector<16x1xf32>
    %299 = arith.select %26, %297, %298 : vector<16x1xi1>, vector<16x1xf32>
    %300 = vector.broadcast %299 : vector<16x1xf32> to vector<16x16xf32>
    %301 = arith.subf %295, %300 : vector<16x16xf32>
    %302 = math.exp %301 : vector<16x16xf32>
    %303 = arith.mulf %17, %302 : vector<16x16xf32>
    %cst_111 = arith.constant dense<0.000000e+00> : vector<16xf32>
    %304 = vector.multi_reduction <add>, %303, %cst_111 [1] : vector<16x16xf32> to vector<16xf32>
    %305 = vector.shape_cast %304 : vector<16xf32> to vector<16x1xf32>
    %cst_112 = arith.constant 0.000000e+00 : f32
    %306 = vector.broadcast %cst_112 : f32 to vector<16x1xf32>
    %307 = arith.cmpf ogt, %305, %306 : vector<16x1xf32>
    %cst_113 = arith.constant 1.000000e+00 : f32
    %308 = vector.broadcast %cst_113 : f32 to vector<16x1xf32>
    %309 = arith.select %307, %305, %308 : vector<16x1xi1>, vector<16x1xf32>
    %310 = tpu.reciprocal %309 {approx = true} : vector<16x1xf32> -> vector<16x1xf32>
    %311 = vector.broadcast %310 : vector<16x1xf32> to vector<16x16xf32>
    %312 = arith.mulf %303, %311 : vector<16x16xf32>
    %313 = vector.extract_strided_slice %185 {offsets = [0, 96], sizes = [16, 32], strides = [1, 1]} : vector<16x128xf32> to vector<16x32xf32>
    %cst_114 = arith.constant dense<0.000000e+00> : vector<16x32xf32>
    %314 = tpu.matmul %312, %313, %cst_114 {dimension_numbers = #tpu.dot_dimension_numbers<[1], [0], [0], [1], [0, 0, 1, 1], [], []>} : vector<16x16xf32>, vector<16x32xf32>, vector<16x32xf32> -> vector<16x32xf32>
    %315 = arith.addf %283, %314 : vector<16x32xf32>
    %cst_115 = arith.constant 2.500000e-01 : f32
    %316 = vector.broadcast %cst_115 : f32 to vector<16x32xf32>
    %317 = arith.mulf %315, %316 : vector<16x32xf32>
    %318 = vector.broadcast %184 : vector<1x32xf32> to vector<16x32xf32>
    %319 = arith.addf %317, %318 : vector<16x32xf32>
    %c2_116 = arith.constant 2 : index
    %c0_117 = arith.constant 0 : index
    %c0_118 = arith.constant 0 : index
    %320 = vector.load %arg4[%c2_116, %c0_117, %c0_118] : memref<9x32x128xf32, #tpu.memory_space<vmem>>, vector<1x32x128xf32>
    %321 = vector.shape_cast %320 : vector<1x32x128xf32> to vector<32x128xf32>
    %c2_119 = arith.constant 2 : index
    %c0_120 = arith.constant 0 : index
    %c0_121 = arith.constant 0 : index
    %322 = vector.load %arg5[%c2_119, %c0_120, %c0_121] : memref<9x128x8xf32, #tpu.memory_space<vmem>>, vector<1x128x8xf32>
    %323 = vector.shape_cast %322 : vector<1x128x8xf32> to vector<128x8xf32>
    %c2_122 = arith.constant 2 : index
    %c0_123 = arith.constant 0 : index
    %c0_124 = arith.constant 0 : index
    %324 = vector.load %arg6[%c2_122, %c0_123, %c0_124] : memref<9x1x32xf32, #tpu.memory_space<vmem>>, vector<1x1x32xf32>
    %325 = vector.shape_cast %324 : vector<1x1x32xf32> to vector<1x32xf32>
    %cst_125 = arith.constant dense<0.000000e+00> : vector<16x128xf32>
    %326 = tpu.matmul %319, %321, %cst_125 {dimension_numbers = #tpu.dot_dimension_numbers<[1], [0], [0], [1], [0, 0, 1, 1], [], []>} : vector<16x32xf32>, vector<32x128xf32>, vector<16x128xf32> -> vector<16x128xf32>
    %cst_126 = arith.constant dense<0.000000e+00> : vector<16x8xf32>
    %327 = tpu.matmul %326, %323, %cst_126 {dimension_numbers = #tpu.dot_dimension_numbers<[1], [0], [0], [1], [0, 0, 1, 1], [], []>} : vector<16x128xf32>, vector<128x8xf32>, vector<16x8xf32> -> vector<16x8xf32>
    %cst_127 = arith.constant 0.000000e+00 : f32
    %328 = vector.broadcast %cst_127 : f32 to vector<16x32xf32>
    %329 = vector.extract_strided_slice %327 {offsets = [0, 0], sizes = [16, 1], strides = [1, 1]} : vector<16x8xf32> to vector<16x1xf32>
    %330 = vector.extract_strided_slice %327 {offsets = [0, 4], sizes = [16, 1], strides = [1, 1]} : vector<16x8xf32> to vector<16x1xf32>
    %331 = tpu.transpose %329, [1, 0] : vector<16x1xf32> -> vector<1x16xf32>
    %332 = vector.broadcast %330 : vector<16x1xf32> to vector<16x16xf32>
    %333 = vector.broadcast %331 : vector<1x16xf32> to vector<16x16xf32>
    %334 = arith.addf %332, %333 : vector<16x16xf32>
    %cst_128 = arith.constant 0.000000e+00 : f32
    %335 = vector.broadcast %cst_128 : f32 to vector<16x16xf32>
    %336 = arith.cmpf ogt, %334, %335 : vector<16x16xf32>
    %cst_129 = arith.constant 2.000000e-01 : f32
    %337 = vector.broadcast %cst_129 : f32 to vector<16x16xf32>
    %338 = arith.mulf %337, %334 : vector<16x16xf32>
    %339 = arith.select %336, %334, %338 : vector<16x16xi1>, vector<16x16xf32>
    %340 = arith.addf %339, %33 : vector<16x16xf32>
    %cst_130 = arith.constant dense<0xFF800000> : vector<16xf32>
    %341 = vector.multi_reduction <maximumf>, %340, %cst_130 [1] : vector<16x16xf32> to vector<16xf32>
    %342 = vector.shape_cast %341 : vector<16xf32> to vector<16x1xf32>
    %cst_131 = arith.constant 0.000000e+00 : f32
    %343 = vector.broadcast %cst_131 : f32 to vector<16x1xf32>
    %344 = arith.select %37, %342, %343 : vector<16x1xi1>, vector<16x1xf32>
    %345 = vector.broadcast %344 : vector<16x1xf32> to vector<16x16xf32>
    %346 = arith.subf %340, %345 : vector<16x16xf32>
    %347 = math.exp %346 : vector<16x16xf32>
    %348 = arith.mulf %28, %347 : vector<16x16xf32>
    %cst_132 = arith.constant dense<0.000000e+00> : vector<16xf32>
    %349 = vector.multi_reduction <add>, %348, %cst_132 [1] : vector<16x16xf32> to vector<16xf32>
    %350 = vector.shape_cast %349 : vector<16xf32> to vector<16x1xf32>
    %cst_133 = arith.constant 0.000000e+00 : f32
    %351 = vector.broadcast %cst_133 : f32 to vector<16x1xf32>
    %352 = arith.cmpf ogt, %350, %351 : vector<16x1xf32>
    %cst_134 = arith.constant 1.000000e+00 : f32
    %353 = vector.broadcast %cst_134 : f32 to vector<16x1xf32>
    %354 = arith.select %352, %350, %353 : vector<16x1xi1>, vector<16x1xf32>
    %355 = tpu.reciprocal %354 {approx = true} : vector<16x1xf32> -> vector<16x1xf32>
    %356 = vector.broadcast %355 : vector<16x1xf32> to vector<16x16xf32>
    %357 = arith.mulf %348, %356 : vector<16x16xf32>
    %358 = vector.extract_strided_slice %326 {offsets = [0, 0], sizes = [16, 32], strides = [1, 1]} : vector<16x128xf32> to vector<16x32xf32>
    %cst_135 = arith.constant dense<0.000000e+00> : vector<16x32xf32>
    %359 = tpu.matmul %357, %358, %cst_135 {dimension_numbers = #tpu.dot_dimension_numbers<[1], [0], [0], [1], [0, 0, 1, 1], [], []>} : vector<16x16xf32>, vector<16x32xf32>, vector<16x32xf32> -> vector<16x32xf32>
    %360 = arith.addf %328, %359 : vector<16x32xf32>
    %361 = vector.extract_strided_slice %327 {offsets = [0, 1], sizes = [16, 1], strides = [1, 1]} : vector<16x8xf32> to vector<16x1xf32>
    %362 = vector.extract_strided_slice %327 {offsets = [0, 5], sizes = [16, 1], strides = [1, 1]} : vector<16x8xf32> to vector<16x1xf32>
    %363 = tpu.transpose %361, [1, 0] : vector<16x1xf32> -> vector<1x16xf32>
    %364 = vector.broadcast %362 : vector<16x1xf32> to vector<16x16xf32>
    %365 = vector.broadcast %363 : vector<1x16xf32> to vector<16x16xf32>
    %366 = arith.addf %364, %365 : vector<16x16xf32>
    %cst_136 = arith.constant 0.000000e+00 : f32
    %367 = vector.broadcast %cst_136 : f32 to vector<16x16xf32>
    %368 = arith.cmpf ogt, %366, %367 : vector<16x16xf32>
    %cst_137 = arith.constant 2.000000e-01 : f32
    %369 = vector.broadcast %cst_137 : f32 to vector<16x16xf32>
    %370 = arith.mulf %369, %366 : vector<16x16xf32>
    %371 = arith.select %368, %366, %370 : vector<16x16xi1>, vector<16x16xf32>
    %372 = arith.addf %371, %33 : vector<16x16xf32>
    %cst_138 = arith.constant dense<0xFF800000> : vector<16xf32>
    %373 = vector.multi_reduction <maximumf>, %372, %cst_138 [1] : vector<16x16xf32> to vector<16xf32>
    %374 = vector.shape_cast %373 : vector<16xf32> to vector<16x1xf32>
    %cst_139 = arith.constant 0.000000e+00 : f32
    %375 = vector.broadcast %cst_139 : f32 to vector<16x1xf32>
    %376 = arith.select %37, %374, %375 : vector<16x1xi1>, vector<16x1xf32>
    %377 = vector.broadcast %376 : vector<16x1xf32> to vector<16x16xf32>
    %378 = arith.subf %372, %377 : vector<16x16xf32>
    %379 = math.exp %378 : vector<16x16xf32>
    %380 = arith.mulf %28, %379 : vector<16x16xf32>
    %cst_140 = arith.constant dense<0.000000e+00> : vector<16xf32>
    %381 = vector.multi_reduction <add>, %380, %cst_140 [1] : vector<16x16xf32> to vector<16xf32>
    %382 = vector.shape_cast %381 : vector<16xf32> to vector<16x1xf32>
    %cst_141 = arith.constant 0.000000e+00 : f32
    %383 = vector.broadcast %cst_141 : f32 to vector<16x1xf32>
    %384 = arith.cmpf ogt, %382, %383 : vector<16x1xf32>
    %cst_142 = arith.constant 1.000000e+00 : f32
    %385 = vector.broadcast %cst_142 : f32 to vector<16x1xf32>
    %386 = arith.select %384, %382, %385 : vector<16x1xi1>, vector<16x1xf32>
    %387 = tpu.reciprocal %386 {approx = true} : vector<16x1xf32> -> vector<16x1xf32>
    %388 = vector.broadcast %387 : vector<16x1xf32> to vector<16x16xf32>
    %389 = arith.mulf %380, %388 : vector<16x16xf32>
    %390 = vector.extract_strided_slice %326 {offsets = [0, 32], sizes = [16, 32], strides = [1, 1]} : vector<16x128xf32> to vector<16x32xf32>
    %cst_143 = arith.constant dense<0.000000e+00> : vector<16x32xf32>
    %391 = tpu.matmul %389, %390, %cst_143 {dimension_numbers = #tpu.dot_dimension_numbers<[1], [0], [0], [1], [0, 0, 1, 1], [], []>} : vector<16x16xf32>, vector<16x32xf32>, vector<16x32xf32> -> vector<16x32xf32>
    %392 = arith.addf %360, %391 : vector<16x32xf32>
    %393 = vector.extract_strided_slice %327 {offsets = [0, 2], sizes = [16, 1], strides = [1, 1]} : vector<16x8xf32> to vector<16x1xf32>
    %394 = vector.extract_strided_slice %327 {offsets = [0, 6], sizes = [16, 1], strides = [1, 1]} : vector<16x8xf32> to vector<16x1xf32>
    %395 = tpu.transpose %393, [1, 0] : vector<16x1xf32> -> vector<1x16xf32>
    %396 = vector.broadcast %394 : vector<16x1xf32> to vector<16x16xf32>
    %397 = vector.broadcast %395 : vector<1x16xf32> to vector<16x16xf32>
    %398 = arith.addf %396, %397 : vector<16x16xf32>
    %cst_144 = arith.constant 0.000000e+00 : f32
    %399 = vector.broadcast %cst_144 : f32 to vector<16x16xf32>
    %400 = arith.cmpf ogt, %398, %399 : vector<16x16xf32>
    %cst_145 = arith.constant 2.000000e-01 : f32
    %401 = vector.broadcast %cst_145 : f32 to vector<16x16xf32>
    %402 = arith.mulf %401, %398 : vector<16x16xf32>
    %403 = arith.select %400, %398, %402 : vector<16x16xi1>, vector<16x16xf32>
    %404 = arith.addf %403, %33 : vector<16x16xf32>
    %cst_146 = arith.constant dense<0xFF800000> : vector<16xf32>
    %405 = vector.multi_reduction <maximumf>, %404, %cst_146 [1] : vector<16x16xf32> to vector<16xf32>
    %406 = vector.shape_cast %405 : vector<16xf32> to vector<16x1xf32>
    %cst_147 = arith.constant 0.000000e+00 : f32
    %407 = vector.broadcast %cst_147 : f32 to vector<16x1xf32>
    %408 = arith.select %37, %406, %407 : vector<16x1xi1>, vector<16x1xf32>
    %409 = vector.broadcast %408 : vector<16x1xf32> to vector<16x16xf32>
    %410 = arith.subf %404, %409 : vector<16x16xf32>
    %411 = math.exp %410 : vector<16x16xf32>
    %412 = arith.mulf %28, %411 : vector<16x16xf32>
    %cst_148 = arith.constant dense<0.000000e+00> : vector<16xf32>
    %413 = vector.multi_reduction <add>, %412, %cst_148 [1] : vector<16x16xf32> to vector<16xf32>
    %414 = vector.shape_cast %413 : vector<16xf32> to vector<16x1xf32>
    %cst_149 = arith.constant 0.000000e+00 : f32
    %415 = vector.broadcast %cst_149 : f32 to vector<16x1xf32>
    %416 = arith.cmpf ogt, %414, %415 : vector<16x1xf32>
    %cst_150 = arith.constant 1.000000e+00 : f32
    %417 = vector.broadcast %cst_150 : f32 to vector<16x1xf32>
    %418 = arith.select %416, %414, %417 : vector<16x1xi1>, vector<16x1xf32>
    %419 = tpu.reciprocal %418 {approx = true} : vector<16x1xf32> -> vector<16x1xf32>
    %420 = vector.broadcast %419 : vector<16x1xf32> to vector<16x16xf32>
    %421 = arith.mulf %412, %420 : vector<16x16xf32>
    %422 = vector.extract_strided_slice %326 {offsets = [0, 64], sizes = [16, 32], strides = [1, 1]} : vector<16x128xf32> to vector<16x32xf32>
    %cst_151 = arith.constant dense<0.000000e+00> : vector<16x32xf32>
    %423 = tpu.matmul %421, %422, %cst_151 {dimension_numbers = #tpu.dot_dimension_numbers<[1], [0], [0], [1], [0, 0, 1, 1], [], []>} : vector<16x16xf32>, vector<16x32xf32>, vector<16x32xf32> -> vector<16x32xf32>
    %424 = arith.addf %392, %423 : vector<16x32xf32>
    %425 = vector.extract_strided_slice %327 {offsets = [0, 3], sizes = [16, 1], strides = [1, 1]} : vector<16x8xf32> to vector<16x1xf32>
    %426 = vector.extract_strided_slice %327 {offsets = [0, 7], sizes = [16, 1], strides = [1, 1]} : vector<16x8xf32> to vector<16x1xf32>
    %427 = tpu.transpose %425, [1, 0] : vector<16x1xf32> -> vector<1x16xf32>
    %428 = vector.broadcast %426 : vector<16x1xf32> to vector<16x16xf32>
    %429 = vector.broadcast %427 : vector<1x16xf32> to vector<16x16xf32>
    %430 = arith.addf %428, %429 : vector<16x16xf32>
    %cst_152 = arith.constant 0.000000e+00 : f32
    %431 = vector.broadcast %cst_152 : f32 to vector<16x16xf32>
    %432 = arith.cmpf ogt, %430, %431 : vector<16x16xf32>
    %cst_153 = arith.constant 2.000000e-01 : f32
    %433 = vector.broadcast %cst_153 : f32 to vector<16x16xf32>
    %434 = arith.mulf %433, %430 : vector<16x16xf32>
    %435 = arith.select %432, %430, %434 : vector<16x16xi1>, vector<16x16xf32>
    %436 = arith.addf %435, %33 : vector<16x16xf32>
    %cst_154 = arith.constant dense<0xFF800000> : vector<16xf32>
    %437 = vector.multi_reduction <maximumf>, %436, %cst_154 [1] : vector<16x16xf32> to vector<16xf32>
    %438 = vector.shape_cast %437 : vector<16xf32> to vector<16x1xf32>
    %cst_155 = arith.constant 0.000000e+00 : f32
    %439 = vector.broadcast %cst_155 : f32 to vector<16x1xf32>
    %440 = arith.select %37, %438, %439 : vector<16x1xi1>, vector<16x1xf32>
    %441 = vector.broadcast %440 : vector<16x1xf32> to vector<16x16xf32>
    %442 = arith.subf %436, %441 : vector<16x16xf32>
    %443 = math.exp %442 : vector<16x16xf32>
    %444 = arith.mulf %28, %443 : vector<16x16xf32>
    %cst_156 = arith.constant dense<0.000000e+00> : vector<16xf32>
    %445 = vector.multi_reduction <add>, %444, %cst_156 [1] : vector<16x16xf32> to vector<16xf32>
    %446 = vector.shape_cast %445 : vector<16xf32> to vector<16x1xf32>
    %cst_157 = arith.constant 0.000000e+00 : f32
    %447 = vector.broadcast %cst_157 : f32 to vector<16x1xf32>
    %448 = arith.cmpf ogt, %446, %447 : vector<16x1xf32>
    %cst_158 = arith.constant 1.000000e+00 : f32
    %449 = vector.broadcast %cst_158 : f32 to vector<16x1xf32>
    %450 = arith.select %448, %446, %449 : vector<16x1xi1>, vector<16x1xf32>
    %451 = tpu.reciprocal %450 {approx = true} : vector<16x1xf32> -> vector<16x1xf32>
    %452 = vector.broadcast %451 : vector<16x1xf32> to vector<16x16xf32>
    %453 = arith.mulf %444, %452 : vector<16x16xf32>
    %454 = vector.extract_strided_slice %326 {offsets = [0, 96], sizes = [16, 32], strides = [1, 1]} : vector<16x128xf32> to vector<16x32xf32>
    %cst_159 = arith.constant dense<0.000000e+00> : vector<16x32xf32>
    %455 = tpu.matmul %453, %454, %cst_159 {dimension_numbers = #tpu.dot_dimension_numbers<[1], [0], [0], [1], [0, 0, 1, 1], [], []>} : vector<16x16xf32>, vector<16x32xf32>, vector<16x32xf32> -> vector<16x32xf32>
    %456 = arith.addf %424, %455 : vector<16x32xf32>
    %cst_160 = arith.constant 2.500000e-01 : f32
    %457 = vector.broadcast %cst_160 : f32 to vector<16x32xf32>
    %458 = arith.mulf %456, %457 : vector<16x32xf32>
    %459 = vector.broadcast %325 : vector<1x32xf32> to vector<16x32xf32>
    %460 = arith.addf %458, %459 : vector<16x32xf32>
    %461 = arith.addf %178, %460 : vector<16x32xf32>
    %462 = arith.addf %461, %4 : vector<16x32xf32>
    %c0_161 = arith.constant 0 : index
    %c0_162 = arith.constant 0 : index
    %463 = vector.load %arg7[%c0_161, %c0_162] : memref<1x32xf32, #tpu.memory_space<vmem>>, vector<1x32xf32>
    %464 = vector.broadcast %463 : vector<1x32xf32> to vector<16x32xf32>
    %465 = arith.mulf %462, %464 : vector<16x32xf32>
    %c0_163 = arith.constant 0 : index
    %c0_164 = arith.constant 0 : index
    %466 = vector.load %arg8[%c0_163, %c0_164] : memref<1x32xf32, #tpu.memory_space<vmem>>, vector<1x32xf32>
    %467 = vector.broadcast %466 : vector<1x32xf32> to vector<16x32xf32>
    %468 = arith.addf %465, %467 : vector<16x32xf32>
    %cst_165 = arith.constant 0.000000e+00 : f32
    %469 = vector.broadcast %cst_165 : f32 to vector<16x32xf32>
    %470 = arith.maximumf %468, %469 : vector<16x32xf32>
    %c3 = arith.constant 3 : index
    %c0_166 = arith.constant 0 : index
    %c0_167 = arith.constant 0 : index
    %471 = vector.load %arg4[%c3, %c0_166, %c0_167] : memref<9x32x128xf32, #tpu.memory_space<vmem>>, vector<1x32x128xf32>
    %472 = vector.shape_cast %471 : vector<1x32x128xf32> to vector<32x128xf32>
    %c3_168 = arith.constant 3 : index
    %c0_169 = arith.constant 0 : index
    %c0_170 = arith.constant 0 : index
    %473 = vector.load %arg5[%c3_168, %c0_169, %c0_170] : memref<9x128x8xf32, #tpu.memory_space<vmem>>, vector<1x128x8xf32>
    %474 = vector.shape_cast %473 : vector<1x128x8xf32> to vector<128x8xf32>
    %c3_171 = arith.constant 3 : index
    %c0_172 = arith.constant 0 : index
    %c0_173 = arith.constant 0 : index
    %475 = vector.load %arg6[%c3_171, %c0_172, %c0_173] : memref<9x1x32xf32, #tpu.memory_space<vmem>>, vector<1x1x32xf32>
    %476 = vector.shape_cast %475 : vector<1x1x32xf32> to vector<1x32xf32>
    %cst_174 = arith.constant dense<0.000000e+00> : vector<16x128xf32>
    %477 = tpu.matmul %470, %472, %cst_174 {dimension_numbers = #tpu.dot_dimension_numbers<[1], [0], [0], [1], [0, 0, 1, 1], [], []>} : vector<16x32xf32>, vector<32x128xf32>, vector<16x128xf32> -> vector<16x128xf32>
    %cst_175 = arith.constant dense<0.000000e+00> : vector<16x8xf32>
    %478 = tpu.matmul %477, %474, %cst_175 {dimension_numbers = #tpu.dot_dimension_numbers<[1], [0], [0], [1], [0, 0, 1, 1], [], []>} : vector<16x128xf32>, vector<128x8xf32>, vector<16x8xf32> -> vector<16x8xf32>
    %cst_176 = arith.constant 0.000000e+00 : f32
    %479 = vector.broadcast %cst_176 : f32 to vector<16x32xf32>
    %480 = vector.extract_strided_slice %478 {offsets = [0, 0], sizes = [16, 1], strides = [1, 1]} : vector<16x8xf32> to vector<16x1xf32>
    %481 = vector.extract_strided_slice %478 {offsets = [0, 4], sizes = [16, 1], strides = [1, 1]} : vector<16x8xf32> to vector<16x1xf32>
    %482 = tpu.transpose %480, [1, 0] : vector<16x1xf32> -> vector<1x16xf32>
    %483 = vector.broadcast %481 : vector<16x1xf32> to vector<16x16xf32>
    %484 = vector.broadcast %482 : vector<1x16xf32> to vector<16x16xf32>
    %485 = arith.addf %483, %484 : vector<16x16xf32>
    %cst_177 = arith.constant 0.000000e+00 : f32
    %486 = vector.broadcast %cst_177 : f32 to vector<16x16xf32>
    %487 = arith.cmpf ogt, %485, %486 : vector<16x16xf32>
    %cst_178 = arith.constant 2.000000e-01 : f32
    %488 = vector.broadcast %cst_178 : f32 to vector<16x16xf32>
    %489 = arith.mulf %488, %485 : vector<16x16xf32>
    %490 = arith.select %487, %485, %489 : vector<16x16xi1>, vector<16x16xf32>
    %491 = arith.addf %490, %11 : vector<16x16xf32>
    %cst_179 = arith.constant dense<0xFF800000> : vector<16xf32>
    %492 = vector.multi_reduction <maximumf>, %491, %cst_179 [1] : vector<16x16xf32> to vector<16xf32>
    %493 = vector.shape_cast %492 : vector<16xf32> to vector<16x1xf32>
    %cst_180 = arith.constant 0.000000e+00 : f32
    %494 = vector.broadcast %cst_180 : f32 to vector<16x1xf32>
    %495 = arith.select %15, %493, %494 : vector<16x1xi1>, vector<16x1xf32>
    %496 = vector.broadcast %495 : vector<16x1xf32> to vector<16x16xf32>
    %497 = arith.subf %491, %496 : vector<16x16xf32>
    %498 = math.exp %497 : vector<16x16xf32>
    %499 = arith.mulf %6, %498 : vector<16x16xf32>
    %cst_181 = arith.constant dense<0.000000e+00> : vector<16xf32>
    %500 = vector.multi_reduction <add>, %499, %cst_181 [1] : vector<16x16xf32> to vector<16xf32>
    %501 = vector.shape_cast %500 : vector<16xf32> to vector<16x1xf32>
    %cst_182 = arith.constant 0.000000e+00 : f32
    %502 = vector.broadcast %cst_182 : f32 to vector<16x1xf32>
    %503 = arith.cmpf ogt, %501, %502 : vector<16x1xf32>
    %cst_183 = arith.constant 1.000000e+00 : f32
    %504 = vector.broadcast %cst_183 : f32 to vector<16x1xf32>
    %505 = arith.select %503, %501, %504 : vector<16x1xi1>, vector<16x1xf32>
    %506 = tpu.reciprocal %505 {approx = true} : vector<16x1xf32> -> vector<16x1xf32>
    %507 = vector.broadcast %506 : vector<16x1xf32> to vector<16x16xf32>
    %508 = arith.mulf %499, %507 : vector<16x16xf32>
    %509 = vector.extract_strided_slice %477 {offsets = [0, 0], sizes = [16, 32], strides = [1, 1]} : vector<16x128xf32> to vector<16x32xf32>
    %cst_184 = arith.constant dense<0.000000e+00> : vector<16x32xf32>
    %510 = tpu.matmul %508, %509, %cst_184 {dimension_numbers = #tpu.dot_dimension_numbers<[1], [0], [0], [1], [0, 0, 1, 1], [], []>} : vector<16x16xf32>, vector<16x32xf32>, vector<16x32xf32> -> vector<16x32xf32>
    %511 = arith.addf %479, %510 : vector<16x32xf32>
    %512 = vector.extract_strided_slice %478 {offsets = [0, 1], sizes = [16, 1], strides = [1, 1]} : vector<16x8xf32> to vector<16x1xf32>
    %513 = vector.extract_strided_slice %478 {offsets = [0, 5], sizes = [16, 1], strides = [1, 1]} : vector<16x8xf32> to vector<16x1xf32>
    %514 = tpu.transpose %512, [1, 0] : vector<16x1xf32> -> vector<1x16xf32>
    %515 = vector.broadcast %513 : vector<16x1xf32> to vector<16x16xf32>
    %516 = vector.broadcast %514 : vector<1x16xf32> to vector<16x16xf32>
    %517 = arith.addf %515, %516 : vector<16x16xf32>
    %cst_185 = arith.constant 0.000000e+00 : f32
    %518 = vector.broadcast %cst_185 : f32 to vector<16x16xf32>
    %519 = arith.cmpf ogt, %517, %518 : vector<16x16xf32>
    %cst_186 = arith.constant 2.000000e-01 : f32
    %520 = vector.broadcast %cst_186 : f32 to vector<16x16xf32>
    %521 = arith.mulf %520, %517 : vector<16x16xf32>
    %522 = arith.select %519, %517, %521 : vector<16x16xi1>, vector<16x16xf32>
    %523 = arith.addf %522, %11 : vector<16x16xf32>
    %cst_187 = arith.constant dense<0xFF800000> : vector<16xf32>
    %524 = vector.multi_reduction <maximumf>, %523, %cst_187 [1] : vector<16x16xf32> to vector<16xf32>
    %525 = vector.shape_cast %524 : vector<16xf32> to vector<16x1xf32>
    %cst_188 = arith.constant 0.000000e+00 : f32
    %526 = vector.broadcast %cst_188 : f32 to vector<16x1xf32>
    %527 = arith.select %15, %525, %526 : vector<16x1xi1>, vector<16x1xf32>
    %528 = vector.broadcast %527 : vector<16x1xf32> to vector<16x16xf32>
    %529 = arith.subf %523, %528 : vector<16x16xf32>
    %530 = math.exp %529 : vector<16x16xf32>
    %531 = arith.mulf %6, %530 : vector<16x16xf32>
    %cst_189 = arith.constant dense<0.000000e+00> : vector<16xf32>
    %532 = vector.multi_reduction <add>, %531, %cst_189 [1] : vector<16x16xf32> to vector<16xf32>
    %533 = vector.shape_cast %532 : vector<16xf32> to vector<16x1xf32>
    %cst_190 = arith.constant 0.000000e+00 : f32
    %534 = vector.broadcast %cst_190 : f32 to vector<16x1xf32>
    %535 = arith.cmpf ogt, %533, %534 : vector<16x1xf32>
    %cst_191 = arith.constant 1.000000e+00 : f32
    %536 = vector.broadcast %cst_191 : f32 to vector<16x1xf32>
    %537 = arith.select %535, %533, %536 : vector<16x1xi1>, vector<16x1xf32>
    %538 = tpu.reciprocal %537 {approx = true} : vector<16x1xf32> -> vector<16x1xf32>
    %539 = vector.broadcast %538 : vector<16x1xf32> to vector<16x16xf32>
    %540 = arith.mulf %531, %539 : vector<16x16xf32>
    %541 = vector.extract_strided_slice %477 {offsets = [0, 32], sizes = [16, 32], strides = [1, 1]} : vector<16x128xf32> to vector<16x32xf32>
    %cst_192 = arith.constant dense<0.000000e+00> : vector<16x32xf32>
    %542 = tpu.matmul %540, %541, %cst_192 {dimension_numbers = #tpu.dot_dimension_numbers<[1], [0], [0], [1], [0, 0, 1, 1], [], []>} : vector<16x16xf32>, vector<16x32xf32>, vector<16x32xf32> -> vector<16x32xf32>
    %543 = arith.addf %511, %542 : vector<16x32xf32>
    %544 = vector.extract_strided_slice %478 {offsets = [0, 2], sizes = [16, 1], strides = [1, 1]} : vector<16x8xf32> to vector<16x1xf32>
    %545 = vector.extract_strided_slice %478 {offsets = [0, 6], sizes = [16, 1], strides = [1, 1]} : vector<16x8xf32> to vector<16x1xf32>
    %546 = tpu.transpose %544, [1, 0] : vector<16x1xf32> -> vector<1x16xf32>
    %547 = vector.broadcast %545 : vector<16x1xf32> to vector<16x16xf32>
    %548 = vector.broadcast %546 : vector<1x16xf32> to vector<16x16xf32>
    %549 = arith.addf %547, %548 : vector<16x16xf32>
    %cst_193 = arith.constant 0.000000e+00 : f32
    %550 = vector.broadcast %cst_193 : f32 to vector<16x16xf32>
    %551 = arith.cmpf ogt, %549, %550 : vector<16x16xf32>
    %cst_194 = arith.constant 2.000000e-01 : f32
    %552 = vector.broadcast %cst_194 : f32 to vector<16x16xf32>
    %553 = arith.mulf %552, %549 : vector<16x16xf32>
    %554 = arith.select %551, %549, %553 : vector<16x16xi1>, vector<16x16xf32>
    %555 = arith.addf %554, %11 : vector<16x16xf32>
    %cst_195 = arith.constant dense<0xFF800000> : vector<16xf32>
    %556 = vector.multi_reduction <maximumf>, %555, %cst_195 [1] : vector<16x16xf32> to vector<16xf32>
    %557 = vector.shape_cast %556 : vector<16xf32> to vector<16x1xf32>
    %cst_196 = arith.constant 0.000000e+00 : f32
    %558 = vector.broadcast %cst_196 : f32 to vector<16x1xf32>
    %559 = arith.select %15, %557, %558 : vector<16x1xi1>, vector<16x1xf32>
    %560 = vector.broadcast %559 : vector<16x1xf32> to vector<16x16xf32>
    %561 = arith.subf %555, %560 : vector<16x16xf32>
    %562 = math.exp %561 : vector<16x16xf32>
    %563 = arith.mulf %6, %562 : vector<16x16xf32>
    %cst_197 = arith.constant dense<0.000000e+00> : vector<16xf32>
    %564 = vector.multi_reduction <add>, %563, %cst_197 [1] : vector<16x16xf32> to vector<16xf32>
    %565 = vector.shape_cast %564 : vector<16xf32> to vector<16x1xf32>
    %cst_198 = arith.constant 0.000000e+00 : f32
    %566 = vector.broadcast %cst_198 : f32 to vector<16x1xf32>
    %567 = arith.cmpf ogt, %565, %566 : vector<16x1xf32>
    %cst_199 = arith.constant 1.000000e+00 : f32
    %568 = vector.broadcast %cst_199 : f32 to vector<16x1xf32>
    %569 = arith.select %567, %565, %568 : vector<16x1xi1>, vector<16x1xf32>
    %570 = tpu.reciprocal %569 {approx = true} : vector<16x1xf32> -> vector<16x1xf32>
    %571 = vector.broadcast %570 : vector<16x1xf32> to vector<16x16xf32>
    %572 = arith.mulf %563, %571 : vector<16x16xf32>
    %573 = vector.extract_strided_slice %477 {offsets = [0, 64], sizes = [16, 32], strides = [1, 1]} : vector<16x128xf32> to vector<16x32xf32>
    %cst_200 = arith.constant dense<0.000000e+00> : vector<16x32xf32>
    %574 = tpu.matmul %572, %573, %cst_200 {dimension_numbers = #tpu.dot_dimension_numbers<[1], [0], [0], [1], [0, 0, 1, 1], [], []>} : vector<16x16xf32>, vector<16x32xf32>, vector<16x32xf32> -> vector<16x32xf32>
    %575 = arith.addf %543, %574 : vector<16x32xf32>
    %576 = vector.extract_strided_slice %478 {offsets = [0, 3], sizes = [16, 1], strides = [1, 1]} : vector<16x8xf32> to vector<16x1xf32>
    %577 = vector.extract_strided_slice %478 {offsets = [0, 7], sizes = [16, 1], strides = [1, 1]} : vector<16x8xf32> to vector<16x1xf32>
    %578 = tpu.transpose %576, [1, 0] : vector<16x1xf32> -> vector<1x16xf32>
    %579 = vector.broadcast %577 : vector<16x1xf32> to vector<16x16xf32>
    %580 = vector.broadcast %578 : vector<1x16xf32> to vector<16x16xf32>
    %581 = arith.addf %579, %580 : vector<16x16xf32>
    %cst_201 = arith.constant 0.000000e+00 : f32
    %582 = vector.broadcast %cst_201 : f32 to vector<16x16xf32>
    %583 = arith.cmpf ogt, %581, %582 : vector<16x16xf32>
    %cst_202 = arith.constant 2.000000e-01 : f32
    %584 = vector.broadcast %cst_202 : f32 to vector<16x16xf32>
    %585 = arith.mulf %584, %581 : vector<16x16xf32>
    %586 = arith.select %583, %581, %585 : vector<16x16xi1>, vector<16x16xf32>
    %587 = arith.addf %586, %11 : vector<16x16xf32>
    %cst_203 = arith.constant dense<0xFF800000> : vector<16xf32>
    %588 = vector.multi_reduction <maximumf>, %587, %cst_203 [1] : vector<16x16xf32> to vector<16xf32>
    %589 = vector.shape_cast %588 : vector<16xf32> to vector<16x1xf32>
    %cst_204 = arith.constant 0.000000e+00 : f32
    %590 = vector.broadcast %cst_204 : f32 to vector<16x1xf32>
    %591 = arith.select %15, %589, %590 : vector<16x1xi1>, vector<16x1xf32>
    %592 = vector.broadcast %591 : vector<16x1xf32> to vector<16x16xf32>
    %593 = arith.subf %587, %592 : vector<16x16xf32>
    %594 = math.exp %593 : vector<16x16xf32>
    %595 = arith.mulf %6, %594 : vector<16x16xf32>
    %cst_205 = arith.constant dense<0.000000e+00> : vector<16xf32>
    %596 = vector.multi_reduction <add>, %595, %cst_205 [1] : vector<16x16xf32> to vector<16xf32>
    %597 = vector.shape_cast %596 : vector<16xf32> to vector<16x1xf32>
    %cst_206 = arith.constant 0.000000e+00 : f32
    %598 = vector.broadcast %cst_206 : f32 to vector<16x1xf32>
    %599 = arith.cmpf ogt, %597, %598 : vector<16x1xf32>
    %cst_207 = arith.constant 1.000000e+00 : f32
    %600 = vector.broadcast %cst_207 : f32 to vector<16x1xf32>
    %601 = arith.select %599, %597, %600 : vector<16x1xi1>, vector<16x1xf32>
    %602 = tpu.reciprocal %601 {approx = true} : vector<16x1xf32> -> vector<16x1xf32>
    %603 = vector.broadcast %602 : vector<16x1xf32> to vector<16x16xf32>
    %604 = arith.mulf %595, %603 : vector<16x16xf32>
    %605 = vector.extract_strided_slice %477 {offsets = [0, 96], sizes = [16, 32], strides = [1, 1]} : vector<16x128xf32> to vector<16x32xf32>
    %cst_208 = arith.constant dense<0.000000e+00> : vector<16x32xf32>
    %606 = tpu.matmul %604, %605, %cst_208 {dimension_numbers = #tpu.dot_dimension_numbers<[1], [0], [0], [1], [0, 0, 1, 1], [], []>} : vector<16x16xf32>, vector<16x32xf32>, vector<16x32xf32> -> vector<16x32xf32>
    %607 = arith.addf %575, %606 : vector<16x32xf32>
    %cst_209 = arith.constant 2.500000e-01 : f32
    %608 = vector.broadcast %cst_209 : f32 to vector<16x32xf32>
    %609 = arith.mulf %607, %608 : vector<16x32xf32>
    %610 = vector.broadcast %476 : vector<1x32xf32> to vector<16x32xf32>
    %611 = arith.addf %609, %610 : vector<16x32xf32>
    %c4 = arith.constant 4 : index
    %c0_210 = arith.constant 0 : index
    %c0_211 = arith.constant 0 : index
    %612 = vector.load %arg4[%c4, %c0_210, %c0_211] : memref<9x32x128xf32, #tpu.memory_space<vmem>>, vector<1x32x128xf32>
    %613 = vector.shape_cast %612 : vector<1x32x128xf32> to vector<32x128xf32>
    %c4_212 = arith.constant 4 : index
    %c0_213 = arith.constant 0 : index
    %c0_214 = arith.constant 0 : index
    %614 = vector.load %arg5[%c4_212, %c0_213, %c0_214] : memref<9x128x8xf32, #tpu.memory_space<vmem>>, vector<1x128x8xf32>
    %615 = vector.shape_cast %614 : vector<1x128x8xf32> to vector<128x8xf32>
    %c4_215 = arith.constant 4 : index
    %c0_216 = arith.constant 0 : index
    %c0_217 = arith.constant 0 : index
    %616 = vector.load %arg6[%c4_215, %c0_216, %c0_217] : memref<9x1x32xf32, #tpu.memory_space<vmem>>, vector<1x1x32xf32>
    %617 = vector.shape_cast %616 : vector<1x1x32xf32> to vector<1x32xf32>
    %cst_218 = arith.constant dense<0.000000e+00> : vector<16x128xf32>
    %618 = tpu.matmul %470, %613, %cst_218 {dimension_numbers = #tpu.dot_dimension_numbers<[1], [0], [0], [1], [0, 0, 1, 1], [], []>} : vector<16x32xf32>, vector<32x128xf32>, vector<16x128xf32> -> vector<16x128xf32>
    %cst_219 = arith.constant dense<0.000000e+00> : vector<16x8xf32>
    %619 = tpu.matmul %618, %615, %cst_219 {dimension_numbers = #tpu.dot_dimension_numbers<[1], [0], [0], [1], [0, 0, 1, 1], [], []>} : vector<16x128xf32>, vector<128x8xf32>, vector<16x8xf32> -> vector<16x8xf32>
    %cst_220 = arith.constant 0.000000e+00 : f32
    %620 = vector.broadcast %cst_220 : f32 to vector<16x32xf32>
    %621 = vector.extract_strided_slice %619 {offsets = [0, 0], sizes = [16, 1], strides = [1, 1]} : vector<16x8xf32> to vector<16x1xf32>
    %622 = vector.extract_strided_slice %619 {offsets = [0, 4], sizes = [16, 1], strides = [1, 1]} : vector<16x8xf32> to vector<16x1xf32>
    %623 = tpu.transpose %621, [1, 0] : vector<16x1xf32> -> vector<1x16xf32>
    %624 = vector.broadcast %622 : vector<16x1xf32> to vector<16x16xf32>
    %625 = vector.broadcast %623 : vector<1x16xf32> to vector<16x16xf32>
    %626 = arith.addf %624, %625 : vector<16x16xf32>
    %cst_221 = arith.constant 0.000000e+00 : f32
    %627 = vector.broadcast %cst_221 : f32 to vector<16x16xf32>
    %628 = arith.cmpf ogt, %626, %627 : vector<16x16xf32>
    %cst_222 = arith.constant 2.000000e-01 : f32
    %629 = vector.broadcast %cst_222 : f32 to vector<16x16xf32>
    %630 = arith.mulf %629, %626 : vector<16x16xf32>
    %631 = arith.select %628, %626, %630 : vector<16x16xi1>, vector<16x16xf32>
    %632 = arith.addf %631, %22 : vector<16x16xf32>
    %cst_223 = arith.constant dense<0xFF800000> : vector<16xf32>
    %633 = vector.multi_reduction <maximumf>, %632, %cst_223 [1] : vector<16x16xf32> to vector<16xf32>
    %634 = vector.shape_cast %633 : vector<16xf32> to vector<16x1xf32>
    %cst_224 = arith.constant 0.000000e+00 : f32
    %635 = vector.broadcast %cst_224 : f32 to vector<16x1xf32>
    %636 = arith.select %26, %634, %635 : vector<16x1xi1>, vector<16x1xf32>
    %637 = vector.broadcast %636 : vector<16x1xf32> to vector<16x16xf32>
    %638 = arith.subf %632, %637 : vector<16x16xf32>
    %639 = math.exp %638 : vector<16x16xf32>
    %640 = arith.mulf %17, %639 : vector<16x16xf32>
    %cst_225 = arith.constant dense<0.000000e+00> : vector<16xf32>
    %641 = vector.multi_reduction <add>, %640, %cst_225 [1] : vector<16x16xf32> to vector<16xf32>
    %642 = vector.shape_cast %641 : vector<16xf32> to vector<16x1xf32>
    %cst_226 = arith.constant 0.000000e+00 : f32
    %643 = vector.broadcast %cst_226 : f32 to vector<16x1xf32>
    %644 = arith.cmpf ogt, %642, %643 : vector<16x1xf32>
    %cst_227 = arith.constant 1.000000e+00 : f32
    %645 = vector.broadcast %cst_227 : f32 to vector<16x1xf32>
    %646 = arith.select %644, %642, %645 : vector<16x1xi1>, vector<16x1xf32>
    %647 = tpu.reciprocal %646 {approx = true} : vector<16x1xf32> -> vector<16x1xf32>
    %648 = vector.broadcast %647 : vector<16x1xf32> to vector<16x16xf32>
    %649 = arith.mulf %640, %648 : vector<16x16xf32>
    %650 = vector.extract_strided_slice %618 {offsets = [0, 0], sizes = [16, 32], strides = [1, 1]} : vector<16x128xf32> to vector<16x32xf32>
    %cst_228 = arith.constant dense<0.000000e+00> : vector<16x32xf32>
    %651 = tpu.matmul %649, %650, %cst_228 {dimension_numbers = #tpu.dot_dimension_numbers<[1], [0], [0], [1], [0, 0, 1, 1], [], []>} : vector<16x16xf32>, vector<16x32xf32>, vector<16x32xf32> -> vector<16x32xf32>
    %652 = arith.addf %620, %651 : vector<16x32xf32>
    %653 = vector.extract_strided_slice %619 {offsets = [0, 1], sizes = [16, 1], strides = [1, 1]} : vector<16x8xf32> to vector<16x1xf32>
    %654 = vector.extract_strided_slice %619 {offsets = [0, 5], sizes = [16, 1], strides = [1, 1]} : vector<16x8xf32> to vector<16x1xf32>
    %655 = tpu.transpose %653, [1, 0] : vector<16x1xf32> -> vector<1x16xf32>
    %656 = vector.broadcast %654 : vector<16x1xf32> to vector<16x16xf32>
    %657 = vector.broadcast %655 : vector<1x16xf32> to vector<16x16xf32>
    %658 = arith.addf %656, %657 : vector<16x16xf32>
    %cst_229 = arith.constant 0.000000e+00 : f32
    %659 = vector.broadcast %cst_229 : f32 to vector<16x16xf32>
    %660 = arith.cmpf ogt, %658, %659 : vector<16x16xf32>
    %cst_230 = arith.constant 2.000000e-01 : f32
    %661 = vector.broadcast %cst_230 : f32 to vector<16x16xf32>
    %662 = arith.mulf %661, %658 : vector<16x16xf32>
    %663 = arith.select %660, %658, %662 : vector<16x16xi1>, vector<16x16xf32>
    %664 = arith.addf %663, %22 : vector<16x16xf32>
    %cst_231 = arith.constant dense<0xFF800000> : vector<16xf32>
    %665 = vector.multi_reduction <maximumf>, %664, %cst_231 [1] : vector<16x16xf32> to vector<16xf32>
    %666 = vector.shape_cast %665 : vector<16xf32> to vector<16x1xf32>
    %cst_232 = arith.constant 0.000000e+00 : f32
    %667 = vector.broadcast %cst_232 : f32 to vector<16x1xf32>
    %668 = arith.select %26, %666, %667 : vector<16x1xi1>, vector<16x1xf32>
    %669 = vector.broadcast %668 : vector<16x1xf32> to vector<16x16xf32>
    %670 = arith.subf %664, %669 : vector<16x16xf32>
    %671 = math.exp %670 : vector<16x16xf32>
    %672 = arith.mulf %17, %671 : vector<16x16xf32>
    %cst_233 = arith.constant dense<0.000000e+00> : vector<16xf32>
    %673 = vector.multi_reduction <add>, %672, %cst_233 [1] : vector<16x16xf32> to vector<16xf32>
    %674 = vector.shape_cast %673 : vector<16xf32> to vector<16x1xf32>
    %cst_234 = arith.constant 0.000000e+00 : f32
    %675 = vector.broadcast %cst_234 : f32 to vector<16x1xf32>
    %676 = arith.cmpf ogt, %674, %675 : vector<16x1xf32>
    %cst_235 = arith.constant 1.000000e+00 : f32
    %677 = vector.broadcast %cst_235 : f32 to vector<16x1xf32>
    %678 = arith.select %676, %674, %677 : vector<16x1xi1>, vector<16x1xf32>
    %679 = tpu.reciprocal %678 {approx = true} : vector<16x1xf32> -> vector<16x1xf32>
    %680 = vector.broadcast %679 : vector<16x1xf32> to vector<16x16xf32>
    %681 = arith.mulf %672, %680 : vector<16x16xf32>
    %682 = vector.extract_strided_slice %618 {offsets = [0, 32], sizes = [16, 32], strides = [1, 1]} : vector<16x128xf32> to vector<16x32xf32>
    %cst_236 = arith.constant dense<0.000000e+00> : vector<16x32xf32>
    %683 = tpu.matmul %681, %682, %cst_236 {dimension_numbers = #tpu.dot_dimension_numbers<[1], [0], [0], [1], [0, 0, 1, 1], [], []>} : vector<16x16xf32>, vector<16x32xf32>, vector<16x32xf32> -> vector<16x32xf32>
    %684 = arith.addf %652, %683 : vector<16x32xf32>
    %685 = vector.extract_strided_slice %619 {offsets = [0, 2], sizes = [16, 1], strides = [1, 1]} : vector<16x8xf32> to vector<16x1xf32>
    %686 = vector.extract_strided_slice %619 {offsets = [0, 6], sizes = [16, 1], strides = [1, 1]} : vector<16x8xf32> to vector<16x1xf32>
    %687 = tpu.transpose %685, [1, 0] : vector<16x1xf32> -> vector<1x16xf32>
    %688 = vector.broadcast %686 : vector<16x1xf32> to vector<16x16xf32>
    %689 = vector.broadcast %687 : vector<1x16xf32> to vector<16x16xf32>
    %690 = arith.addf %688, %689 : vector<16x16xf32>
    %cst_237 = arith.constant 0.000000e+00 : f32
    %691 = vector.broadcast %cst_237 : f32 to vector<16x16xf32>
    %692 = arith.cmpf ogt, %690, %691 : vector<16x16xf32>
    %cst_238 = arith.constant 2.000000e-01 : f32
    %693 = vector.broadcast %cst_238 : f32 to vector<16x16xf32>
    %694 = arith.mulf %693, %690 : vector<16x16xf32>
    %695 = arith.select %692, %690, %694 : vector<16x16xi1>, vector<16x16xf32>
    %696 = arith.addf %695, %22 : vector<16x16xf32>
    %cst_239 = arith.constant dense<0xFF800000> : vector<16xf32>
    %697 = vector.multi_reduction <maximumf>, %696, %cst_239 [1] : vector<16x16xf32> to vector<16xf32>
    %698 = vector.shape_cast %697 : vector<16xf32> to vector<16x1xf32>
    %cst_240 = arith.constant 0.000000e+00 : f32
    %699 = vector.broadcast %cst_240 : f32 to vector<16x1xf32>
    %700 = arith.select %26, %698, %699 : vector<16x1xi1>, vector<16x1xf32>
    %701 = vector.broadcast %700 : vector<16x1xf32> to vector<16x16xf32>
    %702 = arith.subf %696, %701 : vector<16x16xf32>
    %703 = math.exp %702 : vector<16x16xf32>
    %704 = arith.mulf %17, %703 : vector<16x16xf32>
    %cst_241 = arith.constant dense<0.000000e+00> : vector<16xf32>
    %705 = vector.multi_reduction <add>, %704, %cst_241 [1] : vector<16x16xf32> to vector<16xf32>
    %706 = vector.shape_cast %705 : vector<16xf32> to vector<16x1xf32>
    %cst_242 = arith.constant 0.000000e+00 : f32
    %707 = vector.broadcast %cst_242 : f32 to vector<16x1xf32>
    %708 = arith.cmpf ogt, %706, %707 : vector<16x1xf32>
    %cst_243 = arith.constant 1.000000e+00 : f32
    %709 = vector.broadcast %cst_243 : f32 to vector<16x1xf32>
    %710 = arith.select %708, %706, %709 : vector<16x1xi1>, vector<16x1xf32>
    %711 = tpu.reciprocal %710 {approx = true} : vector<16x1xf32> -> vector<16x1xf32>
    %712 = vector.broadcast %711 : vector<16x1xf32> to vector<16x16xf32>
    %713 = arith.mulf %704, %712 : vector<16x16xf32>
    %714 = vector.extract_strided_slice %618 {offsets = [0, 64], sizes = [16, 32], strides = [1, 1]} : vector<16x128xf32> to vector<16x32xf32>
    %cst_244 = arith.constant dense<0.000000e+00> : vector<16x32xf32>
    %715 = tpu.matmul %713, %714, %cst_244 {dimension_numbers = #tpu.dot_dimension_numbers<[1], [0], [0], [1], [0, 0, 1, 1], [], []>} : vector<16x16xf32>, vector<16x32xf32>, vector<16x32xf32> -> vector<16x32xf32>
    %716 = arith.addf %684, %715 : vector<16x32xf32>
    %717 = vector.extract_strided_slice %619 {offsets = [0, 3], sizes = [16, 1], strides = [1, 1]} : vector<16x8xf32> to vector<16x1xf32>
    %718 = vector.extract_strided_slice %619 {offsets = [0, 7], sizes = [16, 1], strides = [1, 1]} : vector<16x8xf32> to vector<16x1xf32>
    %719 = tpu.transpose %717, [1, 0] : vector<16x1xf32> -> vector<1x16xf32>
    %720 = vector.broadcast %718 : vector<16x1xf32> to vector<16x16xf32>
    %721 = vector.broadcast %719 : vector<1x16xf32> to vector<16x16xf32>
    %722 = arith.addf %720, %721 : vector<16x16xf32>
    %cst_245 = arith.constant 0.000000e+00 : f32
    %723 = vector.broadcast %cst_245 : f32 to vector<16x16xf32>
    %724 = arith.cmpf ogt, %722, %723 : vector<16x16xf32>
    %cst_246 = arith.constant 2.000000e-01 : f32
    %725 = vector.broadcast %cst_246 : f32 to vector<16x16xf32>
    %726 = arith.mulf %725, %722 : vector<16x16xf32>
    %727 = arith.select %724, %722, %726 : vector<16x16xi1>, vector<16x16xf32>
    %728 = arith.addf %727, %22 : vector<16x16xf32>
    %cst_247 = arith.constant dense<0xFF800000> : vector<16xf32>
    %729 = vector.multi_reduction <maximumf>, %728, %cst_247 [1] : vector<16x16xf32> to vector<16xf32>
    %730 = vector.shape_cast %729 : vector<16xf32> to vector<16x1xf32>
    %cst_248 = arith.constant 0.000000e+00 : f32
    %731 = vector.broadcast %cst_248 : f32 to vector<16x1xf32>
    %732 = arith.select %26, %730, %731 : vector<16x1xi1>, vector<16x1xf32>
    %733 = vector.broadcast %732 : vector<16x1xf32> to vector<16x16xf32>
    %734 = arith.subf %728, %733 : vector<16x16xf32>
    %735 = math.exp %734 : vector<16x16xf32>
    %736 = arith.mulf %17, %735 : vector<16x16xf32>
    %cst_249 = arith.constant dense<0.000000e+00> : vector<16xf32>
    %737 = vector.multi_reduction <add>, %736, %cst_249 [1] : vector<16x16xf32> to vector<16xf32>
    %738 = vector.shape_cast %737 : vector<16xf32> to vector<16x1xf32>
    %cst_250 = arith.constant 0.000000e+00 : f32
    %739 = vector.broadcast %cst_250 : f32 to vector<16x1xf32>
    %740 = arith.cmpf ogt, %738, %739 : vector<16x1xf32>
    %cst_251 = arith.constant 1.000000e+00 : f32
    %741 = vector.broadcast %cst_251 : f32 to vector<16x1xf32>
    %742 = arith.select %740, %738, %741 : vector<16x1xi1>, vector<16x1xf32>
    %743 = tpu.reciprocal %742 {approx = true} : vector<16x1xf32> -> vector<16x1xf32>
    %744 = vector.broadcast %743 : vector<16x1xf32> to vector<16x16xf32>
    %745 = arith.mulf %736, %744 : vector<16x16xf32>
    %746 = vector.extract_strided_slice %618 {offsets = [0, 96], sizes = [16, 32], strides = [1, 1]} : vector<16x128xf32> to vector<16x32xf32>
    %cst_252 = arith.constant dense<0.000000e+00> : vector<16x32xf32>
    %747 = tpu.matmul %745, %746, %cst_252 {dimension_numbers = #tpu.dot_dimension_numbers<[1], [0], [0], [1], [0, 0, 1, 1], [], []>} : vector<16x16xf32>, vector<16x32xf32>, vector<16x32xf32> -> vector<16x32xf32>
    %748 = arith.addf %716, %747 : vector<16x32xf32>
    %cst_253 = arith.constant 2.500000e-01 : f32
    %749 = vector.broadcast %cst_253 : f32 to vector<16x32xf32>
    %750 = arith.mulf %748, %749 : vector<16x32xf32>
    %751 = vector.broadcast %617 : vector<1x32xf32> to vector<16x32xf32>
    %752 = arith.addf %750, %751 : vector<16x32xf32>
    %c5 = arith.constant 5 : index
    %c0_254 = arith.constant 0 : index
    %c0_255 = arith.constant 0 : index
    %753 = vector.load %arg4[%c5, %c0_254, %c0_255] : memref<9x32x128xf32, #tpu.memory_space<vmem>>, vector<1x32x128xf32>
    %754 = vector.shape_cast %753 : vector<1x32x128xf32> to vector<32x128xf32>
    %c5_256 = arith.constant 5 : index
    %c0_257 = arith.constant 0 : index
    %c0_258 = arith.constant 0 : index
    %755 = vector.load %arg5[%c5_256, %c0_257, %c0_258] : memref<9x128x8xf32, #tpu.memory_space<vmem>>, vector<1x128x8xf32>
    %756 = vector.shape_cast %755 : vector<1x128x8xf32> to vector<128x8xf32>
    %c5_259 = arith.constant 5 : index
    %c0_260 = arith.constant 0 : index
    %c0_261 = arith.constant 0 : index
    %757 = vector.load %arg6[%c5_259, %c0_260, %c0_261] : memref<9x1x32xf32, #tpu.memory_space<vmem>>, vector<1x1x32xf32>
    %758 = vector.shape_cast %757 : vector<1x1x32xf32> to vector<1x32xf32>
    %cst_262 = arith.constant dense<0.000000e+00> : vector<16x128xf32>
    %759 = tpu.matmul %752, %754, %cst_262 {dimension_numbers = #tpu.dot_dimension_numbers<[1], [0], [0], [1], [0, 0, 1, 1], [], []>} : vector<16x32xf32>, vector<32x128xf32>, vector<16x128xf32> -> vector<16x128xf32>
    %cst_263 = arith.constant dense<0.000000e+00> : vector<16x8xf32>
    %760 = tpu.matmul %759, %756, %cst_263 {dimension_numbers = #tpu.dot_dimension_numbers<[1], [0], [0], [1], [0, 0, 1, 1], [], []>} : vector<16x128xf32>, vector<128x8xf32>, vector<16x8xf32> -> vector<16x8xf32>
    %cst_264 = arith.constant 0.000000e+00 : f32
    %761 = vector.broadcast %cst_264 : f32 to vector<16x32xf32>
    %762 = vector.extract_strided_slice %760 {offsets = [0, 0], sizes = [16, 1], strides = [1, 1]} : vector<16x8xf32> to vector<16x1xf32>
    %763 = vector.extract_strided_slice %760 {offsets = [0, 4], sizes = [16, 1], strides = [1, 1]} : vector<16x8xf32> to vector<16x1xf32>
    %764 = tpu.transpose %762, [1, 0] : vector<16x1xf32> -> vector<1x16xf32>
    %765 = vector.broadcast %763 : vector<16x1xf32> to vector<16x16xf32>
    %766 = vector.broadcast %764 : vector<1x16xf32> to vector<16x16xf32>
    %767 = arith.addf %765, %766 : vector<16x16xf32>
    %cst_265 = arith.constant 0.000000e+00 : f32
    %768 = vector.broadcast %cst_265 : f32 to vector<16x16xf32>
    %769 = arith.cmpf ogt, %767, %768 : vector<16x16xf32>
    %cst_266 = arith.constant 2.000000e-01 : f32
    %770 = vector.broadcast %cst_266 : f32 to vector<16x16xf32>
    %771 = arith.mulf %770, %767 : vector<16x16xf32>
    %772 = arith.select %769, %767, %771 : vector<16x16xi1>, vector<16x16xf32>
    %773 = arith.addf %772, %33 : vector<16x16xf32>
    %cst_267 = arith.constant dense<0xFF800000> : vector<16xf32>
    %774 = vector.multi_reduction <maximumf>, %773, %cst_267 [1] : vector<16x16xf32> to vector<16xf32>
    %775 = vector.shape_cast %774 : vector<16xf32> to vector<16x1xf32>
    %cst_268 = arith.constant 0.000000e+00 : f32
    %776 = vector.broadcast %cst_268 : f32 to vector<16x1xf32>
    %777 = arith.select %37, %775, %776 : vector<16x1xi1>, vector<16x1xf32>
    %778 = vector.broadcast %777 : vector<16x1xf32> to vector<16x16xf32>
    %779 = arith.subf %773, %778 : vector<16x16xf32>
    %780 = math.exp %779 : vector<16x16xf32>
    %781 = arith.mulf %28, %780 : vector<16x16xf32>
    %cst_269 = arith.constant dense<0.000000e+00> : vector<16xf32>
    %782 = vector.multi_reduction <add>, %781, %cst_269 [1] : vector<16x16xf32> to vector<16xf32>
    %783 = vector.shape_cast %782 : vector<16xf32> to vector<16x1xf32>
    %cst_270 = arith.constant 0.000000e+00 : f32
    %784 = vector.broadcast %cst_270 : f32 to vector<16x1xf32>
    %785 = arith.cmpf ogt, %783, %784 : vector<16x1xf32>
    %cst_271 = arith.constant 1.000000e+00 : f32
    %786 = vector.broadcast %cst_271 : f32 to vector<16x1xf32>
    %787 = arith.select %785, %783, %786 : vector<16x1xi1>, vector<16x1xf32>
    %788 = tpu.reciprocal %787 {approx = true} : vector<16x1xf32> -> vector<16x1xf32>
    %789 = vector.broadcast %788 : vector<16x1xf32> to vector<16x16xf32>
    %790 = arith.mulf %781, %789 : vector<16x16xf32>
    %791 = vector.extract_strided_slice %759 {offsets = [0, 0], sizes = [16, 32], strides = [1, 1]} : vector<16x128xf32> to vector<16x32xf32>
    %cst_272 = arith.constant dense<0.000000e+00> : vector<16x32xf32>
    %792 = tpu.matmul %790, %791, %cst_272 {dimension_numbers = #tpu.dot_dimension_numbers<[1], [0], [0], [1], [0, 0, 1, 1], [], []>} : vector<16x16xf32>, vector<16x32xf32>, vector<16x32xf32> -> vector<16x32xf32>
    %793 = arith.addf %761, %792 : vector<16x32xf32>
    %794 = vector.extract_strided_slice %760 {offsets = [0, 1], sizes = [16, 1], strides = [1, 1]} : vector<16x8xf32> to vector<16x1xf32>
    %795 = vector.extract_strided_slice %760 {offsets = [0, 5], sizes = [16, 1], strides = [1, 1]} : vector<16x8xf32> to vector<16x1xf32>
    %796 = tpu.transpose %794, [1, 0] : vector<16x1xf32> -> vector<1x16xf32>
    %797 = vector.broadcast %795 : vector<16x1xf32> to vector<16x16xf32>
    %798 = vector.broadcast %796 : vector<1x16xf32> to vector<16x16xf32>
    %799 = arith.addf %797, %798 : vector<16x16xf32>
    %cst_273 = arith.constant 0.000000e+00 : f32
    %800 = vector.broadcast %cst_273 : f32 to vector<16x16xf32>
    %801 = arith.cmpf ogt, %799, %800 : vector<16x16xf32>
    %cst_274 = arith.constant 2.000000e-01 : f32
    %802 = vector.broadcast %cst_274 : f32 to vector<16x16xf32>
    %803 = arith.mulf %802, %799 : vector<16x16xf32>
    %804 = arith.select %801, %799, %803 : vector<16x16xi1>, vector<16x16xf32>
    %805 = arith.addf %804, %33 : vector<16x16xf32>
    %cst_275 = arith.constant dense<0xFF800000> : vector<16xf32>
    %806 = vector.multi_reduction <maximumf>, %805, %cst_275 [1] : vector<16x16xf32> to vector<16xf32>
    %807 = vector.shape_cast %806 : vector<16xf32> to vector<16x1xf32>
    %cst_276 = arith.constant 0.000000e+00 : f32
    %808 = vector.broadcast %cst_276 : f32 to vector<16x1xf32>
    %809 = arith.select %37, %807, %808 : vector<16x1xi1>, vector<16x1xf32>
    %810 = vector.broadcast %809 : vector<16x1xf32> to vector<16x16xf32>
    %811 = arith.subf %805, %810 : vector<16x16xf32>
    %812 = math.exp %811 : vector<16x16xf32>
    %813 = arith.mulf %28, %812 : vector<16x16xf32>
    %cst_277 = arith.constant dense<0.000000e+00> : vector<16xf32>
    %814 = vector.multi_reduction <add>, %813, %cst_277 [1] : vector<16x16xf32> to vector<16xf32>
    %815 = vector.shape_cast %814 : vector<16xf32> to vector<16x1xf32>
    %cst_278 = arith.constant 0.000000e+00 : f32
    %816 = vector.broadcast %cst_278 : f32 to vector<16x1xf32>
    %817 = arith.cmpf ogt, %815, %816 : vector<16x1xf32>
    %cst_279 = arith.constant 1.000000e+00 : f32
    %818 = vector.broadcast %cst_279 : f32 to vector<16x1xf32>
    %819 = arith.select %817, %815, %818 : vector<16x1xi1>, vector<16x1xf32>
    %820 = tpu.reciprocal %819 {approx = true} : vector<16x1xf32> -> vector<16x1xf32>
    %821 = vector.broadcast %820 : vector<16x1xf32> to vector<16x16xf32>
    %822 = arith.mulf %813, %821 : vector<16x16xf32>
    %823 = vector.extract_strided_slice %759 {offsets = [0, 32], sizes = [16, 32], strides = [1, 1]} : vector<16x128xf32> to vector<16x32xf32>
    %cst_280 = arith.constant dense<0.000000e+00> : vector<16x32xf32>
    %824 = tpu.matmul %822, %823, %cst_280 {dimension_numbers = #tpu.dot_dimension_numbers<[1], [0], [0], [1], [0, 0, 1, 1], [], []>} : vector<16x16xf32>, vector<16x32xf32>, vector<16x32xf32> -> vector<16x32xf32>
    %825 = arith.addf %793, %824 : vector<16x32xf32>
    %826 = vector.extract_strided_slice %760 {offsets = [0, 2], sizes = [16, 1], strides = [1, 1]} : vector<16x8xf32> to vector<16x1xf32>
    %827 = vector.extract_strided_slice %760 {offsets = [0, 6], sizes = [16, 1], strides = [1, 1]} : vector<16x8xf32> to vector<16x1xf32>
    %828 = tpu.transpose %826, [1, 0] : vector<16x1xf32> -> vector<1x16xf32>
    %829 = vector.broadcast %827 : vector<16x1xf32> to vector<16x16xf32>
    %830 = vector.broadcast %828 : vector<1x16xf32> to vector<16x16xf32>
    %831 = arith.addf %829, %830 : vector<16x16xf32>
    %cst_281 = arith.constant 0.000000e+00 : f32
    %832 = vector.broadcast %cst_281 : f32 to vector<16x16xf32>
    %833 = arith.cmpf ogt, %831, %832 : vector<16x16xf32>
    %cst_282 = arith.constant 2.000000e-01 : f32
    %834 = vector.broadcast %cst_282 : f32 to vector<16x16xf32>
    %835 = arith.mulf %834, %831 : vector<16x16xf32>
    %836 = arith.select %833, %831, %835 : vector<16x16xi1>, vector<16x16xf32>
    %837 = arith.addf %836, %33 : vector<16x16xf32>
    %cst_283 = arith.constant dense<0xFF800000> : vector<16xf32>
    %838 = vector.multi_reduction <maximumf>, %837, %cst_283 [1] : vector<16x16xf32> to vector<16xf32>
    %839 = vector.shape_cast %838 : vector<16xf32> to vector<16x1xf32>
    %cst_284 = arith.constant 0.000000e+00 : f32
    %840 = vector.broadcast %cst_284 : f32 to vector<16x1xf32>
    %841 = arith.select %37, %839, %840 : vector<16x1xi1>, vector<16x1xf32>
    %842 = vector.broadcast %841 : vector<16x1xf32> to vector<16x16xf32>
    %843 = arith.subf %837, %842 : vector<16x16xf32>
    %844 = math.exp %843 : vector<16x16xf32>
    %845 = arith.mulf %28, %844 : vector<16x16xf32>
    %cst_285 = arith.constant dense<0.000000e+00> : vector<16xf32>
    %846 = vector.multi_reduction <add>, %845, %cst_285 [1] : vector<16x16xf32> to vector<16xf32>
    %847 = vector.shape_cast %846 : vector<16xf32> to vector<16x1xf32>
    %cst_286 = arith.constant 0.000000e+00 : f32
    %848 = vector.broadcast %cst_286 : f32 to vector<16x1xf32>
    %849 = arith.cmpf ogt, %847, %848 : vector<16x1xf32>
    %cst_287 = arith.constant 1.000000e+00 : f32
    %850 = vector.broadcast %cst_287 : f32 to vector<16x1xf32>
    %851 = arith.select %849, %847, %850 : vector<16x1xi1>, vector<16x1xf32>
    %852 = tpu.reciprocal %851 {approx = true} : vector<16x1xf32> -> vector<16x1xf32>
    %853 = vector.broadcast %852 : vector<16x1xf32> to vector<16x16xf32>
    %854 = arith.mulf %845, %853 : vector<16x16xf32>
    %855 = vector.extract_strided_slice %759 {offsets = [0, 64], sizes = [16, 32], strides = [1, 1]} : vector<16x128xf32> to vector<16x32xf32>
    %cst_288 = arith.constant dense<0.000000e+00> : vector<16x32xf32>
    %856 = tpu.matmul %854, %855, %cst_288 {dimension_numbers = #tpu.dot_dimension_numbers<[1], [0], [0], [1], [0, 0, 1, 1], [], []>} : vector<16x16xf32>, vector<16x32xf32>, vector<16x32xf32> -> vector<16x32xf32>
    %857 = arith.addf %825, %856 : vector<16x32xf32>
    %858 = vector.extract_strided_slice %760 {offsets = [0, 3], sizes = [16, 1], strides = [1, 1]} : vector<16x8xf32> to vector<16x1xf32>
    %859 = vector.extract_strided_slice %760 {offsets = [0, 7], sizes = [16, 1], strides = [1, 1]} : vector<16x8xf32> to vector<16x1xf32>
    %860 = tpu.transpose %858, [1, 0] : vector<16x1xf32> -> vector<1x16xf32>
    %861 = vector.broadcast %859 : vector<16x1xf32> to vector<16x16xf32>
    %862 = vector.broadcast %860 : vector<1x16xf32> to vector<16x16xf32>
    %863 = arith.addf %861, %862 : vector<16x16xf32>
    %cst_289 = arith.constant 0.000000e+00 : f32
    %864 = vector.broadcast %cst_289 : f32 to vector<16x16xf32>
    %865 = arith.cmpf ogt, %863, %864 : vector<16x16xf32>
    %cst_290 = arith.constant 2.000000e-01 : f32
    %866 = vector.broadcast %cst_290 : f32 to vector<16x16xf32>
    %867 = arith.mulf %866, %863 : vector<16x16xf32>
    %868 = arith.select %865, %863, %867 : vector<16x16xi1>, vector<16x16xf32>
    %869 = arith.addf %868, %33 : vector<16x16xf32>
    %cst_291 = arith.constant dense<0xFF800000> : vector<16xf32>
    %870 = vector.multi_reduction <maximumf>, %869, %cst_291 [1] : vector<16x16xf32> to vector<16xf32>
    %871 = vector.shape_cast %870 : vector<16xf32> to vector<16x1xf32>
    %cst_292 = arith.constant 0.000000e+00 : f32
    %872 = vector.broadcast %cst_292 : f32 to vector<16x1xf32>
    %873 = arith.select %37, %871, %872 : vector<16x1xi1>, vector<16x1xf32>
    %874 = vector.broadcast %873 : vector<16x1xf32> to vector<16x16xf32>
    %875 = arith.subf %869, %874 : vector<16x16xf32>
    %876 = math.exp %875 : vector<16x16xf32>
    %877 = arith.mulf %28, %876 : vector<16x16xf32>
    %cst_293 = arith.constant dense<0.000000e+00> : vector<16xf32>
    %878 = vector.multi_reduction <add>, %877, %cst_293 [1] : vector<16x16xf32> to vector<16xf32>
    %879 = vector.shape_cast %878 : vector<16xf32> to vector<16x1xf32>
    %cst_294 = arith.constant 0.000000e+00 : f32
    %880 = vector.broadcast %cst_294 : f32 to vector<16x1xf32>
    %881 = arith.cmpf ogt, %879, %880 : vector<16x1xf32>
    %cst_295 = arith.constant 1.000000e+00 : f32
    %882 = vector.broadcast %cst_295 : f32 to vector<16x1xf32>
    %883 = arith.select %881, %879, %882 : vector<16x1xi1>, vector<16x1xf32>
    %884 = tpu.reciprocal %883 {approx = true} : vector<16x1xf32> -> vector<16x1xf32>
    %885 = vector.broadcast %884 : vector<16x1xf32> to vector<16x16xf32>
    %886 = arith.mulf %877, %885 : vector<16x16xf32>
    %887 = vector.extract_strided_slice %759 {offsets = [0, 96], sizes = [16, 32], strides = [1, 1]} : vector<16x128xf32> to vector<16x32xf32>
    %cst_296 = arith.constant dense<0.000000e+00> : vector<16x32xf32>
    %888 = tpu.matmul %886, %887, %cst_296 {dimension_numbers = #tpu.dot_dimension_numbers<[1], [0], [0], [1], [0, 0, 1, 1], [], []>} : vector<16x16xf32>, vector<16x32xf32>, vector<16x32xf32> -> vector<16x32xf32>
    %889 = arith.addf %857, %888 : vector<16x32xf32>
    %cst_297 = arith.constant 2.500000e-01 : f32
    %890 = vector.broadcast %cst_297 : f32 to vector<16x32xf32>
    %891 = arith.mulf %889, %890 : vector<16x32xf32>
    %892 = vector.broadcast %758 : vector<1x32xf32> to vector<16x32xf32>
    %893 = arith.addf %891, %892 : vector<16x32xf32>
    %894 = arith.addf %611, %893 : vector<16x32xf32>
    %895 = arith.addf %894, %470 : vector<16x32xf32>
    %c0_298 = arith.constant 0 : index
    %c0_299 = arith.constant 0 : index
    %896 = vector.load %arg9[%c0_298, %c0_299] : memref<1x32xf32, #tpu.memory_space<vmem>>, vector<1x32xf32>
    %897 = vector.broadcast %896 : vector<1x32xf32> to vector<16x32xf32>
    %898 = arith.mulf %895, %897 : vector<16x32xf32>
    %c0_300 = arith.constant 0 : index
    %c0_301 = arith.constant 0 : index
    %899 = vector.load %arg10[%c0_300, %c0_301] : memref<1x32xf32, #tpu.memory_space<vmem>>, vector<1x32xf32>
    %900 = vector.broadcast %899 : vector<1x32xf32> to vector<16x32xf32>
    %901 = arith.addf %898, %900 : vector<16x32xf32>
    %cst_302 = arith.constant 0.000000e+00 : f32
    %902 = vector.broadcast %cst_302 : f32 to vector<16x32xf32>
    %903 = arith.maximumf %901, %902 : vector<16x32xf32>
    %c6 = arith.constant 6 : index
    %c0_303 = arith.constant 0 : index
    %c0_304 = arith.constant 0 : index
    %904 = vector.load %arg4[%c6, %c0_303, %c0_304] : memref<9x32x128xf32, #tpu.memory_space<vmem>>, vector<1x32x128xf32>
    %905 = vector.shape_cast %904 : vector<1x32x128xf32> to vector<32x128xf32>
    %c6_305 = arith.constant 6 : index
    %c0_306 = arith.constant 0 : index
    %c0_307 = arith.constant 0 : index
    %906 = vector.load %arg5[%c6_305, %c0_306, %c0_307] : memref<9x128x8xf32, #tpu.memory_space<vmem>>, vector<1x128x8xf32>
    %907 = vector.shape_cast %906 : vector<1x128x8xf32> to vector<128x8xf32>
    %c6_308 = arith.constant 6 : index
    %c0_309 = arith.constant 0 : index
    %c0_310 = arith.constant 0 : index
    %908 = vector.load %arg6[%c6_308, %c0_309, %c0_310] : memref<9x1x32xf32, #tpu.memory_space<vmem>>, vector<1x1x32xf32>
    %909 = vector.shape_cast %908 : vector<1x1x32xf32> to vector<1x32xf32>
    %cst_311 = arith.constant dense<0.000000e+00> : vector<16x128xf32>
    %910 = tpu.matmul %903, %905, %cst_311 {dimension_numbers = #tpu.dot_dimension_numbers<[1], [0], [0], [1], [0, 0, 1, 1], [], []>} : vector<16x32xf32>, vector<32x128xf32>, vector<16x128xf32> -> vector<16x128xf32>
    %cst_312 = arith.constant dense<0.000000e+00> : vector<16x8xf32>
    %911 = tpu.matmul %910, %907, %cst_312 {dimension_numbers = #tpu.dot_dimension_numbers<[1], [0], [0], [1], [0, 0, 1, 1], [], []>} : vector<16x128xf32>, vector<128x8xf32>, vector<16x8xf32> -> vector<16x8xf32>
    %cst_313 = arith.constant 0.000000e+00 : f32
    %912 = vector.broadcast %cst_313 : f32 to vector<16x32xf32>
    %913 = vector.extract_strided_slice %911 {offsets = [0, 0], sizes = [16, 1], strides = [1, 1]} : vector<16x8xf32> to vector<16x1xf32>
    %914 = vector.extract_strided_slice %911 {offsets = [0, 4], sizes = [16, 1], strides = [1, 1]} : vector<16x8xf32> to vector<16x1xf32>
    %915 = tpu.transpose %913, [1, 0] : vector<16x1xf32> -> vector<1x16xf32>
    %916 = vector.broadcast %914 : vector<16x1xf32> to vector<16x16xf32>
    %917 = vector.broadcast %915 : vector<1x16xf32> to vector<16x16xf32>
    %918 = arith.addf %916, %917 : vector<16x16xf32>
    %cst_314 = arith.constant 0.000000e+00 : f32
    %919 = vector.broadcast %cst_314 : f32 to vector<16x16xf32>
    %920 = arith.cmpf ogt, %918, %919 : vector<16x16xf32>
    %cst_315 = arith.constant 2.000000e-01 : f32
    %921 = vector.broadcast %cst_315 : f32 to vector<16x16xf32>
    %922 = arith.mulf %921, %918 : vector<16x16xf32>
    %923 = arith.select %920, %918, %922 : vector<16x16xi1>, vector<16x16xf32>
    %924 = arith.addf %923, %11 : vector<16x16xf32>
    %cst_316 = arith.constant dense<0xFF800000> : vector<16xf32>
    %925 = vector.multi_reduction <maximumf>, %924, %cst_316 [1] : vector<16x16xf32> to vector<16xf32>
    %926 = vector.shape_cast %925 : vector<16xf32> to vector<16x1xf32>
    %cst_317 = arith.constant 0.000000e+00 : f32
    %927 = vector.broadcast %cst_317 : f32 to vector<16x1xf32>
    %928 = arith.select %15, %926, %927 : vector<16x1xi1>, vector<16x1xf32>
    %929 = vector.broadcast %928 : vector<16x1xf32> to vector<16x16xf32>
    %930 = arith.subf %924, %929 : vector<16x16xf32>
    %931 = math.exp %930 : vector<16x16xf32>
    %932 = arith.mulf %6, %931 : vector<16x16xf32>
    %cst_318 = arith.constant dense<0.000000e+00> : vector<16xf32>
    %933 = vector.multi_reduction <add>, %932, %cst_318 [1] : vector<16x16xf32> to vector<16xf32>
    %934 = vector.shape_cast %933 : vector<16xf32> to vector<16x1xf32>
    %cst_319 = arith.constant 0.000000e+00 : f32
    %935 = vector.broadcast %cst_319 : f32 to vector<16x1xf32>
    %936 = arith.cmpf ogt, %934, %935 : vector<16x1xf32>
    %cst_320 = arith.constant 1.000000e+00 : f32
    %937 = vector.broadcast %cst_320 : f32 to vector<16x1xf32>
    %938 = arith.select %936, %934, %937 : vector<16x1xi1>, vector<16x1xf32>
    %939 = tpu.reciprocal %938 {approx = true} : vector<16x1xf32> -> vector<16x1xf32>
    %940 = vector.broadcast %939 : vector<16x1xf32> to vector<16x16xf32>
    %941 = arith.mulf %932, %940 : vector<16x16xf32>
    %942 = vector.extract_strided_slice %910 {offsets = [0, 0], sizes = [16, 32], strides = [1, 1]} : vector<16x128xf32> to vector<16x32xf32>
    %cst_321 = arith.constant dense<0.000000e+00> : vector<16x32xf32>
    %943 = tpu.matmul %941, %942, %cst_321 {dimension_numbers = #tpu.dot_dimension_numbers<[1], [0], [0], [1], [0, 0, 1, 1], [], []>} : vector<16x16xf32>, vector<16x32xf32>, vector<16x32xf32> -> vector<16x32xf32>
    %944 = arith.addf %912, %943 : vector<16x32xf32>
    %945 = vector.extract_strided_slice %911 {offsets = [0, 1], sizes = [16, 1], strides = [1, 1]} : vector<16x8xf32> to vector<16x1xf32>
    %946 = vector.extract_strided_slice %911 {offsets = [0, 5], sizes = [16, 1], strides = [1, 1]} : vector<16x8xf32> to vector<16x1xf32>
    %947 = tpu.transpose %945, [1, 0] : vector<16x1xf32> -> vector<1x16xf32>
    %948 = vector.broadcast %946 : vector<16x1xf32> to vector<16x16xf32>
    %949 = vector.broadcast %947 : vector<1x16xf32> to vector<16x16xf32>
    %950 = arith.addf %948, %949 : vector<16x16xf32>
    %cst_322 = arith.constant 0.000000e+00 : f32
    %951 = vector.broadcast %cst_322 : f32 to vector<16x16xf32>
    %952 = arith.cmpf ogt, %950, %951 : vector<16x16xf32>
    %cst_323 = arith.constant 2.000000e-01 : f32
    %953 = vector.broadcast %cst_323 : f32 to vector<16x16xf32>
    %954 = arith.mulf %953, %950 : vector<16x16xf32>
    %955 = arith.select %952, %950, %954 : vector<16x16xi1>, vector<16x16xf32>
    %956 = arith.addf %955, %11 : vector<16x16xf32>
    %cst_324 = arith.constant dense<0xFF800000> : vector<16xf32>
    %957 = vector.multi_reduction <maximumf>, %956, %cst_324 [1] : vector<16x16xf32> to vector<16xf32>
    %958 = vector.shape_cast %957 : vector<16xf32> to vector<16x1xf32>
    %cst_325 = arith.constant 0.000000e+00 : f32
    %959 = vector.broadcast %cst_325 : f32 to vector<16x1xf32>
    %960 = arith.select %15, %958, %959 : vector<16x1xi1>, vector<16x1xf32>
    %961 = vector.broadcast %960 : vector<16x1xf32> to vector<16x16xf32>
    %962 = arith.subf %956, %961 : vector<16x16xf32>
    %963 = math.exp %962 : vector<16x16xf32>
    %964 = arith.mulf %6, %963 : vector<16x16xf32>
    %cst_326 = arith.constant dense<0.000000e+00> : vector<16xf32>
    %965 = vector.multi_reduction <add>, %964, %cst_326 [1] : vector<16x16xf32> to vector<16xf32>
    %966 = vector.shape_cast %965 : vector<16xf32> to vector<16x1xf32>
    %cst_327 = arith.constant 0.000000e+00 : f32
    %967 = vector.broadcast %cst_327 : f32 to vector<16x1xf32>
    %968 = arith.cmpf ogt, %966, %967 : vector<16x1xf32>
    %cst_328 = arith.constant 1.000000e+00 : f32
    %969 = vector.broadcast %cst_328 : f32 to vector<16x1xf32>
    %970 = arith.select %968, %966, %969 : vector<16x1xi1>, vector<16x1xf32>
    %971 = tpu.reciprocal %970 {approx = true} : vector<16x1xf32> -> vector<16x1xf32>
    %972 = vector.broadcast %971 : vector<16x1xf32> to vector<16x16xf32>
    %973 = arith.mulf %964, %972 : vector<16x16xf32>
    %974 = vector.extract_strided_slice %910 {offsets = [0, 32], sizes = [16, 32], strides = [1, 1]} : vector<16x128xf32> to vector<16x32xf32>
    %cst_329 = arith.constant dense<0.000000e+00> : vector<16x32xf32>
    %975 = tpu.matmul %973, %974, %cst_329 {dimension_numbers = #tpu.dot_dimension_numbers<[1], [0], [0], [1], [0, 0, 1, 1], [], []>} : vector<16x16xf32>, vector<16x32xf32>, vector<16x32xf32> -> vector<16x32xf32>
    %976 = arith.addf %944, %975 : vector<16x32xf32>
    %977 = vector.extract_strided_slice %911 {offsets = [0, 2], sizes = [16, 1], strides = [1, 1]} : vector<16x8xf32> to vector<16x1xf32>
    %978 = vector.extract_strided_slice %911 {offsets = [0, 6], sizes = [16, 1], strides = [1, 1]} : vector<16x8xf32> to vector<16x1xf32>
    %979 = tpu.transpose %977, [1, 0] : vector<16x1xf32> -> vector<1x16xf32>
    %980 = vector.broadcast %978 : vector<16x1xf32> to vector<16x16xf32>
    %981 = vector.broadcast %979 : vector<1x16xf32> to vector<16x16xf32>
    %982 = arith.addf %980, %981 : vector<16x16xf32>
    %cst_330 = arith.constant 0.000000e+00 : f32
    %983 = vector.broadcast %cst_330 : f32 to vector<16x16xf32>
    %984 = arith.cmpf ogt, %982, %983 : vector<16x16xf32>
    %cst_331 = arith.constant 2.000000e-01 : f32
    %985 = vector.broadcast %cst_331 : f32 to vector<16x16xf32>
    %986 = arith.mulf %985, %982 : vector<16x16xf32>
    %987 = arith.select %984, %982, %986 : vector<16x16xi1>, vector<16x16xf32>
    %988 = arith.addf %987, %11 : vector<16x16xf32>
    %cst_332 = arith.constant dense<0xFF800000> : vector<16xf32>
    %989 = vector.multi_reduction <maximumf>, %988, %cst_332 [1] : vector<16x16xf32> to vector<16xf32>
    %990 = vector.shape_cast %989 : vector<16xf32> to vector<16x1xf32>
    %cst_333 = arith.constant 0.000000e+00 : f32
    %991 = vector.broadcast %cst_333 : f32 to vector<16x1xf32>
    %992 = arith.select %15, %990, %991 : vector<16x1xi1>, vector<16x1xf32>
    %993 = vector.broadcast %992 : vector<16x1xf32> to vector<16x16xf32>
    %994 = arith.subf %988, %993 : vector<16x16xf32>
    %995 = math.exp %994 : vector<16x16xf32>
    %996 = arith.mulf %6, %995 : vector<16x16xf32>
    %cst_334 = arith.constant dense<0.000000e+00> : vector<16xf32>
    %997 = vector.multi_reduction <add>, %996, %cst_334 [1] : vector<16x16xf32> to vector<16xf32>
    %998 = vector.shape_cast %997 : vector<16xf32> to vector<16x1xf32>
    %cst_335 = arith.constant 0.000000e+00 : f32
    %999 = vector.broadcast %cst_335 : f32 to vector<16x1xf32>
    %1000 = arith.cmpf ogt, %998, %999 : vector<16x1xf32>
    %cst_336 = arith.constant 1.000000e+00 : f32
    %1001 = vector.broadcast %cst_336 : f32 to vector<16x1xf32>
    %1002 = arith.select %1000, %998, %1001 : vector<16x1xi1>, vector<16x1xf32>
    %1003 = tpu.reciprocal %1002 {approx = true} : vector<16x1xf32> -> vector<16x1xf32>
    %1004 = vector.broadcast %1003 : vector<16x1xf32> to vector<16x16xf32>
    %1005 = arith.mulf %996, %1004 : vector<16x16xf32>
    %1006 = vector.extract_strided_slice %910 {offsets = [0, 64], sizes = [16, 32], strides = [1, 1]} : vector<16x128xf32> to vector<16x32xf32>
    %cst_337 = arith.constant dense<0.000000e+00> : vector<16x32xf32>
    %1007 = tpu.matmul %1005, %1006, %cst_337 {dimension_numbers = #tpu.dot_dimension_numbers<[1], [0], [0], [1], [0, 0, 1, 1], [], []>} : vector<16x16xf32>, vector<16x32xf32>, vector<16x32xf32> -> vector<16x32xf32>
    %1008 = arith.addf %976, %1007 : vector<16x32xf32>
    %1009 = vector.extract_strided_slice %911 {offsets = [0, 3], sizes = [16, 1], strides = [1, 1]} : vector<16x8xf32> to vector<16x1xf32>
    %1010 = vector.extract_strided_slice %911 {offsets = [0, 7], sizes = [16, 1], strides = [1, 1]} : vector<16x8xf32> to vector<16x1xf32>
    %1011 = tpu.transpose %1009, [1, 0] : vector<16x1xf32> -> vector<1x16xf32>
    %1012 = vector.broadcast %1010 : vector<16x1xf32> to vector<16x16xf32>
    %1013 = vector.broadcast %1011 : vector<1x16xf32> to vector<16x16xf32>
    %1014 = arith.addf %1012, %1013 : vector<16x16xf32>
    %cst_338 = arith.constant 0.000000e+00 : f32
    %1015 = vector.broadcast %cst_338 : f32 to vector<16x16xf32>
    %1016 = arith.cmpf ogt, %1014, %1015 : vector<16x16xf32>
    %cst_339 = arith.constant 2.000000e-01 : f32
    %1017 = vector.broadcast %cst_339 : f32 to vector<16x16xf32>
    %1018 = arith.mulf %1017, %1014 : vector<16x16xf32>
    %1019 = arith.select %1016, %1014, %1018 : vector<16x16xi1>, vector<16x16xf32>
    %1020 = arith.addf %1019, %11 : vector<16x16xf32>
    %cst_340 = arith.constant dense<0xFF800000> : vector<16xf32>
    %1021 = vector.multi_reduction <maximumf>, %1020, %cst_340 [1] : vector<16x16xf32> to vector<16xf32>
    %1022 = vector.shape_cast %1021 : vector<16xf32> to vector<16x1xf32>
    %cst_341 = arith.constant 0.000000e+00 : f32
    %1023 = vector.broadcast %cst_341 : f32 to vector<16x1xf32>
    %1024 = arith.select %15, %1022, %1023 : vector<16x1xi1>, vector<16x1xf32>
    %1025 = vector.broadcast %1024 : vector<16x1xf32> to vector<16x16xf32>
    %1026 = arith.subf %1020, %1025 : vector<16x16xf32>
    %1027 = math.exp %1026 : vector<16x16xf32>
    %1028 = arith.mulf %6, %1027 : vector<16x16xf32>
    %cst_342 = arith.constant dense<0.000000e+00> : vector<16xf32>
    %1029 = vector.multi_reduction <add>, %1028, %cst_342 [1] : vector<16x16xf32> to vector<16xf32>
    %1030 = vector.shape_cast %1029 : vector<16xf32> to vector<16x1xf32>
    %cst_343 = arith.constant 0.000000e+00 : f32
    %1031 = vector.broadcast %cst_343 : f32 to vector<16x1xf32>
    %1032 = arith.cmpf ogt, %1030, %1031 : vector<16x1xf32>
    %cst_344 = arith.constant 1.000000e+00 : f32
    %1033 = vector.broadcast %cst_344 : f32 to vector<16x1xf32>
    %1034 = arith.select %1032, %1030, %1033 : vector<16x1xi1>, vector<16x1xf32>
    %1035 = tpu.reciprocal %1034 {approx = true} : vector<16x1xf32> -> vector<16x1xf32>
    %1036 = vector.broadcast %1035 : vector<16x1xf32> to vector<16x16xf32>
    %1037 = arith.mulf %1028, %1036 : vector<16x16xf32>
    %1038 = vector.extract_strided_slice %910 {offsets = [0, 96], sizes = [16, 32], strides = [1, 1]} : vector<16x128xf32> to vector<16x32xf32>
    %cst_345 = arith.constant dense<0.000000e+00> : vector<16x32xf32>
    %1039 = tpu.matmul %1037, %1038, %cst_345 {dimension_numbers = #tpu.dot_dimension_numbers<[1], [0], [0], [1], [0, 0, 1, 1], [], []>} : vector<16x16xf32>, vector<16x32xf32>, vector<16x32xf32> -> vector<16x32xf32>
    %1040 = arith.addf %1008, %1039 : vector<16x32xf32>
    %cst_346 = arith.constant 2.500000e-01 : f32
    %1041 = vector.broadcast %cst_346 : f32 to vector<16x32xf32>
    %1042 = arith.mulf %1040, %1041 : vector<16x32xf32>
    %1043 = vector.broadcast %909 : vector<1x32xf32> to vector<16x32xf32>
    %1044 = arith.addf %1042, %1043 : vector<16x32xf32>
    %c7 = arith.constant 7 : index
    %c0_347 = arith.constant 0 : index
    %c0_348 = arith.constant 0 : index
    %1045 = vector.load %arg4[%c7, %c0_347, %c0_348] : memref<9x32x128xf32, #tpu.memory_space<vmem>>, vector<1x32x128xf32>
    %1046 = vector.shape_cast %1045 : vector<1x32x128xf32> to vector<32x128xf32>
    %c7_349 = arith.constant 7 : index
    %c0_350 = arith.constant 0 : index
    %c0_351 = arith.constant 0 : index
    %1047 = vector.load %arg5[%c7_349, %c0_350, %c0_351] : memref<9x128x8xf32, #tpu.memory_space<vmem>>, vector<1x128x8xf32>
    %1048 = vector.shape_cast %1047 : vector<1x128x8xf32> to vector<128x8xf32>
    %c7_352 = arith.constant 7 : index
    %c0_353 = arith.constant 0 : index
    %c0_354 = arith.constant 0 : index
    %1049 = vector.load %arg6[%c7_352, %c0_353, %c0_354] : memref<9x1x32xf32, #tpu.memory_space<vmem>>, vector<1x1x32xf32>
    %1050 = vector.shape_cast %1049 : vector<1x1x32xf32> to vector<1x32xf32>
    %cst_355 = arith.constant dense<0.000000e+00> : vector<16x128xf32>
    %1051 = tpu.matmul %903, %1046, %cst_355 {dimension_numbers = #tpu.dot_dimension_numbers<[1], [0], [0], [1], [0, 0, 1, 1], [], []>} : vector<16x32xf32>, vector<32x128xf32>, vector<16x128xf32> -> vector<16x128xf32>
    %cst_356 = arith.constant dense<0.000000e+00> : vector<16x8xf32>
    %1052 = tpu.matmul %1051, %1048, %cst_356 {dimension_numbers = #tpu.dot_dimension_numbers<[1], [0], [0], [1], [0, 0, 1, 1], [], []>} : vector<16x128xf32>, vector<128x8xf32>, vector<16x8xf32> -> vector<16x8xf32>
    %cst_357 = arith.constant 0.000000e+00 : f32
    %1053 = vector.broadcast %cst_357 : f32 to vector<16x32xf32>
    %1054 = vector.extract_strided_slice %1052 {offsets = [0, 0], sizes = [16, 1], strides = [1, 1]} : vector<16x8xf32> to vector<16x1xf32>
    %1055 = vector.extract_strided_slice %1052 {offsets = [0, 4], sizes = [16, 1], strides = [1, 1]} : vector<16x8xf32> to vector<16x1xf32>
    %1056 = tpu.transpose %1054, [1, 0] : vector<16x1xf32> -> vector<1x16xf32>
    %1057 = vector.broadcast %1055 : vector<16x1xf32> to vector<16x16xf32>
    %1058 = vector.broadcast %1056 : vector<1x16xf32> to vector<16x16xf32>
    %1059 = arith.addf %1057, %1058 : vector<16x16xf32>
    %cst_358 = arith.constant 0.000000e+00 : f32
    %1060 = vector.broadcast %cst_358 : f32 to vector<16x16xf32>
    %1061 = arith.cmpf ogt, %1059, %1060 : vector<16x16xf32>
    %cst_359 = arith.constant 2.000000e-01 : f32
    %1062 = vector.broadcast %cst_359 : f32 to vector<16x16xf32>
    %1063 = arith.mulf %1062, %1059 : vector<16x16xf32>
    %1064 = arith.select %1061, %1059, %1063 : vector<16x16xi1>, vector<16x16xf32>
    %1065 = arith.addf %1064, %22 : vector<16x16xf32>
    %cst_360 = arith.constant dense<0xFF800000> : vector<16xf32>
    %1066 = vector.multi_reduction <maximumf>, %1065, %cst_360 [1] : vector<16x16xf32> to vector<16xf32>
    %1067 = vector.shape_cast %1066 : vector<16xf32> to vector<16x1xf32>
    %cst_361 = arith.constant 0.000000e+00 : f32
    %1068 = vector.broadcast %cst_361 : f32 to vector<16x1xf32>
    %1069 = arith.select %26, %1067, %1068 : vector<16x1xi1>, vector<16x1xf32>
    %1070 = vector.broadcast %1069 : vector<16x1xf32> to vector<16x16xf32>
    %1071 = arith.subf %1065, %1070 : vector<16x16xf32>
    %1072 = math.exp %1071 : vector<16x16xf32>
    %1073 = arith.mulf %17, %1072 : vector<16x16xf32>
    %cst_362 = arith.constant dense<0.000000e+00> : vector<16xf32>
    %1074 = vector.multi_reduction <add>, %1073, %cst_362 [1] : vector<16x16xf32> to vector<16xf32>
    %1075 = vector.shape_cast %1074 : vector<16xf32> to vector<16x1xf32>
    %cst_363 = arith.constant 0.000000e+00 : f32
    %1076 = vector.broadcast %cst_363 : f32 to vector<16x1xf32>
    %1077 = arith.cmpf ogt, %1075, %1076 : vector<16x1xf32>
    %cst_364 = arith.constant 1.000000e+00 : f32
    %1078 = vector.broadcast %cst_364 : f32 to vector<16x1xf32>
    %1079 = arith.select %1077, %1075, %1078 : vector<16x1xi1>, vector<16x1xf32>
    %1080 = tpu.reciprocal %1079 {approx = true} : vector<16x1xf32> -> vector<16x1xf32>
    %1081 = vector.broadcast %1080 : vector<16x1xf32> to vector<16x16xf32>
    %1082 = arith.mulf %1073, %1081 : vector<16x16xf32>
    %1083 = vector.extract_strided_slice %1051 {offsets = [0, 0], sizes = [16, 32], strides = [1, 1]} : vector<16x128xf32> to vector<16x32xf32>
    %cst_365 = arith.constant dense<0.000000e+00> : vector<16x32xf32>
    %1084 = tpu.matmul %1082, %1083, %cst_365 {dimension_numbers = #tpu.dot_dimension_numbers<[1], [0], [0], [1], [0, 0, 1, 1], [], []>} : vector<16x16xf32>, vector<16x32xf32>, vector<16x32xf32> -> vector<16x32xf32>
    %1085 = arith.addf %1053, %1084 : vector<16x32xf32>
    %1086 = vector.extract_strided_slice %1052 {offsets = [0, 1], sizes = [16, 1], strides = [1, 1]} : vector<16x8xf32> to vector<16x1xf32>
    %1087 = vector.extract_strided_slice %1052 {offsets = [0, 5], sizes = [16, 1], strides = [1, 1]} : vector<16x8xf32> to vector<16x1xf32>
    %1088 = tpu.transpose %1086, [1, 0] : vector<16x1xf32> -> vector<1x16xf32>
    %1089 = vector.broadcast %1087 : vector<16x1xf32> to vector<16x16xf32>
    %1090 = vector.broadcast %1088 : vector<1x16xf32> to vector<16x16xf32>
    %1091 = arith.addf %1089, %1090 : vector<16x16xf32>
    %cst_366 = arith.constant 0.000000e+00 : f32
    %1092 = vector.broadcast %cst_366 : f32 to vector<16x16xf32>
    %1093 = arith.cmpf ogt, %1091, %1092 : vector<16x16xf32>
    %cst_367 = arith.constant 2.000000e-01 : f32
    %1094 = vector.broadcast %cst_367 : f32 to vector<16x16xf32>
    %1095 = arith.mulf %1094, %1091 : vector<16x16xf32>
    %1096 = arith.select %1093, %1091, %1095 : vector<16x16xi1>, vector<16x16xf32>
    %1097 = arith.addf %1096, %22 : vector<16x16xf32>
    %cst_368 = arith.constant dense<0xFF800000> : vector<16xf32>
    %1098 = vector.multi_reduction <maximumf>, %1097, %cst_368 [1] : vector<16x16xf32> to vector<16xf32>
    %1099 = vector.shape_cast %1098 : vector<16xf32> to vector<16x1xf32>
    %cst_369 = arith.constant 0.000000e+00 : f32
    %1100 = vector.broadcast %cst_369 : f32 to vector<16x1xf32>
    %1101 = arith.select %26, %1099, %1100 : vector<16x1xi1>, vector<16x1xf32>
    %1102 = vector.broadcast %1101 : vector<16x1xf32> to vector<16x16xf32>
    %1103 = arith.subf %1097, %1102 : vector<16x16xf32>
    %1104 = math.exp %1103 : vector<16x16xf32>
    %1105 = arith.mulf %17, %1104 : vector<16x16xf32>
    %cst_370 = arith.constant dense<0.000000e+00> : vector<16xf32>
    %1106 = vector.multi_reduction <add>, %1105, %cst_370 [1] : vector<16x16xf32> to vector<16xf32>
    %1107 = vector.shape_cast %1106 : vector<16xf32> to vector<16x1xf32>
    %cst_371 = arith.constant 0.000000e+00 : f32
    %1108 = vector.broadcast %cst_371 : f32 to vector<16x1xf32>
    %1109 = arith.cmpf ogt, %1107, %1108 : vector<16x1xf32>
    %cst_372 = arith.constant 1.000000e+00 : f32
    %1110 = vector.broadcast %cst_372 : f32 to vector<16x1xf32>
    %1111 = arith.select %1109, %1107, %1110 : vector<16x1xi1>, vector<16x1xf32>
    %1112 = tpu.reciprocal %1111 {approx = true} : vector<16x1xf32> -> vector<16x1xf32>
    %1113 = vector.broadcast %1112 : vector<16x1xf32> to vector<16x16xf32>
    %1114 = arith.mulf %1105, %1113 : vector<16x16xf32>
    %1115 = vector.extract_strided_slice %1051 {offsets = [0, 32], sizes = [16, 32], strides = [1, 1]} : vector<16x128xf32> to vector<16x32xf32>
    %cst_373 = arith.constant dense<0.000000e+00> : vector<16x32xf32>
    %1116 = tpu.matmul %1114, %1115, %cst_373 {dimension_numbers = #tpu.dot_dimension_numbers<[1], [0], [0], [1], [0, 0, 1, 1], [], []>} : vector<16x16xf32>, vector<16x32xf32>, vector<16x32xf32> -> vector<16x32xf32>
    %1117 = arith.addf %1085, %1116 : vector<16x32xf32>
    %1118 = vector.extract_strided_slice %1052 {offsets = [0, 2], sizes = [16, 1], strides = [1, 1]} : vector<16x8xf32> to vector<16x1xf32>
    %1119 = vector.extract_strided_slice %1052 {offsets = [0, 6], sizes = [16, 1], strides = [1, 1]} : vector<16x8xf32> to vector<16x1xf32>
    %1120 = tpu.transpose %1118, [1, 0] : vector<16x1xf32> -> vector<1x16xf32>
    %1121 = vector.broadcast %1119 : vector<16x1xf32> to vector<16x16xf32>
    %1122 = vector.broadcast %1120 : vector<1x16xf32> to vector<16x16xf32>
    %1123 = arith.addf %1121, %1122 : vector<16x16xf32>
    %cst_374 = arith.constant 0.000000e+00 : f32
    %1124 = vector.broadcast %cst_374 : f32 to vector<16x16xf32>
    %1125 = arith.cmpf ogt, %1123, %1124 : vector<16x16xf32>
    %cst_375 = arith.constant 2.000000e-01 : f32
    %1126 = vector.broadcast %cst_375 : f32 to vector<16x16xf32>
    %1127 = arith.mulf %1126, %1123 : vector<16x16xf32>
    %1128 = arith.select %1125, %1123, %1127 : vector<16x16xi1>, vector<16x16xf32>
    %1129 = arith.addf %1128, %22 : vector<16x16xf32>
    %cst_376 = arith.constant dense<0xFF800000> : vector<16xf32>
    %1130 = vector.multi_reduction <maximumf>, %1129, %cst_376 [1] : vector<16x16xf32> to vector<16xf32>
    %1131 = vector.shape_cast %1130 : vector<16xf32> to vector<16x1xf32>
    %cst_377 = arith.constant 0.000000e+00 : f32
    %1132 = vector.broadcast %cst_377 : f32 to vector<16x1xf32>
    %1133 = arith.select %26, %1131, %1132 : vector<16x1xi1>, vector<16x1xf32>
    %1134 = vector.broadcast %1133 : vector<16x1xf32> to vector<16x16xf32>
    %1135 = arith.subf %1129, %1134 : vector<16x16xf32>
    %1136 = math.exp %1135 : vector<16x16xf32>
    %1137 = arith.mulf %17, %1136 : vector<16x16xf32>
    %cst_378 = arith.constant dense<0.000000e+00> : vector<16xf32>
    %1138 = vector.multi_reduction <add>, %1137, %cst_378 [1] : vector<16x16xf32> to vector<16xf32>
    %1139 = vector.shape_cast %1138 : vector<16xf32> to vector<16x1xf32>
    %cst_379 = arith.constant 0.000000e+00 : f32
    %1140 = vector.broadcast %cst_379 : f32 to vector<16x1xf32>
    %1141 = arith.cmpf ogt, %1139, %1140 : vector<16x1xf32>
    %cst_380 = arith.constant 1.000000e+00 : f32
    %1142 = vector.broadcast %cst_380 : f32 to vector<16x1xf32>
    %1143 = arith.select %1141, %1139, %1142 : vector<16x1xi1>, vector<16x1xf32>
    %1144 = tpu.reciprocal %1143 {approx = true} : vector<16x1xf32> -> vector<16x1xf32>
    %1145 = vector.broadcast %1144 : vector<16x1xf32> to vector<16x16xf32>
    %1146 = arith.mulf %1137, %1145 : vector<16x16xf32>
    %1147 = vector.extract_strided_slice %1051 {offsets = [0, 64], sizes = [16, 32], strides = [1, 1]} : vector<16x128xf32> to vector<16x32xf32>
    %cst_381 = arith.constant dense<0.000000e+00> : vector<16x32xf32>
    %1148 = tpu.matmul %1146, %1147, %cst_381 {dimension_numbers = #tpu.dot_dimension_numbers<[1], [0], [0], [1], [0, 0, 1, 1], [], []>} : vector<16x16xf32>, vector<16x32xf32>, vector<16x32xf32> -> vector<16x32xf32>
    %1149 = arith.addf %1117, %1148 : vector<16x32xf32>
    %1150 = vector.extract_strided_slice %1052 {offsets = [0, 3], sizes = [16, 1], strides = [1, 1]} : vector<16x8xf32> to vector<16x1xf32>
    %1151 = vector.extract_strided_slice %1052 {offsets = [0, 7], sizes = [16, 1], strides = [1, 1]} : vector<16x8xf32> to vector<16x1xf32>
    %1152 = tpu.transpose %1150, [1, 0] : vector<16x1xf32> -> vector<1x16xf32>
    %1153 = vector.broadcast %1151 : vector<16x1xf32> to vector<16x16xf32>
    %1154 = vector.broadcast %1152 : vector<1x16xf32> to vector<16x16xf32>
    %1155 = arith.addf %1153, %1154 : vector<16x16xf32>
    %cst_382 = arith.constant 0.000000e+00 : f32
    %1156 = vector.broadcast %cst_382 : f32 to vector<16x16xf32>
    %1157 = arith.cmpf ogt, %1155, %1156 : vector<16x16xf32>
    %cst_383 = arith.constant 2.000000e-01 : f32
    %1158 = vector.broadcast %cst_383 : f32 to vector<16x16xf32>
    %1159 = arith.mulf %1158, %1155 : vector<16x16xf32>
    %1160 = arith.select %1157, %1155, %1159 : vector<16x16xi1>, vector<16x16xf32>
    %1161 = arith.addf %1160, %22 : vector<16x16xf32>
    %cst_384 = arith.constant dense<0xFF800000> : vector<16xf32>
    %1162 = vector.multi_reduction <maximumf>, %1161, %cst_384 [1] : vector<16x16xf32> to vector<16xf32>
    %1163 = vector.shape_cast %1162 : vector<16xf32> to vector<16x1xf32>
    %cst_385 = arith.constant 0.000000e+00 : f32
    %1164 = vector.broadcast %cst_385 : f32 to vector<16x1xf32>
    %1165 = arith.select %26, %1163, %1164 : vector<16x1xi1>, vector<16x1xf32>
    %1166 = vector.broadcast %1165 : vector<16x1xf32> to vector<16x16xf32>
    %1167 = arith.subf %1161, %1166 : vector<16x16xf32>
    %1168 = math.exp %1167 : vector<16x16xf32>
    %1169 = arith.mulf %17, %1168 : vector<16x16xf32>
    %cst_386 = arith.constant dense<0.000000e+00> : vector<16xf32>
    %1170 = vector.multi_reduction <add>, %1169, %cst_386 [1] : vector<16x16xf32> to vector<16xf32>
    %1171 = vector.shape_cast %1170 : vector<16xf32> to vector<16x1xf32>
    %cst_387 = arith.constant 0.000000e+00 : f32
    %1172 = vector.broadcast %cst_387 : f32 to vector<16x1xf32>
    %1173 = arith.cmpf ogt, %1171, %1172 : vector<16x1xf32>
    %cst_388 = arith.constant 1.000000e+00 : f32
    %1174 = vector.broadcast %cst_388 : f32 to vector<16x1xf32>
    %1175 = arith.select %1173, %1171, %1174 : vector<16x1xi1>, vector<16x1xf32>
    %1176 = tpu.reciprocal %1175 {approx = true} : vector<16x1xf32> -> vector<16x1xf32>
    %1177 = vector.broadcast %1176 : vector<16x1xf32> to vector<16x16xf32>
    %1178 = arith.mulf %1169, %1177 : vector<16x16xf32>
    %1179 = vector.extract_strided_slice %1051 {offsets = [0, 96], sizes = [16, 32], strides = [1, 1]} : vector<16x128xf32> to vector<16x32xf32>
    %cst_389 = arith.constant dense<0.000000e+00> : vector<16x32xf32>
    %1180 = tpu.matmul %1178, %1179, %cst_389 {dimension_numbers = #tpu.dot_dimension_numbers<[1], [0], [0], [1], [0, 0, 1, 1], [], []>} : vector<16x16xf32>, vector<16x32xf32>, vector<16x32xf32> -> vector<16x32xf32>
    %1181 = arith.addf %1149, %1180 : vector<16x32xf32>
    %cst_390 = arith.constant 2.500000e-01 : f32
    %1182 = vector.broadcast %cst_390 : f32 to vector<16x32xf32>
    %1183 = arith.mulf %1181, %1182 : vector<16x32xf32>
    %1184 = vector.broadcast %1050 : vector<1x32xf32> to vector<16x32xf32>
    %1185 = arith.addf %1183, %1184 : vector<16x32xf32>
    %c8 = arith.constant 8 : index
    %c0_391 = arith.constant 0 : index
    %c0_392 = arith.constant 0 : index
    %1186 = vector.load %arg4[%c8, %c0_391, %c0_392] : memref<9x32x128xf32, #tpu.memory_space<vmem>>, vector<1x32x128xf32>
    %1187 = vector.shape_cast %1186 : vector<1x32x128xf32> to vector<32x128xf32>
    %c8_393 = arith.constant 8 : index
    %c0_394 = arith.constant 0 : index
    %c0_395 = arith.constant 0 : index
    %1188 = vector.load %arg5[%c8_393, %c0_394, %c0_395] : memref<9x128x8xf32, #tpu.memory_space<vmem>>, vector<1x128x8xf32>
    %1189 = vector.shape_cast %1188 : vector<1x128x8xf32> to vector<128x8xf32>
    %c8_396 = arith.constant 8 : index
    %c0_397 = arith.constant 0 : index
    %c0_398 = arith.constant 0 : index
    %1190 = vector.load %arg6[%c8_396, %c0_397, %c0_398] : memref<9x1x32xf32, #tpu.memory_space<vmem>>, vector<1x1x32xf32>
    %1191 = vector.shape_cast %1190 : vector<1x1x32xf32> to vector<1x32xf32>
    %cst_399 = arith.constant dense<0.000000e+00> : vector<16x128xf32>
    %1192 = tpu.matmul %1185, %1187, %cst_399 {dimension_numbers = #tpu.dot_dimension_numbers<[1], [0], [0], [1], [0, 0, 1, 1], [], []>} : vector<16x32xf32>, vector<32x128xf32>, vector<16x128xf32> -> vector<16x128xf32>
    %cst_400 = arith.constant dense<0.000000e+00> : vector<16x8xf32>
    %1193 = tpu.matmul %1192, %1189, %cst_400 {dimension_numbers = #tpu.dot_dimension_numbers<[1], [0], [0], [1], [0, 0, 1, 1], [], []>} : vector<16x128xf32>, vector<128x8xf32>, vector<16x8xf32> -> vector<16x8xf32>
    %cst_401 = arith.constant 0.000000e+00 : f32
    %1194 = vector.broadcast %cst_401 : f32 to vector<16x32xf32>
    %1195 = vector.extract_strided_slice %1193 {offsets = [0, 0], sizes = [16, 1], strides = [1, 1]} : vector<16x8xf32> to vector<16x1xf32>
    %1196 = vector.extract_strided_slice %1193 {offsets = [0, 4], sizes = [16, 1], strides = [1, 1]} : vector<16x8xf32> to vector<16x1xf32>
    %1197 = tpu.transpose %1195, [1, 0] : vector<16x1xf32> -> vector<1x16xf32>
    %1198 = vector.broadcast %1196 : vector<16x1xf32> to vector<16x16xf32>
    %1199 = vector.broadcast %1197 : vector<1x16xf32> to vector<16x16xf32>
    %1200 = arith.addf %1198, %1199 : vector<16x16xf32>
    %cst_402 = arith.constant 0.000000e+00 : f32
    %1201 = vector.broadcast %cst_402 : f32 to vector<16x16xf32>
    %1202 = arith.cmpf ogt, %1200, %1201 : vector<16x16xf32>
    %cst_403 = arith.constant 2.000000e-01 : f32
    %1203 = vector.broadcast %cst_403 : f32 to vector<16x16xf32>
    %1204 = arith.mulf %1203, %1200 : vector<16x16xf32>
    %1205 = arith.select %1202, %1200, %1204 : vector<16x16xi1>, vector<16x16xf32>
    %1206 = arith.addf %1205, %33 : vector<16x16xf32>
    %cst_404 = arith.constant dense<0xFF800000> : vector<16xf32>
    %1207 = vector.multi_reduction <maximumf>, %1206, %cst_404 [1] : vector<16x16xf32> to vector<16xf32>
    %1208 = vector.shape_cast %1207 : vector<16xf32> to vector<16x1xf32>
    %cst_405 = arith.constant 0.000000e+00 : f32
    %1209 = vector.broadcast %cst_405 : f32 to vector<16x1xf32>
    %1210 = arith.select %37, %1208, %1209 : vector<16x1xi1>, vector<16x1xf32>
    %1211 = vector.broadcast %1210 : vector<16x1xf32> to vector<16x16xf32>
    %1212 = arith.subf %1206, %1211 : vector<16x16xf32>
    %1213 = math.exp %1212 : vector<16x16xf32>
    %1214 = arith.mulf %28, %1213 : vector<16x16xf32>
    %cst_406 = arith.constant dense<0.000000e+00> : vector<16xf32>
    %1215 = vector.multi_reduction <add>, %1214, %cst_406 [1] : vector<16x16xf32> to vector<16xf32>
    %1216 = vector.shape_cast %1215 : vector<16xf32> to vector<16x1xf32>
    %cst_407 = arith.constant 0.000000e+00 : f32
    %1217 = vector.broadcast %cst_407 : f32 to vector<16x1xf32>
    %1218 = arith.cmpf ogt, %1216, %1217 : vector<16x1xf32>
    %cst_408 = arith.constant 1.000000e+00 : f32
    %1219 = vector.broadcast %cst_408 : f32 to vector<16x1xf32>
    %1220 = arith.select %1218, %1216, %1219 : vector<16x1xi1>, vector<16x1xf32>
    %1221 = tpu.reciprocal %1220 {approx = true} : vector<16x1xf32> -> vector<16x1xf32>
    %1222 = vector.broadcast %1221 : vector<16x1xf32> to vector<16x16xf32>
    %1223 = arith.mulf %1214, %1222 : vector<16x16xf32>
    %1224 = vector.extract_strided_slice %1192 {offsets = [0, 0], sizes = [16, 32], strides = [1, 1]} : vector<16x128xf32> to vector<16x32xf32>
    %cst_409 = arith.constant dense<0.000000e+00> : vector<16x32xf32>
    %1225 = tpu.matmul %1223, %1224, %cst_409 {dimension_numbers = #tpu.dot_dimension_numbers<[1], [0], [0], [1], [0, 0, 1, 1], [], []>} : vector<16x16xf32>, vector<16x32xf32>, vector<16x32xf32> -> vector<16x32xf32>
    %1226 = arith.addf %1194, %1225 : vector<16x32xf32>
    %1227 = vector.extract_strided_slice %1193 {offsets = [0, 1], sizes = [16, 1], strides = [1, 1]} : vector<16x8xf32> to vector<16x1xf32>
    %1228 = vector.extract_strided_slice %1193 {offsets = [0, 5], sizes = [16, 1], strides = [1, 1]} : vector<16x8xf32> to vector<16x1xf32>
    %1229 = tpu.transpose %1227, [1, 0] : vector<16x1xf32> -> vector<1x16xf32>
    %1230 = vector.broadcast %1228 : vector<16x1xf32> to vector<16x16xf32>
    %1231 = vector.broadcast %1229 : vector<1x16xf32> to vector<16x16xf32>
    %1232 = arith.addf %1230, %1231 : vector<16x16xf32>
    %cst_410 = arith.constant 0.000000e+00 : f32
    %1233 = vector.broadcast %cst_410 : f32 to vector<16x16xf32>
    %1234 = arith.cmpf ogt, %1232, %1233 : vector<16x16xf32>
    %cst_411 = arith.constant 2.000000e-01 : f32
    %1235 = vector.broadcast %cst_411 : f32 to vector<16x16xf32>
    %1236 = arith.mulf %1235, %1232 : vector<16x16xf32>
    %1237 = arith.select %1234, %1232, %1236 : vector<16x16xi1>, vector<16x16xf32>
    %1238 = arith.addf %1237, %33 : vector<16x16xf32>
    %cst_412 = arith.constant dense<0xFF800000> : vector<16xf32>
    %1239 = vector.multi_reduction <maximumf>, %1238, %cst_412 [1] : vector<16x16xf32> to vector<16xf32>
    %1240 = vector.shape_cast %1239 : vector<16xf32> to vector<16x1xf32>
    %cst_413 = arith.constant 0.000000e+00 : f32
    %1241 = vector.broadcast %cst_413 : f32 to vector<16x1xf32>
    %1242 = arith.select %37, %1240, %1241 : vector<16x1xi1>, vector<16x1xf32>
    %1243 = vector.broadcast %1242 : vector<16x1xf32> to vector<16x16xf32>
    %1244 = arith.subf %1238, %1243 : vector<16x16xf32>
    %1245 = math.exp %1244 : vector<16x16xf32>
    %1246 = arith.mulf %28, %1245 : vector<16x16xf32>
    %cst_414 = arith.constant dense<0.000000e+00> : vector<16xf32>
    %1247 = vector.multi_reduction <add>, %1246, %cst_414 [1] : vector<16x16xf32> to vector<16xf32>
    %1248 = vector.shape_cast %1247 : vector<16xf32> to vector<16x1xf32>
    %cst_415 = arith.constant 0.000000e+00 : f32
    %1249 = vector.broadcast %cst_415 : f32 to vector<16x1xf32>
    %1250 = arith.cmpf ogt, %1248, %1249 : vector<16x1xf32>
    %cst_416 = arith.constant 1.000000e+00 : f32
    %1251 = vector.broadcast %cst_416 : f32 to vector<16x1xf32>
    %1252 = arith.select %1250, %1248, %1251 : vector<16x1xi1>, vector<16x1xf32>
    %1253 = tpu.reciprocal %1252 {approx = true} : vector<16x1xf32> -> vector<16x1xf32>
    %1254 = vector.broadcast %1253 : vector<16x1xf32> to vector<16x16xf32>
    %1255 = arith.mulf %1246, %1254 : vector<16x16xf32>
    %1256 = vector.extract_strided_slice %1192 {offsets = [0, 32], sizes = [16, 32], strides = [1, 1]} : vector<16x128xf32> to vector<16x32xf32>
    %cst_417 = arith.constant dense<0.000000e+00> : vector<16x32xf32>
    %1257 = tpu.matmul %1255, %1256, %cst_417 {dimension_numbers = #tpu.dot_dimension_numbers<[1], [0], [0], [1], [0, 0, 1, 1], [], []>} : vector<16x16xf32>, vector<16x32xf32>, vector<16x32xf32> -> vector<16x32xf32>
    %1258 = arith.addf %1226, %1257 : vector<16x32xf32>
    %1259 = vector.extract_strided_slice %1193 {offsets = [0, 2], sizes = [16, 1], strides = [1, 1]} : vector<16x8xf32> to vector<16x1xf32>
    %1260 = vector.extract_strided_slice %1193 {offsets = [0, 6], sizes = [16, 1], strides = [1, 1]} : vector<16x8xf32> to vector<16x1xf32>
    %1261 = tpu.transpose %1259, [1, 0] : vector<16x1xf32> -> vector<1x16xf32>
    %1262 = vector.broadcast %1260 : vector<16x1xf32> to vector<16x16xf32>
    %1263 = vector.broadcast %1261 : vector<1x16xf32> to vector<16x16xf32>
    %1264 = arith.addf %1262, %1263 : vector<16x16xf32>
    %cst_418 = arith.constant 0.000000e+00 : f32
    %1265 = vector.broadcast %cst_418 : f32 to vector<16x16xf32>
    %1266 = arith.cmpf ogt, %1264, %1265 : vector<16x16xf32>
    %cst_419 = arith.constant 2.000000e-01 : f32
    %1267 = vector.broadcast %cst_419 : f32 to vector<16x16xf32>
    %1268 = arith.mulf %1267, %1264 : vector<16x16xf32>
    %1269 = arith.select %1266, %1264, %1268 : vector<16x16xi1>, vector<16x16xf32>
    %1270 = arith.addf %1269, %33 : vector<16x16xf32>
    %cst_420 = arith.constant dense<0xFF800000> : vector<16xf32>
    %1271 = vector.multi_reduction <maximumf>, %1270, %cst_420 [1] : vector<16x16xf32> to vector<16xf32>
    %1272 = vector.shape_cast %1271 : vector<16xf32> to vector<16x1xf32>
    %cst_421 = arith.constant 0.000000e+00 : f32
    %1273 = vector.broadcast %cst_421 : f32 to vector<16x1xf32>
    %1274 = arith.select %37, %1272, %1273 : vector<16x1xi1>, vector<16x1xf32>
    %1275 = vector.broadcast %1274 : vector<16x1xf32> to vector<16x16xf32>
    %1276 = arith.subf %1270, %1275 : vector<16x16xf32>
    %1277 = math.exp %1276 : vector<16x16xf32>
    %1278 = arith.mulf %28, %1277 : vector<16x16xf32>
    %cst_422 = arith.constant dense<0.000000e+00> : vector<16xf32>
    %1279 = vector.multi_reduction <add>, %1278, %cst_422 [1] : vector<16x16xf32> to vector<16xf32>
    %1280 = vector.shape_cast %1279 : vector<16xf32> to vector<16x1xf32>
    %cst_423 = arith.constant 0.000000e+00 : f32
    %1281 = vector.broadcast %cst_423 : f32 to vector<16x1xf32>
    %1282 = arith.cmpf ogt, %1280, %1281 : vector<16x1xf32>
    %cst_424 = arith.constant 1.000000e+00 : f32
    %1283 = vector.broadcast %cst_424 : f32 to vector<16x1xf32>
    %1284 = arith.select %1282, %1280, %1283 : vector<16x1xi1>, vector<16x1xf32>
    %1285 = tpu.reciprocal %1284 {approx = true} : vector<16x1xf32> -> vector<16x1xf32>
    %1286 = vector.broadcast %1285 : vector<16x1xf32> to vector<16x16xf32>
    %1287 = arith.mulf %1278, %1286 : vector<16x16xf32>
    %1288 = vector.extract_strided_slice %1192 {offsets = [0, 64], sizes = [16, 32], strides = [1, 1]} : vector<16x128xf32> to vector<16x32xf32>
    %cst_425 = arith.constant dense<0.000000e+00> : vector<16x32xf32>
    %1289 = tpu.matmul %1287, %1288, %cst_425 {dimension_numbers = #tpu.dot_dimension_numbers<[1], [0], [0], [1], [0, 0, 1, 1], [], []>} : vector<16x16xf32>, vector<16x32xf32>, vector<16x32xf32> -> vector<16x32xf32>
    %1290 = arith.addf %1258, %1289 : vector<16x32xf32>
    %1291 = vector.extract_strided_slice %1193 {offsets = [0, 3], sizes = [16, 1], strides = [1, 1]} : vector<16x8xf32> to vector<16x1xf32>
    %1292 = vector.extract_strided_slice %1193 {offsets = [0, 7], sizes = [16, 1], strides = [1, 1]} : vector<16x8xf32> to vector<16x1xf32>
    %1293 = tpu.transpose %1291, [1, 0] : vector<16x1xf32> -> vector<1x16xf32>
    %1294 = vector.broadcast %1292 : vector<16x1xf32> to vector<16x16xf32>
    %1295 = vector.broadcast %1293 : vector<1x16xf32> to vector<16x16xf32>
    %1296 = arith.addf %1294, %1295 : vector<16x16xf32>
    %cst_426 = arith.constant 0.000000e+00 : f32
    %1297 = vector.broadcast %cst_426 : f32 to vector<16x16xf32>
    %1298 = arith.cmpf ogt, %1296, %1297 : vector<16x16xf32>
    %cst_427 = arith.constant 2.000000e-01 : f32
    %1299 = vector.broadcast %cst_427 : f32 to vector<16x16xf32>
    %1300 = arith.mulf %1299, %1296 : vector<16x16xf32>
    %1301 = arith.select %1298, %1296, %1300 : vector<16x16xi1>, vector<16x16xf32>
    %1302 = arith.addf %1301, %33 : vector<16x16xf32>
    %cst_428 = arith.constant dense<0xFF800000> : vector<16xf32>
    %1303 = vector.multi_reduction <maximumf>, %1302, %cst_428 [1] : vector<16x16xf32> to vector<16xf32>
    %1304 = vector.shape_cast %1303 : vector<16xf32> to vector<16x1xf32>
    %cst_429 = arith.constant 0.000000e+00 : f32
    %1305 = vector.broadcast %cst_429 : f32 to vector<16x1xf32>
    %1306 = arith.select %37, %1304, %1305 : vector<16x1xi1>, vector<16x1xf32>
    %1307 = vector.broadcast %1306 : vector<16x1xf32> to vector<16x16xf32>
    %1308 = arith.subf %1302, %1307 : vector<16x16xf32>
    %1309 = math.exp %1308 : vector<16x16xf32>
    %1310 = arith.mulf %28, %1309 : vector<16x16xf32>
    %cst_430 = arith.constant dense<0.000000e+00> : vector<16xf32>
    %1311 = vector.multi_reduction <add>, %1310, %cst_430 [1] : vector<16x16xf32> to vector<16xf32>
    %1312 = vector.shape_cast %1311 : vector<16xf32> to vector<16x1xf32>
    %cst_431 = arith.constant 0.000000e+00 : f32
    %1313 = vector.broadcast %cst_431 : f32 to vector<16x1xf32>
    %1314 = arith.cmpf ogt, %1312, %1313 : vector<16x1xf32>
    %cst_432 = arith.constant 1.000000e+00 : f32
    %1315 = vector.broadcast %cst_432 : f32 to vector<16x1xf32>
    %1316 = arith.select %1314, %1312, %1315 : vector<16x1xi1>, vector<16x1xf32>
    %1317 = tpu.reciprocal %1316 {approx = true} : vector<16x1xf32> -> vector<16x1xf32>
    %1318 = vector.broadcast %1317 : vector<16x1xf32> to vector<16x16xf32>
    %1319 = arith.mulf %1310, %1318 : vector<16x16xf32>
    %1320 = vector.extract_strided_slice %1192 {offsets = [0, 96], sizes = [16, 32], strides = [1, 1]} : vector<16x128xf32> to vector<16x32xf32>
    %cst_433 = arith.constant dense<0.000000e+00> : vector<16x32xf32>
    %1321 = tpu.matmul %1319, %1320, %cst_433 {dimension_numbers = #tpu.dot_dimension_numbers<[1], [0], [0], [1], [0, 0, 1, 1], [], []>} : vector<16x16xf32>, vector<16x32xf32>, vector<16x32xf32> -> vector<16x32xf32>
    %1322 = arith.addf %1290, %1321 : vector<16x32xf32>
    %cst_434 = arith.constant 2.500000e-01 : f32
    %1323 = vector.broadcast %cst_434 : f32 to vector<16x32xf32>
    %1324 = arith.mulf %1322, %1323 : vector<16x32xf32>
    %1325 = vector.broadcast %1191 : vector<1x32xf32> to vector<16x32xf32>
    %1326 = arith.addf %1324, %1325 : vector<16x32xf32>
    %1327 = arith.addf %1044, %1326 : vector<16x32xf32>
    %1328 = arith.addf %1327, %903 : vector<16x32xf32>
    %c0_435 = arith.constant 0 : index
    %c0_436 = arith.constant 0 : index
    %1329 = vector.load %arg11[%c0_435, %c0_436] : memref<32x8xf32, #tpu.memory_space<vmem>>, vector<32x8xf32>
    %cst_437 = arith.constant dense<0.000000e+00> : vector<16x8xf32>
    %1330 = tpu.matmul %1328, %1329, %cst_437 {dimension_numbers = #tpu.dot_dimension_numbers<[1], [0], [0], [1], [0, 0, 1, 1], [], []>} : vector<16x32xf32>, vector<32x8xf32>, vector<16x8xf32> -> vector<16x8xf32>
    %c0_438 = arith.constant 0 : index
    %c0_439 = arith.constant 0 : index
    %1331 = vector.load %arg12[%c0_438, %c0_439] : memref<32x8xf32, #tpu.memory_space<vmem>>, vector<32x8xf32>
    %cst_440 = arith.constant dense<0.000000e+00> : vector<16x8xf32>
    %1332 = tpu.matmul %4, %1331, %cst_440 {dimension_numbers = #tpu.dot_dimension_numbers<[1], [0], [0], [1], [0, 0, 1, 1], [], []>} : vector<16x32xf32>, vector<32x8xf32>, vector<16x8xf32> -> vector<16x8xf32>
    %1333 = arith.addf %1330, %1332 : vector<16x8xf32>
    %c0_441 = arith.constant 0 : index
    %c0_442 = arith.constant 0 : index
    %1334 = vector.load %arg13[%c0_441, %c0_442] : memref<1x8xf32, #tpu.memory_space<vmem>>, vector<1x8xf32>
    %1335 = vector.broadcast %1334 : vector<1x8xf32> to vector<16x8xf32>
    %1336 = arith.addf %1333, %1335 : vector<16x8xf32>
    %c0_443 = arith.constant 0 : index
    %c0_444 = arith.constant 0 : index
    %1337 = vector.load %arg14[%c0_443, %c0_444] : memref<16x8xf32, #tpu.memory_space<vmem>>, vector<16x8xf32>
    tpu.vector_store %arg14[%c0_443, %c0_444], %1336 {strides = array<i32>} : memref<16x8xf32, #tpu.memory_space<vmem>>, vector<16x8xf32>,
    return
  }
  func.func @transform_0(%arg0: i32) -> (i32, i32) {
    %c0_i32 = arith.constant 0 : i32
    %c0_i32_0 = arith.constant 0 : i32
    %c0_i32_1 = arith.constant 0 : i32
    return %c0_i32, %c0_i32_0 : i32, i32
  }
  func.func @transform_1(%arg0: i32) -> (i32, i32) {
    %c0_i32 = arith.constant 0 : i32
    %c0_i32_0 = arith.constant 0 : i32
    %c0_i32_1 = arith.constant 0 : i32
    return %c0_i32, %c0_i32_0 : i32, i32
  }
  func.func @transform_2(%arg0: i32) -> (i32, i32, i32) {
    %c0_i32 = arith.constant 0 : i32
    %c0_i32_0 = arith.constant 0 : i32
    %c0_i32_1 = arith.constant 0 : i32
    %c0_i32_2 = arith.constant 0 : i32
    return %c0_i32, %c0_i32_0, %c0_i32_1 : i32, i32, i32
  }
  func.func @transform_3(%arg0: i32) -> (i32, i32, i32) {
    %c0_i32 = arith.constant 0 : i32
    %c0_i32_0 = arith.constant 0 : i32
    %c0_i32_1 = arith.constant 0 : i32
    %c0_i32_2 = arith.constant 0 : i32
    return %c0_i32, %c0_i32_0, %c0_i32_1 : i32, i32, i32
  }
  func.func @transform_4(%arg0: i32) -> (i32, i32, i32) {
    %c0_i32 = arith.constant 0 : i32
    %c0_i32_0 = arith.constant 0 : i32
    %c0_i32_1 = arith.constant 0 : i32
    %c0_i32_2 = arith.constant 0 : i32
    return %c0_i32, %c0_i32_0, %c0_i32_1 : i32, i32, i32
  }
  func.func @transform_5(%arg0: i32) -> (i32, i32, i32) {
    %c0_i32 = arith.constant 0 : i32
    %c0_i32_0 = arith.constant 0 : i32
    %c0_i32_1 = arith.constant 0 : i32
    %c0_i32_2 = arith.constant 0 : i32
    return %c0_i32, %c0_i32_0, %c0_i32_1 : i32, i32, i32
  }
  func.func @transform_6(%arg0: i32) -> (i32, i32) {
    %c0_i32 = arith.constant 0 : i32
    %c0_i32_0 = arith.constant 0 : i32
    %c0_i32_1 = arith.constant 0 : i32
    return %c0_i32, %c0_i32_0 : i32, i32
  }
  func.func @transform_7(%arg0: i32) -> (i32, i32) {
    %c0_i32 = arith.constant 0 : i32
    %c0_i32_0 = arith.constant 0 : i32
    %c0_i32_1 = arith.constant 0 : i32
    return %c0_i32, %c0_i32_0 : i32, i32
  }
  func.func @transform_8(%arg0: i32) -> (i32, i32) {
    %c0_i32 = arith.constant 0 : i32
    %c0_i32_0 = arith.constant 0 : i32
    %c0_i32_1 = arith.constant 0 : i32
    return %c0_i32, %c0_i32_0 : i32, i32
  }
  func.func @transform_9(%arg0: i32) -> (i32, i32) {
    %c0_i32 = arith.constant 0 : i32
    %c0_i32_0 = arith.constant 0 : i32
    %c0_i32_1 = arith.constant 0 : i32
    return %c0_i32, %c0_i32_0 : i32, i32
  }
  func.func @transform_10(%arg0: i32) -> (i32, i32) {
    %c0_i32 = arith.constant 0 : i32
    %c0_i32_0 = arith.constant 0 : i32
    %c0_i32_1 = arith.constant 0 : i32
    return %c0_i32, %c0_i32_0 : i32, i32
  }
  func.func @transform_11(%arg0: i32) -> (i32, i32) {
    %c0_i32 = arith.constant 0 : i32
    %c0_i32_0 = arith.constant 0 : i32
    %c0_i32_1 = arith.constant 0 : i32
    return %c0_i32, %c0_i32_0 : i32, i32
  }
  func.func @transform_12(%arg0: i32) -> (i32, i32) {
    %c0_i32 = arith.constant 0 : i32
    %c0_i32_0 = arith.constant 0 : i32
    %c0_i32_1 = arith.constant 0 : i32
    return %c0_i32, %c0_i32_0 : i32, i32
  }
  func.func @transform_13(%arg0: i32) -> (i32, i32) {
    %c0_i32 = arith.constant 0 : i32
    %c0_i32_0 = arith.constant 0 : i32
    %c0_i32_1 = arith.constant 0 : i32
    return %c0_i32, %c0_i32_0 : i32, i32
  }
}

</mosaic_0001>

<llo_original>
// kernel: _forward_jit.1
$region0: #{_forward_jit.1}
  #allocation0 [shape = 'u32[]', space=smem, size = 0x4, offset = 0x4, fixed_abs, tag = 'smem constant byte address 0x4 - core index']
  #allocation1 [shape = 'u32[72,128]{1,0:T(1,128)}', space=vmem, size = 0x9000, scoped, tag = 'internal scratch']
  %s0 = inlined_call_operand.vmem [shape: f32[16,66], index: 0, kind: input, shape index: {}]
  %s1 = inlined_call_operand.vmem [shape: f32[66,32], index: 1, kind: input, shape index: {}]
  %s2 = inlined_call_operand.vmem [shape: f32[3,16,16], index: 2, kind: input, shape index: {}]
  %s3 = inlined_call_operand.vmem [shape: f32[9,32,128], index: 3, kind: input, shape index: {}]
  %s4 = inlined_call_operand.vmem [shape: f32[9,128,8], index: 4, kind: input, shape index: {}]
  %s5 = inlined_call_operand.vmem [shape: f32[9,1,32], index: 5, kind: input, shape index: {}]
  %s6 = inlined_call_operand.vmem [shape: f32[1,32], index: 6, kind: input, shape index: {}]
  %s7 = inlined_call_operand.vmem [shape: f32[1,32], index: 7, kind: input, shape index: {}]
  %s8 = inlined_call_operand.vmem [shape: f32[1,32], index: 8, kind: input, shape index: {}]
  %s9 = inlined_call_operand.vmem [shape: f32[1,32], index: 9, kind: input, shape index: {}]
  %s10 = inlined_call_operand.vmem [shape: f32[32,8], index: 10, kind: input, shape index: {}]
  %s11 = inlined_call_operand.vmem [shape: f32[32,8], index: 11, kind: input, shape index: {}]
  %s12 = inlined_call_operand.vmem [shape: f32[1,8], index: 12, kind: input, shape index: {}]
  %s13 = inlined_call_operand.vmem [shape: f32[16,8], index: 13, kind: output, shape index: {}]
  %s14 = sld [smem:[#allocation0]]
  $region62: #{_forward_jit.1} parent=0
    _
  %s16 = ssub.s32 1, %s14
  %s17 = scalar_select 0, %s16, %s14
  // Predicated region
  $region2: #{_forward_jit.1} parent=0 // pred_check
    _
  $region3: #{_forward_jit.1} parent=0 // pred_check_branch
    %19 = sbr.rel (0) target = $region5
  $region4: #{_forward_jit.1} parent=0 // pred_region
    _
  $region5: #{_forward_jit.1} parent=0 // pred_fallthru
    _
  // Predicated region
  $region6: #{_forward_jit.1} parent=0 // pred_check
    _
  $region7: #{_forward_jit.1} parent=0 // pred_check_branch
    %21 = sbr.rel (0) target = $region9
  $region8: #{_forward_jit.1} parent=0 // pred_region
    _
  $region9: #{_forward_jit.1} parent=0 // pred_fallthru
    _
  // Predicated region
  $region10: #{_forward_jit.1} parent=0 // pred_check
    _
  $region11: #{_forward_jit.1} parent=0 // pred_check_branch
    %23 = sbr.rel (0) target = $region13
  $region12: #{_forward_jit.1} parent=0 // pred_region
    _
  $region13: #{_forward_jit.1} parent=0 // pred_fallthru
    _
  // Predicated region
  $region14: #{_forward_jit.1} parent=0 // pred_check
    _
  $region15: #{_forward_jit.1} parent=0 // pred_check_branch
    %25 = sbr.rel (0) target = $region17
  $region16: #{_forward_jit.1} parent=0 // pred_region
    _
  $region17: #{_forward_jit.1} parent=0 // pred_fallthru
    _
  // Predicated region
  $region18: #{_forward_jit.1} parent=0 // pred_check
    _
  $region19: #{_forward_jit.1} parent=0 // pred_check_branch
    %27 = sbr.rel (0) target = $region21
  $region20: #{_forward_jit.1} parent=0 // pred_region
    _
  $region21: #{_forward_jit.1} parent=0 // pred_fallthru
    _
  // Predicated region
  $region22: #{_forward_jit.1} parent=0 // pred_check
    _
  $region23: #{_forward_jit.1} parent=0 // pred_check_branch
    %29 = sbr.rel (0) target = $region25
  $region24: #{_forward_jit.1} parent=0 // pred_region
    _
  $region25: #{_forward_jit.1} parent=0 // pred_fallthru
    _
  // Predicated region
  $region26: #{_forward_jit.1} parent=0 // pred_check
    _
  $region27: #{_forward_jit.1} parent=0 // pred_check_branch
    %31 = sbr.rel (0) target = $region29
  $region28: #{_forward_jit.1} parent=0 // pred_region
    _
  $region29: #{_forward_jit.1} parent=0 // pred_fallthru
    _
  // Predicated region
  $region30: #{_forward_jit.1} parent=0 // pred_check
    _
  $region31: #{_forward_jit.1} parent=0 // pred_check_branch
    %33 = sbr.rel (0) target = $region33
  $region32: #{_forward_jit.1} parent=0 // pred_region
    _
  $region33: #{_forward_jit.1} parent=0 // pred_fallthru
    _
  // Predicated region
  $region34: #{_forward_jit.1} parent=0 // pred_check
    _
  $region35: #{_forward_jit.1} parent=0 // pred_check_branch
    %35 = sbr.rel (0) target = $region37
  $region36: #{_forward_jit.1} parent=0 // pred_region
    _
  $region37: #{_forward_jit.1} parent=0 // pred_fallthru
    _
  // Predicated region
  $region38: #{_forward_jit.1} parent=0 // pred_check
    _
  $region39: #{_forward_jit.1} parent=0 // pred_check_branch
    %37 = sbr.rel (0) target = $region41
  $region40: #{_forward_jit.1} parent=0 // pred_region
    _
  $region41: #{_forward_jit.1} parent=0 // pred_fallthru
    _
  // Predicated region
  $region42: #{_forward_jit.1} parent=0 // pred_check
    _
  $region43: #{_forward_jit.1} parent=0 // pred_check_branch
    %39 = sbr.rel (0) target = $region45
  $region44: #{_forward_jit.1} parent=0 // pred_region
    _
  $region45: #{_forward_jit.1} parent=0 // pred_fallthru
    _
  // Predicated region
  $region46: #{_forward_jit.1} parent=0 // pred_check
    _
  $region47: #{_forward_jit.1} parent=0 // pred_check_branch
    %41 = sbr.rel (0) target = $region49
  $region48: #{_forward_jit.1} parent=0 // pred_region
    _
  $region49: #{_forward_jit.1} parent=0 // pred_fallthru
    _
  // Predicated region
  $region50: #{_forward_jit.1} parent=0 // pred_check
    _
  $region51: #{_forward_jit.1} parent=0 // pred_check_branch
    %43 = sbr.rel (0) target = $region53
  $region52: #{_forward_jit.1} parent=0 // pred_region
    _
  $region53: #{_forward_jit.1} parent=0 // pred_fallthru
    _
  %v44 = vld [vmem:[%s0] sm:$0xff]
  %v45 = vld [vmem:[%s0 + $0x8] sm:$0xff]
  %v46 = vld [vmem:[%s1] sm:$0xff]
  %v47 = vld [vmem:[%s1 + $0x8] sm:$0xff]
  %v48 = vld [vmem:[%s1 + $0x10] sm:$0xff]
  %v49 = vld [vmem:[%s1 + $0x18] sm:$0xff]
  %v50 = vld [vmem:[%s1 + $0x20] sm:$0xff]
  %v51 = vld [vmem:[%s1 + $0x28] sm:$0xff]
  %v52 = vld [vmem:[%s1 + $0x30] sm:$0xff]
  %v53 = vld [vmem:[%s1 + $0x38] sm:$0xff]
  %v54 = vld [vmem:[%s1 + $0x40] sm:$0x3]
  %vm55 = vcmask 539648
  %v57 = vsel %vm55, %v44, 0
  %v60 = vsel %vm55, %v45, 0
  %vm62 = vcmask 1041408
  %v64 = vsel %vm62, %v54, 0
  %66 = vmatpush.msra.mxu0 0.0
  %67 = vmatpush.msra.mxu0 0.0
  %68 = vmatpush.msra.mxu0 0.0
  %69 = vmatpush.msra.mxu0 0.0
  %70 = vmatpush.msra.mxu0 0.0
  %71 = vmatpush.msra.mxu0 0.0
  %72 = vmatpush.msra.mxu0 0.0
  %73 = vmatpush.msra.mxu0 %v64
  %74 = vmatpush.msra.mxu0 %v53
  %75 = vmatpush.msra.mxu0 %v52
  %76 = vmatpush.msra.mxu0 %v51
  %77 = vmatpush.msra.mxu0 %v50
  %78 = vmatpush.msra.mxu0 %v49
  %79 = vmatpush.msra.mxu0 %v48
  %80 = vmatpush.msra.mxu0 %v47
  %81 = vmatpush.msra.mxu0 %v46
  %82 = vmatmul.f32.gmra.mxu0 %v57
  %v83 = vpop.f32.mrf.mxu0
  %v84 = vadd.f32 0.0, %v83
  %85 = vmatmul.f32.gmra.mxu0 %v60
  %v86 = vpop.f32.mrf.mxu0
  %v87 = vadd.f32 0.0, %v86
  %88 = vdwg.mxu0
  %v89 = vmax.f32 %v84, 0.0
  %v90 = vmax.f32 %v87, 0.0
  %v91 = vld [vmem:[%s2] sm:$0xff]
  %v92 = vld [vmem:[%s2 + $0x8] sm:$0xff]
  %vm93 = vcmp.gt.f32.partialorder %v91, 0.0
  %vm94 = vcmp.gt.f32.partialorder %v92, 0.0
  %v95 = vsel %vm93, 0.0, -1e+30
  %v96 = vsel %vm94, 0.0, -1e+30
  %vm97 = vcmask 130048
  %v98 = vsel %vm97, %v91, 0.0
  %99 = vadd.xlane.f32.xlu0 %v98
  %v100 = vpop.xlane.xlu0 %99
  %v101 = vsel %vm97, %v92, 0.0
  %102 = vadd.xlane.f32.xlu0 %v101
  %v103 = vpop.xlane.xlu0 %102
  %vm104 = vcmp.gt.f32.partialorder %v100, 0.0
  %vm105 = vcmp.gt.f32.partialorder %v103, 0.0
  %s106 = scalar_lea.vmem %s2, 16
  %v107 = vld [vmem:[%s106] sm:$0xff]
  %v108 = vld [vmem:[%s106 + $0x8] sm:$0xff]
  %vm109 = vcmp.gt.f32.partialorder %v107, 0.0
  %vm110 = vcmp.gt.f32.partialorder %v108, 0.0
  %v111 = vsel %vm109, 0.0, -1e+30
  %v112 = vsel %vm110, 0.0, -1e+30
  %v113 = vsel %vm97, %v107, 0.0
  %114 = vadd.xlane.f32.xlu0 %v113
  %v115 = vpop.xlane.xlu0 %114
  %v116 = vsel %vm97, %v108, 0.0
  %117 = vadd.xlane.f32.xlu0 %v116
  %v118 = vpop.xlane.xlu0 %117
  %vm119 = vcmp.gt.f32.partialorder %v115, 0.0
  %vm120 = vcmp.gt.f32.partialorder %v118, 0.0
  %s121 = scalar_lea.vmem %s2, 32
  %v122 = vld [vmem:[%s121] sm:$0xff]
  %v123 = vld [vmem:[%s121 + $0x8] sm:$0xff]
  %vm124 = vcmp.gt.f32.partialorder %v122, 0.0
  %vm125 = vcmp.gt.f32.partialorder %v123, 0.0
  %v126 = vsel %vm124, 0.0, -1e+30
  %v127 = vsel %vm125, 0.0, -1e+30
  %v128 = vsel %vm97, %v122, 0.0
  %129 = vadd.xlane.f32.xlu0 %v128
  %v130 = vpop.xlane.xlu0 %129
  %v131 = vsel %vm97, %v123, 0.0
  %132 = vadd.xlane.f32.xlu0 %v131
  %v133 = vpop.xlane.xlu0 %132
  %vm134 = vcmp.gt.f32.partialorder %v130, 0.0
  %vm135 = vcmp.gt.f32.partialorder %v133, 0.0
  %v136 = vld [vmem:[%s3] sm:$0xff]
  %v137 = vld [vmem:[%s3 + $0x8] sm:$0xff]
  %v138 = vld [vmem:[%s3 + $0x10] sm:$0xff]
  %v139 = vld [vmem:[%s3 + $0x18] sm:$0xff]
  %v140 = vld [vmem:[%s4] sm:$0xff]
  %v141 = vld [vmem:[%s4 + $0x8] sm:$0xff]
  %v142 = vld [vmem:[%s4 + $0x10] sm:$0xff]
  %v143 = vld [vmem:[%s4 + $0x18] sm:$0xff]
  %v144 = vld [vmem:[%s4 + $0x20] sm:$0xff]
  %v145 = vld [vmem:[%s4 + $0x28] sm:$0xff]
  %v146 = vld [vmem:[%s4 + $0x30] sm:$0xff]
  %v147 = vld [vmem:[%s4 + $0x38] sm:$0xff]
  %v148 = vld [vmem:[%s4 + $0x40] sm:$0xff]
  %v149 = vld [vmem:[%s4 + $0x48] sm:$0xff]
  %v150 = vld [vmem:[%s4 + $0x50] sm:$0xff]
  %v151 = vld [vmem:[%s4 + $0x58] sm:$0xff]
  %v152 = vld [vmem:[%s4 + $0x60] sm:$0xff]
  %v153 = vld [vmem:[%s4 + $0x68] sm:$0xff]
  %v154 = vld [vmem:[%s4 + $0x70] sm:$0xff]
  %v155 = vld [vmem:[%s4 + $0x78] sm:$0xff]
  %v156 = vld [vmem:[%s5] sm:$0x1]
  %vm157 = vcmask 261120
  %v159 = vsel %vm157, %v89, 0
  %v162 = vsel %vm157, %v90, 0
  %164 = vmatpush.msra.mxu0 0.0
  %165 = vmatpush.msra.mxu0 0.0
  %166 = vmatpush.msra.mxu0 0.0
  %167 = vmatpush.msra.mxu0 0.0
  %168 = vmatpush.msra.mxu0 0.0
  %169 = vmatpush.msra.mxu0 0.0
  %170 = vmatpush.msra.mxu0 0.0
  %171 = vmatpush.msra.mxu0 0.0
  %172 = vmatpush.msra.mxu0 0.0
  %173 = vmatpush.msra.mxu0 0.0
  %174 = vmatpush.msra.mxu0 0.0
  %175 = vmatpush.msra.mxu0 0.0
  %176 = vmatpush.msra.mxu0 %v139
  %177 = vmatpush.msra.mxu0 %v138
  %178 = vmatpush.msra.mxu0 %v137
  %179 = vmatpush.msra.mxu0 %v136
  %180 = vmatmul.f32.gmra.mxu0 %v159
  %v181 = vpop.f32.mrf.mxu0
  %v182 = vadd.f32 0.0, %v181
  %183 = vmatmul.f32.gmra.mxu0 %v162
  %v184 = vpop.f32.mrf.mxu0
  %v185 = vadd.f32 0.0, %v184
  %186 = vdwg.mxu0
  %187 = vmatpush.msra.mxu0 %v155
  %188 = vmatpush.msra.mxu0 %v154
  %189 = vmatpush.msra.mxu0 %v153
  %190 = vmatpush.msra.mxu0 %v152
  %191 = vmatpush.msra.mxu0 %v151
  %192 = vmatpush.msra.mxu0 %v150
  %193 = vmatpush.msra.mxu0 %v149
  %194 = vmatpush.msra.mxu0 %v148
  %195 = vmatpush.msra.mxu0 %v147
  %196 = vmatpush.msra.mxu0 %v146
  %197 = vmatpush.msra.mxu0 %v145
  %198 = vmatpush.msra.mxu0 %v144
  %199 = vmatpush.msra.mxu0 %v143
  %200 = vmatpush.msra.mxu0 %v142
  %201 = vmatpush.msra.mxu0 %v141
  %202 = vmatpush.msra.mxu0 %v140
  %203 = vmatmul.f32.gmra.mxu0 %v182
  %v204 = vpop.f32.mrf.mxu0
  %v205 = vadd.f32 0.0, %v204
  %206 = vmatmul.f32.gmra.mxu0 %v185
  %v207 = vpop.f32.mrf.mxu0
  %v208 = vadd.f32 0.0, %v207
  %209 = vdwg.mxu0
  %210 = vxpose.xlu0.b32.start [1/16] %v205, 128
  %211 = vxpose.xlu0.b32.cont [2/16] %v208, 128
  %212 = vxpose.xlu0.b32.cont [3/16] 0.0, 128
  %213 = vxpose.xlu0.b32.cont [4/16] 0.0, 128
  %214 = vxpose.xlu0.b32.cont [5/16] 0.0, 128
  %215 = vxpose.xlu0.b32.cont [6/16] 0.0, 128
  %216 = vxpose.xlu0.b32.cont [7/16] 0.0, 128
  %217 = vxpose.xlu0.b32.cont [8/16] 0.0, 128
  %218 = vxpose.xlu0.b32.cont [9/16] 0.0, 128
  %219 = vxpose.xlu0.b32.cont [10/16] 0.0, 128
  %220 = vxpose.xlu0.b32.cont [11/16] 0.0, 128
  %221 = vxpose.xlu0.b32.cont [12/16] 0.0, 128
  %222 = vxpose.xlu0.b32.cont [13/16] 0.0, 128
  %223 = vxpose.xlu0.b32.cont [14/16] 0.0, 128
  %224 = vxpose.xlu0.b32.cont [15/16] 0.0, 128
  %225 = vxpose.xlu0.b32.end [16/16] 0.0, 128
  %v226 = vpop.trf.xlu0
  %v227 = vpop.trf.xlu0
  %v228 = vpop.trf.xlu0
  %v229 = vpop.trf.xlu0
  %v230 = vpop.trf.xlu0
  %v231 = vpop.trf.xlu0
  %v232 = vpop.trf.xlu0
  %v233 = vpop.trf.xlu0
  %v234 = vpop.trf.xlu0
  %v235 = vpop.trf.xlu0
  %v236 = vpop.trf.xlu0
  %v237 = vpop.trf.xlu0
  %v238 = vpop.trf.xlu0
  %v239 = vpop.trf.xlu0
  %v240 = vpop.trf.xlu0
  %v241 = vpop.trf.xlu0
  %243 = vset.pattern.permute.xlu0 4
  %244 = vperm.xlu0 %243, %v205
  %v245 = vpop.permute.xlu0 %244
  %248 = vset.pattern.permute.xlu0 4
  %249 = vperm.xlu0 %248, %v208
  %v250 = vpop.permute.xlu0 %249
  %v252 = vperm.slane %v226, 0
  %v253 = vadd.f32 %v245, %v252
  %v254 = vadd.f32 %v250, %v252
  %vm255 = vcmp.gt.f32.partialorder %v253, 0.0
  %vm256 = vcmp.gt.f32.partialorder %v254, 0.0
  %v257 = vmul.f32 %v253, 0.2
  %v258 = vmul.f32 %v254, 0.2
  %v259 = vsel %vm255, %v253, %v257
  %v260 = vsel %vm256, %v254, %v258
  %v261 = vadd.f32 %v259, %v95
  %v262 = vadd.f32 %v260, %v96
  %v263 = vsel %vm97, %v261, -inf
  %264 = vmax.xlane.f32.xlu0 %v263
  %v265 = vpop.xlane.xlu0 %264
  %v266 = vsel %vm97, %v262, -inf
  %267 = vmax.xlane.f32.xlu0 %v266
  %v268 = vpop.xlane.xlu0 %267
  %v269 = vsel %vm104, %v265, 0.0
  %v270 = vsel %vm105, %v268, 0.0
  %v271 = vsub.f32 %v261, %v269
  %v272 = vsub.f32 %v262, %v270
  %v273 = vmul.f32 %v271, 1.442695
  %v274 = vpow.pop %v273
  %v275 = vmul.f32 %v272, 1.442695
  %v276 = vpow.pop %v275
  %v277 = vmul.f32 %v91, %v274
  %v278 = vmul.f32 %v92, %v276
  %v279 = vsel %vm97, %v277, 0.0
  %280 = vadd.xlane.f32.xlu0 %v279
  %v281 = vpop.xlane.xlu0 %280
  %v282 = vsel %vm97, %v278, 0.0
  %283 = vadd.xlane.f32.xlu0 %v282
  %v284 = vpop.xlane.xlu0 %283
  %vm285 = vcmp.gt.f32.partialorder %v281, 0.0
  %vm286 = vcmp.gt.f32.partialorder %v284, 0.0
  %v287 = vsel %vm285, %v281, 1.0
  %v288 = vsel %vm286, %v284, 1.0
  %v289 = vrcp.pop %v287
  %v290 = vrcp.pop %v288
  %v291 = vmul.f32 %v277, %v289
  %v292 = vmul.f32 %v278, %v290
  %293 = vrot.lane.b32.xlu0 %v205, 127
  %v294 = vpop.permute.xlu0 %293
  %295 = vrot.lane.b32.xlu0 %v208, 127
  %v296 = vpop.permute.xlu0 %295
  %299 = vxpose.xlu0.b32.start [1/16] %v294, 128
  %300 = vxpose.xlu0.b32.cont [2/16] %v296, 128
  %301 = vxpose.xlu0.b32.cont [3/16] 0.0, 128
  %302 = vxpose.xlu0.b32.cont [4/16] 0.0, 128
  %303 = vxpose.xlu0.b32.cont [5/16] 0.0, 128
  %304 = vxpose.xlu0.b32.cont [6/16] 0.0, 128
  %305 = vxpose.xlu0.b32.cont [7/16] 0.0, 128
  %306 = vxpose.xlu0.b32.cont [8/16] 0.0, 128
  %307 = vxpose.xlu0.b32.cont [9/16] 0.0, 128
  %308 = vxpose.xlu0.b32.cont [10/16] 0.0, 128
  %309 = vxpose.xlu0.b32.cont [11/16] 0.0, 128
  %310 = vxpose.xlu0.b32.cont [12/16] 0.0, 128
  %311 = vxpose.xlu0.b32.cont [13/16] 0.0, 128
  %312 = vxpose.xlu0.b32.cont [14/16] 0.0, 128
  %313 = vxpose.xlu0.b32.cont [15/16] 0.0, 128
  %314 = vxpose.xlu0.b32.end [16/16] 0.0, 128
  %v315 = vpop.trf.xlu0
  %v316 = vpop.trf.xlu0
  %v317 = vpop.trf.xlu0
  %v318 = vpop.trf.xlu0
  %v319 = vpop.trf.xlu0
  %v320 = vpop.trf.xlu0
  %v321 = vpop.trf.xlu0
  %v322 = vpop.trf.xlu0
  %v323 = vpop.trf.xlu0
  %v324 = vpop.trf.xlu0
  %v325 = vpop.trf.xlu0
  %v326 = vpop.trf.xlu0
  %v327 = vpop.trf.xlu0
  %v328 = vpop.trf.xlu0
  %v329 = vpop.trf.xlu0
  %v330 = vpop.trf.xlu0
  %331 = vset.pattern.permute.xlu0 5
  %332 = vperm.xlu0 %331, %v205
  %v333 = vpop.permute.xlu0 %332
  %335 = vset.pattern.permute.xlu0 5
  %336 = vperm.xlu0 %335, %v208
  %v337 = vpop.permute.xlu0 %336
  %v339 = vperm.slane %v315, 0
  %v340 = vadd.f32 %v333, %v339
  %v341 = vadd.f32 %v337, %v339
  %vm342 = vcmp.gt.f32.partialorder %v340, 0.0
  %vm343 = vcmp.gt.f32.partialorder %v341, 0.0
  %v344 = vmul.f32 %v340, 0.2
  %v345 = vmul.f32 %v341, 0.2
  %v346 = vsel %vm342, %v340, %v344
  %v347 = vsel %vm343, %v341, %v345
  %v348 = vadd.f32 %v346, %v95
  %v349 = vadd.f32 %v347, %v96
  %v350 = vsel %vm97, %v348, -inf
  %351 = vmax.xlane.f32.xlu0 %v350
  %v352 = vpop.xlane.xlu0 %351
  %v353 = vsel %vm97, %v349, -inf
  %354 = vmax.xlane.f32.xlu0 %v353
  %v355 = vpop.xlane.xlu0 %354
  %v356 = vsel %vm104, %v352, 0.0
  %v357 = vsel %vm105, %v355, 0.0
  %v358 = vsub.f32 %v348, %v356
  %v359 = vsub.f32 %v349, %v357
  %v360 = vmul.f32 %v358, 1.442695
  %v361 = vpow.pop %v360
  %v362 = vmul.f32 %v359, 1.442695
  %v363 = vpow.pop %v362
  %v364 = vmul.f32 %v91, %v361
  %v365 = vmul.f32 %v92, %v363
  %v366 = vsel %vm97, %v364, 0.0
  %367 = vadd.xlane.f32.xlu0 %v366
  %v368 = vpop.xlane.xlu0 %367
  %v369 = vsel %vm97, %v365, 0.0
  %370 = vadd.xlane.f32.xlu0 %v369
  %v371 = vpop.xlane.xlu0 %370
  %vm372 = vcmp.gt.f32.partialorder %v368, 0.0
  %vm373 = vcmp.gt.f32.partialorder %v371, 0.0
  %v374 = vsel %vm372, %v368, 1.0
  %v375 = vsel %vm373, %v371, 1.0
  %v376 = vrcp.pop %v374
  %v377 = vrcp.pop %v375
  %v378 = vmul.f32 %v364, %v376
  %v379 = vmul.f32 %v365, %v377
  %382 = vrot.lane.b32.xlu0 %v182, 96
  %v383 = vpop.permute.xlu0 %382
  %384 = vrot.lane.b32.xlu0 %v185, 96
  %v385 = vpop.permute.xlu0 %384
  %v389 = vsel %vm97, %v378, 0
  %v392 = vsel %vm97, %v379, 0
  %394 = vmatpush.msra.mxu0 0.0
  %395 = vmatpush.msra.mxu0 0.0
  %396 = vmatpush.msra.mxu0 0.0
  %397 = vmatpush.msra.mxu0 0.0
  %398 = vmatpush.msra.mxu0 0.0
  %399 = vmatpush.msra.mxu0 0.0
  %400 = vmatpush.msra.mxu0 0.0
  %401 = vmatpush.msra.mxu0 0.0
  %402 = vmatpush.msra.mxu0 0.0
  %403 = vmatpush.msra.mxu0 0.0
  %404 = vmatpush.msra.mxu0 0.0
  %405 = vmatpush.msra.mxu0 0.0
  %406 = vmatpush.msra.mxu0 0.0
  %407 = vmatpush.msra.mxu0 0.0
  %408 = vmatpush.msra.mxu0 %v385
  %409 = vmatpush.msra.mxu0 %v383
  %410 = vmatmul.f32.gmra.mxu0 %v389
  %v411 = vpop.f32.mrf.mxu0
  %v412 = vadd.f32 0.0, %v411
  %413 = vmatmul.f32.gmra.mxu0 %v392
  %v414 = vpop.f32.mrf.mxu0
  %v415 = vadd.f32 0.0, %v414
  %416 = vdwg.mxu0
  %v418 = vsel %vm97, %v291, 0
  %v421 = vsel %vm97, %v292, 0
  %423 = vmatpush.msra.mxu0 0.0
  %424 = vmatpush.msra.mxu0 0.0
  %425 = vmatpush.msra.mxu0 0.0
  %426 = vmatpush.msra.mxu0 0.0
  %427 = vmatpush.msra.mxu0 0.0
  %428 = vmatpush.msra.mxu0 0.0
  %429 = vmatpush.msra.mxu0 0.0
  %430 = vmatpush.msra.mxu0 0.0
  %431 = vmatpush.msra.mxu0 0.0
  %432 = vmatpush.msra.mxu0 0.0
  %433 = vmatpush.msra.mxu0 0.0
  %434 = vmatpush.msra.mxu0 0.0
  %435 = vmatpush.msra.mxu0 0.0
  %436 = vmatpush.msra.mxu0 0.0
  %437 = vmatpush.msra.mxu0 %v185
  %438 = vmatpush.msra.mxu0 %v182
  %439 = vmatmul.f32.gmra.mxu0 %v418
  %v440 = vpop.f32.mrf.mxu0
  %v441 = vadd.f32 %v412, %v440
  %442 = vmatmul.f32.gmra.mxu0 %v421
  %v443 = vpop.f32.mrf.mxu0
  %v444 = vadd.f32 %v415, %v443
  %445 = vdwg.mxu0
  %446 = vrot.lane.b32.xlu0 %v205, 126
  %v447 = vpop.permute.xlu0 %446
  %448 = vrot.lane.b32.xlu0 %v208, 126
  %v449 = vpop.permute.xlu0 %448
  %452 = vxpose.xlu0.b32.start [1/16] %v447, 128
  %453 = vxpose.xlu0.b32.cont [2/16] %v449, 128
  %454 = vxpose.xlu0.b32.cont [3/16] 0.0, 128
  %455 = vxpose.xlu0.b32.cont [4/16] 0.0, 128
  %456 = vxpose.xlu0.b32.cont [5/16] 0.0, 128
  %457 = vxpose.xlu0.b32.cont [6/16] 0.0, 128
  %458 = vxpose.xlu0.b32.cont [7/16] 0.0, 128
  %459 = vxpose.xlu0.b32.cont [8/16] 0.0, 128
  %460 = vxpose.xlu0.b32.cont [9/16] 0.0, 128
  %461 = vxpose.xlu0.b32.cont [10/16] 0.0, 128
  %462 = vxpose.xlu0.b32.cont [11/16] 0.0, 128
  %463 = vxpose.xlu0.b32.cont [12/16] 0.0, 128
  %464 = vxpose.xlu0.b32.cont [13/16] 0.0, 128
  %465 = vxpose.xlu0.b32.cont [14/16] 0.0, 128
  %466 = vxpose.xlu0.b32.cont [15/16] 0.0, 128
  %467 = vxpose.xlu0.b32.end [16/16] 0.0, 128
  %v468 = vpop.trf.xlu0
  %v469 = vpop.trf.xlu0
  %v470 = vpop.trf.xlu0
  %v471 = vpop.trf.xlu0
  %v472 = vpop.trf.xlu0
  %v473 = vpop.trf.xlu0
  %v474 = vpop.trf.xlu0
  %v475 = vpop.trf.xlu0
  %v476 = vpop.trf.xlu0
  %v477 = vpop.trf.xlu0
  %v478 = vpop.trf.xlu0
  %v479 = vpop.trf.xlu0
  %v480 = vpop.trf.xlu0
  %v481 = vpop.trf.xlu0
  %v482 = vpop.trf.xlu0
  %v483 = vpop.trf.xlu0
  %484 = vset.pattern.permute.xlu0 6
  %485 = vperm.xlu0 %484, %v205
  %v486 = vpop.permute.xlu0 %485
  %488 = vset.pattern.permute.xlu0 6
  %489 = vperm.xlu0 %488, %v208
  %v490 = vpop.permute.xlu0 %489
  %v492 = vperm.slane %v468, 0
  %v493 = vadd.f32 %v486, %v492
  %v494 = vadd.f32 %v490, %v492
  %vm495 = vcmp.gt.f32.partialorder %v493, 0.0
  %vm496 = vcmp.gt.f32.partialorder %v494, 0.0
  %v497 = vmul.f32 %v493, 0.2
  %v498 = vmul.f32 %v494, 0.2
  %v499 = vsel %vm495, %v493, %v497
  %v500 = vsel %vm496, %v494, %v498
  %v501 = vadd.f32 %v499, %v95
  %v502 = vadd.f32 %v500, %v96
  %v503 = vsel %vm97, %v501, -inf
  %504 = vmax.xlane.f32.xlu0 %v503
  %v505 = vpop.xlane.xlu0 %504
  %v506 = vsel %vm97, %v502, -inf
  %507 = vmax.xlane.f32.xlu0 %v506
  %v508 = vpop.xlane.xlu0 %507
  %v509 = vsel %vm104, %v505, 0.0
  %v510 = vsel %vm105, %v508, 0.0
  %v511 = vsub.f32 %v501, %v509
  %v512 = vsub.f32 %v502, %v510
  %v513 = vmul.f32 %v511, 1.442695
  %v514 = vpow.pop %v513
  %v515 = vmul.f32 %v512, 1.442695
  %v516 = vpow.pop %v515
  %v517 = vmul.f32 %v91, %v514
  %v518 = vmul.f32 %v92, %v516
  %v519 = vsel %vm97, %v517, 0.0
  %520 = vadd.xlane.f32.xlu0 %v519
  %v521 = vpop.xlane.xlu0 %520
  %v522 = vsel %vm97, %v518, 0.0
  %523 = vadd.xlane.f32.xlu0 %v522
  %v524 = vpop.xlane.xlu0 %523
  %vm525 = vcmp.gt.f32.partialorder %v521, 0.0
  %vm526 = vcmp.gt.f32.partialorder %v524, 0.0
  %v527 = vsel %vm525, %v521, 1.0
  %v528 = vsel %vm526, %v524, 1.0
  %v529 = vrcp.pop %v527
  %v530 = vrcp.pop %v528
  %v531 = vmul.f32 %v517, %v529
  %v532 = vmul.f32 %v518, %v530
  %533 = vrot.lane.b32.xlu0 %v182, 64
  %v534 = vpop.permute.xlu0 %533
  %535 = vrot.lane.b32.xlu0 %v185, 64
  %v536 = vpop.permute.xlu0 %535
  %v540 = vsel %vm97, %v531, 0
  %v543 = vsel %vm97, %v532, 0
  %545 = vmatpush.msra.mxu0 0.0
  %546 = vmatpush.msra.mxu0 0.0
  %547 = vmatpush.msra.mxu0 0.0
  %548 = vmatpush.msra.mxu0 0.0
  %549 = vmatpush.msra.mxu0 0.0
  %550 = vmatpush.msra.mxu0 0.0
  %551 = vmatpush.msra.mxu0 0.0
  %552 = vmatpush.msra.mxu0 0.0
  %553 = vmatpush.msra.mxu0 0.0
  %554 = vmatpush.msra.mxu0 0.0
  %555 = vmatpush.msra.mxu0 0.0
  %556 = vmatpush.msra.mxu0 0.0
  %557 = vmatpush.msra.mxu0 0.0
  %558 = vmatpush.msra.mxu0 0.0
  %559 = vmatpush.msra.mxu0 %v536
  %560 = vmatpush.msra.mxu0 %v534
  %561 = vmatmul.f32.gmra.mxu0 %v540
  %v562 = vpop.f32.mrf.mxu0
  %v563 = vadd.f32 0.0, %v562
  %564 = vmatmul.f32.gmra.mxu0 %v543
  %v565 = vpop.f32.mrf.mxu0
  %v566 = vadd.f32 0.0, %v565
  %567 = vdwg.mxu0
  %v568 = vadd.f32 %v441, %v563
  %v569 = vadd.f32 %v444, %v566
  %570 = vrot.lane.b32.xlu0 %v205, 125
  %v571 = vpop.permute.xlu0 %570
  %572 = vrot.lane.b32.xlu0 %v208, 125
  %v573 = vpop.permute.xlu0 %572
  %576 = vxpose.xlu0.b32.start [1/16] %v571, 128
  %577 = vxpose.xlu0.b32.cont [2/16] %v573, 128
  %578 = vxpose.xlu0.b32.cont [3/16] 0.0, 128
  %579 = vxpose.xlu0.b32.cont [4/16] 0.0, 128
  %580 = vxpose.xlu0.b32.cont [5/16] 0.0, 128
  %581 = vxpose.xlu0.b32.cont [6/16] 0.0, 128
  %582 = vxpose.xlu0.b32.cont [7/16] 0.0, 128
  %583 = vxpose.xlu0.b32.cont [8/16] 0.0, 128
  %584 = vxpose.xlu0.b32.cont [9/16] 0.0, 128
  %585 = vxpose.xlu0.b32.cont [10/16] 0.0, 128
  %586 = vxpose.xlu0.b32.cont [11/16] 0.0, 128
  %587 = vxpose.xlu0.b32.cont [12/16] 0.0, 128
  %588 = vxpose.xlu0.b32.cont [13/16] 0.0, 128
  %589 = vxpose.xlu0.b32.cont [14/16] 0.0, 128
  %590 = vxpose.xlu0.b32.cont [15/16] 0.0, 128
  %591 = vxpose.xlu0.b32.end [16/16] 0.0, 128
  %v592 = vpop.trf.xlu0
  %v593 = vpop.trf.xlu0
  %v594 = vpop.trf.xlu0
  %v595 = vpop.trf.xlu0
  %v596 = vpop.trf.xlu0
  %v597 = vpop.trf.xlu0
  %v598 = vpop.trf.xlu0
  %v599 = vpop.trf.xlu0
  %v600 = vpop.trf.xlu0
  %v601 = vpop.trf.xlu0
  %v602 = vpop.trf.xlu0
  %v603 = vpop.trf.xlu0
  %v604 = vpop.trf.xlu0
  %v605 = vpop.trf.xlu0
  %v606 = vpop.trf.xlu0
  %v607 = vpop.trf.xlu0
  %608 = vset.pattern.permute.xlu0 7
  %609 = vperm.xlu0 %608, %v205
  %v610 = vpop.permute.xlu0 %609
  %612 = vset.pattern.permute.xlu0 7
  %613 = vperm.xlu0 %612, %v208
  %v614 = vpop.permute.xlu0 %613
  %v616 = vperm.slane %v592, 0
  %v617 = vadd.f32 %v610, %v616
  %v618 = vadd.f32 %v614, %v616
  %vm619 = vcmp.gt.f32.partialorder %v617, 0.0
  %vm620 = vcmp.gt.f32.partialorder %v618, 0.0
  %v621 = vmul.f32 %v617, 0.2
  %v622 = vmul.f32 %v618, 0.2
  %v623 = vsel %vm619, %v617, %v621
  %v624 = vsel %vm620, %v618, %v622
  %v625 = vadd.f32 %v623, %v95
  %v626 = vadd.f32 %v624, %v96
  %v627 = vsel %vm97, %v625, -inf
  %628 = vmax.xlane.f32.xlu0 %v627
  %v629 = vpop.xlane.xlu0 %628
  %v630 = vsel %vm97, %v626, -inf
  %631 = vmax.xlane.f32.xlu0 %v630
  %v632 = vpop.xlane.xlu0 %631
  %v633 = vsel %vm104, %v629, 0.0
  %v634 = vsel %vm105, %v632, 0.0
  %v635 = vsub.f32 %v625, %v633
  %v636 = vsub.f32 %v626, %v634
  %v637 = vmul.f32 %v635, 1.442695
  %v638 = vpow.pop %v637
  %v639 = vmul.f32 %v636, 1.442695
  %v640 = vpow.pop %v639
  %v641 = vmul.f32 %v91, %v638
  %v642 = vmul.f32 %v92, %v640
  %v643 = vsel %vm97, %v641, 0.0
  %644 = vadd.xlane.f32.xlu0 %v643
  %v645 = vpop.xlane.xlu0 %644
  %v646 = vsel %vm97, %v642, 0.0
  %647 = vadd.xlane.f32.xlu0 %v646
  %v648 = vpop.xlane.xlu0 %647
  %vm649 = vcmp.gt.f32.partialorder %v645, 0.0
  %vm650 = vcmp.gt.f32.partialorder %v648, 0.0
  %v651 = vsel %vm649, %v645, 1.0
  %v652 = vsel %vm650, %v648, 1.0
  %v653 = vrcp.pop %v651
  %v654 = vrcp.pop %v652
  %v655 = vmul.f32 %v641, %v653
  %v656 = vmul.f32 %v642, %v654
  %657 = vrot.lane.b32.xlu0 %v182, 32
  %v658 = vpop.permute.xlu0 %657
  %659 = vrot.lane.b32.xlu0 %v185, 32
  %v660 = vpop.permute.xlu0 %659
  %v664 = vsel %vm97, %v655, 0
  %v667 = vsel %vm97, %v656, 0
  %669 = vmatpush.msra.mxu0 0.0
  %670 = vmatpush.msra.mxu0 0.0
  %671 = vmatpush.msra.mxu0 0.0
  %672 = vmatpush.msra.mxu0 0.0
  %673 = vmatpush.msra.mxu0 0.0
  %674 = vmatpush.msra.mxu0 0.0
  %675 = vmatpush.msra.mxu0 0.0
  %676 = vmatpush.msra.mxu0 0.0
  %677 = vmatpush.msra.mxu0 0.0
  %678 = vmatpush.msra.mxu0 0.0
  %679 = vmatpush.msra.mxu0 0.0
  %680 = vmatpush.msra.mxu0 0.0
  %681 = vmatpush.msra.mxu0 0.0
  %682 = vmatpush.msra.mxu0 0.0
  %683 = vmatpush.msra.mxu0 %v660
  %684 = vmatpush.msra.mxu0 %v658
  %685 = vmatmul.f32.gmra.mxu0 %v664
  %v686 = vpop.f32.mrf.mxu0
  %v687 = vadd.f32 0.0, %v686
  %688 = vmatmul.f32.gmra.mxu0 %v667
  %v689 = vpop.f32.mrf.mxu0
  %v690 = vadd.f32 0.0, %v689
  %691 = vdwg.mxu0
  %v692 = vadd.f32 %v568, %v687
  %v693 = vadd.f32 %v569, %v690
  %v694 = vmul.f32 %v692, 0.25
  %v695 = vmul.f32 %v693, 0.25
  %v697 = vperm.slane %v156, 0
  %v699 = vadd.f32 %v694, %v697
  %v700 = vadd.f32 %v695, %v697
  %s701 = scalar_lea.vmem %s3, 32
  %v702 = vld [vmem:[%s701] sm:$0xff]
  %v703 = vld [vmem:[%s701 + $0x8] sm:$0xff]
  %v704 = vld [vmem:[%s701 + $0x10] sm:$0xff]
  %v705 = vld [vmem:[%s701 + $0x18] sm:$0xff]
  %s706 = scalar_lea.vmem %s4, 128
  %v707 = vld [vmem:[%s706] sm:$0xff]
  %v708 = vld [vmem:[%s706 + $0x8] sm:$0xff]
  %v709 = vld [vmem:[%s706 + $0x10] sm:$0xff]
  %v710 = vld [vmem:[%s706 + $0x18] sm:$0xff]
  %v711 = vld [vmem:[%s706 + $0x20] sm:$0xff]
  %v712 = vld [vmem:[%s706 + $0x28] sm:$0xff]
  %v713 = vld [vmem:[%s706 + $0x30] sm:$0xff]
  %v714 = vld [vmem:[%s706 + $0x38] sm:$0xff]
  %v715 = vld [vmem:[%s706 + $0x40] sm:$0xff]
  %v716 = vld [vmem:[%s706 + $0x48] sm:$0xff]
  %v717 = vld [vmem:[%s706 + $0x50] sm:$0xff]
  %v718 = vld [vmem:[%s706 + $0x58] sm:$0xff]
  %v719 = vld [vmem:[%s706 + $0x60] sm:$0xff]
  %v720 = vld [vmem:[%s706 + $0x68] sm:$0xff]
  %v721 = vld [vmem:[%s706 + $0x70] sm:$0xff]
  %v722 = vld [vmem:[%s706 + $0x78] sm:$0xff]
  %s723 = scalar_lea.vmem %s5, 1
  %v724 = vld [vmem:[%s723] sm:$0x1]
  %725 = vmatpush.msra.mxu0 0.0
  %726 = vmatpush.msra.mxu0 0.0
  %727 = vmatpush.msra.mxu0 0.0
  %728 = vmatpush.msra.mxu0 0.0
  %729 = vmatpush.msra.mxu0 0.0
  %730 = vmatpush.msra.mxu0 0.0
  %731 = vmatpush.msra.mxu0 0.0
  %732 = vmatpush.msra.mxu0 0.0
  %733 = vmatpush.msra.mxu0 0.0
  %734 = vmatpush.msra.mxu0 0.0
  %735 = vmatpush.msra.mxu0 0.0
  %736 = vmatpush.msra.mxu0 0.0
  %737 = vmatpush.msra.mxu0 %v705
  %738 = vmatpush.msra.mxu0 %v704
  %739 = vmatpush.msra.mxu0 %v703
  %740 = vmatpush.msra.mxu0 %v702
  %741 = vmatmul.f32.gmra.mxu0 %v159
  %v742 = vpop.f32.mrf.mxu0
  %v743 = vadd.f32 0.0, %v742
  %744 = vmatmul.f32.gmra.mxu0 %v162
  %v745 = vpop.f32.mrf.mxu0
  %v746 = vadd.f32 0.0, %v745
  %747 = vdwg.mxu0
  %748 = vmatpush.msra.mxu0 %v722
  %749 = vmatpush.msra.mxu0 %v721
  %750 = vmatpush.msra.mxu0 %v720
  %751 = vmatpush.msra.mxu0 %v719
  %752 = vmatpush.msra.mxu0 %v718
  %753 = vmatpush.msra.mxu0 %v717
  %754 = vmatpush.msra.mxu0 %v716
  %755 = vmatpush.msra.mxu0 %v715
  %756 = vmatpush.msra.mxu0 %v714
  %757 = vmatpush.msra.mxu0 %v713
  %758 = vmatpush.msra.mxu0 %v712
  %759 = vmatpush.msra.mxu0 %v711
  %760 = vmatpush.msra.mxu0 %v710
  %761 = vmatpush.msra.mxu0 %v709
  %762 = vmatpush.msra.mxu0 %v708
  %763 = vmatpush.msra.mxu0 %v707
  %764 = vmatmul.f32.gmra.mxu0 %v743
  %v765 = vpop.f32.mrf.mxu0
  %v766 = vadd.f32 0.0, %v765
  %767 = vmatmul.f32.gmra.mxu0 %v746
  %v768 = vpop.f32.mrf.mxu0
  %v769 = vadd.f32 0.0, %v768
  %770 = vdwg.mxu0
  %771 = vxpose.xlu0.b32.start [1/16] %v766, 128
  %772 = vxpose.xlu0.b32.cont [2/16] %v769, 128
  %773 = vxpose.xlu0.b32.cont [3/16] 0.0, 128
  %774 = vxpose.xlu0.b32.cont [4/16] 0.0, 128
  %775 = vxpose.xlu0.b32.cont [5/16] 0.0, 128
  %776 = vxpose.xlu0.b32.cont [6/16] 0.0, 128
  %777 = vxpose.xlu0.b32.cont [7/16] 0.0, 128
  %778 = vxpose.xlu0.b32.cont [8/16] 0.0, 128
  %779 = vxpose.xlu0.b32.cont [9/16] 0.0, 128
  %780 = vxpose.xlu0.b32.cont [10/16] 0.0, 128
  %781 = vxpose.xlu0.b32.cont [11/16] 0.0, 128
  %782 = vxpose.xlu0.b32.cont [12/16] 0.0, 128
  %783 = vxpose.xlu0.b32.cont [13/16] 0.0, 128
  %784 = vxpose.xlu0.b32.cont [14/16] 0.0, 128
  %785 = vxpose.xlu0.b32.cont [15/16] 0.0, 128
  %786 = vxpose.xlu0.b32.end [16/16] 0.0, 128
  %v787 = vpop.trf.xlu0
  %v788 = vpop.trf.xlu0
  %v789 = vpop.trf.xlu0
  %v790 = vpop.trf.xlu0
  %v791 = vpop.trf.xlu0
  %v792 = vpop.trf.xlu0
  %v793 = vpop.trf.xlu0
  %v794 = vpop.trf.xlu0
  %v795 = vpop.trf.xlu0
  %v796 = vpop.trf.xlu0
  %v797 = vpop.trf.xlu0
  %v798 = vpop.trf.xlu0
  %v799 = vpop.trf.xlu0
  %v800 = vpop.trf.xlu0
  %v801 = vpop.trf.xlu0
  %v802 = vpop.trf.xlu0
  %804 = vset.pattern.permute.xlu0 4
  %805 = vperm.xlu0 %804, %v766
  %v806 = vpop.permute.xlu0 %805
  %809 = vset.pattern.permute.xlu0 4
  %810 = vperm.xlu0 %809, %v769
  %v811 = vpop.permute.xlu0 %810
  %v813 = vperm.slane %v787, 0
  %v814 = vadd.f32 %v806, %v813
  %v815 = vadd.f32 %v811, %v813
  %vm816 = vcmp.gt.f32.partialorder %v814, 0.0
  %vm817 = vcmp.gt.f32.partialorder %v815, 0.0
  %v818 = vmul.f32 %v814, 0.2
  %v819 = vmul.f32 %v815, 0.2
  %v820 = vsel %vm816, %v814, %v818
  %v821 = vsel %vm817, %v815, %v819
  %v822 = vadd.f32 %v820, %v111
  %v823 = vadd.f32 %v821, %v112
  %v824 = vsel %vm97, %v822, -inf
  %825 = vmax.xlane.f32.xlu0 %v824
  %v826 = vpop.xlane.xlu0 %825
  %v827 = vsel %vm97, %v823, -inf
  %828 = vmax.xlane.f32.xlu0 %v827
  %v829 = vpop.xlane.xlu0 %828
  %v830 = vsel %vm119, %v826, 0.0
  %v831 = vsel %vm120, %v829, 0.0
  %v832 = vsub.f32 %v822, %v830
  %v833 = vsub.f32 %v823, %v831
  %v834 = vmul.f32 %v832, 1.442695
  %v835 = vpow.pop %v834
  %v836 = vmul.f32 %v833, 1.442695
  %v837 = vpow.pop %v836
  %v838 = vmul.f32 %v107, %v835
  %v839 = vmul.f32 %v108, %v837
  %v840 = vsel %vm97, %v838, 0.0
  %841 = vadd.xlane.f32.xlu0 %v840
  %v842 = vpop.xlane.xlu0 %841
  %v843 = vsel %vm97, %v839, 0.0
  %844 = vadd.xlane.f32.xlu0 %v843
  %v845 = vpop.xlane.xlu0 %844
  %vm846 = vcmp.gt.f32.partialorder %v842, 0.0
  %vm847 = vcmp.gt.f32.partialorder %v845, 0.0
  %v848 = vsel %vm846, %v842, 1.0
  %v849 = vsel %vm847, %v845, 1.0
  %v850 = vrcp.pop %v848
  %v851 = vrcp.pop %v849
  %v852 = vmul.f32 %v838, %v850
  %v853 = vmul.f32 %v839, %v851
  %854 = vrot.lane.b32.xlu0 %v766, 127
  %v855 = vpop.permute.xlu0 %854
  %856 = vrot.lane.b32.xlu0 %v769, 127
  %v857 = vpop.permute.xlu0 %856
  %860 = vxpose.xlu0.b32.start [1/16] %v855, 128
  %861 = vxpose.xlu0.b32.cont [2/16] %v857, 128
  %862 = vxpose.xlu0.b32.cont [3/16] 0.0, 128
  %863 = vxpose.xlu0.b32.cont [4/16] 0.0, 128
  %864 = vxpose.xlu0.b32.cont [5/16] 0.0, 128
  %865 = vxpose.xlu0.b32.cont [6/16] 0.0, 128
  %866 = vxpose.xlu0.b32.cont [7/16] 0.0, 128
  %867 = vxpose.xlu0.b32.cont [8/16] 0.0, 128
  %868 = vxpose.xlu0.b32.cont [9/16] 0.0, 128
  %869 = vxpose.xlu0.b32.cont [10/16] 0.0, 128
  %870 = vxpose.xlu0.b32.cont [11/16] 0.0, 128
  %871 = vxpose.xlu0.b32.cont [12/16] 0.0, 128
  %872 = vxpose.xlu0.b32.cont [13/16] 0.0, 128
  %873 = vxpose.xlu0.b32.cont [14/16] 0.0, 128
  %874 = vxpose.xlu0.b32.cont [15/16] 0.0, 128
  %875 = vxpose.xlu0.b32.end [16/16] 0.0, 128
  %v876 = vpop.trf.xlu0
  %v877 = vpop.trf.xlu0
  %v878 = vpop.trf.xlu0
  %v879 = vpop.trf.xlu0
  %v880 = vpop.trf.xlu0
  %v881 = vpop.trf.xlu0
  %v882 = vpop.trf.xlu0
  %v883 = vpop.trf.xlu0
  %v884 = vpop.trf.xlu0
  %v885 = vpop.trf.xlu0
  %v886 = vpop.trf.xlu0
  %v887 = vpop.trf.xlu0
  %v888 = vpop.trf.xlu0
  %v889 = vpop.trf.xlu0
  %v890 = vpop.trf.xlu0
  %v891 = vpop.trf.xlu0
  %892 = vset.pattern.permute.xlu0 5
  %893 = vperm.xlu0 %892, %v766
  %v894 = vpop.permute.xlu0 %893
  %896 = vset.pattern.permute.xlu0 5
  %897 = vperm.xlu0 %896, %v769
  %v898 = vpop.permute.xlu0 %897
  %v900 = vperm.slane %v876, 0
  %v901 = vadd.f32 %v894, %v900
  %v902 = vadd.f32 %v898, %v900
  %vm903 = vcmp.gt.f32.partialorder %v901, 0.0
  %vm904 = vcmp.gt.f32.partialorder %v902, 0.0
  %v905 = vmul.f32 %v901, 0.2
  %v906 = vmul.f32 %v902, 0.2
  %v907 = vsel %vm903, %v901, %v905
  %v908 = vsel %vm904, %v902, %v906
  %v909 = vadd.f32 %v907, %v111
  %v910 = vadd.f32 %v908, %v112
  %v911 = vsel %vm97, %v909, -inf
  %912 = vmax.xlane.f32.xlu0 %v911
  %v913 = vpop.xlane.xlu0 %912
  %v914 = vsel %vm97, %v910, -inf
  %915 = vmax.xlane.f32.xlu0 %v914
  %v916 = vpop.xlane.xlu0 %915
  %v917 = vsel %vm119, %v913, 0.0
  %v918 = vsel %vm120, %v916, 0.0
  %v919 = vsub.f32 %v909, %v917
  %v920 = vsub.f32 %v910, %v918
  %v921 = vmul.f32 %v919, 1.442695
  %v922 = vpow.pop %v921
  %v923 = vmul.f32 %v920, 1.442695
  %v924 = vpow.pop %v923
  %v925 = vmul.f32 %v107, %v922
  %v926 = vmul.f32 %v108, %v924
  %v927 = vsel %vm97, %v925, 0.0
  %928 = vadd.xlane.f32.xlu0 %v927
  %v929 = vpop.xlane.xlu0 %928
  %v930 = vsel %vm97, %v926, 0.0
  %931 = vadd.xlane.f32.xlu0 %v930
  %v932 = vpop.xlane.xlu0 %931
  %vm933 = vcmp.gt.f32.partialorder %v929, 0.0
  %vm934 = vcmp.gt.f32.partialorder %v932, 0.0
  %v935 = vsel %vm933, %v929, 1.0
  %v936 = vsel %vm934, %v932, 1.0
  %v937 = vrcp.pop %v935
  %v938 = vrcp.pop %v936
  %v939 = vmul.f32 %v925, %v937
  %v940 = vmul.f32 %v926, %v938
  %943 = vrot.lane.b32.xlu0 %v743, 96
  %v944 = vpop.permute.xlu0 %943
  %945 = vrot.lane.b32.xlu0 %v746, 96
  %v946 = vpop.permute.xlu0 %945
  %v950 = vsel %vm97, %v939, 0
  %v953 = vsel %vm97, %v940, 0
  %955 = vmatpush.msra.mxu0 0.0
  %956 = vmatpush.msra.mxu0 0.0
  %957 = vmatpush.msra.mxu0 0.0
  %958 = vmatpush.msra.mxu0 0.0
  %959 = vmatpush.msra.mxu0 0.0
  %960 = vmatpush.msra.mxu0 0.0
  %961 = vmatpush.msra.mxu0 0.0
  %962 = vmatpush.msra.mxu0 0.0
  %963 = vmatpush.msra.mxu0 0.0
  %964 = vmatpush.msra.mxu0 0.0
  %965 = vmatpush.msra.mxu0 0.0
  %966 = vmatpush.msra.mxu0 0.0
  %967 = vmatpush.msra.mxu0 0.0
  %968 = vmatpush.msra.mxu0 0.0
  %969 = vmatpush.msra.mxu0 %v946
  %970 = vmatpush.msra.mxu0 %v944
  %971 = vmatmul.f32.gmra.mxu0 %v950
  %v972 = vpop.f32.mrf.mxu0
  %v973 = vadd.f32 0.0, %v972
  %974 = vmatmul.f32.gmra.mxu0 %v953
  %v975 = vpop.f32.mrf.mxu0
  %v976 = vadd.f32 0.0, %v975
  %977 = vdwg.mxu0
  %v979 = vsel %vm97, %v852, 0
  %v982 = vsel %vm97, %v853, 0
  %984 = vmatpush.msra.mxu0 0.0
  %985 = vmatpush.msra.mxu0 0.0
  %986 = vmatpush.msra.mxu0 0.0
  %987 = vmatpush.msra.mxu0 0.0
  %988 = vmatpush.msra.mxu0 0.0
  %989 = vmatpush.msra.mxu0 0.0
  %990 = vmatpush.msra.mxu0 0.0
  %991 = vmatpush.msra.mxu0 0.0
  %992 = vmatpush.msra.mxu0 0.0
  %993 = vmatpush.msra.mxu0 0.0
  %994 = vmatpush.msra.mxu0 0.0
  %995 = vmatpush.msra.mxu0 0.0
  %996 = vmatpush.msra.mxu0 0.0
  %997 = vmatpush.msra.mxu0 0.0
  %998 = vmatpush.msra.mxu0 %v746
  %999 = vmatpush.msra.mxu0 %v743
  %1000 = vmatmul.f32.gmra.mxu0 %v979
  %v1001 = vpop.f32.mrf.mxu0
  %v1002 = vadd.f32 %v973, %v1001
  %1003 = vmatmul.f32.gmra.mxu0 %v982
  %v1004 = vpop.f32.mrf.mxu0
  %v1005 = vadd.f32 %v976, %v1004
  %1006 = vdwg.mxu0
  %1007 = vrot.lane.b32.xlu0 %v766, 126
  %v1008 = vpop.permute.xlu0 %1007
  %1009 = vrot.lane.b32.xlu0 %v769, 126
  %v1010 = vpop.permute.xlu0 %1009
  %1013 = vxpose.xlu0.b32.start [1/16] %v1008, 128
  %1014 = vxpose.xlu0.b32.cont [2/16] %v1010, 128
  %1015 = vxpose.xlu0.b32.cont [3/16] 0.0, 128
  %1016 = vxpose.xlu0.b32.cont [4/16] 0.0, 128
  %1017 = vxpose.xlu0.b32.cont [5/16] 0.0, 128
  %1018 = vxpose.xlu0.b32.cont [6/16] 0.0, 128
  %1019 = vxpose.xlu0.b32.cont [7/16] 0.0, 128
  %1020 = vxpose.xlu0.b32.cont [8/16] 0.0, 128
  %1021 = vxpose.xlu0.b32.cont [9/16] 0.0, 128
  %1022 = vxpose.xlu0.b32.cont [10/16] 0.0, 128
  %1023 = vxpose.xlu0.b32.cont [11/16] 0.0, 128
  %1024 = vxpose.xlu0.b32.cont [12/16] 0.0, 128
  %1025 = vxpose.xlu0.b32.cont [13/16] 0.0, 128
  %1026 = vxpose.xlu0.b32.cont [14/16] 0.0, 128
  %1027 = vxpose.xlu0.b32.cont [15/16] 0.0, 128
  %1028 = vxpose.xlu0.b32.end [16/16] 0.0, 128
  %v1029 = vpop.trf.xlu0
  %v1030 = vpop.trf.xlu0
  %v1031 = vpop.trf.xlu0
  %v1032 = vpop.trf.xlu0
  %v1033 = vpop.trf.xlu0
  %v1034 = vpop.trf.xlu0
  %v1035 = vpop.trf.xlu0
  %v1036 = vpop.trf.xlu0
  %v1037 = vpop.trf.xlu0
  %v1038 = vpop.trf.xlu0
  %v1039 = vpop.trf.xlu0
  %v1040 = vpop.trf.xlu0
  %v1041 = vpop.trf.xlu0
  %v1042 = vpop.trf.xlu0
  %v1043 = vpop.trf.xlu0
  %v1044 = vpop.trf.xlu0
  %1045 = vset.pattern.permute.xlu0 6
  %1046 = vperm.xlu0 %1045, %v766
  %v1047 = vpop.permute.xlu0 %1046
  %1049 = vset.pattern.permute.xlu0 6
  %1050 = vperm.xlu0 %1049, %v769
  %v1051 = vpop.permute.xlu0 %1050
  %v1053 = vperm.slane %v1029, 0
  %v1054 = vadd.f32 %v1047, %v1053
  %v1055 = vadd.f32 %v1051, %v1053
  %vm1056 = vcmp.gt.f32.partialorder %v1054, 0.0
  %vm1057 = vcmp.gt.f32.partialorder %v1055, 0.0
  %v1058 = vmul.f32 %v1054, 0.2
  %v1059 = vmul.f32 %v1055, 0.2
  %v1060 = vsel %vm1056, %v1054, %v1058
  %v1061 = vsel %vm1057, %v1055, %v1059
  %v1062 = vadd.f32 %v1060, %v111
  %v1063 = vadd.f32 %v1061, %v112
  %v1064 = vsel %vm97, %v1062, -inf
  %1065 = vmax.xlane.f32.xlu0 %v1064
  %v1066 = vpop.xlane.xlu0 %1065
  %v1067 = vsel %vm97, %v1063, -inf
  %1068 = vmax.xlane.f32.xlu0 %v1067
  %v1069 = vpop.xlane.xlu0 %1068
  %v1070 = vsel %vm119, %v1066, 0.0
  %v1071 = vsel %vm120, %v1069, 0.0
  %v1072 = vsub.f32 %v1062, %v1070
  %v1073 = vsub.f32 %v1063, %v1071
  %v1074 = vmul.f32 %v1072, 1.442695
  %v1075 = vpow.pop %v1074
  %v1076 = vmul.f32 %v1073, 1.442695
  %v1077 = vpow.pop %v1076
  %v1078 = vmul.f32 %v107, %v1075
  %v1079 = vmul.f32 %v108, %v1077
  %v1080 = vsel %vm97, %v1078, 0.0
  %1081 = vadd.xlane.f32.xlu0 %v1080
  %v1082 = vpop.xlane.xlu0 %1081
  %v1083 = vsel %vm97, %v1079, 0.0
  %1084 = vadd.xlane.f32.xlu0 %v1083
  %v1085 = vpop.xlane.xlu0 %1084
  %vm1086 = vcmp.gt.f32.partialorder %v1082, 0.0
  %vm1087 = vcmp.gt.f32.partialorder %v1085, 0.0
  %v1088 = vsel %vm1086, %v1082, 1.0
  %v1089 = vsel %vm1087, %v1085, 1.0
  %v1090 = vrcp.pop %v1088
  %v1091 = vrcp.pop %v1089
  %v1092 = vmul.f32 %v1078, %v1090
  %v1093 = vmul.f32 %v1079, %v1091
  %1094 = vrot.lane.b32.xlu0 %v743, 64
  %v1095 = vpop.permute.xlu0 %1094
  %1096 = vrot.lane.b32.xlu0 %v746, 64
  %v1097 = vpop.permute.xlu0 %1096
  %v1101 = vsel %vm97, %v1092, 0
  %v1104 = vsel %vm97, %v1093, 0
  %1106 = vmatpush.msra.mxu0 0.0
  %1107 = vmatpush.msra.mxu0 0.0
  %1108 = vmatpush.msra.mxu0 0.0
  %1109 = vmatpush.msra.mxu0 0.0
  %1110 = vmatpush.msra.mxu0 0.0
  %1111 = vmatpush.msra.mxu0 0.0
  %1112 = vmatpush.msra.mxu0 0.0
  %1113 = vmatpush.msra.mxu0 0.0
  %1114 = vmatpush.msra.mxu0 0.0
  %1115 = vmatpush.msra.mxu0 0.0
  %1116 = vmatpush.msra.mxu0 0.0
  %1117 = vmatpush.msra.mxu0 0.0
  %1118 = vmatpush.msra.mxu0 0.0
  %1119 = vmatpush.msra.mxu0 0.0
  %1120 = vmatpush.msra.mxu0 %v1097
  %1121 = vmatpush.msra.mxu0 %v1095
  %1122 = vmatmul.f32.gmra.mxu0 %v1101
  %v1123 = vpop.f32.mrf.mxu0
  %v1124 = vadd.f32 0.0, %v1123
  %1125 = vmatmul.f32.gmra.mxu0 %v1104
  %v1126 = vpop.f32.mrf.mxu0
  %v1127 = vadd.f32 0.0, %v1126
  %1128 = vdwg.mxu0
  %v1129 = vadd.f32 %v1002, %v1124
  %v1130 = vadd.f32 %v1005, %v1127
  %1131 = vrot.lane.b32.xlu0 %v766, 125
  %v1132 = vpop.permute.xlu0 %1131
  %1133 = vrot.lane.b32.xlu0 %v769, 125
  %v1134 = vpop.permute.xlu0 %1133
  %1137 = vxpose.xlu0.b32.start [1/16] %v1132, 128
  %1138 = vxpose.xlu0.b32.cont [2/16] %v1134, 128
  %1139 = vxpose.xlu0.b32.cont [3/16] 0.0, 128
  %1140 = vxpose.xlu0.b32.cont [4/16] 0.0, 128
  %1141 = vxpose.xlu0.b32.cont [5/16] 0.0, 128
  %1142 = vxpose.xlu0.b32.cont [6/16] 0.0, 128
  %1143 = vxpose.xlu0.b32.cont [7/16] 0.0, 128
  %1144 = vxpose.xlu0.b32.cont [8/16] 0.0, 128
  %1145 = vxpose.xlu0.b32.cont [9/16] 0.0, 128
  %1146 = vxpose.xlu0.b32.cont [10/16] 0.0, 128
  %1147 = vxpose.xlu0.b32.cont [11/16] 0.0, 128
  %1148 = vxpose.xlu0.b32.cont [12/16] 0.0, 128
  %1149 = vxpose.xlu0.b32.cont [13/16] 0.0, 128
  %1150 = vxpose.xlu0.b32.cont [14/16] 0.0, 128
  %1151 = vxpose.xlu0.b32.cont [15/16] 0.0, 128
  %1152 = vxpose.xlu0.b32.end [16/16] 0.0, 128
  %v1153 = vpop.trf.xlu0
  %v1154 = vpop.trf.xlu0
  %v1155 = vpop.trf.xlu0
  %v1156 = vpop.trf.xlu0
  %v1157 = vpop.trf.xlu0
  %v1158 = vpop.trf.xlu0
  %v1159 = vpop.trf.xlu0
  %v1160 = vpop.trf.xlu0
  %v1161 = vpop.trf.xlu0
  %v1162 = vpop.trf.xlu0
  %v1163 = vpop.trf.xlu0
  %v1164 = vpop.trf.xlu0
  %v1165 = vpop.trf.xlu0
  %v1166 = vpop.trf.xlu0
  %v1167 = vpop.trf.xlu0
  %v1168 = vpop.trf.xlu0
  %1169 = vset.pattern.permute.xlu0 7
  %1170 = vperm.xlu0 %1169, %v766
  %v1171 = vpop.permute.xlu0 %1170
  %1173 = vset.pattern.permute.xlu0 7
  %1174 = vperm.xlu0 %1173, %v769
  %v1175 = vpop.permute.xlu0 %1174
  %v1177 = vperm.slane %v1153, 0
  %v1178 = vadd.f32 %v1171, %v1177
  %v1179 = vadd.f32 %v1175, %v1177
  %vm1180 = vcmp.gt.f32.partialorder %v1178, 0.0
  %vm1181 = vcmp.gt.f32.partialorder %v1179, 0.0
  %v1182 = vmul.f32 %v1178, 0.2
  %v1183 = vmul.f32 %v1179, 0.2
  %v1184 = vsel %vm1180, %v1178, %v1182
  %v1185 = vsel %vm1181, %v1179, %v1183
  %v1186 = vadd.f32 %v1184, %v111
  %v1187 = vadd.f32 %v1185, %v112
  %v1188 = vsel %vm97, %v1186, -inf
  %1189 = vmax.xlane.f32.xlu0 %v1188
  %v1190 = vpop.xlane.xlu0 %1189
  %v1191 = vsel %vm97, %v1187, -inf
  %1192 = vmax.xlane.f32.xlu0 %v1191
  %v1193 = vpop.xlane.xlu0 %1192
  %v1194 = vsel %vm119, %v1190, 0.0
  %v1195 = vsel %vm120, %v1193, 0.0
  %v1196 = vsub.f32 %v1186, %v1194
  %v1197 = vsub.f32 %v1187, %v1195
  %v1198 = vmul.f32 %v1196, 1.442695
  %v1199 = vpow.pop %v1198
  %v1200 = vmul.f32 %v1197, 1.442695
  %v1201 = vpow.pop %v1200
  %v1202 = vmul.f32 %v107, %v1199
  %v1203 = vmul.f32 %v108, %v1201
  %v1204 = vsel %vm97, %v1202, 0.0
  %1205 = vadd.xlane.f32.xlu0 %v1204
  %v1206 = vpop.xlane.xlu0 %1205
  %v1207 = vsel %vm97, %v1203, 0.0
  %1208 = vadd.xlane.f32.xlu0 %v1207
  %v1209 = vpop.xlane.xlu0 %1208
  %vm1210 = vcmp.gt.f32.partialorder %v1206, 0.0
  %vm1211 = vcmp.gt.f32.partialorder %v1209, 0.0
  %v1212 = vsel %vm1210, %v1206, 1.0
  %v1213 = vsel %vm1211, %v1209, 1.0
  %v1214 = vrcp.pop %v1212
  %v1215 = vrcp.pop %v1213
  %v1216 = vmul.f32 %v1202, %v1214
  %v1217 = vmul.f32 %v1203, %v1215
  %1218 = vrot.lane.b32.xlu0 %v743, 32
  %v1219 = vpop.permute.xlu0 %1218
  %1220 = vrot.lane.b32.xlu0 %v746, 32
  %v1221 = vpop.permute.xlu0 %1220
  %v1225 = vsel %vm97, %v1216, 0
  %v1228 = vsel %vm97, %v1217, 0
  %1230 = vmatpush.msra.mxu0 0.0
  %1231 = vmatpush.msra.mxu0 0.0
  %1232 = vmatpush.msra.mxu0 0.0
  %1233 = vmatpush.msra.mxu0 0.0
  %1234 = vmatpush.msra.mxu0 0.0
  %1235 = vmatpush.msra.mxu0 0.0
  %1236 = vmatpush.msra.mxu0 0.0
  %1237 = vmatpush.msra.mxu0 0.0
  %1238 = vmatpush.msra.mxu0 0.0
  %1239 = vmatpush.msra.mxu0 0.0
  %1240 = vmatpush.msra.mxu0 0.0
  %1241 = vmatpush.msra.mxu0 0.0
  %1242 = vmatpush.msra.mxu0 0.0
  %1243 = vmatpush.msra.mxu0 0.0
  %1244 = vmatpush.msra.mxu0 %v1221
  %1245 = vmatpush.msra.mxu0 %v1219
  %1246 = vmatmul.f32.gmra.mxu0 %v1225
  %v1247 = vpop.f32.mrf.mxu0
  %v1248 = vadd.f32 0.0, %v1247
  %1249 = vmatmul.f32.gmra.mxu0 %v1228
  %v1250 = vpop.f32.mrf.mxu0
  %v1251 = vadd.f32 0.0, %v1250
  %1252 = vdwg.mxu0
  %v1253 = vadd.f32 %v1129, %v1248
  %v1254 = vadd.f32 %v1130, %v1251
  %v1255 = vmul.f32 %v1253, 0.25
  %v1256 = vmul.f32 %v1254, 0.25
  %v1258 = vperm.slane %v724, 0
  %v1260 = vadd.f32 %v1255, %v1258
  %v1261 = vadd.f32 %v1256, %v1258
  %s1262 = scalar_lea.vmem %s3, 64
  %v1263 = vld [vmem:[%s1262] sm:$0xff]
  %v1264 = vld [vmem:[%s1262 + $0x8] sm:$0xff]
  %v1265 = vld [vmem:[%s1262 + $0x10] sm:$0xff]
  %v1266 = vld [vmem:[%s1262 + $0x18] sm:$0xff]
  %s1267 = scalar_lea.vmem %s4, 256
  %v1268 = vld [vmem:[%s1267] sm:$0xff]
  %v1269 = vld [vmem:[%s1267 + $0x8] sm:$0xff]
  %v1270 = vld [vmem:[%s1267 + $0x10] sm:$0xff]
  %v1271 = vld [vmem:[%s1267 + $0x18] sm:$0xff]
  %v1272 = vld [vmem:[%s1267 + $0x20] sm:$0xff]
  %v1273 = vld [vmem:[%s1267 + $0x28] sm:$0xff]
  %v1274 = vld [vmem:[%s1267 + $0x30] sm:$0xff]
  %v1275 = vld [vmem:[%s1267 + $0x38] sm:$0xff]
  %v1276 = vld [vmem:[%s1267 + $0x40] sm:$0xff]
  %v1277 = vld [vmem:[%s1267 + $0x48] sm:$0xff]
  %v1278 = vld [vmem:[%s1267 + $0x50] sm:$0xff]
  %v1279 = vld [vmem:[%s1267 + $0x58] sm:$0xff]
  %v1280 = vld [vmem:[%s1267 + $0x60] sm:$0xff]
  %v1281 = vld [vmem:[%s1267 + $0x68] sm:$0xff]
  %v1282 = vld [vmem:[%s1267 + $0x70] sm:$0xff]
  %v1283 = vld [vmem:[%s1267 + $0x78] sm:$0xff]
  %s1284 = scalar_lea.vmem %s5, 2
  %v1285 = vld [vmem:[%s1284] sm:$0x1]
  %v1287 = vsel %vm157, %v1260, 0
  %v1290 = vsel %vm157, %v1261, 0
  %1292 = vmatpush.msra.mxu0 0.0
  %1293 = vmatpush.msra.mxu0 0.0
  %1294 = vmatpush.msra.mxu0 0.0
  %1295 = vmatpush.msra.mxu0 0.0
  %1296 = vmatpush.msra.mxu0 0.0
  %1297 = vmatpush.msra.mxu0 0.0
  %1298 = vmatpush.msra.mxu0 0.0
  %1299 = vmatpush.msra.mxu0 0.0
  %1300 = vmatpush.msra.mxu0 0.0
  %1301 = vmatpush.msra.mxu0 0.0
  %1302 = vmatpush.msra.mxu0 0.0
  %1303 = vmatpush.msra.mxu0 0.0
  %1304 = vmatpush.msra.mxu0 %v1266
  %1305 = vmatpush.msra.mxu0 %v1265
  %1306 = vmatpush.msra.mxu0 %v1264
  %1307 = vmatpush.msra.mxu0 %v1263
  %1308 = vmatmul.f32.gmra.mxu0 %v1287
  %v1309 = vpop.f32.mrf.mxu0
  %v1310 = vadd.f32 0.0, %v1309
  %1311 = vmatmul.f32.gmra.mxu0 %v1290
  %v1312 = vpop.f32.mrf.mxu0
  %v1313 = vadd.f32 0.0, %v1312
  %1314 = vdwg.mxu0
  %1315 = vmatpush.msra.mxu0 %v1283
  %1316 = vmatpush.msra.mxu0 %v1282
  %1317 = vmatpush.msra.mxu0 %v1281
  %1318 = vmatpush.msra.mxu0 %v1280
  %1319 = vmatpush.msra.mxu0 %v1279
  %1320 = vmatpush.msra.mxu0 %v1278
  %1321 = vmatpush.msra.mxu0 %v1277
  %1322 = vmatpush.msra.mxu0 %v1276
  %1323 = vmatpush.msra.mxu0 %v1275
  %1324 = vmatpush.msra.mxu0 %v1274
  %1325 = vmatpush.msra.mxu0 %v1273
  %1326 = vmatpush.msra.mxu0 %v1272
  %1327 = vmatpush.msra.mxu0 %v1271
  %1328 = vmatpush.msra.mxu0 %v1270
  %1329 = vmatpush.msra.mxu0 %v1269
  %1330 = vmatpush.msra.mxu0 %v1268
  %1331 = vmatmul.f32.gmra.mxu0 %v1310
  %v1332 = vpop.f32.mrf.mxu0
  %v1333 = vadd.f32 0.0, %v1332
  %1334 = vmatmul.f32.gmra.mxu0 %v1313
  %v1335 = vpop.f32.mrf.mxu0
  %v1336 = vadd.f32 0.0, %v1335
  %1337 = vdwg.mxu0
  %1338 = vxpose.xlu0.b32.start [1/16] %v1333, 128
  %1339 = vxpose.xlu0.b32.cont [2/16] %v1336, 128
  %1340 = vxpose.xlu0.b32.cont [3/16] 0.0, 128
  %1341 = vxpose.xlu0.b32.cont [4/16] 0.0, 128
  %1342 = vxpose.xlu0.b32.cont [5/16] 0.0, 128
  %1343 = vxpose.xlu0.b32.cont [6/16] 0.0, 128
  %1344 = vxpose.xlu0.b32.cont [7/16] 0.0, 128
  %1345 = vxpose.xlu0.b32.cont [8/16] 0.0, 128
  %1346 = vxpose.xlu0.b32.cont [9/16] 0.0, 128
  %1347 = vxpose.xlu0.b32.cont [10/16] 0.0, 128
  %1348 = vxpose.xlu0.b32.cont [11/16] 0.0, 128
  %1349 = vxpose.xlu0.b32.cont [12/16] 0.0, 128
  %1350 = vxpose.xlu0.b32.cont [13/16] 0.0, 128
  %1351 = vxpose.xlu0.b32.cont [14/16] 0.0, 128
  %1352 = vxpose.xlu0.b32.cont [15/16] 0.0, 128
  %1353 = vxpose.xlu0.b32.end [16/16] 0.0, 128
  %v1354 = vpop.trf.xlu0
  %v1355 = vpop.trf.xlu0
  %v1356 = vpop.trf.xlu0
  %v1357 = vpop.trf.xlu0
  %v1358 = vpop.trf.xlu0
  %v1359 = vpop.trf.xlu0
  %v1360 = vpop.trf.xlu0
  %v1361 = vpop.trf.xlu0
  %v1362 = vpop.trf.xlu0
  %v1363 = vpop.trf.xlu0
  %v1364 = vpop.trf.xlu0
  %v1365 = vpop.trf.xlu0
  %v1366 = vpop.trf.xlu0
  %v1367 = vpop.trf.xlu0
  %v1368 = vpop.trf.xlu0
  %v1369 = vpop.trf.xlu0
  %1371 = vset.pattern.permute.xlu0 4
  %1372 = vperm.xlu0 %1371, %v1333
  %v1373 = vpop.permute.xlu0 %1372
  %1376 = vset.pattern.permute.xlu0 4
  %1377 = vperm.xlu0 %1376, %v1336
  %v1378 = vpop.permute.xlu0 %1377
  %v1380 = vperm.slane %v1354, 0
  %v1381 = vadd.f32 %v1373, %v1380
  %v1382 = vadd.f32 %v1378, %v1380
  %vm1383 = vcmp.gt.f32.partialorder %v1381, 0.0
  %vm1384 = vcmp.gt.f32.partialorder %v1382, 0.0
  %v1385 = vmul.f32 %v1381, 0.2
  %v1386 = vmul.f32 %v1382, 0.2
  %v1387 = vsel %vm1383, %v1381, %v1385
  %v1388 = vsel %vm1384, %v1382, %v1386
  %v1389 = vadd.f32 %v1387, %v126
  %v1390 = vadd.f32 %v1388, %v127
  %v1391 = vsel %vm97, %v1389, -inf
  %1392 = vmax.xlane.f32.xlu0 %v1391
  %v1393 = vpop.xlane.xlu0 %1392
  %v1394 = vsel %vm97, %v1390, -inf
  %1395 = vmax.xlane.f32.xlu0 %v1394
  %v1396 = vpop.xlane.xlu0 %1395
  %v1397 = vsel %vm134, %v1393, 0.0
  %v1398 = vsel %vm135, %v1396, 0.0
  %v1399 = vsub.f32 %v1389, %v1397
  %v1400 = vsub.f32 %v1390, %v1398
  %v1401 = vmul.f32 %v1399, 1.442695
  %v1402 = vpow.pop %v1401
  %v1403 = vmul.f32 %v1400, 1.442695
  %v1404 = vpow.pop %v1403
  %v1405 = vmul.f32 %v122, %v1402
  %v1406 = vmul.f32 %v123, %v1404
  %v1407 = vsel %vm97, %v1405, 0.0
  %1408 = vadd.xlane.f32.xlu0 %v1407
  %v1409 = vpop.xlane.xlu0 %1408
  %v1410 = vsel %vm97, %v1406, 0.0
  %1411 = vadd.xlane.f32.xlu0 %v1410
  %v1412 = vpop.xlane.xlu0 %1411
  %vm1413 = vcmp.gt.f32.partialorder %v1409, 0.0
  %vm1414 = vcmp.gt.f32.partialorder %v1412, 0.0
  %v1415 = vsel %vm1413, %v1409, 1.0
  %v1416 = vsel %vm1414, %v1412, 1.0
  %v1417 = vrcp.pop %v1415
  %v1418 = vrcp.pop %v1416
  %v1419 = vmul.f32 %v1405, %v1417
  %v1420 = vmul.f32 %v1406, %v1418
  %1421 = vrot.lane.b32.xlu0 %v1333, 127
  %v1422 = vpop.permute.xlu0 %1421
  %1423 = vrot.lane.b32.xlu0 %v1336, 127
  %v1424 = vpop.permute.xlu0 %1423
  %1427 = vxpose.xlu0.b32.start [1/16] %v1422, 128
  %1428 = vxpose.xlu0.b32.cont [2/16] %v1424, 128
  %1429 = vxpose.xlu0.b32.cont [3/16] 0.0, 128
  %1430 = vxpose.xlu0.b32.cont [4/16] 0.0, 128
  %1431 = vxpose.xlu0.b32.cont [5/16] 0.0, 128
  %1432 = vxpose.xlu0.b32.cont [6/16] 0.0, 128
  %1433 = vxpose.xlu0.b32.cont [7/16] 0.0, 128
  %1434 = vxpose.xlu0.b32.cont [8/16] 0.0, 128
  %1435 = vxpose.xlu0.b32.cont [9/16] 0.0, 128
  %1436 = vxpose.xlu0.b32.cont [10/16] 0.0, 128
  %1437 = vxpose.xlu0.b32.cont [11/16] 0.0, 128
  %1438 = vxpose.xlu0.b32.cont [12/16] 0.0, 128
  %1439 = vxpose.xlu0.b32.cont [13/16] 0.0, 128
  %1440 = vxpose.xlu0.b32.cont [14/16] 0.0, 128
  %1441 = vxpose.xlu0.b32.cont [15/16] 0.0, 128
  %1442 = vxpose.xlu0.b32.end [16/16] 0.0, 128
  %v1443 = vpop.trf.xlu0
  %v1444 = vpop.trf.xlu0
  %v1445 = vpop.trf.xlu0
  %v1446 = vpop.trf.xlu0
  %v1447 = vpop.trf.xlu0
  %v1448 = vpop.trf.xlu0
  %v1449 = vpop.trf.xlu0
  %v1450 = vpop.trf.xlu0
  %v1451 = vpop.trf.xlu0
  %v1452 = vpop.trf.xlu0
  %v1453 = vpop.trf.xlu0
  %v1454 = vpop.trf.xlu0
  %v1455 = vpop.trf.xlu0
  %v1456 = vpop.trf.xlu0
  %v1457 = vpop.trf.xlu0
  %v1458 = vpop.trf.xlu0
  %1459 = vset.pattern.permute.xlu0 5
  %1460 = vperm.xlu0 %1459, %v1333
  %v1461 = vpop.permute.xlu0 %1460
  %1463 = vset.pattern.permute.xlu0 5
  %1464 = vperm.xlu0 %1463, %v1336
  %v1465 = vpop.permute.xlu0 %1464
  %v1467 = vperm.slane %v1443, 0
  %v1468 = vadd.f32 %v1461, %v1467
  %v1469 = vadd.f32 %v1465, %v1467
  %vm1470 = vcmp.gt.f32.partialorder %v1468, 0.0
  %vm1471 = vcmp.gt.f32.partialorder %v1469, 0.0
  %v1472 = vmul.f32 %v1468, 0.2
  %v1473 = vmul.f32 %v1469, 0.2
  %v1474 = vsel %vm1470, %v1468, %v1472
  %v1475 = vsel %vm1471, %v1469, %v1473
  %v1476 = vadd.f32 %v1474, %v126
  %v1477 = vadd.f32 %v1475, %v127
  %v1478 = vsel %vm97, %v1476, -inf
  %1479 = vmax.xlane.f32.xlu0 %v1478
  %v1480 = vpop.xlane.xlu0 %1479
  %v1481 = vsel %vm97, %v1477, -inf
  %1482 = vmax.xlane.f32.xlu0 %v1481
  %v1483 = vpop.xlane.xlu0 %1482
  %v1484 = vsel %vm134, %v1480, 0.0
  %v1485 = vsel %vm135, %v1483, 0.0
  %v1486 = vsub.f32 %v1476, %v1484
  %v1487 = vsub.f32 %v1477, %v1485
  %v1488 = vmul.f32 %v1486, 1.442695
  %v1489 = vpow.pop %v1488
  %v1490 = vmul.f32 %v1487, 1.442695
  %v1491 = vpow.pop %v1490
  %v1492 = vmul.f32 %v122, %v1489
  %v1493 = vmul.f32 %v123, %v1491
  %v1494 = vsel %vm97, %v1492, 0.0
  %1495 = vadd.xlane.f32.xlu0 %v1494
  %v1496 = vpop.xlane.xlu0 %1495
  %v1497 = vsel %vm97, %v1493, 0.0
  %1498 = vadd.xlane.f32.xlu0 %v1497
  %v1499 = vpop.xlane.xlu0 %1498
  %vm1500 = vcmp.gt.f32.partialorder %v1496, 0.0
  %vm1501 = vcmp.gt.f32.partialorder %v1499, 0.0
  %v1502 = vsel %vm1500, %v1496, 1.0
  %v1503 = vsel %vm1501, %v1499, 1.0
  %v1504 = vrcp.pop %v1502
  %v1505 = vrcp.pop %v1503
  %v1506 = vmul.f32 %v1492, %v1504
  %v1507 = vmul.f32 %v1493, %v1505
  %1510 = vrot.lane.b32.xlu0 %v1310, 96
  %v1511 = vpop.permute.xlu0 %1510
  %1512 = vrot.lane.b32.xlu0 %v1313, 96
  %v1513 = vpop.permute.xlu0 %1512
  %v1517 = vsel %vm97, %v1506, 0
  %v1520 = vsel %vm97, %v1507, 0
  %1522 = vmatpush.msra.mxu0 0.0
  %1523 = vmatpush.msra.mxu0 0.0
  %1524 = vmatpush.msra.mxu0 0.0
  %1525 = vmatpush.msra.mxu0 0.0
  %1526 = vmatpush.msra.mxu0 0.0
  %1527 = vmatpush.msra.mxu0 0.0
  %1528 = vmatpush.msra.mxu0 0.0
  %1529 = vmatpush.msra.mxu0 0.0
  %1530 = vmatpush.msra.mxu0 0.0
  %1531 = vmatpush.msra.mxu0 0.0
  %1532 = vmatpush.msra.mxu0 0.0
  %1533 = vmatpush.msra.mxu0 0.0
  %1534 = vmatpush.msra.mxu0 0.0
  %1535 = vmatpush.msra.mxu0 0.0
  %1536 = vmatpush.msra.mxu0 %v1513
  %1537 = vmatpush.msra.mxu0 %v1511
  %1538 = vmatmul.f32.gmra.mxu0 %v1517
  %v1539 = vpop.f32.mrf.mxu0
  %v1540 = vadd.f32 0.0, %v1539
  %1541 = vmatmul.f32.gmra.mxu0 %v1520
  %v1542 = vpop.f32.mrf.mxu0
  %v1543 = vadd.f32 0.0, %v1542
  %1544 = vdwg.mxu0
  %v1546 = vsel %vm97, %v1419, 0
  %v1549 = vsel %vm97, %v1420, 0
  %1551 = vmatpush.msra.mxu0 0.0
  %1552 = vmatpush.msra.mxu0 0.0
  %1553 = vmatpush.msra.mxu0 0.0
  %1554 = vmatpush.msra.mxu0 0.0
  %1555 = vmatpush.msra.mxu0 0.0
  %1556 = vmatpush.msra.mxu0 0.0
  %1557 = vmatpush.msra.mxu0 0.0
  %1558 = vmatpush.msra.mxu0 0.0
  %1559 = vmatpush.msra.mxu0 0.0
  %1560 = vmatpush.msra.mxu0 0.0
  %1561 = vmatpush.msra.mxu0 0.0
  %1562 = vmatpush.msra.mxu0 0.0
  %1563 = vmatpush.msra.mxu0 0.0
  %1564 = vmatpush.msra.mxu0 0.0
  %1565 = vmatpush.msra.mxu0 %v1313
  %1566 = vmatpush.msra.mxu0 %v1310
  %1567 = vmatmul.f32.gmra.mxu0 %v1546
  %v1568 = vpop.f32.mrf.mxu0
  %v1569 = vadd.f32 %v1540, %v1568
  %1570 = vmatmul.f32.gmra.mxu0 %v1549
  %v1571 = vpop.f32.mrf.mxu0
  %v1572 = vadd.f32 %v1543, %v1571
  %1573 = vdwg.mxu0
  %1574 = vrot.lane.b32.xlu0 %v1333, 126
  %v1575 = vpop.permute.xlu0 %1574
  %1576 = vrot.lane.b32.xlu0 %v1336, 126
  %v1577 = vpop.permute.xlu0 %1576
  %1580 = vxpose.xlu0.b32.start [1/16] %v1575, 128
  %1581 = vxpose.xlu0.b32.cont [2/16] %v1577, 128
  %1582 = vxpose.xlu0.b32.cont [3/16] 0.0, 128
  %1583 = vxpose.xlu0.b32.cont [4/16] 0.0, 128
  %1584 = vxpose.xlu0.b32.cont [5/16] 0.0, 128
  %1585 = vxpose.xlu0.b32.cont [6/16] 0.0, 128
  %1586 = vxpose.xlu0.b32.cont [7/16] 0.0, 128
  %1587 = vxpose.xlu0.b32.cont [8/16] 0.0, 128
  %1588 = vxpose.xlu0.b32.cont [9/16] 0.0, 128
  %1589 = vxpose.xlu0.b32.cont [10/16] 0.0, 128
  %1590 = vxpose.xlu0.b32.cont [11/16] 0.0, 128
  %1591 = vxpose.xlu0.b32.cont [12/16] 0.0, 128
  %1592 = vxpose.xlu0.b32.cont [13/16] 0.0, 128
  %1593 = vxpose.xlu0.b32.cont [14/16] 0.0, 128
  %1594 = vxpose.xlu0.b32.cont [15/16] 0.0, 128
  %1595 = vxpose.xlu0.b32.end [16/16] 0.0, 128
  %v1596 = vpop.trf.xlu0
  %v1597 = vpop.trf.xlu0
  %v1598 = vpop.trf.xlu0
  %v1599 = vpop.trf.xlu0
  %v1600 = vpop.trf.xlu0
  %v1601 = vpop.trf.xlu0
  %v1602 = vpop.trf.xlu0
  %v1603 = vpop.trf.xlu0
  %v1604 = vpop.trf.xlu0
  %v1605 = vpop.trf.xlu0
  %v1606 = vpop.trf.xlu0
  %v1607 = vpop.trf.xlu0
  %v1608 = vpop.trf.xlu0
  %v1609 = vpop.trf.xlu0
  %v1610 = vpop.trf.xlu0
  %v1611 = vpop.trf.xlu0
  %1612 = vset.pattern.permute.xlu0 6
  %1613 = vperm.xlu0 %1612, %v1333
  %v1614 = vpop.permute.xlu0 %1613
  %1616 = vset.pattern.permute.xlu0 6
  %1617 = vperm.xlu0 %1616, %v1336
  %v1618 = vpop.permute.xlu0 %1617
  %v1620 = vperm.slane %v1596, 0
  %v1621 = vadd.f32 %v1614, %v1620
  %v1622 = vadd.f32 %v1618, %v1620
  %vm1623 = vcmp.gt.f32.partialorder %v1621, 0.0
  %vm1624 = vcmp.gt.f32.partialorder %v1622, 0.0
  %v1625 = vmul.f32 %v1621, 0.2
  %v1626 = vmul.f32 %v1622, 0.2
  %v1627 = vsel %vm1623, %v1621, %v1625
  %v1628 = vsel %vm1624, %v1622, %v1626
  %v1629 = vadd.f32 %v1627, %v126
  %v1630 = vadd.f32 %v1628, %v127
  %v1631 = vsel %vm97, %v1629, -inf
  %1632 = vmax.xlane.f32.xlu0 %v1631
  %v1633 = vpop.xlane.xlu0 %1632
  %v1634 = vsel %vm97, %v1630, -inf
  %1635 = vmax.xlane.f32.xlu0 %v1634
  %v1636 = vpop.xlane.xlu0 %1635
  %v1637 = vsel %vm134, %v1633, 0.0
  %v1638 = vsel %vm135, %v1636, 0.0
  %v1639 = vsub.f32 %v1629, %v1637
  %v1640 = vsub.f32 %v1630, %v1638
  %v1641 = vmul.f32 %v1639, 1.442695
  %v1642 = vpow.pop %v1641
  %v1643 = vmul.f32 %v1640, 1.442695
  %v1644 = vpow.pop %v1643
  %v1645 = vmul.f32 %v122, %v1642
  %v1646 = vmul.f32 %v123, %v1644
  %v1647 = vsel %vm97, %v1645, 0.0
  %1648 = vadd.xlane.f32.xlu0 %v1647
  %v1649 = vpop.xlane.xlu0 %1648
  %v1650 = vsel %vm97, %v1646, 0.0
  %1651 = vadd.xlane.f32.xlu0 %v1650
  %v1652 = vpop.xlane.xlu0 %1651
  %vm1653 = vcmp.gt.f32.partialorder %v1649, 0.0
  %vm1654 = vcmp.gt.f32.partialorder %v1652, 0.0
  %v1655 = vsel %vm1653, %v1649, 1.0
  %v1656 = vsel %vm1654, %v1652, 1.0
  %v1657 = vrcp.pop %v1655
  %v1658 = vrcp.pop %v1656
  %v1659 = vmul.f32 %v1645, %v1657
  %v1660 = vmul.f32 %v1646, %v1658
  %1661 = vrot.lane.b32.xlu0 %v1310, 64
  %v1662 = vpop.permute.xlu0 %1661
  %1663 = vrot.lane.b32.xlu0 %v1313, 64
  %v1664 = vpop.permute.xlu0 %1663
  %v1668 = vsel %vm97, %v1659, 0
  %v1671 = vsel %vm97, %v1660, 0
  %1673 = vmatpush.msra.mxu0 0.0
  %1674 = vmatpush.msra.mxu0 0.0
  %1675 = vmatpush.msra.mxu0 0.0
  %1676 = vmatpush.msra.mxu0 0.0
  %1677 = vmatpush.msra.mxu0 0.0
  %1678 = vmatpush.msra.mxu0 0.0
  %1679 = vmatpush.msra.mxu0 0.0
  %1680 = vmatpush.msra.mxu0 0.0
  %1681 = vmatpush.msra.mxu0 0.0
  %1682 = vmatpush.msra.mxu0 0.0
  %1683 = vmatpush.msra.mxu0 0.0
  %1684 = vmatpush.msra.mxu0 0.0
  %1685 = vmatpush.msra.mxu0 0.0
  %1686 = vmatpush.msra.mxu0 0.0
  %1687 = vmatpush.msra.mxu0 %v1664
  %1688 = vmatpush.msra.mxu0 %v1662
  %1689 = vmatmul.f32.gmra.mxu0 %v1668
  %v1690 = vpop.f32.mrf.mxu0
  %v1691 = vadd.f32 0.0, %v1690
  %1692 = vmatmul.f32.gmra.mxu0 %v1671
  %v1693 = vpop.f32.mrf.mxu0
  %v1694 = vadd.f32 0.0, %v1693
  %1695 = vdwg.mxu0
  %v1696 = vadd.f32 %v1569, %v1691
  %v1697 = vadd.f32 %v1572, %v1694
  %1698 = vrot.lane.b32.xlu0 %v1333, 125
  %v1699 = vpop.permute.xlu0 %1698
  %1700 = vrot.lane.b32.xlu0 %v1336, 125
  %v1701 = vpop.permute.xlu0 %1700
  %1704 = vxpose.xlu0.b32.start [1/16] %v1699, 128
  %1705 = vxpose.xlu0.b32.cont [2/16] %v1701, 128
  %1706 = vxpose.xlu0.b32.cont [3/16] 0.0, 128
  %1707 = vxpose.xlu0.b32.cont [4/16] 0.0, 128
  %1708 = vxpose.xlu0.b32.cont [5/16] 0.0, 128
  %1709 = vxpose.xlu0.b32.cont [6/16] 0.0, 128
  %1710 = vxpose.xlu0.b32.cont [7/16] 0.0, 128
  %1711 = vxpose.xlu0.b32.cont [8/16] 0.0, 128
  %1712 = vxpose.xlu0.b32.cont [9/16] 0.0, 128
  %1713 = vxpose.xlu0.b32.cont [10/16] 0.0, 128
  %1714 = vxpose.xlu0.b32.cont [11/16] 0.0, 128
  %1715 = vxpose.xlu0.b32.cont [12/16] 0.0, 128
  %1716 = vxpose.xlu0.b32.cont [13/16] 0.0, 128
  %1717 = vxpose.xlu0.b32.cont [14/16] 0.0, 128
  %1718 = vxpose.xlu0.b32.cont [15/16] 0.0, 128
  %1719 = vxpose.xlu0.b32.end [16/16] 0.0, 128
  %v1720 = vpop.trf.xlu0
  %v1721 = vpop.trf.xlu0
  %v1722 = vpop.trf.xlu0
  %v1723 = vpop.trf.xlu0
  %v1724 = vpop.trf.xlu0
  %v1725 = vpop.trf.xlu0
  %v1726 = vpop.trf.xlu0
  %v1727 = vpop.trf.xlu0
  %v1728 = vpop.trf.xlu0
  %v1729 = vpop.trf.xlu0
  %v1730 = vpop.trf.xlu0
  %v1731 = vpop.trf.xlu0
  %v1732 = vpop.trf.xlu0
  %v1733 = vpop.trf.xlu0
  %v1734 = vpop.trf.xlu0
  %v1735 = vpop.trf.xlu0
  %1736 = vset.pattern.permute.xlu0 7
  %1737 = vperm.xlu0 %1736, %v1333
  %v1738 = vpop.permute.xlu0 %1737
  %1740 = vset.pattern.permute.xlu0 7
  %1741 = vperm.xlu0 %1740, %v1336
  %v1742 = vpop.permute.xlu0 %1741
  %v1744 = vperm.slane %v1720, 0
  %v1745 = vadd.f32 %v1738, %v1744
  %v1746 = vadd.f32 %v1742, %v1744
  %vm1747 = vcmp.gt.f32.partialorder %v1745, 0.0
  %vm1748 = vcmp.gt.f32.partialorder %v1746, 0.0
  %v1749 = vmul.f32 %v1745, 0.2
  %v1750 = vmul.f32 %v1746, 0.2
  %v1751 = vsel %vm1747, %v1745, %v1749
  %v1752 = vsel %vm1748, %v1746, %v1750
  %v1753 = vadd.f32 %v1751, %v126
  %v1754 = vadd.f32 %v1752, %v127
  %v1755 = vsel %vm97, %v1753, -inf
  %1756 = vmax.xlane.f32.xlu0 %v1755
  %v1757 = vpop.xlane.xlu0 %1756
  %v1758 = vsel %vm97, %v1754, -inf
  %1759 = vmax.xlane.f32.xlu0 %v1758
  %v1760 = vpop.xlane.xlu0 %1759
  %v1761 = vsel %vm134, %v1757, 0.0
  %v1762 = vsel %vm135, %v1760, 0.0
  %v1763 = vsub.f32 %v1753, %v1761
  %v1764 = vsub.f32 %v1754, %v1762
  %v1765 = vmul.f32 %v1763, 1.442695
  %v1766 = vpow.pop %v1765
  %v1767 = vmul.f32 %v1764, 1.442695
  %v1768 = vpow.pop %v1767
  %v1769 = vmul.f32 %v122, %v1766
  %v1770 = vmul.f32 %v123, %v1768
  %v1771 = vsel %vm97, %v1769, 0.0
  %1772 = vadd.xlane.f32.xlu0 %v1771
  %v1773 = vpop.xlane.xlu0 %1772
  %v1774 = vsel %vm97, %v1770, 0.0
  %1775 = vadd.xlane.f32.xlu0 %v1774
  %v1776 = vpop.xlane.xlu0 %1775
  %vm1777 = vcmp.gt.f32.partialorder %v1773, 0.0
  %vm1778 = vcmp.gt.f32.partialorder %v1776, 0.0
  %v1779 = vsel %vm1777, %v1773, 1.0
  %v1780 = vsel %vm1778, %v1776, 1.0
  %v1781 = vrcp.pop %v1779
  %v1782 = vrcp.pop %v1780
  %v1783 = vmul.f32 %v1769, %v1781
  %v1784 = vmul.f32 %v1770, %v1782
  %1785 = vrot.lane.b32.xlu0 %v1310, 32
  %v1786 = vpop.permute.xlu0 %1785
  %1787 = vrot.lane.b32.xlu0 %v1313, 32
  %v1788 = vpop.permute.xlu0 %1787
  %v1792 = vsel %vm97, %v1783, 0
  %v1795 = vsel %vm97, %v1784, 0
  %1797 = vmatpush.msra.mxu0 0.0
  %1798 = vmatpush.msra.mxu0 0.0
  %1799 = vmatpush.msra.mxu0 0.0
  %1800 = vmatpush.msra.mxu0 0.0
  %1801 = vmatpush.msra.mxu0 0.0
  %1802 = vmatpush.msra.mxu0 0.0
  %1803 = vmatpush.msra.mxu0 0.0
  %1804 = vmatpush.msra.mxu0 0.0
  %1805 = vmatpush.msra.mxu0 0.0
  %1806 = vmatpush.msra.mxu0 0.0
  %1807 = vmatpush.msra.mxu0 0.0
  %1808 = vmatpush.msra.mxu0 0.0
  %1809 = vmatpush.msra.mxu0 0.0
  %1810 = vmatpush.msra.mxu0 0.0
  %1811 = vmatpush.msra.mxu0 %v1788
  %1812 = vmatpush.msra.mxu0 %v1786
  %1813 = vmatmul.f32.gmra.mxu0 %v1792
  %v1814 = vpop.f32.mrf.mxu0
  %v1815 = vadd.f32 0.0, %v1814
  %1816 = vmatmul.f32.gmra.mxu0 %v1795
  %v1817 = vpop.f32.mrf.mxu0
  %v1818 = vadd.f32 0.0, %v1817
  %1819 = vdwg.mxu0
  %v1820 = vadd.f32 %v1696, %v1815
  %v1821 = vadd.f32 %v1697, %v1818
  %v1822 = vmul.f32 %v1820, 0.25
  %v1823 = vmul.f32 %v1821, 0.25
  %v1825 = vperm.slane %v1285, 0
  %v1827 = vadd.f32 %v1822, %v1825
  %v1828 = vadd.f32 %v1823, %v1825
  %v1829 = vadd.f32 %v699, %v1827
  %v1830 = vadd.f32 %v700, %v1828
  %v1831 = vadd.f32 %v1829, %v89
  %v1832 = vadd.f32 %v1830, %v90
  %v1833 = vld [vmem:[%s6] sm:$0x1]
  %v1835 = vperm.slane %v1833, 0
  %v1837 = vmul.f32 %v1831, %v1835
  %v1838 = vmul.f32 %v1832, %v1835
  %v1839 = vld [vmem:[%s7] sm:$0x1]
  %v1841 = vperm.slane %v1839, 0
  %v1843 = vadd.f32 %v1837, %v1841
  %v1844 = vadd.f32 %v1838, %v1841
  %v1845 = vmax.f32 %v1843, 0.0
  %v1846 = vmax.f32 %v1844, 0.0
  %s1847 = scalar_lea.vmem %s3, 96
  %v1848 = vld [vmem:[%s1847] sm:$0xff]
  %v1849 = vld [vmem:[%s1847 + $0x8] sm:$0xff]
  %v1850 = vld [vmem:[%s1847 + $0x10] sm:$0xff]
  %v1851 = vld [vmem:[%s1847 + $0x18] sm:$0xff]
  %s1852 = scalar_lea.vmem %s4, 384
  %v1853 = vld [vmem:[%s1852] sm:$0xff]
  %v1854 = vld [vmem:[%s1852 + $0x8] sm:$0xff]
  %v1855 = vld [vmem:[%s1852 + $0x10] sm:$0xff]
  %v1856 = vld [vmem:[%s1852 + $0x18] sm:$0xff]
  %v1857 = vld [vmem:[%s1852 + $0x20] sm:$0xff]
  %v1858 = vld [vmem:[%s1852 + $0x28] sm:$0xff]
  %v1859 = vld [vmem:[%s1852 + $0x30] sm:$0xff]
  %v1860 = vld [vmem:[%s1852 + $0x38] sm:$0xff]
  %v1861 = vld [vmem:[%s1852 + $0x40] sm:$0xff]
  %v1862 = vld [vmem:[%s1852 + $0x48] sm:$0xff]
  %v1863 = vld [vmem:[%s1852 + $0x50] sm:$0xff]
  %v1864 = vld [vmem:[%s1852 + $0x58] sm:$0xff]
  %v1865 = vld [vmem:[%s1852 + $0x60] sm:$0xff]
  %v1866 = vld [vmem:[%s1852 + $0x68] sm:$0xff]
  %v1867 = vld [vmem:[%s1852 + $0x70] sm:$0xff]
  %v1868 = vld [vmem:[%s1852 + $0x78] sm:$0xff]
  %s1869 = scalar_lea.vmem %s5, 3
  %v1870 = vld [vmem:[%s1869] sm:$0x1]
  %v1872 = vsel %vm157, %v1845, 0
  %v1875 = vsel %vm157, %v1846, 0
  %1877 = vmatpush.msra.mxu0 0.0
  %1878 = vmatpush.msra.mxu0 0.0
  %1879 = vmatpush.msra.mxu0 0.0
  %1880 = vmatpush.msra.mxu0 0.0
  %1881 = vmatpush.msra.mxu0 0.0
  %1882 = vmatpush.msra.mxu0 0.0
  %1883 = vmatpush.msra.mxu0 0.0
  %1884 = vmatpush.msra.mxu0 0.0
  %1885 = vmatpush.msra.mxu0 0.0
  %1886 = vmatpush.msra.mxu0 0.0
  %1887 = vmatpush.msra.mxu0 0.0
  %1888 = vmatpush.msra.mxu0 0.0
  %1889 = vmatpush.msra.mxu0 %v1851
  %1890 = vmatpush.msra.mxu0 %v1850
  %1891 = vmatpush.msra.mxu0 %v1849
  %1892 = vmatpush.msra.mxu0 %v1848
  %1893 = vmatmul.f32.gmra.mxu0 %v1872
  %v1894 = vpop.f32.mrf.mxu0
  %v1895 = vadd.f32 0.0, %v1894
  %1896 = vmatmul.f32.gmra.mxu0 %v1875
  %v1897 = vpop.f32.mrf.mxu0
  %v1898 = vadd.f32 0.0, %v1897
  %1899 = vdwg.mxu0
  %1900 = vmatpush.msra.mxu0 %v1868
  %1901 = vmatpush.msra.mxu0 %v1867
  %1902 = vmatpush.msra.mxu0 %v1866
  %1903 = vmatpush.msra.mxu0 %v1865
  %1904 = vmatpush.msra.mxu0 %v1864
  %1905 = vmatpush.msra.mxu0 %v1863
  %1906 = vmatpush.msra.mxu0 %v1862
  %1907 = vmatpush.msra.mxu0 %v1861
  %1908 = vmatpush.msra.mxu0 %v1860
  %1909 = vmatpush.msra.mxu0 %v1859
  %1910 = vmatpush.msra.mxu0 %v1858
  %1911 = vmatpush.msra.mxu0 %v1857
  %1912 = vmatpush.msra.mxu0 %v1856
  %1913 = vmatpush.msra.mxu0 %v1855
  %1914 = vmatpush.msra.mxu0 %v1854
  %1915 = vmatpush.msra.mxu0 %v1853
  %1916 = vmatmul.f32.gmra.mxu0 %v1895
  %v1917 = vpop.f32.mrf.mxu0
  %v1918 = vadd.f32 0.0, %v1917
  %1919 = vmatmul.f32.gmra.mxu0 %v1898
  %v1920 = vpop.f32.mrf.mxu0
  %v1921 = vadd.f32 0.0, %v1920
  %1922 = vdwg.mxu0
  %1923 = vxpose.xlu0.b32.start [1/16] %v1918, 128
  %1924 = vxpose.xlu0.b32.cont [2/16] %v1921, 128
  %1925 = vxpose.xlu0.b32.cont [3/16] 0.0, 128
  %1926 = vxpose.xlu0.b32.cont [4/16] 0.0, 128
  %1927 = vxpose.xlu0.b32.cont [5/16] 0.0, 128
  %1928 = vxpose.xlu0.b32.cont [6/16] 0.0, 128
  %1929 = vxpose.xlu0.b32.cont [7/16] 0.0, 128
  %1930 = vxpose.xlu0.b32.cont [8/16] 0.0, 128
  %1931 = vxpose.xlu0.b32.cont [9/16] 0.0, 128
  %1932 = vxpose.xlu0.b32.cont [10/16] 0.0, 128
  %1933 = vxpose.xlu0.b32.cont [11/16] 0.0, 128
  %1934 = vxpose.xlu0.b32.cont [12/16] 0.0, 128
  %1935 = vxpose.xlu0.b32.cont [13/16] 0.0, 128
  %1936 = vxpose.xlu0.b32.cont [14/16] 0.0, 128
  %1937 = vxpose.xlu0.b32.cont [15/16] 0.0, 128
  %1938 = vxpose.xlu0.b32.end [16/16] 0.0, 128
  %v1939 = vpop.trf.xlu0
  %v1940 = vpop.trf.xlu0
  %v1941 = vpop.trf.xlu0
  %v1942 = vpop.trf.xlu0
  %v1943 = vpop.trf.xlu0
  %v1944 = vpop.trf.xlu0
  %v1945 = vpop.trf.xlu0
  %v1946 = vpop.trf.xlu0
  %v1947 = vpop.trf.xlu0
  %v1948 = vpop.trf.xlu0
  %v1949 = vpop.trf.xlu0
  %v1950 = vpop.trf.xlu0
  %v1951 = vpop.trf.xlu0
  %v1952 = vpop.trf.xlu0
  %v1953 = vpop.trf.xlu0
  %v1954 = vpop.trf.xlu0
  %1956 = vset.pattern.permute.xlu0 4
  %1957 = vperm.xlu0 %1956, %v1918
  %v1958 = vpop.permute.xlu0 %1957
  %1961 = vset.pattern.permute.xlu0 4
  %1962 = vperm.xlu0 %1961, %v1921
  %v1963 = vpop.permute.xlu0 %1962
  %v1965 = vperm.slane %v1939, 0
  %v1966 = vadd.f32 %v1958, %v1965
  %v1967 = vadd.f32 %v1963, %v1965
  %vm1968 = vcmp.gt.f32.partialorder %v1966, 0.0
  %vm1969 = vcmp.gt.f32.partialorder %v1967, 0.0
  %v1970 = vmul.f32 %v1966, 0.2
  %v1971 = vmul.f32 %v1967, 0.2
  %v1972 = vsel %vm1968, %v1966, %v1970
  %v1973 = vsel %vm1969, %v1967, %v1971
  %v1974 = vadd.f32 %v1972, %v95
  %v1975 = vadd.f32 %v1973, %v96
  %v1976 = vsel %vm97, %v1974, -inf
  %1977 = vmax.xlane.f32.xlu0 %v1976
  %v1978 = vpop.xlane.xlu0 %1977
  %v1979 = vsel %vm97, %v1975, -inf
  %1980 = vmax.xlane.f32.xlu0 %v1979
  %v1981 = vpop.xlane.xlu0 %1980
  %v1982 = vsel %vm104, %v1978, 0.0
  %v1983 = vsel %vm105, %v1981, 0.0
  %v1984 = vsub.f32 %v1974, %v1982
  %v1985 = vsub.f32 %v1975, %v1983
  %v1986 = vmul.f32 %v1984, 1.442695
  %v1987 = vpow.pop %v1986
  %v1988 = vmul.f32 %v1985, 1.442695
  %v1989 = vpow.pop %v1988
  %v1990 = vmul.f32 %v91, %v1987
  %v1991 = vmul.f32 %v92, %v1989
  %v1992 = vsel %vm97, %v1990, 0.0
  %1993 = vadd.xlane.f32.xlu0 %v1992
  %v1994 = vpop.xlane.xlu0 %1993
  %v1995 = vsel %vm97, %v1991, 0.0
  %1996 = vadd.xlane.f32.xlu0 %v1995
  %v1997 = vpop.xlane.xlu0 %1996
  %vm1998 = vcmp.gt.f32.partialorder %v1994, 0.0
  %vm1999 = vcmp.gt.f32.partialorder %v1997, 0.0
  %v2000 = vsel %vm1998, %v1994, 1.0
  %v2001 = vsel %vm1999, %v1997, 1.0
  %v2002 = vrcp.pop %v2000
  %v2003 = vrcp.pop %v2001
  %v2004 = vmul.f32 %v1990, %v2002
  %v2005 = vmul.f32 %v1991, %v2003
  %2006 = vrot.lane.b32.xlu0 %v1918, 127
  %v2007 = vpop.permute.xlu0 %2006
  %2008 = vrot.lane.b32.xlu0 %v1921, 127
  %v2009 = vpop.permute.xlu0 %2008
  %2012 = vxpose.xlu0.b32.start [1/16] %v2007, 128
  %2013 = vxpose.xlu0.b32.cont [2/16] %v2009, 128
  %2014 = vxpose.xlu0.b32.cont [3/16] 0.0, 128
  %2015 = vxpose.xlu0.b32.cont [4/16] 0.0, 128
  %2016 = vxpose.xlu0.b32.cont [5/16] 0.0, 128
  %2017 = vxpose.xlu0.b32.cont [6/16] 0.0, 128
  %2018 = vxpose.xlu0.b32.cont [7/16] 0.0, 128
  %2019 = vxpose.xlu0.b32.cont [8/16] 0.0, 128
  %2020 = vxpose.xlu0.b32.cont [9/16] 0.0, 128
  %2021 = vxpose.xlu0.b32.cont [10/16] 0.0, 128
  %2022 = vxpose.xlu0.b32.cont [11/16] 0.0, 128
  %2023 = vxpose.xlu0.b32.cont [12/16] 0.0, 128
  %2024 = vxpose.xlu0.b32.cont [13/16] 0.0, 128
  %2025 = vxpose.xlu0.b32.cont [14/16] 0.0, 128
  %2026 = vxpose.xlu0.b32.cont [15/16] 0.0, 128
  %2027 = vxpose.xlu0.b32.end [16/16] 0.0, 128
  %v2028 = vpop.trf.xlu0
  %v2029 = vpop.trf.xlu0
  %v2030 = vpop.trf.xlu0
  %v2031 = vpop.trf.xlu0
  %v2032 = vpop.trf.xlu0
  %v2033 = vpop.trf.xlu0
  %v2034 = vpop.trf.xlu0
  %v2035 = vpop.trf.xlu0
  %v2036 = vpop.trf.xlu0
  %v2037 = vpop.trf.xlu0
  %v2038 = vpop.trf.xlu0
  %v2039 = vpop.trf.xlu0
  %v2040 = vpop.trf.xlu0
  %v2041 = vpop.trf.xlu0
  %v2042 = vpop.trf.xlu0
  %v2043 = vpop.trf.xlu0
  %2044 = vset.pattern.permute.xlu0 5
  %2045 = vperm.xlu0 %2044, %v1918
  %v2046 = vpop.permute.xlu0 %2045
  %2048 = vset.pattern.permute.xlu0 5
  %2049 = vperm.xlu0 %2048, %v1921
  %v2050 = vpop.permute.xlu0 %2049
  %v2052 = vperm.slane %v2028, 0
  %v2053 = vadd.f32 %v2046, %v2052
  %v2054 = vadd.f32 %v2050, %v2052
  %vm2055 = vcmp.gt.f32.partialorder %v2053, 0.0
  %vm2056 = vcmp.gt.f32.partialorder %v2054, 0.0
  %v2057 = vmul.f32 %v2053, 0.2
  %v2058 = vmul.f32 %v2054, 0.2
  %v2059 = vsel %vm2055, %v2053, %v2057
  %v2060 = vsel %vm2056, %v2054, %v2058
  %v2061 = vadd.f32 %v2059, %v95
  %v2062 = vadd.f32 %v2060, %v96
  %v2063 = vsel %vm97, %v2061, -inf
  %2064 = vmax.xlane.f32.xlu0 %v2063
  %v2065 = vpop.xlane.xlu0 %2064
  %v2066 = vsel %vm97, %v2062, -inf
  %2067 = vmax.xlane.f32.xlu0 %v2066
  %v2068 = vpop.xlane.xlu0 %2067
  %v2069 = vsel %vm104, %v2065, 0.0
  %v2070 = vsel %vm105, %v2068, 0.0
  %v2071 = vsub.f32 %v2061, %v2069
  %v2072 = vsub.f32 %v2062, %v2070
  %v2073 = vmul.f32 %v2071, 1.442695
  %v2074 = vpow.pop %v2073
  %v2075 = vmul.f32 %v2072, 1.442695
  %v2076 = vpow.pop %v2075
  %v2077 = vmul.f32 %v91, %v2074
  %v2078 = vmul.f32 %v92, %v2076
  %v2079 = vsel %vm97, %v2077, 0.0
  %2080 = vadd.xlane.f32.xlu0 %v2079
  %v2081 = vpop.xlane.xlu0 %2080
  %v2082 = vsel %vm97, %v2078, 0.0
  %2083 = vadd.xlane.f32.xlu0 %v2082
  %v2084 = vpop.xlane.xlu0 %2083
  %vm2085 = vcmp.gt.f32.partialorder %v2081, 0.0
  %vm2086 = vcmp.gt.f32.partialorder %v2084, 0.0
  %v2087 = vsel %vm2085, %v2081, 1.0
  %v2088 = vsel %vm2086, %v2084, 1.0
  %v2089 = vrcp.pop %v2087
  %v2090 = vrcp.pop %v2088
  %v2091 = vmul.f32 %v2077, %v2089
  %v2092 = vmul.f32 %v2078, %v2090
  %2095 = vrot.lane.b32.xlu0 %v1895, 96
  %v2096 = vpop.permute.xlu0 %2095
  %2097 = vrot.lane.b32.xlu0 %v1898, 96
  %v2098 = vpop.permute.xlu0 %2097
  %v2102 = vsel %vm97, %v2091, 0
  %v2105 = vsel %vm97, %v2092, 0
  %2107 = vmatpush.msra.mxu0 0.0
  %2108 = vmatpush.msra.mxu0 0.0
  %2109 = vmatpush.msra.mxu0 0.0
  %2110 = vmatpush.msra.mxu0 0.0
  %2111 = vmatpush.msra.mxu0 0.0
  %2112 = vmatpush.msra.mxu0 0.0
  %2113 = vmatpush.msra.mxu0 0.0
  %2114 = vmatpush.msra.mxu0 0.0
  %2115 = vmatpush.msra.mxu0 0.0
  %2116 = vmatpush.msra.mxu0 0.0
  %2117 = vmatpush.msra.mxu0 0.0
  %2118 = vmatpush.msra.mxu0 0.0
  %2119 = vmatpush.msra.mxu0 0.0
  %2120 = vmatpush.msra.mxu0 0.0
  %2121 = vmatpush.msra.mxu0 %v2098
  %2122 = vmatpush.msra.mxu0 %v2096
  %2123 = vmatmul.f32.gmra.mxu0 %v2102
  %v2124 = vpop.f32.mrf.mxu0
  %v2125 = vadd.f32 0.0, %v2124
  %2126 = vmatmul.f32.gmra.mxu0 %v2105
  %v2127 = vpop.f32.mrf.mxu0
  %v2128 = vadd.f32 0.0, %v2127
  %2129 = vdwg.mxu0
  %v2131 = vsel %vm97, %v2004, 0
  %v2134 = vsel %vm97, %v2005, 0
  %2136 = vmatpush.msra.mxu0 0.0
  %2137 = vmatpush.msra.mxu0 0.0
  %2138 = vmatpush.msra.mxu0 0.0
  %2139 = vmatpush.msra.mxu0 0.0
  %2140 = vmatpush.msra.mxu0 0.0
  %2141 = vmatpush.msra.mxu0 0.0
  %2142 = vmatpush.msra.mxu0 0.0
  %2143 = vmatpush.msra.mxu0 0.0
  %2144 = vmatpush.msra.mxu0 0.0
  %2145 = vmatpush.msra.mxu0 0.0
  %2146 = vmatpush.msra.mxu0 0.0
  %2147 = vmatpush.msra.mxu0 0.0
  %2148 = vmatpush.msra.mxu0 0.0
  %2149 = vmatpush.msra.mxu0 0.0
  %2150 = vmatpush.msra.mxu0 %v1898
  %2151 = vmatpush.msra.mxu0 %v1895
  %2152 = vmatmul.f32.gmra.mxu0 %v2131
  %v2153 = vpop.f32.mrf.mxu0
  %v2154 = vadd.f32 %v2125, %v2153
  %2155 = vmatmul.f32.gmra.mxu0 %v2134
  %v2156 = vpop.f32.mrf.mxu0
  %v2157 = vadd.f32 %v2128, %v2156
  %2158 = vdwg.mxu0
  %2159 = vrot.lane.b32.xlu0 %v1918, 126
  %v2160 = vpop.permute.xlu0 %2159
  %2161 = vrot.lane.b32.xlu0 %v1921, 126
  %v2162 = vpop.permute.xlu0 %2161
  %2165 = vxpose.xlu0.b32.start [1/16] %v2160, 128
  %2166 = vxpose.xlu0.b32.cont [2/16] %v2162, 128
  %2167 = vxpose.xlu0.b32.cont [3/16] 0.0, 128
  %2168 = vxpose.xlu0.b32.cont [4/16] 0.0, 128
  %2169 = vxpose.xlu0.b32.cont [5/16] 0.0, 128
  %2170 = vxpose.xlu0.b32.cont [6/16] 0.0, 128
  %2171 = vxpose.xlu0.b32.cont [7/16] 0.0, 128
  %2172 = vxpose.xlu0.b32.cont [8/16] 0.0, 128
  %2173 = vxpose.xlu0.b32.cont [9/16] 0.0, 128
  %2174 = vxpose.xlu0.b32.cont [10/16] 0.0, 128
  %2175 = vxpose.xlu0.b32.cont [11/16] 0.0, 128
  %2176 = vxpose.xlu0.b32.cont [12/16] 0.0, 128
  %2177 = vxpose.xlu0.b32.cont [13/16] 0.0, 128
  %2178 = vxpose.xlu0.b32.cont [14/16] 0.0, 128
  %2179 = vxpose.xlu0.b32.cont [15/16] 0.0, 128
  %2180 = vxpose.xlu0.b32.end [16/16] 0.0, 128
  %v2181 = vpop.trf.xlu0
  %v2182 = vpop.trf.xlu0
  %v2183 = vpop.trf.xlu0
  %v2184 = vpop.trf.xlu0
  %v2185 = vpop.trf.xlu0
  %v2186 = vpop.trf.xlu0
  %v2187 = vpop.trf.xlu0
  %v2188 = vpop.trf.xlu0
  %v2189 = vpop.trf.xlu0
  %v2190 = vpop.trf.xlu0
  %v2191 = vpop.trf.xlu0
  %v2192 = vpop.trf.xlu0
  %v2193 = vpop.trf.xlu0
  %v2194 = vpop.trf.xlu0
  %v2195 = vpop.trf.xlu0
  %v2196 = vpop.trf.xlu0
  %2197 = vset.pattern.permute.xlu0 6
  %2198 = vperm.xlu0 %2197, %v1918
  %v2199 = vpop.permute.xlu0 %2198
  %2201 = vset.pattern.permute.xlu0 6
  %2202 = vperm.xlu0 %2201, %v1921
  %v2203 = vpop.permute.xlu0 %2202
  %v2205 = vperm.slane %v2181, 0
  %v2206 = vadd.f32 %v2199, %v2205
  %v2207 = vadd.f32 %v2203, %v2205
  %vm2208 = vcmp.gt.f32.partialorder %v2206, 0.0
  %vm2209 = vcmp.gt.f32.partialorder %v2207, 0.0
  %v2210 = vmul.f32 %v2206, 0.2
  %v2211 = vmul.f32 %v2207, 0.2
  %v2212 = vsel %vm2208, %v2206, %v2210
  %v2213 = vsel %vm2209, %v2207, %v2211
  %v2214 = vadd.f32 %v2212, %v95
  %v2215 = vadd.f32 %v2213, %v96
  %v2216 = vsel %vm97, %v2214, -inf
  %2217 = vmax.xlane.f32.xlu0 %v2216
  %v2218 = vpop.xlane.xlu0 %2217
  %v2219 = vsel %vm97, %v2215, -inf
  %2220 = vmax.xlane.f32.xlu0 %v2219
  %v2221 = vpop.xlane.xlu0 %2220
  %v2222 = vsel %vm104, %v2218, 0.0
  %v2223 = vsel %vm105, %v2221, 0.0
  %v2224 = vsub.f32 %v2214, %v2222
  %v2225 = vsub.f32 %v2215, %v2223
  %v2226 = vmul.f32 %v2224, 1.442695
  %v2227 = vpow.pop %v2226
  %v2228 = vmul.f32 %v2225, 1.442695
  %v2229 = vpow.pop %v2228
  %v2230 = vmul.f32 %v91, %v2227
  %v2231 = vmul.f32 %v92, %v2229
  %v2232 = vsel %vm97, %v2230, 0.0
  %2233 = vadd.xlane.f32.xlu0 %v2232
  %v2234 = vpop.xlane.xlu0 %2233
  %v2235 = vsel %vm97, %v2231, 0.0
  %2236 = vadd.xlane.f32.xlu0 %v2235
  %v2237 = vpop.xlane.xlu0 %2236
  %vm2238 = vcmp.gt.f32.partialorder %v2234, 0.0
  %vm2239 = vcmp.gt.f32.partialorder %v2237, 0.0
  %v2240 = vsel %vm2238, %v2234, 1.0
  %v2241 = vsel %vm2239, %v2237, 1.0
  %v2242 = vrcp.pop %v2240
  %v2243 = vrcp.pop %v2241
  %v2244 = vmul.f32 %v2230, %v2242
  %v2245 = vmul.f32 %v2231, %v2243
  %2246 = vrot.lane.b32.xlu0 %v1895, 64
  %v2247 = vpop.permute.xlu0 %2246
  %2248 = vrot.lane.b32.xlu0 %v1898, 64
  %v2249 = vpop.permute.xlu0 %2248
  %v2253 = vsel %vm97, %v2244, 0
  %v2256 = vsel %vm97, %v2245, 0
  %2258 = vmatpush.msra.mxu0 0.0
  %2259 = vmatpush.msra.mxu0 0.0
  %2260 = vmatpush.msra.mxu0 0.0
  %2261 = vmatpush.msra.mxu0 0.0
  %2262 = vmatpush.msra.mxu0 0.0
  %2263 = vmatpush.msra.mxu0 0.0
  %2264 = vmatpush.msra.mxu0 0.0
  %2265 = vmatpush.msra.mxu0 0.0
  %2266 = vmatpush.msra.mxu0 0.0
  %2267 = vmatpush.msra.mxu0 0.0
  %2268 = vmatpush.msra.mxu0 0.0
  %2269 = vmatpush.msra.mxu0 0.0
  %2270 = vmatpush.msra.mxu0 0.0
  %2271 = vmatpush.msra.mxu0 0.0
  %2272 = vmatpush.msra.mxu0 %v2249
  %2273 = vmatpush.msra.mxu0 %v2247
  %2274 = vmatmul.f32.gmra.mxu0 %v2253
  %v2275 = vpop.f32.mrf.mxu0
  %v2276 = vadd.f32 0.0, %v2275
  %2277 = vmatmul.f32.gmra.mxu0 %v2256
  %v2278 = vpop.f32.mrf.mxu0
  %v2279 = vadd.f32 0.0, %v2278
  %2280 = vdwg.mxu0
  %v2281 = vadd.f32 %v2154, %v2276
  %v2282 = vadd.f32 %v2157, %v2279
  %2283 = vrot.lane.b32.xlu0 %v1918, 125
  %v2284 = vpop.permute.xlu0 %2283
  %2285 = vrot.lane.b32.xlu0 %v1921, 125
  %v2286 = vpop.permute.xlu0 %2285
  %2289 = vxpose.xlu0.b32.start [1/16] %v2284, 128
  %2290 = vxpose.xlu0.b32.cont [2/16] %v2286, 128
  %2291 = vxpose.xlu0.b32.cont [3/16] 0.0, 128
  %2292 = vxpose.xlu0.b32.cont [4/16] 0.0, 128
  %2293 = vxpose.xlu0.b32.cont [5/16] 0.0, 128
  %2294 = vxpose.xlu0.b32.cont [6/16] 0.0, 128
  %2295 = vxpose.xlu0.b32.cont [7/16] 0.0, 128
  %2296 = vxpose.xlu0.b32.cont [8/16] 0.0, 128
  %2297 = vxpose.xlu0.b32.cont [9/16] 0.0, 128
  %2298 = vxpose.xlu0.b32.cont [10/16] 0.0, 128
  %2299 = vxpose.xlu0.b32.cont [11/16] 0.0, 128
  %2300 = vxpose.xlu0.b32.cont [12/16] 0.0, 128
  %2301 = vxpose.xlu0.b32.cont [13/16] 0.0, 128
  %2302 = vxpose.xlu0.b32.cont [14/16] 0.0, 128
  %2303 = vxpose.xlu0.b32.cont [15/16] 0.0, 128
  %2304 = vxpose.xlu0.b32.end [16/16] 0.0, 128
  %v2305 = vpop.trf.xlu0
  %v2306 = vpop.trf.xlu0
  %v2307 = vpop.trf.xlu0
  %v2308 = vpop.trf.xlu0
  %v2309 = vpop.trf.xlu0
  %v2310 = vpop.trf.xlu0
  %v2311 = vpop.trf.xlu0
  %v2312 = vpop.trf.xlu0
  %v2313 = vpop.trf.xlu0
  %v2314 = vpop.trf.xlu0
  %v2315 = vpop.trf.xlu0
  %v2316 = vpop.trf.xlu0
  %v2317 = vpop.trf.xlu0
  %v2318 = vpop.trf.xlu0
  %v2319 = vpop.trf.xlu0
  %v2320 = vpop.trf.xlu0
  %2321 = vset.pattern.permute.xlu0 7
  %2322 = vperm.xlu0 %2321, %v1918
  %v2323 = vpop.permute.xlu0 %2322
  %2325 = vset.pattern.permute.xlu0 7
  %2326 = vperm.xlu0 %2325, %v1921
  %v2327 = vpop.permute.xlu0 %2326
  %v2329 = vperm.slane %v2305, 0
  %v2330 = vadd.f32 %v2323, %v2329
  %v2331 = vadd.f32 %v2327, %v2329
  %vm2332 = vcmp.gt.f32.partialorder %v2330, 0.0
  %vm2333 = vcmp.gt.f32.partialorder %v2331, 0.0
  %v2334 = vmul.f32 %v2330, 0.2
  %v2335 = vmul.f32 %v2331, 0.2
  %v2336 = vsel %vm2332, %v2330, %v2334
  %v2337 = vsel %vm2333, %v2331, %v2335
  %v2338 = vadd.f32 %v2336, %v95
  %v2339 = vadd.f32 %v2337, %v96
  %v2340 = vsel %vm97, %v2338, -inf
  %2341 = vmax.xlane.f32.xlu0 %v2340
  %v2342 = vpop.xlane.xlu0 %2341
  %v2343 = vsel %vm97, %v2339, -inf
  %2344 = vmax.xlane.f32.xlu0 %v2343
  %v2345 = vpop.xlane.xlu0 %2344
  %v2346 = vsel %vm104, %v2342, 0.0
  %v2347 = vsel %vm105, %v2345, 0.0
  %v2348 = vsub.f32 %v2338, %v2346
  %v2349 = vsub.f32 %v2339, %v2347
  %v2350 = vmul.f32 %v2348, 1.442695
  %v2351 = vpow.pop %v2350
  %v2352 = vmul.f32 %v2349, 1.442695
  %v2353 = vpow.pop %v2352
  %v2354 = vmul.f32 %v91, %v2351
  %v2355 = vmul.f32 %v92, %v2353
  %v2356 = vsel %vm97, %v2354, 0.0
  %2357 = vadd.xlane.f32.xlu0 %v2356
  %v2358 = vpop.xlane.xlu0 %2357
  %v2359 = vsel %vm97, %v2355, 0.0
  %2360 = vadd.xlane.f32.xlu0 %v2359
  %v2361 = vpop.xlane.xlu0 %2360
  %vm2362 = vcmp.gt.f32.partialorder %v2358, 0.0
  %vm2363 = vcmp.gt.f32.partialorder %v2361, 0.0
  %v2364 = vsel %vm2362, %v2358, 1.0
  %v2365 = vsel %vm2363, %v2361, 1.0
  %v2366 = vrcp.pop %v2364
  %v2367 = vrcp.pop %v2365
  %v2368 = vmul.f32 %v2354, %v2366
  %v2369 = vmul.f32 %v2355, %v2367
  %2370 = vrot.lane.b32.xlu0 %v1895, 32
  %v2371 = vpop.permute.xlu0 %2370
  %2372 = vrot.lane.b32.xlu0 %v1898, 32
  %v2373 = vpop.permute.xlu0 %2372
  %v2377 = vsel %vm97, %v2368, 0
  %v2380 = vsel %vm97, %v2369, 0
  %2382 = vmatpush.msra.mxu0 0.0
  %2383 = vmatpush.msra.mxu0 0.0
  %2384 = vmatpush.msra.mxu0 0.0
  %2385 = vmatpush.msra.mxu0 0.0
  %2386 = vmatpush.msra.mxu0 0.0
  %2387 = vmatpush.msra.mxu0 0.0
  %2388 = vmatpush.msra.mxu0 0.0
  %2389 = vmatpush.msra.mxu0 0.0
  %2390 = vmatpush.msra.mxu0 0.0
  %2391 = vmatpush.msra.mxu0 0.0
  %2392 = vmatpush.msra.mxu0 0.0
  %2393 = vmatpush.msra.mxu0 0.0
  %2394 = vmatpush.msra.mxu0 0.0
  %2395 = vmatpush.msra.mxu0 0.0
  %2396 = vmatpush.msra.mxu0 %v2373
  %2397 = vmatpush.msra.mxu0 %v2371
  %2398 = vmatmul.f32.gmra.mxu0 %v2377
  %v2399 = vpop.f32.mrf.mxu0
  %v2400 = vadd.f32 0.0, %v2399
  %2401 = vmatmul.f32.gmra.mxu0 %v2380
  %v2402 = vpop.f32.mrf.mxu0
  %v2403 = vadd.f32 0.0, %v2402
  %2404 = vdwg.mxu0
  %v2405 = vadd.f32 %v2281, %v2400
  %v2406 = vadd.f32 %v2282, %v2403
  %v2407 = vmul.f32 %v2405, 0.25
  %v2408 = vmul.f32 %v2406, 0.25
  %v2410 = vperm.slane %v1870, 0
  %v2412 = vadd.f32 %v2407, %v2410
  %v2413 = vadd.f32 %v2408, %v2410
  %s2414 = scalar_lea.vmem %s3, 128
  %v2415 = vld [vmem:[%s2414] sm:$0xff]
  %v2416 = vld [vmem:[%s2414 + $0x8] sm:$0xff]
  %v2417 = vld [vmem:[%s2414 + $0x10] sm:$0xff]
  %v2418 = vld [vmem:[%s2414 + $0x18] sm:$0xff]
  %s2419 = scalar_lea.vmem %s4, 512
  %v2420 = vld [vmem:[%s2419] sm:$0xff]
  %v2421 = vld [vmem:[%s2419 + $0x8] sm:$0xff]
  %v2422 = vld [vmem:[%s2419 + $0x10] sm:$0xff]
  %v2423 = vld [vmem:[%s2419 + $0x18] sm:$0xff]
  %v2424 = vld [vmem:[%s2419 + $0x20] sm:$0xff]
  %v2425 = vld [vmem:[%s2419 + $0x28] sm:$0xff]
  %v2426 = vld [vmem:[%s2419 + $0x30] sm:$0xff]
  %v2427 = vld [vmem:[%s2419 + $0x38] sm:$0xff]
  %v2428 = vld [vmem:[%s2419 + $0x40] sm:$0xff]
  %v2429 = vld [vmem:[%s2419 + $0x48] sm:$0xff]
  %v2430 = vld [vmem:[%s2419 + $0x50] sm:$0xff]
  %v2431 = vld [vmem:[%s2419 + $0x58] sm:$0xff]
  %v2432 = vld [vmem:[%s2419 + $0x60] sm:$0xff]
  %v2433 = vld [vmem:[%s2419 + $0x68] sm:$0xff]
  %v2434 = vld [vmem:[%s2419 + $0x70] sm:$0xff]
  %v2435 = vld [vmem:[%s2419 + $0x78] sm:$0xff]
  %s2436 = scalar_lea.vmem %s5, 4
  %v2437 = vld [vmem:[%s2436] sm:$0x1]
  %2438 = vmatpush.msra.mxu0 0.0
  %2439 = vmatpush.msra.mxu0 0.0
  %2440 = vmatpush.msra.mxu0 0.0
  %2441 = vmatpush.msra.mxu0 0.0
  %2442 = vmatpush.msra.mxu0 0.0
  %2443 = vmatpush.msra.mxu0 0.0
  %2444 = vmatpush.msra.mxu0 0.0
  %2445 = vmatpush.msra.mxu0 0.0
  %2446 = vmatpush.msra.mxu0 0.0
  %2447 = vmatpush.msra.mxu0 0.0
  %2448 = vmatpush.msra.mxu0 0.0
  %2449 = vmatpush.msra.mxu0 0.0
  %2450 = vmatpush.msra.mxu0 %v2418
  %2451 = vmatpush.msra.mxu0 %v2417
  %2452 = vmatpush.msra.mxu0 %v2416
  %2453 = vmatpush.msra.mxu0 %v2415
  %2454 = vmatmul.f32.gmra.mxu0 %v1872
  %v2455 = vpop.f32.mrf.mxu0
  %v2456 = vadd.f32 0.0, %v2455
  %2457 = vmatmul.f32.gmra.mxu0 %v1875
  %v2458 = vpop.f32.mrf.mxu0
  %v2459 = vadd.f32 0.0, %v2458
  %2460 = vdwg.mxu0
  %2461 = vmatpush.msra.mxu0 %v2435
  %2462 = vmatpush.msra.mxu0 %v2434
  %2463 = vmatpush.msra.mxu0 %v2433
  %2464 = vmatpush.msra.mxu0 %v2432
  %2465 = vmatpush.msra.mxu0 %v2431
  %2466 = vmatpush.msra.mxu0 %v2430
  %2467 = vmatpush.msra.mxu0 %v2429
  %2468 = vmatpush.msra.mxu0 %v2428
  %2469 = vmatpush.msra.mxu0 %v2427
  %2470 = vmatpush.msra.mxu0 %v2426
  %2471 = vmatpush.msra.mxu0 %v2425
  %2472 = vmatpush.msra.mxu0 %v2424
  %2473 = vmatpush.msra.mxu0 %v2423
  %2474 = vmatpush.msra.mxu0 %v2422
  %2475 = vmatpush.msra.mxu0 %v2421
  %2476 = vmatpush.msra.mxu0 %v2420
  %2477 = vmatmul.f32.gmra.mxu0 %v2456
  %v2478 = vpop.f32.mrf.mxu0
  %v2479 = vadd.f32 0.0, %v2478
  %2480 = vmatmul.f32.gmra.mxu0 %v2459
  %v2481 = vpop.f32.mrf.mxu0
  %v2482 = vadd.f32 0.0, %v2481
  %2483 = vdwg.mxu0
  %2484 = vxpose.xlu0.b32.start [1/16] %v2479, 128
  %2485 = vxpose.xlu0.b32.cont [2/16] %v2482, 128
  %2486 = vxpose.xlu0.b32.cont [3/16] 0.0, 128
  %2487 = vxpose.xlu0.b32.cont [4/16] 0.0, 128
  %2488 = vxpose.xlu0.b32.cont [5/16] 0.0, 128
  %2489 = vxpose.xlu0.b32.cont [6/16] 0.0, 128
  %2490 = vxpose.xlu0.b32.cont [7/16] 0.0, 128
  %2491 = vxpose.xlu0.b32.cont [8/16] 0.0, 128
  %2492 = vxpose.xlu0.b32.cont [9/16] 0.0, 128
  %2493 = vxpose.xlu0.b32.cont [10/16] 0.0, 128
  %2494 = vxpose.xlu0.b32.cont [11/16] 0.0, 128
  %2495 = vxpose.xlu0.b32.cont [12/16] 0.0, 128
  %2496 = vxpose.xlu0.b32.cont [13/16] 0.0, 128
  %2497 = vxpose.xlu0.b32.cont [14/16] 0.0, 128
  %2498 = vxpose.xlu0.b32.cont [15/16] 0.0, 128
  %2499 = vxpose.xlu0.b32.end [16/16] 0.0, 128
  %v2500 = vpop.trf.xlu0
  %v2501 = vpop.trf.xlu0
  %v2502 = vpop.trf.xlu0
  %v2503 = vpop.trf.xlu0
  %v2504 = vpop.trf.xlu0
  %v2505 = vpop.trf.xlu0
  %v2506 = vpop.trf.xlu0
  %v2507 = vpop.trf.xlu0
  %v2508 = vpop.trf.xlu0
  %v2509 = vpop.trf.xlu0
  %v2510 = vpop.trf.xlu0
  %v2511 = vpop.trf.xlu0
  %v2512 = vpop.trf.xlu0
  %v2513 = vpop.trf.xlu0
  %v2514 = vpop.trf.xlu0
  %v2515 = vpop.trf.xlu0
  %2517 = vset.pattern.permute.xlu0 4
  %2518 = vperm.xlu0 %2517, %v2479
  %v2519 = vpop.permute.xlu0 %2518
  %2522 = vset.pattern.permute.xlu0 4
  %2523 = vperm.xlu0 %2522, %v2482
  %v2524 = vpop.permute.xlu0 %2523
  %v2526 = vperm.slane %v2500, 0
  %v2527 = vadd.f32 %v2519, %v2526
  %v2528 = vadd.f32 %v2524, %v2526
  %vm2529 = vcmp.gt.f32.partialorder %v2527, 0.0
  %vm2530 = vcmp.gt.f32.partialorder %v2528, 0.0
  %v2531 = vmul.f32 %v2527, 0.2
  %v2532 = vmul.f32 %v2528, 0.2
  %v2533 = vsel %vm2529, %v2527, %v2531
  %v2534 = vsel %vm2530, %v2528, %v2532
  %v2535 = vadd.f32 %v2533, %v111
  %v2536 = vadd.f32 %v2534, %v112
  %v2537 = vsel %vm97, %v2535, -inf
  %2538 = vmax.xlane.f32.xlu0 %v2537
  %v2539 = vpop.xlane.xlu0 %2538
  %v2540 = vsel %vm97, %v2536, -inf
  %2541 = vmax.xlane.f32.xlu0 %v2540
  %v2542 = vpop.xlane.xlu0 %2541
  %v2543 = vsel %vm119, %v2539, 0.0
  %v2544 = vsel %vm120, %v2542, 0.0
  %v2545 = vsub.f32 %v2535, %v2543
  %v2546 = vsub.f32 %v2536, %v2544
  %v2547 = vmul.f32 %v2545, 1.442695
  %v2548 = vpow.pop %v2547
  %v2549 = vmul.f32 %v2546, 1.442695
  %v2550 = vpow.pop %v2549
  %v2551 = vmul.f32 %v107, %v2548
  %v2552 = vmul.f32 %v108, %v2550
  %v2553 = vsel %vm97, %v2551, 0.0
  %2554 = vadd.xlane.f32.xlu0 %v2553
  %v2555 = vpop.xlane.xlu0 %2554
  %v2556 = vsel %vm97, %v2552, 0.0
  %2557 = vadd.xlane.f32.xlu0 %v2556
  %v2558 = vpop.xlane.xlu0 %2557
  %vm2559 = vcmp.gt.f32.partialorder %v2555, 0.0
  %vm2560 = vcmp.gt.f32.partialorder %v2558, 0.0
  %v2561 = vsel %vm2559, %v2555, 1.0
  %v2562 = vsel %vm2560, %v2558, 1.0
  %v2563 = vrcp.pop %v2561
  %v2564 = vrcp.pop %v2562
  %v2565 = vmul.f32 %v2551, %v2563
  %v2566 = vmul.f32 %v2552, %v2564
  %2567 = vrot.lane.b32.xlu0 %v2479, 127
  %v2568 = vpop.permute.xlu0 %2567
  %2569 = vrot.lane.b32.xlu0 %v2482, 127
  %v2570 = vpop.permute.xlu0 %2569
  %2573 = vxpose.xlu0.b32.start [1/16] %v2568, 128
  %2574 = vxpose.xlu0.b32.cont [2/16] %v2570, 128
  %2575 = vxpose.xlu0.b32.cont [3/16] 0.0, 128
  %2576 = vxpose.xlu0.b32.cont [4/16] 0.0, 128
  %2577 = vxpose.xlu0.b32.cont [5/16] 0.0, 128
  %2578 = vxpose.xlu0.b32.cont [6/16] 0.0, 128
  %2579 = vxpose.xlu0.b32.cont [7/16] 0.0, 128
  %2580 = vxpose.xlu0.b32.cont [8/16] 0.0, 128
  %2581 = vxpose.xlu0.b32.cont [9/16] 0.0, 128
  %2582 = vxpose.xlu0.b32.cont [10/16] 0.0, 128
  %2583 = vxpose.xlu0.b32.cont [11/16] 0.0, 128
  %2584 = vxpose.xlu0.b32.cont [12/16] 0.0, 128
  %2585 = vxpose.xlu0.b32.cont [13/16] 0.0, 128
  %2586 = vxpose.xlu0.b32.cont [14/16] 0.0, 128
  %2587 = vxpose.xlu0.b32.cont [15/16] 0.0, 128
  %2588 = vxpose.xlu0.b32.end [16/16] 0.0, 128
  %v2589 = vpop.trf.xlu0
  %v2590 = vpop.trf.xlu0
  %v2591 = vpop.trf.xlu0
  %v2592 = vpop.trf.xlu0
  %v2593 = vpop.trf.xlu0
  %v2594 = vpop.trf.xlu0
  %v2595 = vpop.trf.xlu0
  %v2596 = vpop.trf.xlu0
  %v2597 = vpop.trf.xlu0
  %v2598 = vpop.trf.xlu0
  %v2599 = vpop.trf.xlu0
  %v2600 = vpop.trf.xlu0
  %v2601 = vpop.trf.xlu0
  %v2602 = vpop.trf.xlu0
  %v2603 = vpop.trf.xlu0
  %v2604 = vpop.trf.xlu0
  %2605 = vset.pattern.permute.xlu0 5
  %2606 = vperm.xlu0 %2605, %v2479
  %v2607 = vpop.permute.xlu0 %2606
  %2609 = vset.pattern.permute.xlu0 5
  %2610 = vperm.xlu0 %2609, %v2482
  %v2611 = vpop.permute.xlu0 %2610
  %v2613 = vperm.slane %v2589, 0
  %v2614 = vadd.f32 %v2607, %v2613
  %v2615 = vadd.f32 %v2611, %v2613
  %vm2616 = vcmp.gt.f32.partialorder %v2614, 0.0
  %vm2617 = vcmp.gt.f32.partialorder %v2615, 0.0
  %v2618 = vmul.f32 %v2614, 0.2
  %v2619 = vmul.f32 %v2615, 0.2
  %v2620 = vsel %vm2616, %v2614, %v2618
  %v2621 = vsel %vm2617, %v2615, %v2619
  %v2622 = vadd.f32 %v2620, %v111
  %v2623 = vadd.f32 %v2621, %v112
  %v2624 = vsel %vm97, %v2622, -inf
  %2625 = vmax.xlane.f32.xlu0 %v2624
  %v2626 = vpop.xlane.xlu0 %2625
  %v2627 = vsel %vm97, %v2623, -inf
  %2628 = vmax.xlane.f32.xlu0 %v2627
  %v2629 = vpop.xlane.xlu0 %2628
  %v2630 = vsel %vm119, %v2626, 0.0
  %v2631 = vsel %vm120, %v2629, 0.0
  %v2632 = vsub.f32 %v2622, %v2630
  %v2633 = vsub.f32 %v2623, %v2631
  %v2634 = vmul.f32 %v2632, 1.442695
  %v2635 = vpow.pop %v2634
  %v2636 = vmul.f32 %v2633, 1.442695
  %v2637 = vpow.pop %v2636
  %v2638 = vmul.f32 %v107, %v2635
  %v2639 = vmul.f32 %v108, %v2637
  %v2640 = vsel %vm97, %v2638, 0.0
  %2641 = vadd.xlane.f32.xlu0 %v2640
  %v2642 = vpop.xlane.xlu0 %2641
  %v2643 = vsel %vm97, %v2639, 0.0
  %2644 = vadd.xlane.f32.xlu0 %v2643
  %v2645 = vpop.xlane.xlu0 %2644
  %vm2646 = vcmp.gt.f32.partialorder %v2642, 0.0
  %vm2647 = vcmp.gt.f32.partialorder %v2645, 0.0
  %v2648 = vsel %vm2646, %v2642, 1.0
  %v2649 = vsel %vm2647, %v2645, 1.0
  %v2650 = vrcp.pop %v2648
  %v2651 = vrcp.pop %v2649
  %v2652 = vmul.f32 %v2638, %v2650
  %v2653 = vmul.f32 %v2639, %v2651
  %2656 = vrot.lane.b32.xlu0 %v2456, 96
  %v2657 = vpop.permute.xlu0 %2656
  %2658 = vrot.lane.b32.xlu0 %v2459, 96
  %v2659 = vpop.permute.xlu0 %2658
  %v2663 = vsel %vm97, %v2652, 0
  %v2666 = vsel %vm97, %v2653, 0
  %2668 = vmatpush.msra.mxu0 0.0
  %2669 = vmatpush.msra.mxu0 0.0
  %2670 = vmatpush.msra.mxu0 0.0
  %2671 = vmatpush.msra.mxu0 0.0
  %2672 = vmatpush.msra.mxu0 0.0
  %2673 = vmatpush.msra.mxu0 0.0
  %2674 = vmatpush.msra.mxu0 0.0
  %2675 = vmatpush.msra.mxu0 0.0
  %2676 = vmatpush.msra.mxu0 0.0
  %2677 = vmatpush.msra.mxu0 0.0
  %2678 = vmatpush.msra.mxu0 0.0
  %2679 = vmatpush.msra.mxu0 0.0
  %2680 = vmatpush.msra.mxu0 0.0
  %2681 = vmatpush.msra.mxu0 0.0
  %2682 = vmatpush.msra.mxu0 %v2659
  %2683 = vmatpush.msra.mxu0 %v2657
  %2684 = vmatmul.f32.gmra.mxu0 %v2663
  %v2685 = vpop.f32.mrf.mxu0
  %v2686 = vadd.f32 0.0, %v2685
  %2687 = vmatmul.f32.gmra.mxu0 %v2666
  %v2688 = vpop.f32.mrf.mxu0
  %v2689 = vadd.f32 0.0, %v2688
  %2690 = vdwg.mxu0
  %v2692 = vsel %vm97, %v2565, 0
  %v2695 = vsel %vm97, %v2566, 0
  %2697 = vmatpush.msra.mxu0 0.0
  %2698 = vmatpush.msra.mxu0 0.0
  %2699 = vmatpush.msra.mxu0 0.0
  %2700 = vmatpush.msra.mxu0 0.0
  %2701 = vmatpush.msra.mxu0 0.0
  %2702 = vmatpush.msra.mxu0 0.0
  %2703 = vmatpush.msra.mxu0 0.0
  %2704 = vmatpush.msra.mxu0 0.0
  %2705 = vmatpush.msra.mxu0 0.0
  %2706 = vmatpush.msra.mxu0 0.0
  %2707 = vmatpush.msra.mxu0 0.0
  %2708 = vmatpush.msra.mxu0 0.0
  %2709 = vmatpush.msra.mxu0 0.0
  %2710 = vmatpush.msra.mxu0 0.0
  %2711 = vmatpush.msra.mxu0 %v2459
  %2712 = vmatpush.msra.mxu0 %v2456
  %2713 = vmatmul.f32.gmra.mxu0 %v2692
  %v2714 = vpop.f32.mrf.mxu0
  %v2715 = vadd.f32 %v2686, %v2714
  %2716 = vmatmul.f32.gmra.mxu0 %v2695
  %v2717 = vpop.f32.mrf.mxu0
  %v2718 = vadd.f32 %v2689, %v2717
  %2719 = vdwg.mxu0
  %2720 = vrot.lane.b32.xlu0 %v2479, 126
  %v2721 = vpop.permute.xlu0 %2720
  %2722 = vrot.lane.b32.xlu0 %v2482, 126
  %v2723 = vpop.permute.xlu0 %2722
  %2726 = vxpose.xlu0.b32.start [1/16] %v2721, 128
  %2727 = vxpose.xlu0.b32.cont [2/16] %v2723, 128
  %2728 = vxpose.xlu0.b32.cont [3/16] 0.0, 128
  %2729 = vxpose.xlu0.b32.cont [4/16] 0.0, 128
  %2730 = vxpose.xlu0.b32.cont [5/16] 0.0, 128
  %2731 = vxpose.xlu0.b32.cont [6/16] 0.0, 128
  %2732 = vxpose.xlu0.b32.cont [7/16] 0.0, 128
  %2733 = vxpose.xlu0.b32.cont [8/16] 0.0, 128
  %2734 = vxpose.xlu0.b32.cont [9/16] 0.0, 128
  %2735 = vxpose.xlu0.b32.cont [10/16] 0.0, 128
  %2736 = vxpose.xlu0.b32.cont [11/16] 0.0, 128
  %2737 = vxpose.xlu0.b32.cont [12/16] 0.0, 128
  %2738 = vxpose.xlu0.b32.cont [13/16] 0.0, 128
  %2739 = vxpose.xlu0.b32.cont [14/16] 0.0, 128
  %2740 = vxpose.xlu0.b32.cont [15/16] 0.0, 128
  %2741 = vxpose.xlu0.b32.end [16/16] 0.0, 128
  %v2742 = vpop.trf.xlu0
  %v2743 = vpop.trf.xlu0
  %v2744 = vpop.trf.xlu0
  %v2745 = vpop.trf.xlu0
  %v2746 = vpop.trf.xlu0
  %v2747 = vpop.trf.xlu0
  %v2748 = vpop.trf.xlu0
  %v2749 = vpop.trf.xlu0
  %v2750 = vpop.trf.xlu0
  %v2751 = vpop.trf.xlu0
  %v2752 = vpop.trf.xlu0
  %v2753 = vpop.trf.xlu0
  %v2754 = vpop.trf.xlu0
  %v2755 = vpop.trf.xlu0
  %v2756 = vpop.trf.xlu0
  %v2757 = vpop.trf.xlu0
  %2758 = vset.pattern.permute.xlu0 6
  %2759 = vperm.xlu0 %2758, %v2479
  %v2760 = vpop.permute.xlu0 %2759
  %2762 = vset.pattern.permute.xlu0 6
  %2763 = vperm.xlu0 %2762, %v2482
  %v2764 = vpop.permute.xlu0 %2763
  %v2766 = vperm.slane %v2742, 0
  %v2767 = vadd.f32 %v2760, %v2766
  %v2768 = vadd.f32 %v2764, %v2766
  %vm2769 = vcmp.gt.f32.partialorder %v2767, 0.0
  %vm2770 = vcmp.gt.f32.partialorder %v2768, 0.0
  %v2771 = vmul.f32 %v2767, 0.2
  %v2772 = vmul.f32 %v2768, 0.2
  %v2773 = vsel %vm2769, %v2767, %v2771
  %v2774 = vsel %vm2770, %v2768, %v2772
  %v2775 = vadd.f32 %v2773, %v111
  %v2776 = vadd.f32 %v2774, %v112
  %v2777 = vsel %vm97, %v2775, -inf
  %2778 = vmax.xlane.f32.xlu0 %v2777
  %v2779 = vpop.xlane.xlu0 %2778
  %v2780 = vsel %vm97, %v2776, -inf
  %2781 = vmax.xlane.f32.xlu0 %v2780
  %v2782 = vpop.xlane.xlu0 %2781
  %v2783 = vsel %vm119, %v2779, 0.0
  %v2784 = vsel %vm120, %v2782, 0.0
  %v2785 = vsub.f32 %v2775, %v2783
  %v2786 = vsub.f32 %v2776, %v2784
  %v2787 = vmul.f32 %v2785, 1.442695
  %v2788 = vpow.pop %v2787
  %v2789 = vmul.f32 %v2786, 1.442695
  %v2790 = vpow.pop %v2789
  %v2791 = vmul.f32 %v107, %v2788
  %v2792 = vmul.f32 %v108, %v2790
  %v2793 = vsel %vm97, %v2791, 0.0
  %2794 = vadd.xlane.f32.xlu0 %v2793
  %v2795 = vpop.xlane.xlu0 %2794
  %v2796 = vsel %vm97, %v2792, 0.0
  %2797 = vadd.xlane.f32.xlu0 %v2796
  %v2798 = vpop.xlane.xlu0 %2797
  %vm2799 = vcmp.gt.f32.partialorder %v2795, 0.0
  %vm2800 = vcmp.gt.f32.partialorder %v2798, 0.0
  %v2801 = vsel %vm2799, %v2795, 1.0
  %v2802 = vsel %vm2800, %v2798, 1.0
  %v2803 = vrcp.pop %v2801
  %v2804 = vrcp.pop %v2802
  %v2805 = vmul.f32 %v2791, %v2803
  %v2806 = vmul.f32 %v2792, %v2804
  %2807 = vrot.lane.b32.xlu0 %v2456, 64
  %v2808 = vpop.permute.xlu0 %2807
  %2809 = vrot.lane.b32.xlu0 %v2459, 64
  %v2810 = vpop.permute.xlu0 %2809
  %v2814 = vsel %vm97, %v2805, 0
  %v2817 = vsel %vm97, %v2806, 0
  %2819 = vmatpush.msra.mxu0 0.0
  %2820 = vmatpush.msra.mxu0 0.0
  %2821 = vmatpush.msra.mxu0 0.0
  %2822 = vmatpush.msra.mxu0 0.0
  %2823 = vmatpush.msra.mxu0 0.0
  %2824 = vmatpush.msra.mxu0 0.0
  %2825 = vmatpush.msra.mxu0 0.0
  %2826 = vmatpush.msra.mxu0 0.0
  %2827 = vmatpush.msra.mxu0 0.0
  %2828 = vmatpush.msra.mxu0 0.0
  %2829 = vmatpush.msra.mxu0 0.0
  %2830 = vmatpush.msra.mxu0 0.0
  %2831 = vmatpush.msra.mxu0 0.0
  %2832 = vmatpush.msra.mxu0 0.0
  %2833 = vmatpush.msra.mxu0 %v2810
  %2834 = vmatpush.msra.mxu0 %v2808
  %2835 = vmatmul.f32.gmra.mxu0 %v2814
  %v2836 = vpop.f32.mrf.mxu0
  %v2837 = vadd.f32 0.0, %v2836
  %2838 = vmatmul.f32.gmra.mxu0 %v2817
  %v2839 = vpop.f32.mrf.mxu0
  %v2840 = vadd.f32 0.0, %v2839
  %2841 = vdwg.mxu0
  %v2842 = vadd.f32 %v2715, %v2837
  %v2843 = vadd.f32 %v2718, %v2840
  %2844 = vrot.lane.b32.xlu0 %v2479, 125
  %v2845 = vpop.permute.xlu0 %2844
  %2846 = vrot.lane.b32.xlu0 %v2482, 125
  %v2847 = vpop.permute.xlu0 %2846
  %2850 = vxpose.xlu0.b32.start [1/16] %v2845, 128
  %2851 = vxpose.xlu0.b32.cont [2/16] %v2847, 128
  %2852 = vxpose.xlu0.b32.cont [3/16] 0.0, 128
  %2853 = vxpose.xlu0.b32.cont [4/16] 0.0, 128
  %2854 = vxpose.xlu0.b32.cont [5/16] 0.0, 128
  %2855 = vxpose.xlu0.b32.cont [6/16] 0.0, 128
  %2856 = vxpose.xlu0.b32.cont [7/16] 0.0, 128
  %2857 = vxpose.xlu0.b32.cont [8/16] 0.0, 128
  %2858 = vxpose.xlu0.b32.cont [9/16] 0.0, 128
  %2859 = vxpose.xlu0.b32.cont [10/16] 0.0, 128
  %2860 = vxpose.xlu0.b32.cont [11/16] 0.0, 128
  %2861 = vxpose.xlu0.b32.cont [12/16] 0.0, 128
  %2862 = vxpose.xlu0.b32.cont [13/16] 0.0, 128
  %2863 = vxpose.xlu0.b32.cont [14/16] 0.0, 128
  %2864 = vxpose.xlu0.b32.cont [15/16] 0.0, 128
  %2865 = vxpose.xlu0.b32.end [16/16] 0.0, 128
  %v2866 = vpop.trf.xlu0
  %v2867 = vpop.trf.xlu0
  %v2868 = vpop.trf.xlu0
  %v2869 = vpop.trf.xlu0
  %v2870 = vpop.trf.xlu0
  %v2871 = vpop.trf.xlu0
  %v2872 = vpop.trf.xlu0
  %v2873 = vpop.trf.xlu0
  %v2874 = vpop.trf.xlu0
  %v2875 = vpop.trf.xlu0
  %v2876 = vpop.trf.xlu0
  %v2877 = vpop.trf.xlu0
  %v2878 = vpop.trf.xlu0
  %v2879 = vpop.trf.xlu0
  %v2880 = vpop.trf.xlu0
  %v2881 = vpop.trf.xlu0
  %2882 = vset.pattern.permute.xlu0 7
  %2883 = vperm.xlu0 %2882, %v2479
  %v2884 = vpop.permute.xlu0 %2883
  %2886 = vset.pattern.permute.xlu0 7
  %2887 = vperm.xlu0 %2886, %v2482
  %v2888 = vpop.permute.xlu0 %2887
  %v2890 = vperm.slane %v2866, 0
  %v2891 = vadd.f32 %v2884, %v2890
  %v2892 = vadd.f32 %v2888, %v2890
  %vm2893 = vcmp.gt.f32.partialorder %v2891, 0.0
  %vm2894 = vcmp.gt.f32.partialorder %v2892, 0.0
  %v2895 = vmul.f32 %v2891, 0.2
  %v2896 = vmul.f32 %v2892, 0.2
  %v2897 = vsel %vm2893, %v2891, %v2895
  %v2898 = vsel %vm2894, %v2892, %v2896
  %v2899 = vadd.f32 %v2897, %v111
  %v2900 = vadd.f32 %v2898, %v112
  %v2901 = vsel %vm97, %v2899, -inf
  %2902 = vmax.xlane.f32.xlu0 %v2901
  %v2903 = vpop.xlane.xlu0 %2902
  %v2904 = vsel %vm97, %v2900, -inf
  %2905 = vmax.xlane.f32.xlu0 %v2904
  %v2906 = vpop.xlane.xlu0 %2905
  %v2907 = vsel %vm119, %v2903, 0.0
  %v2908 = vsel %vm120, %v2906, 0.0
  %v2909 = vsub.f32 %v2899, %v2907
  %v2910 = vsub.f32 %v2900, %v2908
  %v2911 = vmul.f32 %v2909, 1.442695
  %v2912 = vpow.pop %v2911
  %v2913 = vmul.f32 %v2910, 1.442695
  %v2914 = vpow.pop %v2913
  %v2915 = vmul.f32 %v107, %v2912
  %v2916 = vmul.f32 %v108, %v2914
  %v2917 = vsel %vm97, %v2915, 0.0
  %2918 = vadd.xlane.f32.xlu0 %v2917
  %v2919 = vpop.xlane.xlu0 %2918
  %v2920 = vsel %vm97, %v2916, 0.0
  %2921 = vadd.xlane.f32.xlu0 %v2920
  %v2922 = vpop.xlane.xlu0 %2921
  %vm2923 = vcmp.gt.f32.partialorder %v2919, 0.0
  %vm2924 = vcmp.gt.f32.partialorder %v2922, 0.0
  %v2925 = vsel %vm2923, %v2919, 1.0
  %v2926 = vsel %vm2924, %v2922, 1.0
  %v2927 = vrcp.pop %v2925
  %v2928 = vrcp.pop %v2926
  %v2929 = vmul.f32 %v2915, %v2927
  %v2930 = vmul.f32 %v2916, %v2928
  %2931 = vrot.lane.b32.xlu0 %v2456, 32
  %v2932 = vpop.permute.xlu0 %2931
  %2933 = vrot.lane.b32.xlu0 %v2459, 32
  %v2934 = vpop.permute.xlu0 %2933
  %v2938 = vsel %vm97, %v2929, 0
  %v2941 = vsel %vm97, %v2930, 0
  %2943 = vmatpush.msra.mxu0 0.0
  %2944 = vmatpush.msra.mxu0 0.0
  %2945 = vmatpush.msra.mxu0 0.0
  %2946 = vmatpush.msra.mxu0 0.0
  %2947 = vmatpush.msra.mxu0 0.0
  %2948 = vmatpush.msra.mxu0 0.0
  %2949 = vmatpush.msra.mxu0 0.0
  %2950 = vmatpush.msra.mxu0 0.0
  %2951 = vmatpush.msra.mxu0 0.0
  %2952 = vmatpush.msra.mxu0 0.0
  %2953 = vmatpush.msra.mxu0 0.0
  %2954 = vmatpush.msra.mxu0 0.0
  %2955 = vmatpush.msra.mxu0 0.0
  %2956 = vmatpush.msra.mxu0 0.0
  %2957 = vmatpush.msra.mxu0 %v2934
  %2958 = vmatpush.msra.mxu0 %v2932
  %2959 = vmatmul.f32.gmra.mxu0 %v2938
  %v2960 = vpop.f32.mrf.mxu0
  %v2961 = vadd.f32 0.0, %v2960
  %2962 = vmatmul.f32.gmra.mxu0 %v2941
  %v2963 = vpop.f32.mrf.mxu0
  %v2964 = vadd.f32 0.0, %v2963
  %2965 = vdwg.mxu0
  %v2966 = vadd.f32 %v2842, %v2961
  %v2967 = vadd.f32 %v2843, %v2964
  %v2968 = vmul.f32 %v2966, 0.25
  %v2969 = vmul.f32 %v2967, 0.25
  %v2971 = vperm.slane %v2437, 0
  %v2973 = vadd.f32 %v2968, %v2971
  %v2974 = vadd.f32 %v2969, %v2971
  %s2975 = scalar_lea.vmem %s3, 160
  %v2976 = vld [vmem:[%s2975] sm:$0xff]
  %v2977 = vld [vmem:[%s2975 + $0x8] sm:$0xff]
  %v2978 = vld [vmem:[%s2975 + $0x10] sm:$0xff]
  %v2979 = vld [vmem:[%s2975 + $0x18] sm:$0xff]
  %s2980 = scalar_lea.vmem %s4, 640
  %v2981 = vld [vmem:[%s2980] sm:$0xff]
  %v2982 = vld [vmem:[%s2980 + $0x8] sm:$0xff]
  %v2983 = vld [vmem:[%s2980 + $0x10] sm:$0xff]
  %v2984 = vld [vmem:[%s2980 + $0x18] sm:$0xff]
  %v2985 = vld [vmem:[%s2980 + $0x20] sm:$0xff]
  %v2986 = vld [vmem:[%s2980 + $0x28] sm:$0xff]
  %v2987 = vld [vmem:[%s2980 + $0x30] sm:$0xff]
  %v2988 = vld [vmem:[%s2980 + $0x38] sm:$0xff]
  %v2989 = vld [vmem:[%s2980 + $0x40] sm:$0xff]
  %v2990 = vld [vmem:[%s2980 + $0x48] sm:$0xff]
  %v2991 = vld [vmem:[%s2980 + $0x50] sm:$0xff]
  %v2992 = vld [vmem:[%s2980 + $0x58] sm:$0xff]
  %v2993 = vld [vmem:[%s2980 + $0x60] sm:$0xff]
  %v2994 = vld [vmem:[%s2980 + $0x68] sm:$0xff]
  %v2995 = vld [vmem:[%s2980 + $0x70] sm:$0xff]
  %v2996 = vld [vmem:[%s2980 + $0x78] sm:$0xff]
  %s2997 = scalar_lea.vmem %s5, 5
  %v2998 = vld [vmem:[%s2997] sm:$0x1]
  %v3000 = vsel %vm157, %v2973, 0
  %v3003 = vsel %vm157, %v2974, 0
  %3005 = vmatpush.msra.mxu0 0.0
  %3006 = vmatpush.msra.mxu0 0.0
  %3007 = vmatpush.msra.mxu0 0.0
  %3008 = vmatpush.msra.mxu0 0.0
  %3009 = vmatpush.msra.mxu0 0.0
  %3010 = vmatpush.msra.mxu0 0.0
  %3011 = vmatpush.msra.mxu0 0.0
  %3012 = vmatpush.msra.mxu0 0.0
  %3013 = vmatpush.msra.mxu0 0.0
  %3014 = vmatpush.msra.mxu0 0.0
  %3015 = vmatpush.msra.mxu0 0.0
  %3016 = vmatpush.msra.mxu0 0.0
  %3017 = vmatpush.msra.mxu0 %v2979
  %3018 = vmatpush.msra.mxu0 %v2978
  %3019 = vmatpush.msra.mxu0 %v2977
  %3020 = vmatpush.msra.mxu0 %v2976
  %3021 = vmatmul.f32.gmra.mxu0 %v3000
  %v3022 = vpop.f32.mrf.mxu0
  %v3023 = vadd.f32 0.0, %v3022
  %3024 = vmatmul.f32.gmra.mxu0 %v3003
  %v3025 = vpop.f32.mrf.mxu0
  %v3026 = vadd.f32 0.0, %v3025
  %3027 = vdwg.mxu0
  %3028 = vmatpush.msra.mxu0 %v2996
  %3029 = vmatpush.msra.mxu0 %v2995
  %3030 = vmatpush.msra.mxu0 %v2994
  %3031 = vmatpush.msra.mxu0 %v2993
  %3032 = vmatpush.msra.mxu0 %v2992
  %3033 = vmatpush.msra.mxu0 %v2991
  %3034 = vmatpush.msra.mxu0 %v2990
  %3035 = vmatpush.msra.mxu0 %v2989
  %3036 = vmatpush.msra.mxu0 %v2988
  %3037 = vmatpush.msra.mxu0 %v2987
  %3038 = vmatpush.msra.mxu0 %v2986
  %3039 = vmatpush.msra.mxu0 %v2985
  %3040 = vmatpush.msra.mxu0 %v2984
  %3041 = vmatpush.msra.mxu0 %v2983
  %3042 = vmatpush.msra.mxu0 %v2982
  %3043 = vmatpush.msra.mxu0 %v2981
  %3044 = vmatmul.f32.gmra.mxu0 %v3023
  %v3045 = vpop.f32.mrf.mxu0
  %v3046 = vadd.f32 0.0, %v3045
  %3047 = vmatmul.f32.gmra.mxu0 %v3026
  %v3048 = vpop.f32.mrf.mxu0
  %v3049 = vadd.f32 0.0, %v3048
  %3050 = vdwg.mxu0
  %3051 = vxpose.xlu0.b32.start [1/16] %v3046, 128
  %3052 = vxpose.xlu0.b32.cont [2/16] %v3049, 128
  %3053 = vxpose.xlu0.b32.cont [3/16] 0.0, 128
  %3054 = vxpose.xlu0.b32.cont [4/16] 0.0, 128
  %3055 = vxpose.xlu0.b32.cont [5/16] 0.0, 128
  %3056 = vxpose.xlu0.b32.cont [6/16] 0.0, 128
  %3057 = vxpose.xlu0.b32.cont [7/16] 0.0, 128
  %3058 = vxpose.xlu0.b32.cont [8/16] 0.0, 128
  %3059 = vxpose.xlu0.b32.cont [9/16] 0.0, 128
  %3060 = vxpose.xlu0.b32.cont [10/16] 0.0, 128
  %3061 = vxpose.xlu0.b32.cont [11/16] 0.0, 128
  %3062 = vxpose.xlu0.b32.cont [12/16] 0.0, 128
  %3063 = vxpose.xlu0.b32.cont [13/16] 0.0, 128
  %3064 = vxpose.xlu0.b32.cont [14/16] 0.0, 128
  %3065 = vxpose.xlu0.b32.cont [15/16] 0.0, 128
  %3066 = vxpose.xlu0.b32.end [16/16] 0.0, 128
  %v3067 = vpop.trf.xlu0
  %v3068 = vpop.trf.xlu0
  %v3069 = vpop.trf.xlu0
  %v3070 = vpop.trf.xlu0
  %v3071 = vpop.trf.xlu0
  %v3072 = vpop.trf.xlu0
  %v3073 = vpop.trf.xlu0
  %v3074 = vpop.trf.xlu0
  %v3075 = vpop.trf.xlu0
  %v3076 = vpop.trf.xlu0
  %v3077 = vpop.trf.xlu0
  %v3078 = vpop.trf.xlu0
  %v3079 = vpop.trf.xlu0
  %v3080 = vpop.trf.xlu0
  %v3081 = vpop.trf.xlu0
  %v3082 = vpop.trf.xlu0
  %3084 = vset.pattern.permute.xlu0 4
  %3085 = vperm.xlu0 %3084, %v3046
  %v3086 = vpop.permute.xlu0 %3085
  %3089 = vset.pattern.permute.xlu0 4
  %3090 = vperm.xlu0 %3089, %v3049
  %v3091 = vpop.permute.xlu0 %3090
  %v3093 = vperm.slane %v3067, 0
  %v3094 = vadd.f32 %v3086, %v3093
  %v3095 = vadd.f32 %v3091, %v3093
  %vm3096 = vcmp.gt.f32.partialorder %v3094, 0.0
  %vm3097 = vcmp.gt.f32.partialorder %v3095, 0.0
  %v3098 = vmul.f32 %v3094, 0.2
  %v3099 = vmul.f32 %v3095, 0.2
  %v3100 = vsel %vm3096, %v3094, %v3098
  %v3101 = vsel %vm3097, %v3095, %v3099
  %v3102 = vadd.f32 %v3100, %v126
  %v3103 = vadd.f32 %v3101, %v127
  %v3104 = vsel %vm97, %v3102, -inf
  %3105 = vmax.xlane.f32.xlu0 %v3104
  %v3106 = vpop.xlane.xlu0 %3105
  %v3107 = vsel %vm97, %v3103, -inf
  %3108 = vmax.xlane.f32.xlu0 %v3107
  %v3109 = vpop.xlane.xlu0 %3108
  %v3110 = vsel %vm134, %v3106, 0.0
  %v3111 = vsel %vm135, %v3109, 0.0
  %v3112 = vsub.f32 %v3102, %v3110
  %v3113 = vsub.f32 %v3103, %v3111
  %v3114 = vmul.f32 %v3112, 1.442695
  %v3115 = vpow.pop %v3114
  %v3116 = vmul.f32 %v3113, 1.442695
  %v3117 = vpow.pop %v3116
  %v3118 = vmul.f32 %v122, %v3115
  %v3119 = vmul.f32 %v123, %v3117
  %v3120 = vsel %vm97, %v3118, 0.0
  %3121 = vadd.xlane.f32.xlu0 %v3120
  %v3122 = vpop.xlane.xlu0 %3121
  %v3123 = vsel %vm97, %v3119, 0.0
  %3124 = vadd.xlane.f32.xlu0 %v3123
  %v3125 = vpop.xlane.xlu0 %3124
  %vm3126 = vcmp.gt.f32.partialorder %v3122, 0.0
  %vm3127 = vcmp.gt.f32.partialorder %v3125, 0.0
  %v3128 = vsel %vm3126, %v3122, 1.0
  %v3129 = vsel %vm3127, %v3125, 1.0
  %v3130 = vrcp.pop %v3128
  %v3131 = vrcp.pop %v3129
  %v3132 = vmul.f32 %v3118, %v3130
  %v3133 = vmul.f32 %v3119, %v3131
  %3134 = vrot.lane.b32.xlu0 %v3046, 127
  %v3135 = vpop.permute.xlu0 %3134
  %3136 = vrot.lane.b32.xlu0 %v3049, 127
  %v3137 = vpop.permute.xlu0 %3136
  %3140 = vxpose.xlu0.b32.start [1/16] %v3135, 128
  %3141 = vxpose.xlu0.b32.cont [2/16] %v3137, 128
  %3142 = vxpose.xlu0.b32.cont [3/16] 0.0, 128
  %3143 = vxpose.xlu0.b32.cont [4/16] 0.0, 128
  %3144 = vxpose.xlu0.b32.cont [5/16] 0.0, 128
  %3145 = vxpose.xlu0.b32.cont [6/16] 0.0, 128
  %3146 = vxpose.xlu0.b32.cont [7/16] 0.0, 128
  %3147 = vxpose.xlu0.b32.cont [8/16] 0.0, 128
  %3148 = vxpose.xlu0.b32.cont [9/16] 0.0, 128
  %3149 = vxpose.xlu0.b32.cont [10/16] 0.0, 128
  %3150 = vxpose.xlu0.b32.cont [11/16] 0.0, 128
  %3151 = vxpose.xlu0.b32.cont [12/16] 0.0, 128
  %3152 = vxpose.xlu0.b32.cont [13/16] 0.0, 128
  %3153 = vxpose.xlu0.b32.cont [14/16] 0.0, 128
  %3154 = vxpose.xlu0.b32.cont [15/16] 0.0, 128
  %3155 = vxpose.xlu0.b32.end [16/16] 0.0, 128
  %v3156 = vpop.trf.xlu0
  %v3157 = vpop.trf.xlu0
  %v3158 = vpop.trf.xlu0
  %v3159 = vpop.trf.xlu0
  %v3160 = vpop.trf.xlu0
  %v3161 = vpop.trf.xlu0
  %v3162 = vpop.trf.xlu0
  %v3163 = vpop.trf.xlu0
  %v3164 = vpop.trf.xlu0
  %v3165 = vpop.trf.xlu0
  %v3166 = vpop.trf.xlu0
  %v3167 = vpop.trf.xlu0
  %v3168 = vpop.trf.xlu0
  %v3169 = vpop.trf.xlu0
  %v3170 = vpop.trf.xlu0
  %v3171 = vpop.trf.xlu0
  %3172 = vset.pattern.permute.xlu0 5
  %3173 = vperm.xlu0 %3172, %v3046
  %v3174 = vpop.permute.xlu0 %3173
  %3176 = vset.pattern.permute.xlu0 5
  %3177 = vperm.xlu0 %3176, %v3049
  %v3178 = vpop.permute.xlu0 %3177
  %v3180 = vperm.slane %v3156, 0
  %v3181 = vadd.f32 %v3174, %v3180
  %v3182 = vadd.f32 %v3178, %v3180
  %vm3183 = vcmp.gt.f32.partialorder %v3181, 0.0
  %vm3184 = vcmp.gt.f32.partialorder %v3182, 0.0
  %v3185 = vmul.f32 %v3181, 0.2
  %v3186 = vmul.f32 %v3182, 0.2
  %v3187 = vsel %vm3183, %v3181, %v3185
  %v3188 = vsel %vm3184, %v3182, %v3186
  %v3189 = vadd.f32 %v3187, %v126
  %v3190 = vadd.f32 %v3188, %v127
  %v3191 = vsel %vm97, %v3189, -inf
  %3192 = vmax.xlane.f32.xlu0 %v3191
  %v3193 = vpop.xlane.xlu0 %3192
  %v3194 = vsel %vm97, %v3190, -inf
  %3195 = vmax.xlane.f32.xlu0 %v3194
  %v3196 = vpop.xlane.xlu0 %3195
  %v3197 = vsel %vm134, %v3193, 0.0
  %v3198 = vsel %vm135, %v3196, 0.0
  %v3199 = vsub.f32 %v3189, %v3197
  %v3200 = vsub.f32 %v3190, %v3198
  %v3201 = vmul.f32 %v3199, 1.442695
  %v3202 = vpow.pop %v3201
  %v3203 = vmul.f32 %v3200, 1.442695
  %v3204 = vpow.pop %v3203
  %v3205 = vmul.f32 %v122, %v3202
  %v3206 = vmul.f32 %v123, %v3204
  %v3207 = vsel %vm97, %v3205, 0.0
  %3208 = vadd.xlane.f32.xlu0 %v3207
  %v3209 = vpop.xlane.xlu0 %3208
  %v3210 = vsel %vm97, %v3206, 0.0
  %3211 = vadd.xlane.f32.xlu0 %v3210
  %v3212 = vpop.xlane.xlu0 %3211
  %vm3213 = vcmp.gt.f32.partialorder %v3209, 0.0
  %vm3214 = vcmp.gt.f32.partialorder %v3212, 0.0
  %v3215 = vsel %vm3213, %v3209, 1.0
  %v3216 = vsel %vm3214, %v3212, 1.0
  %v3217 = vrcp.pop %v3215
  %v3218 = vrcp.pop %v3216
  %v3219 = vmul.f32 %v3205, %v3217
  %v3220 = vmul.f32 %v3206, %v3218
  %3223 = vrot.lane.b32.xlu0 %v3023, 96
  %v3224 = vpop.permute.xlu0 %3223
  %3225 = vrot.lane.b32.xlu0 %v3026, 96
  %v3226 = vpop.permute.xlu0 %3225
  %v3230 = vsel %vm97, %v3219, 0
  %v3233 = vsel %vm97, %v3220, 0
  %3235 = vmatpush.msra.mxu0 0.0
  %3236 = vmatpush.msra.mxu0 0.0
  %3237 = vmatpush.msra.mxu0 0.0
  %3238 = vmatpush.msra.mxu0 0.0
  %3239 = vmatpush.msra.mxu0 0.0
  %3240 = vmatpush.msra.mxu0 0.0
  %3241 = vmatpush.msra.mxu0 0.0
  %3242 = vmatpush.msra.mxu0 0.0
  %3243 = vmatpush.msra.mxu0 0.0
  %3244 = vmatpush.msra.mxu0 0.0
  %3245 = vmatpush.msra.mxu0 0.0
  %3246 = vmatpush.msra.mxu0 0.0
  %3247 = vmatpush.msra.mxu0 0.0
  %3248 = vmatpush.msra.mxu0 0.0
  %3249 = vmatpush.msra.mxu0 %v3226
  %3250 = vmatpush.msra.mxu0 %v3224
  %3251 = vmatmul.f32.gmra.mxu0 %v3230
  %v3252 = vpop.f32.mrf.mxu0
  %v3253 = vadd.f32 0.0, %v3252
  %3254 = vmatmul.f32.gmra.mxu0 %v3233
  %v3255 = vpop.f32.mrf.mxu0
  %v3256 = vadd.f32 0.0, %v3255
  %3257 = vdwg.mxu0
  %v3259 = vsel %vm97, %v3132, 0
  %v3262 = vsel %vm97, %v3133, 0
  %3264 = vmatpush.msra.mxu0 0.0
  %3265 = vmatpush.msra.mxu0 0.0
  %3266 = vmatpush.msra.mxu0 0.0
  %3267 = vmatpush.msra.mxu0 0.0
  %3268 = vmatpush.msra.mxu0 0.0
  %3269 = vmatpush.msra.mxu0 0.0
  %3270 = vmatpush.msra.mxu0 0.0
  %3271 = vmatpush.msra.mxu0 0.0
  %3272 = vmatpush.msra.mxu0 0.0
  %3273 = vmatpush.msra.mxu0 0.0
  %3274 = vmatpush.msra.mxu0 0.0
  %3275 = vmatpush.msra.mxu0 0.0
  %3276 = vmatpush.msra.mxu0 0.0
  %3277 = vmatpush.msra.mxu0 0.0
  %3278 = vmatpush.msra.mxu0 %v3026
  %3279 = vmatpush.msra.mxu0 %v3023
  %3280 = vmatmul.f32.gmra.mxu0 %v3259
  %v3281 = vpop.f32.mrf.mxu0
  %v3282 = vadd.f32 %v3253, %v3281
  %3283 = vmatmul.f32.gmra.mxu0 %v3262
  %v3284 = vpop.f32.mrf.mxu0
  %v3285 = vadd.f32 %v3256, %v3284
  %3286 = vdwg.mxu0
  %3287 = vrot.lane.b32.xlu0 %v3046, 126
  %v3288 = vpop.permute.xlu0 %3287
  %3289 = vrot.lane.b32.xlu0 %v3049, 126
  %v3290 = vpop.permute.xlu0 %3289
  %3293 = vxpose.xlu0.b32.start [1/16] %v3288, 128
  %3294 = vxpose.xlu0.b32.cont [2/16] %v3290, 128
  %3295 = vxpose.xlu0.b32.cont [3/16] 0.0, 128
  %3296 = vxpose.xlu0.b32.cont [4/16] 0.0, 128
  %3297 = vxpose.xlu0.b32.cont [5/16] 0.0, 128
  %3298 = vxpose.xlu0.b32.cont [6/16] 0.0, 128
  %3299 = vxpose.xlu0.b32.cont [7/16] 0.0, 128
  %3300 = vxpose.xlu0.b32.cont [8/16] 0.0, 128
  %3301 = vxpose.xlu0.b32.cont [9/16] 0.0, 128
  %3302 = vxpose.xlu0.b32.cont [10/16] 0.0, 128
  %3303 = vxpose.xlu0.b32.cont [11/16] 0.0, 128
  %3304 = vxpose.xlu0.b32.cont [12/16] 0.0, 128
  %3305 = vxpose.xlu0.b32.cont [13/16] 0.0, 128
  %3306 = vxpose.xlu0.b32.cont [14/16] 0.0, 128
  %3307 = vxpose.xlu0.b32.cont [15/16] 0.0, 128
  %3308 = vxpose.xlu0.b32.end [16/16] 0.0, 128
  %v3309 = vpop.trf.xlu0
  %v3310 = vpop.trf.xlu0
  %v3311 = vpop.trf.xlu0
  %v3312 = vpop.trf.xlu0
  %v3313 = vpop.trf.xlu0
  %v3314 = vpop.trf.xlu0
  %v3315 = vpop.trf.xlu0
  %v3316 = vpop.trf.xlu0
  %v3317 = vpop.trf.xlu0
  %v3318 = vpop.trf.xlu0
  %v3319 = vpop.trf.xlu0
  %v3320 = vpop.trf.xlu0
  %v3321 = vpop.trf.xlu0
  %v3322 = vpop.trf.xlu0
  %v3323 = vpop.trf.xlu0
  %v3324 = vpop.trf.xlu0
  %3325 = vset.pattern.permute.xlu0 6
  %3326 = vperm.xlu0 %3325, %v3046
  %v3327 = vpop.permute.xlu0 %3326
  %3329 = vset.pattern.permute.xlu0 6
  %3330 = vperm.xlu0 %3329, %v3049
  %v3331 = vpop.permute.xlu0 %3330
  %v3333 = vperm.slane %v3309, 0
  %v3334 = vadd.f32 %v3327, %v3333
  %v3335 = vadd.f32 %v3331, %v3333
  %vm3336 = vcmp.gt.f32.partialorder %v3334, 0.0
  %vm3337 = vcmp.gt.f32.partialorder %v3335, 0.0
  %v3338 = vmul.f32 %v3334, 0.2
  %v3339 = vmul.f32 %v3335, 0.2
  %v3340 = vsel %vm3336, %v3334, %v3338
  %v3341 = vsel %vm3337, %v3335, %v3339
  %v3342 = vadd.f32 %v3340, %v126
  %v3343 = vadd.f32 %v3341, %v127
  %v3344 = vsel %vm97, %v3342, -inf
  %3345 = vmax.xlane.f32.xlu0 %v3344
  %v3346 = vpop.xlane.xlu0 %3345
  %v3347 = vsel %vm97, %v3343, -inf
  %3348 = vmax.xlane.f32.xlu0 %v3347
  %v3349 = vpop.xlane.xlu0 %3348
  %v3350 = vsel %vm134, %v3346, 0.0
  %v3351 = vsel %vm135, %v3349, 0.0
  %v3352 = vsub.f32 %v3342, %v3350
  %v3353 = vsub.f32 %v3343, %v3351
  %v3354 = vmul.f32 %v3352, 1.442695
  %v3355 = vpow.pop %v3354
  %v3356 = vmul.f32 %v3353, 1.442695
  %v3357 = vpow.pop %v3356
  %v3358 = vmul.f32 %v122, %v3355
  %v3359 = vmul.f32 %v123, %v3357
  %v3360 = vsel %vm97, %v3358, 0.0
  %3361 = vadd.xlane.f32.xlu0 %v3360
  %v3362 = vpop.xlane.xlu0 %3361
  %v3363 = vsel %vm97, %v3359, 0.0
  %3364 = vadd.xlane.f32.xlu0 %v3363
  %v3365 = vpop.xlane.xlu0 %3364
  %vm3366 = vcmp.gt.f32.partialorder %v3362, 0.0
  %vm3367 = vcmp.gt.f32.partialorder %v3365, 0.0
  %v3368 = vsel %vm3366, %v3362, 1.0
  %v3369 = vsel %vm3367, %v3365, 1.0
  %v3370 = vrcp.pop %v3368
  %v3371 = vrcp.pop %v3369
  %v3372 = vmul.f32 %v3358, %v3370
  %v3373 = vmul.f32 %v3359, %v3371
  %3374 = vrot.lane.b32.xlu0 %v3023, 64
  %v3375 = vpop.permute.xlu0 %3374
  %3376 = vrot.lane.b32.xlu0 %v3026, 64
  %v3377 = vpop.permute.xlu0 %3376
  %v3381 = vsel %vm97, %v3372, 0
  %v3384 = vsel %vm97, %v3373, 0
  %3386 = vmatpush.msra.mxu0 0.0
  %3387 = vmatpush.msra.mxu0 0.0
  %3388 = vmatpush.msra.mxu0 0.0
  %3389 = vmatpush.msra.mxu0 0.0
  %3390 = vmatpush.msra.mxu0 0.0
  %3391 = vmatpush.msra.mxu0 0.0
  %3392 = vmatpush.msra.mxu0 0.0
  %3393 = vmatpush.msra.mxu0 0.0
  %3394 = vmatpush.msra.mxu0 0.0
  %3395 = vmatpush.msra.mxu0 0.0
  %3396 = vmatpush.msra.mxu0 0.0
  %3397 = vmatpush.msra.mxu0 0.0
  %3398 = vmatpush.msra.mxu0 0.0
  %3399 = vmatpush.msra.mxu0 0.0
  %3400 = vmatpush.msra.mxu0 %v3377
  %3401 = vmatpush.msra.mxu0 %v3375
  %3402 = vmatmul.f32.gmra.mxu0 %v3381
  %v3403 = vpop.f32.mrf.mxu0
  %v3404 = vadd.f32 0.0, %v3403
  %3405 = vmatmul.f32.gmra.mxu0 %v3384
  %v3406 = vpop.f32.mrf.mxu0
  %v3407 = vadd.f32 0.0, %v3406
  %3408 = vdwg.mxu0
  %v3409 = vadd.f32 %v3282, %v3404
  %v3410 = vadd.f32 %v3285, %v3407
  %3411 = vrot.lane.b32.xlu0 %v3046, 125
  %v3412 = vpop.permute.xlu0 %3411
  %3413 = vrot.lane.b32.xlu0 %v3049, 125
  %v3414 = vpop.permute.xlu0 %3413
  %3417 = vxpose.xlu0.b32.start [1/16] %v3412, 128
  %3418 = vxpose.xlu0.b32.cont [2/16] %v3414, 128
  %3419 = vxpose.xlu0.b32.cont [3/16] 0.0, 128
  %3420 = vxpose.xlu0.b32.cont [4/16] 0.0, 128
  %3421 = vxpose.xlu0.b32.cont [5/16] 0.0, 128
  %3422 = vxpose.xlu0.b32.cont [6/16] 0.0, 128
  %3423 = vxpose.xlu0.b32.cont [7/16] 0.0, 128
  %3424 = vxpose.xlu0.b32.cont [8/16] 0.0, 128
  %3425 = vxpose.xlu0.b32.cont [9/16] 0.0, 128
  %3426 = vxpose.xlu0.b32.cont [10/16] 0.0, 128
  %3427 = vxpose.xlu0.b32.cont [11/16] 0.0, 128
  %3428 = vxpose.xlu0.b32.cont [12/16] 0.0, 128
  %3429 = vxpose.xlu0.b32.cont [13/16] 0.0, 128
  %3430 = vxpose.xlu0.b32.cont [14/16] 0.0, 128
  %3431 = vxpose.xlu0.b32.cont [15/16] 0.0, 128
  %3432 = vxpose.xlu0.b32.end [16/16] 0.0, 128
  %v3433 = vpop.trf.xlu0
  %v3434 = vpop.trf.xlu0
  %v3435 = vpop.trf.xlu0
  %v3436 = vpop.trf.xlu0
  %v3437 = vpop.trf.xlu0
  %v3438 = vpop.trf.xlu0
  %v3439 = vpop.trf.xlu0
  %v3440 = vpop.trf.xlu0
  %v3441 = vpop.trf.xlu0
  %v3442 = vpop.trf.xlu0
  %v3443 = vpop.trf.xlu0
  %v3444 = vpop.trf.xlu0
  %v3445 = vpop.trf.xlu0
  %v3446 = vpop.trf.xlu0
  %v3447 = vpop.trf.xlu0
  %v3448 = vpop.trf.xlu0
  %3449 = vset.pattern.permute.xlu0 7
  %3450 = vperm.xlu0 %3449, %v3046
  %v3451 = vpop.permute.xlu0 %3450
  %3453 = vset.pattern.permute.xlu0 7
  %3454 = vperm.xlu0 %3453, %v3049
  %v3455 = vpop.permute.xlu0 %3454
  %v3457 = vperm.slane %v3433, 0
  %v3458 = vadd.f32 %v3451, %v3457
  %v3459 = vadd.f32 %v3455, %v3457
  %vm3460 = vcmp.gt.f32.partialorder %v3458, 0.0
  %vm3461 = vcmp.gt.f32.partialorder %v3459, 0.0
  %v3462 = vmul.f32 %v3458, 0.2
  %v3463 = vmul.f32 %v3459, 0.2
  %v3464 = vsel %vm3460, %v3458, %v3462
  %v3465 = vsel %vm3461, %v3459, %v3463
  %v3466 = vadd.f32 %v3464, %v126
  %v3467 = vadd.f32 %v3465, %v127
  %v3468 = vsel %vm97, %v3466, -inf
  %3469 = vmax.xlane.f32.xlu0 %v3468
  %v3470 = vpop.xlane.xlu0 %3469
  %v3471 = vsel %vm97, %v3467, -inf
  %3472 = vmax.xlane.f32.xlu0 %v3471
  %v3473 = vpop.xlane.xlu0 %3472
  %v3474 = vsel %vm134, %v3470, 0.0
  %v3475 = vsel %vm135, %v3473, 0.0
  %v3476 = vsub.f32 %v3466, %v3474
  %v3477 = vsub.f32 %v3467, %v3475
  %v3478 = vmul.f32 %v3476, 1.442695
  %v3479 = vpow.pop %v3478
  %v3480 = vmul.f32 %v3477, 1.442695
  %v3481 = vpow.pop %v3480
  %v3482 = vmul.f32 %v122, %v3479
  %v3483 = vmul.f32 %v123, %v3481
  %v3484 = vsel %vm97, %v3482, 0.0
  %3485 = vadd.xlane.f32.xlu0 %v3484
  %v3486 = vpop.xlane.xlu0 %3485
  %v3487 = vsel %vm97, %v3483, 0.0
  %3488 = vadd.xlane.f32.xlu0 %v3487
  %v3489 = vpop.xlane.xlu0 %3488
  %vm3490 = vcmp.gt.f32.partialorder %v3486, 0.0
  %vm3491 = vcmp.gt.f32.partialorder %v3489, 0.0
  %v3492 = vsel %vm3490, %v3486, 1.0
  %v3493 = vsel %vm3491, %v3489, 1.0
  %v3494 = vrcp.pop %v3492
  %v3495 = vrcp.pop %v3493
  %v3496 = vmul.f32 %v3482, %v3494
  %v3497 = vmul.f32 %v3483, %v3495
  %3498 = vrot.lane.b32.xlu0 %v3023, 32
  %v3499 = vpop.permute.xlu0 %3498
  %3500 = vrot.lane.b32.xlu0 %v3026, 32
  %v3501 = vpop.permute.xlu0 %3500
  %v3505 = vsel %vm97, %v3496, 0
  %v3508 = vsel %vm97, %v3497, 0
  %3510 = vmatpush.msra.mxu0 0.0
  %3511 = vmatpush.msra.mxu0 0.0
  %3512 = vmatpush.msra.mxu0 0.0
  %3513 = vmatpush.msra.mxu0 0.0
  %3514 = vmatpush.msra.mxu0 0.0
  %3515 = vmatpush.msra.mxu0 0.0
  %3516 = vmatpush.msra.mxu0 0.0
  %3517 = vmatpush.msra.mxu0 0.0
  %3518 = vmatpush.msra.mxu0 0.0
  %3519 = vmatpush.msra.mxu0 0.0
  %3520 = vmatpush.msra.mxu0 0.0
  %3521 = vmatpush.msra.mxu0 0.0
  %3522 = vmatpush.msra.mxu0 0.0
  %3523 = vmatpush.msra.mxu0 0.0
  %3524 = vmatpush.msra.mxu0 %v3501
  %3525 = vmatpush.msra.mxu0 %v3499
  %3526 = vmatmul.f32.gmra.mxu0 %v3505
  %v3527 = vpop.f32.mrf.mxu0
  %v3528 = vadd.f32 0.0, %v3527
  %3529 = vmatmul.f32.gmra.mxu0 %v3508
  %v3530 = vpop.f32.mrf.mxu0
  %v3531 = vadd.f32 0.0, %v3530
  %3532 = vdwg.mxu0
  %v3533 = vadd.f32 %v3409, %v3528
  %v3534 = vadd.f32 %v3410, %v3531
  %v3535 = vmul.f32 %v3533, 0.25
  %v3536 = vmul.f32 %v3534, 0.25
  %v3538 = vperm.slane %v2998, 0
  %v3540 = vadd.f32 %v3535, %v3538
  %v3541 = vadd.f32 %v3536, %v3538
  %v3542 = vadd.f32 %v2412, %v3540
  %v3543 = vadd.f32 %v2413, %v3541
  %v3544 = vadd.f32 %v3542, %v1845
  %v3545 = vadd.f32 %v3543, %v1846
  %v3546 = vld [vmem:[%s8] sm:$0x1]
  %v3548 = vperm.slane %v3546, 0
  %v3550 = vmul.f32 %v3544, %v3548
  %v3551 = vmul.f32 %v3545, %v3548
  %v3552 = vld [vmem:[%s9] sm:$0x1]
  %v3554 = vperm.slane %v3552, 0
  %v3556 = vadd.f32 %v3550, %v3554
  %v3557 = vadd.f32 %v3551, %v3554
  %v3558 = vmax.f32 %v3556, 0.0
  %v3559 = vmax.f32 %v3557, 0.0
  %s3560 = scalar_lea.vmem %s3, 192
  %v3561 = vld [vmem:[%s3560] sm:$0xff]
  %v3562 = vld [vmem:[%s3560 + $0x8] sm:$0xff]
  %v3563 = vld [vmem:[%s3560 + $0x10] sm:$0xff]
  %v3564 = vld [vmem:[%s3560 + $0x18] sm:$0xff]
  %s3565 = scalar_lea.vmem %s4, 768
  %v3566 = vld [vmem:[%s3565] sm:$0xff]
  %v3567 = vld [vmem:[%s3565 + $0x8] sm:$0xff]
  %v3568 = vld [vmem:[%s3565 + $0x10] sm:$0xff]
  %v3569 = vld [vmem:[%s3565 + $0x18] sm:$0xff]
  %v3570 = vld [vmem:[%s3565 + $0x20] sm:$0xff]
  %v3571 = vld [vmem:[%s3565 + $0x28] sm:$0xff]
  %v3572 = vld [vmem:[%s3565 + $0x30] sm:$0xff]
  %v3573 = vld [vmem:[%s3565 + $0x38] sm:$0xff]
  %v3574 = vld [vmem:[%s3565 + $0x40] sm:$0xff]
  %v3575 = vld [vmem:[%s3565 + $0x48] sm:$0xff]
  %v3576 = vld [vmem:[%s3565 + $0x50] sm:$0xff]
  %v3577 = vld [vmem:[%s3565 + $0x58] sm:$0xff]
  %v3578 = vld [vmem:[%s3565 + $0x60] sm:$0xff]
  %v3579 = vld [vmem:[%s3565 + $0x68] sm:$0xff]
  %v3580 = vld [vmem:[%s3565 + $0x70] sm:$0xff]
  %v3581 = vld [vmem:[%s3565 + $0x78] sm:$0xff]
  %s3582 = scalar_lea.vmem %s5, 6
  %v3583 = vld [vmem:[%s3582] sm:$0x1]
  %v3585 = vsel %vm157, %v3558, 0
  %v3588 = vsel %vm157, %v3559, 0
  %3590 = vmatpush.msra.mxu0 0.0
  %3591 = vmatpush.msra.mxu0 0.0
  %3592 = vmatpush.msra.mxu0 0.0
  %3593 = vmatpush.msra.mxu0 0.0
  %3594 = vmatpush.msra.mxu0 0.0
  %3595 = vmatpush.msra.mxu0 0.0
  %3596 = vmatpush.msra.mxu0 0.0
  %3597 = vmatpush.msra.mxu0 0.0
  %3598 = vmatpush.msra.mxu0 0.0
  %3599 = vmatpush.msra.mxu0 0.0
  %3600 = vmatpush.msra.mxu0 0.0
  %3601 = vmatpush.msra.mxu0 0.0
  %3602 = vmatpush.msra.mxu0 %v3564
  %3603 = vmatpush.msra.mxu0 %v3563
  %3604 = vmatpush.msra.mxu0 %v3562
  %3605 = vmatpush.msra.mxu0 %v3561
  %3606 = vmatmul.f32.gmra.mxu0 %v3585
  %v3607 = vpop.f32.mrf.mxu0
  %v3608 = vadd.f32 0.0, %v3607
  %3609 = vmatmul.f32.gmra.mxu0 %v3588
  %v3610 = vpop.f32.mrf.mxu0
  %v3611 = vadd.f32 0.0, %v3610
  %3612 = vdwg.mxu0
  %3613 = vmatpush.msra.mxu0 %v3581
  %3614 = vmatpush.msra.mxu0 %v3580
  %3615 = vmatpush.msra.mxu0 %v3579
  %3616 = vmatpush.msra.mxu0 %v3578
  %3617 = vmatpush.msra.mxu0 %v3577
  %3618 = vmatpush.msra.mxu0 %v3576
  %3619 = vmatpush.msra.mxu0 %v3575
  %3620 = vmatpush.msra.mxu0 %v3574
  %3621 = vmatpush.msra.mxu0 %v3573
  %3622 = vmatpush.msra.mxu0 %v3572
  %3623 = vmatpush.msra.mxu0 %v3571
  %3624 = vmatpush.msra.mxu0 %v3570
  %3625 = vmatpush.msra.mxu0 %v3569
  %3626 = vmatpush.msra.mxu0 %v3568
  %3627 = vmatpush.msra.mxu0 %v3567
  %3628 = vmatpush.msra.mxu0 %v3566
  %3629 = vmatmul.f32.gmra.mxu0 %v3608
  %v3630 = vpop.f32.mrf.mxu0
  %v3631 = vadd.f32 0.0, %v3630
  %3632 = vmatmul.f32.gmra.mxu0 %v3611
  %v3633 = vpop.f32.mrf.mxu0
  %v3634 = vadd.f32 0.0, %v3633
  %3635 = vdwg.mxu0
  %3636 = vxpose.xlu0.b32.start [1/16] %v3631, 128
  %3637 = vxpose.xlu0.b32.cont [2/16] %v3634, 128
  %3638 = vxpose.xlu0.b32.cont [3/16] 0.0, 128
  %3639 = vxpose.xlu0.b32.cont [4/16] 0.0, 128
  %3640 = vxpose.xlu0.b32.cont [5/16] 0.0, 128
  %3641 = vxpose.xlu0.b32.cont [6/16] 0.0, 128
  %3642 = vxpose.xlu0.b32.cont [7/16] 0.0, 128
  %3643 = vxpose.xlu0.b32.cont [8/16] 0.0, 128
  %3644 = vxpose.xlu0.b32.cont [9/16] 0.0, 128
  %3645 = vxpose.xlu0.b32.cont [10/16] 0.0, 128
  %3646 = vxpose.xlu0.b32.cont [11/16] 0.0, 128
  %3647 = vxpose.xlu0.b32.cont [12/16] 0.0, 128
  %3648 = vxpose.xlu0.b32.cont [13/16] 0.0, 128
  %3649 = vxpose.xlu0.b32.cont [14/16] 0.0, 128
  %3650 = vxpose.xlu0.b32.cont [15/16] 0.0, 128
  %3651 = vxpose.xlu0.b32.end [16/16] 0.0, 128
  %v3652 = vpop.trf.xlu0
  %v3653 = vpop.trf.xlu0
  %v3654 = vpop.trf.xlu0
  %v3655 = vpop.trf.xlu0
  %v3656 = vpop.trf.xlu0
  %v3657 = vpop.trf.xlu0
  %v3658 = vpop.trf.xlu0
  %v3659 = vpop.trf.xlu0
  %v3660 = vpop.trf.xlu0
  %v3661 = vpop.trf.xlu0
  %v3662 = vpop.trf.xlu0
  %v3663 = vpop.trf.xlu0
  %v3664 = vpop.trf.xlu0
  %v3665 = vpop.trf.xlu0
  %v3666 = vpop.trf.xlu0
  %v3667 = vpop.trf.xlu0
  %3669 = vset.pattern.permute.xlu0 4
  %3670 = vperm.xlu0 %3669, %v3631
  %v3671 = vpop.permute.xlu0 %3670
  %3674 = vset.pattern.permute.xlu0 4
  %3675 = vperm.xlu0 %3674, %v3634
  %v3676 = vpop.permute.xlu0 %3675
  %v3678 = vperm.slane %v3652, 0
  %v3679 = vadd.f32 %v3671, %v3678
  %v3680 = vadd.f32 %v3676, %v3678
  %vm3681 = vcmp.gt.f32.partialorder %v3679, 0.0
  %vm3682 = vcmp.gt.f32.partialorder %v3680, 0.0
  %v3683 = vmul.f32 %v3679, 0.2
  %v3684 = vmul.f32 %v3680, 0.2
  %v3685 = vsel %vm3681, %v3679, %v3683
  %v3686 = vsel %vm3682, %v3680, %v3684
  %v3687 = vadd.f32 %v3685, %v95
  %v3688 = vadd.f32 %v3686, %v96
  %v3689 = vsel %vm97, %v3687, -inf
  %3690 = vmax.xlane.f32.xlu0 %v3689
  %v3691 = vpop.xlane.xlu0 %3690
  %v3692 = vsel %vm97, %v3688, -inf
  %3693 = vmax.xlane.f32.xlu0 %v3692
  %v3694 = vpop.xlane.xlu0 %3693
  %v3695 = vsel %vm104, %v3691, 0.0
  %v3696 = vsel %vm105, %v3694, 0.0
  %v3697 = vsub.f32 %v3687, %v3695
  %v3698 = vsub.f32 %v3688, %v3696
  %v3699 = vmul.f32 %v3697, 1.442695
  %v3700 = vpow.pop %v3699
  %v3701 = vmul.f32 %v3698, 1.442695
  %v3702 = vpow.pop %v3701
  %v3703 = vmul.f32 %v91, %v3700
  %v3704 = vmul.f32 %v92, %v3702
  %v3705 = vsel %vm97, %v3703, 0.0
  %3706 = vadd.xlane.f32.xlu0 %v3705
  %v3707 = vpop.xlane.xlu0 %3706
  %v3708 = vsel %vm97, %v3704, 0.0
  %3709 = vadd.xlane.f32.xlu0 %v3708
  %v3710 = vpop.xlane.xlu0 %3709
  %vm3711 = vcmp.gt.f32.partialorder %v3707, 0.0
  %vm3712 = vcmp.gt.f32.partialorder %v3710, 0.0
  %v3713 = vsel %vm3711, %v3707, 1.0
  %v3714 = vsel %vm3712, %v3710, 1.0
  %v3715 = vrcp.pop %v3713
  %v3716 = vrcp.pop %v3714
  %v3717 = vmul.f32 %v3703, %v3715
  %v3718 = vmul.f32 %v3704, %v3716
  %3719 = vrot.lane.b32.xlu0 %v3631, 127
  %v3720 = vpop.permute.xlu0 %3719
  %3721 = vrot.lane.b32.xlu0 %v3634, 127
  %v3722 = vpop.permute.xlu0 %3721
  %3725 = vxpose.xlu0.b32.start [1/16] %v3720, 128
  %3726 = vxpose.xlu0.b32.cont [2/16] %v3722, 128
  %3727 = vxpose.xlu0.b32.cont [3/16] 0.0, 128
  %3728 = vxpose.xlu0.b32.cont [4/16] 0.0, 128
  %3729 = vxpose.xlu0.b32.cont [5/16] 0.0, 128
  %3730 = vxpose.xlu0.b32.cont [6/16] 0.0, 128
  %3731 = vxpose.xlu0.b32.cont [7/16] 0.0, 128
  %3732 = vxpose.xlu0.b32.cont [8/16] 0.0, 128
  %3733 = vxpose.xlu0.b32.cont [9/16] 0.0, 128
  %3734 = vxpose.xlu0.b32.cont [10/16] 0.0, 128
  %3735 = vxpose.xlu0.b32.cont [11/16] 0.0, 128
  %3736 = vxpose.xlu0.b32.cont [12/16] 0.0, 128
  %3737 = vxpose.xlu0.b32.cont [13/16] 0.0, 128
  %3738 = vxpose.xlu0.b32.cont [14/16] 0.0, 128
  %3739 = vxpose.xlu0.b32.cont [15/16] 0.0, 128
  %3740 = vxpose.xlu0.b32.end [16/16] 0.0, 128
  %v3741 = vpop.trf.xlu0
  %v3742 = vpop.trf.xlu0
  %v3743 = vpop.trf.xlu0
  %v3744 = vpop.trf.xlu0
  %v3745 = vpop.trf.xlu0
  %v3746 = vpop.trf.xlu0
  %v3747 = vpop.trf.xlu0
  %v3748 = vpop.trf.xlu0
  %v3749 = vpop.trf.xlu0
  %v3750 = vpop.trf.xlu0
  %v3751 = vpop.trf.xlu0
  %v3752 = vpop.trf.xlu0
  %v3753 = vpop.trf.xlu0
  %v3754 = vpop.trf.xlu0
  %v3755 = vpop.trf.xlu0
  %v3756 = vpop.trf.xlu0
  %3757 = vset.pattern.permute.xlu0 5
  %3758 = vperm.xlu0 %3757, %v3631
  %v3759 = vpop.permute.xlu0 %3758
  %3761 = vset.pattern.permute.xlu0 5
  %3762 = vperm.xlu0 %3761, %v3634
  %v3763 = vpop.permute.xlu0 %3762
  %v3765 = vperm.slane %v3741, 0
  %v3766 = vadd.f32 %v3759, %v3765
  %v3767 = vadd.f32 %v3763, %v3765
  %vm3768 = vcmp.gt.f32.partialorder %v3766, 0.0
  %vm3769 = vcmp.gt.f32.partialorder %v3767, 0.0
  %v3770 = vmul.f32 %v3766, 0.2
  %v3771 = vmul.f32 %v3767, 0.2
  %v3772 = vsel %vm3768, %v3766, %v3770
  %v3773 = vsel %vm3769, %v3767, %v3771
  %v3774 = vadd.f32 %v3772, %v95
  %v3775 = vadd.f32 %v3773, %v96
  %v3776 = vsel %vm97, %v3774, -inf
  %3777 = vmax.xlane.f32.xlu0 %v3776
  %v3778 = vpop.xlane.xlu0 %3777
  %v3779 = vsel %vm97, %v3775, -inf
  %3780 = vmax.xlane.f32.xlu0 %v3779
  %v3781 = vpop.xlane.xlu0 %3780
  %v3782 = vsel %vm104, %v3778, 0.0
  %v3783 = vsel %vm105, %v3781, 0.0
  %v3784 = vsub.f32 %v3774, %v3782
  %v3785 = vsub.f32 %v3775, %v3783
  %v3786 = vmul.f32 %v3784, 1.442695
  %v3787 = vpow.pop %v3786
  %v3788 = vmul.f32 %v3785, 1.442695
  %v3789 = vpow.pop %v3788
  %v3790 = vmul.f32 %v91, %v3787
  %v3791 = vmul.f32 %v92, %v3789
  %v3792 = vsel %vm97, %v3790, 0.0
  %3793 = vadd.xlane.f32.xlu0 %v3792
  %v3794 = vpop.xlane.xlu0 %3793
  %v3795 = vsel %vm97, %v3791, 0.0
  %3796 = vadd.xlane.f32.xlu0 %v3795
  %v3797 = vpop.xlane.xlu0 %3796
  %vm3798 = vcmp.gt.f32.partialorder %v3794, 0.0
  %vm3799 = vcmp.gt.f32.partialorder %v3797, 0.0
  %v3800 = vsel %vm3798, %v3794, 1.0
  %v3801 = vsel %vm3799, %v3797, 1.0
  %v3802 = vrcp.pop %v3800
  %v3803 = vrcp.pop %v3801
  %v3804 = vmul.f32 %v3790, %v3802
  %v3805 = vmul.f32 %v3791, %v3803
  %3808 = vrot.lane.b32.xlu0 %v3608, 96
  %v3809 = vpop.permute.xlu0 %3808
  %3810 = vrot.lane.b32.xlu0 %v3611, 96
  %v3811 = vpop.permute.xlu0 %3810
  %v3815 = vsel %vm97, %v3804, 0
  %v3818 = vsel %vm97, %v3805, 0
  %3820 = vmatpush.msra.mxu0 0.0
  %3821 = vmatpush.msra.mxu0 0.0
  %3822 = vmatpush.msra.mxu0 0.0
  %3823 = vmatpush.msra.mxu0 0.0
  %3824 = vmatpush.msra.mxu0 0.0
  %3825 = vmatpush.msra.mxu0 0.0
  %3826 = vmatpush.msra.mxu0 0.0
  %3827 = vmatpush.msra.mxu0 0.0
  %3828 = vmatpush.msra.mxu0 0.0
  %3829 = vmatpush.msra.mxu0 0.0
  %3830 = vmatpush.msra.mxu0 0.0
  %3831 = vmatpush.msra.mxu0 0.0
  %3832 = vmatpush.msra.mxu0 0.0
  %3833 = vmatpush.msra.mxu0 0.0
  %3834 = vmatpush.msra.mxu0 %v3811
  %3835 = vmatpush.msra.mxu0 %v3809
  %3836 = vmatmul.f32.gmra.mxu0 %v3815
  %v3837 = vpop.f32.mrf.mxu0
  %v3838 = vadd.f32 0.0, %v3837
  %3839 = vmatmul.f32.gmra.mxu0 %v3818
  %v3840 = vpop.f32.mrf.mxu0
  %v3841 = vadd.f32 0.0, %v3840
  %3842 = vdwg.mxu0
  %v3844 = vsel %vm97, %v3717, 0
  %v3847 = vsel %vm97, %v3718, 0
  %3849 = vmatpush.msra.mxu0 0.0
  %3850 = vmatpush.msra.mxu0 0.0
  %3851 = vmatpush.msra.mxu0 0.0
  %3852 = vmatpush.msra.mxu0 0.0
  %3853 = vmatpush.msra.mxu0 0.0
  %3854 = vmatpush.msra.mxu0 0.0
  %3855 = vmatpush.msra.mxu0 0.0
  %3856 = vmatpush.msra.mxu0 0.0
  %3857 = vmatpush.msra.mxu0 0.0
  %3858 = vmatpush.msra.mxu0 0.0
  %3859 = vmatpush.msra.mxu0 0.0
  %3860 = vmatpush.msra.mxu0 0.0
  %3861 = vmatpush.msra.mxu0 0.0
  %3862 = vmatpush.msra.mxu0 0.0
  %3863 = vmatpush.msra.mxu0 %v3611
  %3864 = vmatpush.msra.mxu0 %v3608
  %3865 = vmatmul.f32.gmra.mxu0 %v3844
  %v3866 = vpop.f32.mrf.mxu0
  %v3867 = vadd.f32 %v3838, %v3866
  %3868 = vmatmul.f32.gmra.mxu0 %v3847
  %v3869 = vpop.f32.mrf.mxu0
  %v3870 = vadd.f32 %v3841, %v3869
  %3871 = vdwg.mxu0
  %3872 = vrot.lane.b32.xlu0 %v3631, 126
  %v3873 = vpop.permute.xlu0 %3872
  %3874 = vrot.lane.b32.xlu0 %v3634, 126
  %v3875 = vpop.permute.xlu0 %3874
  %3878 = vxpose.xlu0.b32.start [1/16] %v3873, 128
  %3879 = vxpose.xlu0.b32.cont [2/16] %v3875, 128
  %3880 = vxpose.xlu0.b32.cont [3/16] 0.0, 128
  %3881 = vxpose.xlu0.b32.cont [4/16] 0.0, 128
  %3882 = vxpose.xlu0.b32.cont [5/16] 0.0, 128
  %3883 = vxpose.xlu0.b32.cont [6/16] 0.0, 128
  %3884 = vxpose.xlu0.b32.cont [7/16] 0.0, 128
  %3885 = vxpose.xlu0.b32.cont [8/16] 0.0, 128
  %3886 = vxpose.xlu0.b32.cont [9/16] 0.0, 128
  %3887 = vxpose.xlu0.b32.cont [10/16] 0.0, 128
  %3888 = vxpose.xlu0.b32.cont [11/16] 0.0, 128
  %3889 = vxpose.xlu0.b32.cont [12/16] 0.0, 128
  %3890 = vxpose.xlu0.b32.cont [13/16] 0.0, 128
  %3891 = vxpose.xlu0.b32.cont [14/16] 0.0, 128
  %3892 = vxpose.xlu0.b32.cont [15/16] 0.0, 128
  %3893 = vxpose.xlu0.b32.end [16/16] 0.0, 128
  %v3894 = vpop.trf.xlu0
  %v3895 = vpop.trf.xlu0
  %v3896 = vpop.trf.xlu0
  %v3897 = vpop.trf.xlu0
  %v3898 = vpop.trf.xlu0
  %v3899 = vpop.trf.xlu0
  %v3900 = vpop.trf.xlu0
  %v3901 = vpop.trf.xlu0
  %v3902 = vpop.trf.xlu0
  %v3903 = vpop.trf.xlu0
  %v3904 = vpop.trf.xlu0
  %v3905 = vpop.trf.xlu0
  %v3906 = vpop.trf.xlu0
  %v3907 = vpop.trf.xlu0
  %v3908 = vpop.trf.xlu0
  %v3909 = vpop.trf.xlu0
  %3910 = vset.pattern.permute.xlu0 6
  %3911 = vperm.xlu0 %3910, %v3631
  %v3912 = vpop.permute.xlu0 %3911
  %3914 = vset.pattern.permute.xlu0 6
  %3915 = vperm.xlu0 %3914, %v3634
  %v3916 = vpop.permute.xlu0 %3915
  %v3918 = vperm.slane %v3894, 0
  %v3919 = vadd.f32 %v3912, %v3918
  %v3920 = vadd.f32 %v3916, %v3918
  %vm3921 = vcmp.gt.f32.partialorder %v3919, 0.0
  %vm3922 = vcmp.gt.f32.partialorder %v3920, 0.0
  %v3923 = vmul.f32 %v3919, 0.2
  %v3924 = vmul.f32 %v3920, 0.2
  %v3925 = vsel %vm3921, %v3919, %v3923
  %v3926 = vsel %vm3922, %v3920, %v3924
  %v3927 = vadd.f32 %v3925, %v95
  %v3928 = vadd.f32 %v3926, %v96
  %v3929 = vsel %vm97, %v3927, -inf
  %3930 = vmax.xlane.f32.xlu0 %v3929
  %v3931 = vpop.xlane.xlu0 %3930
  %v3932 = vsel %vm97, %v3928, -inf
  %3933 = vmax.xlane.f32.xlu0 %v3932
  %v3934 = vpop.xlane.xlu0 %3933
  %v3935 = vsel %vm104, %v3931, 0.0
  %v3936 = vsel %vm105, %v3934, 0.0
  %v3937 = vsub.f32 %v3927, %v3935
  %v3938 = vsub.f32 %v3928, %v3936
  %v3939 = vmul.f32 %v3937, 1.442695
  %v3940 = vpow.pop %v3939
  %v3941 = vmul.f32 %v3938, 1.442695
  %v3942 = vpow.pop %v3941
  %v3943 = vmul.f32 %v91, %v3940
  %v3944 = vmul.f32 %v92, %v3942
  %v3945 = vsel %vm97, %v3943, 0.0
  %3946 = vadd.xlane.f32.xlu0 %v3945
  %v3947 = vpop.xlane.xlu0 %3946
  %v3948 = vsel %vm97, %v3944, 0.0
  %3949 = vadd.xlane.f32.xlu0 %v3948
  %v3950 = vpop.xlane.xlu0 %3949
  %vm3951 = vcmp.gt.f32.partialorder %v3947, 0.0
  %vm3952 = vcmp.gt.f32.partialorder %v3950, 0.0
  %v3953 = vsel %vm3951, %v3947, 1.0
  %v3954 = vsel %vm3952, %v3950, 1.0
  %v3955 = vrcp.pop %v3953
  %v3956 = vrcp.pop %v3954
  %v3957 = vmul.f32 %v3943, %v3955
  %v3958 = vmul.f32 %v3944, %v3956
  %3959 = vrot.lane.b32.xlu0 %v3608, 64
  %v3960 = vpop.permute.xlu0 %3959
  %3961 = vrot.lane.b32.xlu0 %v3611, 64
  %v3962 = vpop.permute.xlu0 %3961
  %v3966 = vsel %vm97, %v3957, 0
  %v3969 = vsel %vm97, %v3958, 0
  %3971 = vmatpush.msra.mxu0 0.0
  %3972 = vmatpush.msra.mxu0 0.0
  %3973 = vmatpush.msra.mxu0 0.0
  %3974 = vmatpush.msra.mxu0 0.0
  %3975 = vmatpush.msra.mxu0 0.0
  %3976 = vmatpush.msra.mxu0 0.0
  %3977 = vmatpush.msra.mxu0 0.0
  %3978 = vmatpush.msra.mxu0 0.0
  %3979 = vmatpush.msra.mxu0 0.0
  %3980 = vmatpush.msra.mxu0 0.0
  %3981 = vmatpush.msra.mxu0 0.0
  %3982 = vmatpush.msra.mxu0 0.0
  %3983 = vmatpush.msra.mxu0 0.0
  %3984 = vmatpush.msra.mxu0 0.0
  %3985 = vmatpush.msra.mxu0 %v3962
  %3986 = vmatpush.msra.mxu0 %v3960
  %3987 = vmatmul.f32.gmra.mxu0 %v3966
  %v3988 = vpop.f32.mrf.mxu0
  %v3989 = vadd.f32 0.0, %v3988
  %3990 = vmatmul.f32.gmra.mxu0 %v3969
  %v3991 = vpop.f32.mrf.mxu0
  %v3992 = vadd.f32 0.0, %v3991
  %3993 = vdwg.mxu0
  %v3994 = vadd.f32 %v3867, %v3989
  %v3995 = vadd.f32 %v3870, %v3992
  %3996 = vrot.lane.b32.xlu0 %v3631, 125
  %v3997 = vpop.permute.xlu0 %3996
  %3998 = vrot.lane.b32.xlu0 %v3634, 125
  %v3999 = vpop.permute.xlu0 %3998
  %4002 = vxpose.xlu0.b32.start [1/16] %v3997, 128
  %4003 = vxpose.xlu0.b32.cont [2/16] %v3999, 128
  %4004 = vxpose.xlu0.b32.cont [3/16] 0.0, 128
  %4005 = vxpose.xlu0.b32.cont [4/16] 0.0, 128
  %4006 = vxpose.xlu0.b32.cont [5/16] 0.0, 128
  %4007 = vxpose.xlu0.b32.cont [6/16] 0.0, 128
  %4008 = vxpose.xlu0.b32.cont [7/16] 0.0, 128
  %4009 = vxpose.xlu0.b32.cont [8/16] 0.0, 128
  %4010 = vxpose.xlu0.b32.cont [9/16] 0.0, 128
  %4011 = vxpose.xlu0.b32.cont [10/16] 0.0, 128
  %4012 = vxpose.xlu0.b32.cont [11/16] 0.0, 128
  %4013 = vxpose.xlu0.b32.cont [12/16] 0.0, 128
  %4014 = vxpose.xlu0.b32.cont [13/16] 0.0, 128
  %4015 = vxpose.xlu0.b32.cont [14/16] 0.0, 128
  %4016 = vxpose.xlu0.b32.cont [15/16] 0.0, 128
  %4017 = vxpose.xlu0.b32.end [16/16] 0.0, 128
  %v4018 = vpop.trf.xlu0
  %v4019 = vpop.trf.xlu0
  %v4020 = vpop.trf.xlu0
  %v4021 = vpop.trf.xlu0
  %v4022 = vpop.trf.xlu0
  %v4023 = vpop.trf.xlu0
  %v4024 = vpop.trf.xlu0
  %v4025 = vpop.trf.xlu0
  %v4026 = vpop.trf.xlu0
  %v4027 = vpop.trf.xlu0
  %v4028 = vpop.trf.xlu0
  %v4029 = vpop.trf.xlu0
  %v4030 = vpop.trf.xlu0
  %v4031 = vpop.trf.xlu0
  %v4032 = vpop.trf.xlu0
  %v4033 = vpop.trf.xlu0
  %4034 = vset.pattern.permute.xlu0 7
  %4035 = vperm.xlu0 %4034, %v3631
  %v4036 = vpop.permute.xlu0 %4035
  %4038 = vset.pattern.permute.xlu0 7
  %4039 = vperm.xlu0 %4038, %v3634
  %v4040 = vpop.permute.xlu0 %4039
  %v4042 = vperm.slane %v4018, 0
  %v4043 = vadd.f32 %v4036, %v4042
  %v4044 = vadd.f32 %v4040, %v4042
  %vm4045 = vcmp.gt.f32.partialorder %v4043, 0.0
  %vm4046 = vcmp.gt.f32.partialorder %v4044, 0.0
  %v4047 = vmul.f32 %v4043, 0.2
  %v4048 = vmul.f32 %v4044, 0.2
  %v4049 = vsel %vm4045, %v4043, %v4047
  %v4050 = vsel %vm4046, %v4044, %v4048
  %v4051 = vadd.f32 %v4049, %v95
  %v4052 = vadd.f32 %v4050, %v96
  %v4053 = vsel %vm97, %v4051, -inf
  %4054 = vmax.xlane.f32.xlu0 %v4053
  %v4055 = vpop.xlane.xlu0 %4054
  %v4056 = vsel %vm97, %v4052, -inf
  %4057 = vmax.xlane.f32.xlu0 %v4056
  %v4058 = vpop.xlane.xlu0 %4057
  %v4059 = vsel %vm104, %v4055, 0.0
  %v4060 = vsel %vm105, %v4058, 0.0
  %v4061 = vsub.f32 %v4051, %v4059
  %v4062 = vsub.f32 %v4052, %v4060
  %v4063 = vmul.f32 %v4061, 1.442695
  %v4064 = vpow.pop %v4063
  %v4065 = vmul.f32 %v4062, 1.442695
  %v4066 = vpow.pop %v4065
  %v4067 = vmul.f32 %v91, %v4064
  %v4068 = vmul.f32 %v92, %v4066
  %v4069 = vsel %vm97, %v4067, 0.0
  %4070 = vadd.xlane.f32.xlu0 %v4069
  %v4071 = vpop.xlane.xlu0 %4070
  %v4072 = vsel %vm97, %v4068, 0.0
  %4073 = vadd.xlane.f32.xlu0 %v4072
  %v4074 = vpop.xlane.xlu0 %4073
  %vm4075 = vcmp.gt.f32.partialorder %v4071, 0.0
  %vm4076 = vcmp.gt.f32.partialorder %v4074, 0.0
  %v4077 = vsel %vm4075, %v4071, 1.0
  %v4078 = vsel %vm4076, %v4074, 1.0
  %v4079 = vrcp.pop %v4077
  %v4080 = vrcp.pop %v4078
  %v4081 = vmul.f32 %v4067, %v4079
  %v4082 = vmul.f32 %v4068, %v4080
  %4083 = vrot.lane.b32.xlu0 %v3608, 32
  %v4084 = vpop.permute.xlu0 %4083
  %4085 = vrot.lane.b32.xlu0 %v3611, 32
  %v4086 = vpop.permute.xlu0 %4085
  %v4090 = vsel %vm97, %v4081, 0
  %v4093 = vsel %vm97, %v4082, 0
  %4095 = vmatpush.msra.mxu0 0.0
  %4096 = vmatpush.msra.mxu0 0.0
  %4097 = vmatpush.msra.mxu0 0.0
  %4098 = vmatpush.msra.mxu0 0.0
  %4099 = vmatpush.msra.mxu0 0.0
  %4100 = vmatpush.msra.mxu0 0.0
  %4101 = vmatpush.msra.mxu0 0.0
  %4102 = vmatpush.msra.mxu0 0.0
  %4103 = vmatpush.msra.mxu0 0.0
  %4104 = vmatpush.msra.mxu0 0.0
  %4105 = vmatpush.msra.mxu0 0.0
  %4106 = vmatpush.msra.mxu0 0.0
  %4107 = vmatpush.msra.mxu0 0.0
  %4108 = vmatpush.msra.mxu0 0.0
  %4109 = vmatpush.msra.mxu0 %v4086
  %4110 = vmatpush.msra.mxu0 %v4084
  %4111 = vmatmul.f32.gmra.mxu0 %v4090
  %v4112 = vpop.f32.mrf.mxu0
  %v4113 = vadd.f32 0.0, %v4112
  %4114 = vmatmul.f32.gmra.mxu0 %v4093
  %v4115 = vpop.f32.mrf.mxu0
  %v4116 = vadd.f32 0.0, %v4115
  %4117 = vdwg.mxu0
  %v4118 = vadd.f32 %v3994, %v4113
  %v4119 = vadd.f32 %v3995, %v4116
  %v4120 = vmul.f32 %v4118, 0.25
  %v4121 = vmul.f32 %v4119, 0.25
  %v4123 = vperm.slane %v3583, 0
  %v4125 = vadd.f32 %v4120, %v4123
  %v4126 = vadd.f32 %v4121, %v4123
  %s4127 = scalar_lea.vmem %s3, 224
  %v4128 = vld [vmem:[%s4127] sm:$0xff]
  %v4129 = vld [vmem:[%s4127 + $0x8] sm:$0xff]
  %v4130 = vld [vmem:[%s4127 + $0x10] sm:$0xff]
  %v4131 = vld [vmem:[%s4127 + $0x18] sm:$0xff]
  %s4132 = scalar_lea.vmem %s4, 896
  %v4133 = vld [vmem:[%s4132] sm:$0xff]
  %v4134 = vld [vmem:[%s4132 + $0x8] sm:$0xff]
  %v4135 = vld [vmem:[%s4132 + $0x10] sm:$0xff]
  %v4136 = vld [vmem:[%s4132 + $0x18] sm:$0xff]
  %v4137 = vld [vmem:[%s4132 + $0x20] sm:$0xff]
  %v4138 = vld [vmem:[%s4132 + $0x28] sm:$0xff]
  %v4139 = vld [vmem:[%s4132 + $0x30] sm:$0xff]
  %v4140 = vld [vmem:[%s4132 + $0x38] sm:$0xff]
  %v4141 = vld [vmem:[%s4132 + $0x40] sm:$0xff]
  %v4142 = vld [vmem:[%s4132 + $0x48] sm:$0xff]
  %v4143 = vld [vmem:[%s4132 + $0x50] sm:$0xff]
  %v4144 = vld [vmem:[%s4132 + $0x58] sm:$0xff]
  %v4145 = vld [vmem:[%s4132 + $0x60] sm:$0xff]
  %v4146 = vld [vmem:[%s4132 + $0x68] sm:$0xff]
  %v4147 = vld [vmem:[%s4132 + $0x70] sm:$0xff]
  %v4148 = vld [vmem:[%s4132 + $0x78] sm:$0xff]
  %s4149 = scalar_lea.vmem %s5, 7
  %v4150 = vld [vmem:[%s4149] sm:$0x1]
  %4151 = vmatpush.msra.mxu0 0.0
  %4152 = vmatpush.msra.mxu0 0.0
  %4153 = vmatpush.msra.mxu0 0.0
  %4154 = vmatpush.msra.mxu0 0.0
  %4155 = vmatpush.msra.mxu0 0.0
  %4156 = vmatpush.msra.mxu0 0.0
  %4157 = vmatpush.msra.mxu0 0.0
  %4158 = vmatpush.msra.mxu0 0.0
  %4159 = vmatpush.msra.mxu0 0.0
  %4160 = vmatpush.msra.mxu0 0.0
  %4161 = vmatpush.msra.mxu0 0.0
  %4162 = vmatpush.msra.mxu0 0.0
  %4163 = vmatpush.msra.mxu0 %v4131
  %4164 = vmatpush.msra.mxu0 %v4130
  %4165 = vmatpush.msra.mxu0 %v4129
  %4166 = vmatpush.msra.mxu0 %v4128
  %4167 = vmatmul.f32.gmra.mxu0 %v3585
  %v4168 = vpop.f32.mrf.mxu0
  %v4169 = vadd.f32 0.0, %v4168
  %4170 = vmatmul.f32.gmra.mxu0 %v3588
  %v4171 = vpop.f32.mrf.mxu0
  %v4172 = vadd.f32 0.0, %v4171
  %4173 = vdwg.mxu0
  %4174 = vmatpush.msra.mxu0 %v4148
  %4175 = vmatpush.msra.mxu0 %v4147
  %4176 = vmatpush.msra.mxu0 %v4146
  %4177 = vmatpush.msra.mxu0 %v4145
  %4178 = vmatpush.msra.mxu0 %v4144
  %4179 = vmatpush.msra.mxu0 %v4143
  %4180 = vmatpush.msra.mxu0 %v4142
  %4181 = vmatpush.msra.mxu0 %v4141
  %4182 = vmatpush.msra.mxu0 %v4140
  %4183 = vmatpush.msra.mxu0 %v4139
  %4184 = vmatpush.msra.mxu0 %v4138
  %4185 = vmatpush.msra.mxu0 %v4137
  %4186 = vmatpush.msra.mxu0 %v4136
  %4187 = vmatpush.msra.mxu0 %v4135
  %4188 = vmatpush.msra.mxu0 %v4134
  %4189 = vmatpush.msra.mxu0 %v4133
  %4190 = vmatmul.f32.gmra.mxu0 %v4169
  %v4191 = vpop.f32.mrf.mxu0
  %v4192 = vadd.f32 0.0, %v4191
  %4193 = vmatmul.f32.gmra.mxu0 %v4172
  %v4194 = vpop.f32.mrf.mxu0
  %v4195 = vadd.f32 0.0, %v4194
  %4196 = vdwg.mxu0
  %4197 = vxpose.xlu0.b32.start [1/16] %v4192, 128
  %4198 = vxpose.xlu0.b32.cont [2/16] %v4195, 128
  %4199 = vxpose.xlu0.b32.cont [3/16] 0.0, 128
  %4200 = vxpose.xlu0.b32.cont [4/16] 0.0, 128
  %4201 = vxpose.xlu0.b32.cont [5/16] 0.0, 128
  %4202 = vxpose.xlu0.b32.cont [6/16] 0.0, 128
  %4203 = vxpose.xlu0.b32.cont [7/16] 0.0, 128
  %4204 = vxpose.xlu0.b32.cont [8/16] 0.0, 128
  %4205 = vxpose.xlu0.b32.cont [9/16] 0.0, 128
  %4206 = vxpose.xlu0.b32.cont [10/16] 0.0, 128
  %4207 = vxpose.xlu0.b32.cont [11/16] 0.0, 128
  %4208 = vxpose.xlu0.b32.cont [12/16] 0.0, 128
  %4209 = vxpose.xlu0.b32.cont [13/16] 0.0, 128
  %4210 = vxpose.xlu0.b32.cont [14/16] 0.0, 128
  %4211 = vxpose.xlu0.b32.cont [15/16] 0.0, 128
  %4212 = vxpose.xlu0.b32.end [16/16] 0.0, 128
  %v4213 = vpop.trf.xlu0
  %v4214 = vpop.trf.xlu0
  %v4215 = vpop.trf.xlu0
  %v4216 = vpop.trf.xlu0
  %v4217 = vpop.trf.xlu0
  %v4218 = vpop.trf.xlu0
  %v4219 = vpop.trf.xlu0
  %v4220 = vpop.trf.xlu0
  %v4221 = vpop.trf.xlu0
  %v4222 = vpop.trf.xlu0
  %v4223 = vpop.trf.xlu0
  %v4224 = vpop.trf.xlu0
  %v4225 = vpop.trf.xlu0
  %v4226 = vpop.trf.xlu0
  %v4227 = vpop.trf.xlu0
  %v4228 = vpop.trf.xlu0
  %4230 = vset.pattern.permute.xlu0 4
  %4231 = vperm.xlu0 %4230, %v4192
  %v4232 = vpop.permute.xlu0 %4231
  %4235 = vset.pattern.permute.xlu0 4
  %4236 = vperm.xlu0 %4235, %v4195
  %v4237 = vpop.permute.xlu0 %4236
  %v4239 = vperm.slane %v4213, 0
  %v4240 = vadd.f32 %v4232, %v4239
  %v4241 = vadd.f32 %v4237, %v4239
  %vm4242 = vcmp.gt.f32.partialorder %v4240, 0.0
  %vm4243 = vcmp.gt.f32.partialorder %v4241, 0.0
  %v4244 = vmul.f32 %v4240, 0.2
  %v4245 = vmul.f32 %v4241, 0.2
  %v4246 = vsel %vm4242, %v4240, %v4244
  %v4247 = vsel %vm4243, %v4241, %v4245
  %v4248 = vadd.f32 %v4246, %v111
  %v4249 = vadd.f32 %v4247, %v112
  %v4250 = vsel %vm97, %v4248, -inf
  %4251 = vmax.xlane.f32.xlu0 %v4250
  %v4252 = vpop.xlane.xlu0 %4251
  %v4253 = vsel %vm97, %v4249, -inf
  %4254 = vmax.xlane.f32.xlu0 %v4253
  %v4255 = vpop.xlane.xlu0 %4254
  %v4256 = vsel %vm119, %v4252, 0.0
  %v4257 = vsel %vm120, %v4255, 0.0
  %v4258 = vsub.f32 %v4248, %v4256
  %v4259 = vsub.f32 %v4249, %v4257
  %v4260 = vmul.f32 %v4258, 1.442695
  %v4261 = vpow.pop %v4260
  %v4262 = vmul.f32 %v4259, 1.442695
  %v4263 = vpow.pop %v4262
  %v4264 = vmul.f32 %v107, %v4261
  %v4265 = vmul.f32 %v108, %v4263
  %v4266 = vsel %vm97, %v4264, 0.0
  %4267 = vadd.xlane.f32.xlu0 %v4266
  %v4268 = vpop.xlane.xlu0 %4267
  %v4269 = vsel %vm97, %v4265, 0.0
  %4270 = vadd.xlane.f32.xlu0 %v4269
  %v4271 = vpop.xlane.xlu0 %4270
  %vm4272 = vcmp.gt.f32.partialorder %v4268, 0.0
  %vm4273 = vcmp.gt.f32.partialorder %v4271, 0.0
  %v4274 = vsel %vm4272, %v4268, 1.0
  %v4275 = vsel %vm4273, %v4271, 1.0
  %v4276 = vrcp.pop %v4274
  %v4277 = vrcp.pop %v4275
  %v4278 = vmul.f32 %v4264, %v4276
  %v4279 = vmul.f32 %v4265, %v4277
  %4280 = vrot.lane.b32.xlu0 %v4192, 127
  %v4281 = vpop.permute.xlu0 %4280
  %4282 = vrot.lane.b32.xlu0 %v4195, 127
  %v4283 = vpop.permute.xlu0 %4282
  %4286 = vxpose.xlu0.b32.start [1/16] %v4281, 128
  %4287 = vxpose.xlu0.b32.cont [2/16] %v4283, 128
  %4288 = vxpose.xlu0.b32.cont [3/16] 0.0, 128
  %4289 = vxpose.xlu0.b32.cont [4/16] 0.0, 128
  %4290 = vxpose.xlu0.b32.cont [5/16] 0.0, 128
  %4291 = vxpose.xlu0.b32.cont [6/16] 0.0, 128
  %4292 = vxpose.xlu0.b32.cont [7/16] 0.0, 128
  %4293 = vxpose.xlu0.b32.cont [8/16] 0.0, 128
  %4294 = vxpose.xlu0.b32.cont [9/16] 0.0, 128
  %4295 = vxpose.xlu0.b32.cont [10/16] 0.0, 128
  %4296 = vxpose.xlu0.b32.cont [11/16] 0.0, 128
  %4297 = vxpose.xlu0.b32.cont [12/16] 0.0, 128
  %4298 = vxpose.xlu0.b32.cont [13/16] 0.0, 128
  %4299 = vxpose.xlu0.b32.cont [14/16] 0.0, 128
  %4300 = vxpose.xlu0.b32.cont [15/16] 0.0, 128
  %4301 = vxpose.xlu0.b32.end [16/16] 0.0, 128
  %v4302 = vpop.trf.xlu0
  %v4303 = vpop.trf.xlu0
  %v4304 = vpop.trf.xlu0
  %v4305 = vpop.trf.xlu0
  %v4306 = vpop.trf.xlu0
  %v4307 = vpop.trf.xlu0
  %v4308 = vpop.trf.xlu0
  %v4309 = vpop.trf.xlu0
  %v4310 = vpop.trf.xlu0
  %v4311 = vpop.trf.xlu0
  %v4312 = vpop.trf.xlu0
  %v4313 = vpop.trf.xlu0
  %v4314 = vpop.trf.xlu0
  %v4315 = vpop.trf.xlu0
  %v4316 = vpop.trf.xlu0
  %v4317 = vpop.trf.xlu0
  %4318 = vset.pattern.permute.xlu0 5
  %4319 = vperm.xlu0 %4318, %v4192
  %v4320 = vpop.permute.xlu0 %4319
  %4322 = vset.pattern.permute.xlu0 5
  %4323 = vperm.xlu0 %4322, %v4195
  %v4324 = vpop.permute.xlu0 %4323
  %v4326 = vperm.slane %v4302, 0
  %v4327 = vadd.f32 %v4320, %v4326
  %v4328 = vadd.f32 %v4324, %v4326
  %vm4329 = vcmp.gt.f32.partialorder %v4327, 0.0
  %vm4330 = vcmp.gt.f32.partialorder %v4328, 0.0
  %v4331 = vmul.f32 %v4327, 0.2
  %v4332 = vmul.f32 %v4328, 0.2
  %v4333 = vsel %vm4329, %v4327, %v4331
  %v4334 = vsel %vm4330, %v4328, %v4332
  %v4335 = vadd.f32 %v4333, %v111
  %v4336 = vadd.f32 %v4334, %v112
  %v4337 = vsel %vm97, %v4335, -inf
  %4338 = vmax.xlane.f32.xlu0 %v4337
  %v4339 = vpop.xlane.xlu0 %4338
  %v4340 = vsel %vm97, %v4336, -inf
  %4341 = vmax.xlane.f32.xlu0 %v4340
  %v4342 = vpop.xlane.xlu0 %4341
  %v4343 = vsel %vm119, %v4339, 0.0
  %v4344 = vsel %vm120, %v4342, 0.0
  %v4345 = vsub.f32 %v4335, %v4343
  %v4346 = vsub.f32 %v4336, %v4344
  %v4347 = vmul.f32 %v4345, 1.442695
  %v4348 = vpow.pop %v4347
  %v4349 = vmul.f32 %v4346, 1.442695
  %v4350 = vpow.pop %v4349
  %v4351 = vmul.f32 %v107, %v4348
  %v4352 = vmul.f32 %v108, %v4350
  %v4353 = vsel %vm97, %v4351, 0.0
  %4354 = vadd.xlane.f32.xlu0 %v4353
  %v4355 = vpop.xlane.xlu0 %4354
  %v4356 = vsel %vm97, %v4352, 0.0
  %4357 = vadd.xlane.f32.xlu0 %v4356
  %v4358 = vpop.xlane.xlu0 %4357
  %vm4359 = vcmp.gt.f32.partialorder %v4355, 0.0
  %vm4360 = vcmp.gt.f32.partialorder %v4358, 0.0
  %v4361 = vsel %vm4359, %v4355, 1.0
  %v4362 = vsel %vm4360, %v4358, 1.0
  %v4363 = vrcp.pop %v4361
  %v4364 = vrcp.pop %v4362
  %v4365 = vmul.f32 %v4351, %v4363
  %v4366 = vmul.f32 %v4352, %v4364
  %4369 = vrot.lane.b32.xlu0 %v4169, 96
  %v4370 = vpop.permute.xlu0 %4369
  %4371 = vrot.lane.b32.xlu0 %v4172, 96
  %v4372 = vpop.permute.xlu0 %4371
  %v4376 = vsel %vm97, %v4365, 0
  %v4379 = vsel %vm97, %v4366, 0
  %4381 = vmatpush.msra.mxu0 0.0
  %4382 = vmatpush.msra.mxu0 0.0
  %4383 = vmatpush.msra.mxu0 0.0
  %4384 = vmatpush.msra.mxu0 0.0
  %4385 = vmatpush.msra.mxu0 0.0
  %4386 = vmatpush.msra.mxu0 0.0
  %4387 = vmatpush.msra.mxu0 0.0
  %4388 = vmatpush.msra.mxu0 0.0
  %4389 = vmatpush.msra.mxu0 0.0
  %4390 = vmatpush.msra.mxu0 0.0
  %4391 = vmatpush.msra.mxu0 0.0
  %4392 = vmatpush.msra.mxu0 0.0
  %4393 = vmatpush.msra.mxu0 0.0
  %4394 = vmatpush.msra.mxu0 0.0
  %4395 = vmatpush.msra.mxu0 %v4372
  %4396 = vmatpush.msra.mxu0 %v4370
  %4397 = vmatmul.f32.gmra.mxu0 %v4376
  %v4398 = vpop.f32.mrf.mxu0
  %v4399 = vadd.f32 0.0, %v4398
  %4400 = vmatmul.f32.gmra.mxu0 %v4379
  %v4401 = vpop.f32.mrf.mxu0
  %v4402 = vadd.f32 0.0, %v4401
  %4403 = vdwg.mxu0
  %v4405 = vsel %vm97, %v4278, 0
  %v4408 = vsel %vm97, %v4279, 0
  %4410 = vmatpush.msra.mxu0 0.0
  %4411 = vmatpush.msra.mxu0 0.0
  %4412 = vmatpush.msra.mxu0 0.0
  %4413 = vmatpush.msra.mxu0 0.0
  %4414 = vmatpush.msra.mxu0 0.0
  %4415 = vmatpush.msra.mxu0 0.0
  %4416 = vmatpush.msra.mxu0 0.0
  %4417 = vmatpush.msra.mxu0 0.0
  %4418 = vmatpush.msra.mxu0 0.0
  %4419 = vmatpush.msra.mxu0 0.0
  %4420 = vmatpush.msra.mxu0 0.0
  %4421 = vmatpush.msra.mxu0 0.0
  %4422 = vmatpush.msra.mxu0 0.0
  %4423 = vmatpush.msra.mxu0 0.0
  %4424 = vmatpush.msra.mxu0 %v4172
  %4425 = vmatpush.msra.mxu0 %v4169
  %4426 = vmatmul.f32.gmra.mxu0 %v4405
  %v4427 = vpop.f32.mrf.mxu0
  %v4428 = vadd.f32 %v4399, %v4427
  %4429 = vmatmul.f32.gmra.mxu0 %v4408
  %v4430 = vpop.f32.mrf.mxu0
  %v4431 = vadd.f32 %v4402, %v4430
  %4432 = vdwg.mxu0
  %4433 = vrot.lane.b32.xlu0 %v4192, 126
  %v4434 = vpop.permute.xlu0 %4433
  %4435 = vrot.lane.b32.xlu0 %v4195, 126
  %v4436 = vpop.permute.xlu0 %4435
  %4439 = vxpose.xlu0.b32.start [1/16] %v4434, 128
  %4440 = vxpose.xlu0.b32.cont [2/16] %v4436, 128
  %4441 = vxpose.xlu0.b32.cont [3/16] 0.0, 128
  %4442 = vxpose.xlu0.b32.cont [4/16] 0.0, 128
  %4443 = vxpose.xlu0.b32.cont [5/16] 0.0, 128
  %4444 = vxpose.xlu0.b32.cont [6/16] 0.0, 128
  %4445 = vxpose.xlu0.b32.cont [7/16] 0.0, 128
  %4446 = vxpose.xlu0.b32.cont [8/16] 0.0, 128
  %4447 = vxpose.xlu0.b32.cont [9/16] 0.0, 128
  %4448 = vxpose.xlu0.b32.cont [10/16] 0.0, 128
  %4449 = vxpose.xlu0.b32.cont [11/16] 0.0, 128
  %4450 = vxpose.xlu0.b32.cont [12/16] 0.0, 128
  %4451 = vxpose.xlu0.b32.cont [13/16] 0.0, 128
  %4452 = vxpose.xlu0.b32.cont [14/16] 0.0, 128
  %4453 = vxpose.xlu0.b32.cont [15/16] 0.0, 128
  %4454 = vxpose.xlu0.b32.end [16/16] 0.0, 128
  %v4455 = vpop.trf.xlu0
  %v4456 = vpop.trf.xlu0
  %v4457 = vpop.trf.xlu0
  %v4458 = vpop.trf.xlu0
  %v4459 = vpop.trf.xlu0
  %v4460 = vpop.trf.xlu0
  %v4461 = vpop.trf.xlu0
  %v4462 = vpop.trf.xlu0
  %v4463 = vpop.trf.xlu0
  %v4464 = vpop.trf.xlu0
  %v4465 = vpop.trf.xlu0
  %v4466 = vpop.trf.xlu0
  %v4467 = vpop.trf.xlu0
  %v4468 = vpop.trf.xlu0
  %v4469 = vpop.trf.xlu0
  %v4470 = vpop.trf.xlu0
  %4471 = vset.pattern.permute.xlu0 6
  %4472 = vperm.xlu0 %4471, %v4192
  %v4473 = vpop.permute.xlu0 %4472
  %4475 = vset.pattern.permute.xlu0 6
  %4476 = vperm.xlu0 %4475, %v4195
  %v4477 = vpop.permute.xlu0 %4476
  %v4479 = vperm.slane %v4455, 0
  %v4480 = vadd.f32 %v4473, %v4479
  %v4481 = vadd.f32 %v4477, %v4479
  %vm4482 = vcmp.gt.f32.partialorder %v4480, 0.0
  %vm4483 = vcmp.gt.f32.partialorder %v4481, 0.0
  %v4484 = vmul.f32 %v4480, 0.2
  %v4485 = vmul.f32 %v4481, 0.2
  %v4486 = vsel %vm4482, %v4480, %v4484
  %v4487 = vsel %vm4483, %v4481, %v4485
  %v4488 = vadd.f32 %v4486, %v111
  %v4489 = vadd.f32 %v4487, %v112
  %v4490 = vsel %vm97, %v4488, -inf
  %4491 = vmax.xlane.f32.xlu0 %v4490
  %v4492 = vpop.xlane.xlu0 %4491
  %v4493 = vsel %vm97, %v4489, -inf
  %4494 = vmax.xlane.f32.xlu0 %v4493
  %v4495 = vpop.xlane.xlu0 %4494
  %v4496 = vsel %vm119, %v4492, 0.0
  %v4497 = vsel %vm120, %v4495, 0.0
  %v4498 = vsub.f32 %v4488, %v4496
  %v4499 = vsub.f32 %v4489, %v4497
  %v4500 = vmul.f32 %v4498, 1.442695
  %v4501 = vpow.pop %v4500
  %v4502 = vmul.f32 %v4499, 1.442695
  %v4503 = vpow.pop %v4502
  %v4504 = vmul.f32 %v107, %v4501
  %v4505 = vmul.f32 %v108, %v4503
  %v4506 = vsel %vm97, %v4504, 0.0
  %4507 = vadd.xlane.f32.xlu0 %v4506
  %v4508 = vpop.xlane.xlu0 %4507
  %v4509 = vsel %vm97, %v4505, 0.0
  %4510 = vadd.xlane.f32.xlu0 %v4509
  %v4511 = vpop.xlane.xlu0 %4510
  %vm4512 = vcmp.gt.f32.partialorder %v4508, 0.0
  %vm4513 = vcmp.gt.f32.partialorder %v4511, 0.0
  %v4514 = vsel %vm4512, %v4508, 1.0
  %v4515 = vsel %vm4513, %v4511, 1.0
  %v4516 = vrcp.pop %v4514
  %v4517 = vrcp.pop %v4515
  %v4518 = vmul.f32 %v4504, %v4516
  %v4519 = vmul.f32 %v4505, %v4517
  %4520 = vrot.lane.b32.xlu0 %v4169, 64
  %v4521 = vpop.permute.xlu0 %4520
  %4522 = vrot.lane.b32.xlu0 %v4172, 64
  %v4523 = vpop.permute.xlu0 %4522
  %v4527 = vsel %vm97, %v4518, 0
  %v4530 = vsel %vm97, %v4519, 0
  %4532 = vmatpush.msra.mxu0 0.0
  %4533 = vmatpush.msra.mxu0 0.0
  %4534 = vmatpush.msra.mxu0 0.0
  %4535 = vmatpush.msra.mxu0 0.0
  %4536 = vmatpush.msra.mxu0 0.0
  %4537 = vmatpush.msra.mxu0 0.0
  %4538 = vmatpush.msra.mxu0 0.0
  %4539 = vmatpush.msra.mxu0 0.0
  %4540 = vmatpush.msra.mxu0 0.0
  %4541 = vmatpush.msra.mxu0 0.0
  %4542 = vmatpush.msra.mxu0 0.0
  %4543 = vmatpush.msra.mxu0 0.0
  %4544 = vmatpush.msra.mxu0 0.0
  %4545 = vmatpush.msra.mxu0 0.0
  %4546 = vmatpush.msra.mxu0 %v4523
  %4547 = vmatpush.msra.mxu0 %v4521
  %4548 = vmatmul.f32.gmra.mxu0 %v4527
  %v4549 = vpop.f32.mrf.mxu0
  %v4550 = vadd.f32 0.0, %v4549
  %4551 = vmatmul.f32.gmra.mxu0 %v4530
  %v4552 = vpop.f32.mrf.mxu0
  %v4553 = vadd.f32 0.0, %v4552
  %4554 = vdwg.mxu0
  %v4555 = vadd.f32 %v4428, %v4550
  %v4556 = vadd.f32 %v4431, %v4553
  %4557 = vrot.lane.b32.xlu0 %v4192, 125
  %v4558 = vpop.permute.xlu0 %4557
  %4559 = vrot.lane.b32.xlu0 %v4195, 125
  %v4560 = vpop.permute.xlu0 %4559
  %4563 = vxpose.xlu0.b32.start [1/16] %v4558, 128
  %4564 = vxpose.xlu0.b32.cont [2/16] %v4560, 128
  %4565 = vxpose.xlu0.b32.cont [3/16] 0.0, 128
  %4566 = vxpose.xlu0.b32.cont [4/16] 0.0, 128
  %4567 = vxpose.xlu0.b32.cont [5/16] 0.0, 128
  %4568 = vxpose.xlu0.b32.cont [6/16] 0.0, 128
  %4569 = vxpose.xlu0.b32.cont [7/16] 0.0, 128
  %4570 = vxpose.xlu0.b32.cont [8/16] 0.0, 128
  %4571 = vxpose.xlu0.b32.cont [9/16] 0.0, 128
  %4572 = vxpose.xlu0.b32.cont [10/16] 0.0, 128
  %4573 = vxpose.xlu0.b32.cont [11/16] 0.0, 128
  %4574 = vxpose.xlu0.b32.cont [12/16] 0.0, 128
  %4575 = vxpose.xlu0.b32.cont [13/16] 0.0, 128
  %4576 = vxpose.xlu0.b32.cont [14/16] 0.0, 128
  %4577 = vxpose.xlu0.b32.cont [15/16] 0.0, 128
  %4578 = vxpose.xlu0.b32.end [16/16] 0.0, 128
  %v4579 = vpop.trf.xlu0
  %v4580 = vpop.trf.xlu0
  %v4581 = vpop.trf.xlu0
  %v4582 = vpop.trf.xlu0
  %v4583 = vpop.trf.xlu0
  %v4584 = vpop.trf.xlu0
  %v4585 = vpop.trf.xlu0
  %v4586 = vpop.trf.xlu0
  %v4587 = vpop.trf.xlu0
  %v4588 = vpop.trf.xlu0
  %v4589 = vpop.trf.xlu0
  %v4590 = vpop.trf.xlu0
  %v4591 = vpop.trf.xlu0
  %v4592 = vpop.trf.xlu0
  %v4593 = vpop.trf.xlu0
  %v4594 = vpop.trf.xlu0
  %4595 = vset.pattern.permute.xlu0 7
  %4596 = vperm.xlu0 %4595, %v4192
  %v4597 = vpop.permute.xlu0 %4596
  %4599 = vset.pattern.permute.xlu0 7
  %4600 = vperm.xlu0 %4599, %v4195
  %v4601 = vpop.permute.xlu0 %4600
  %v4603 = vperm.slane %v4579, 0
  %v4604 = vadd.f32 %v4597, %v4603
  %v4605 = vadd.f32 %v4601, %v4603
  %vm4606 = vcmp.gt.f32.partialorder %v4604, 0.0
  %vm4607 = vcmp.gt.f32.partialorder %v4605, 0.0
  %v4608 = vmul.f32 %v4604, 0.2
  %v4609 = vmul.f32 %v4605, 0.2
  %v4610 = vsel %vm4606, %v4604, %v4608
  %v4611 = vsel %vm4607, %v4605, %v4609
  %v4612 = vadd.f32 %v4610, %v111
  %v4613 = vadd.f32 %v4611, %v112
  %v4614 = vsel %vm97, %v4612, -inf
  %4615 = vmax.xlane.f32.xlu0 %v4614
  %v4616 = vpop.xlane.xlu0 %4615
  %v4617 = vsel %vm97, %v4613, -inf
  %4618 = vmax.xlane.f32.xlu0 %v4617
  %v4619 = vpop.xlane.xlu0 %4618
  %v4620 = vsel %vm119, %v4616, 0.0
  %v4621 = vsel %vm120, %v4619, 0.0
  %v4622 = vsub.f32 %v4612, %v4620
  %v4623 = vsub.f32 %v4613, %v4621
  %v4624 = vmul.f32 %v4622, 1.442695
  %v4625 = vpow.pop %v4624
  %v4626 = vmul.f32 %v4623, 1.442695
  %v4627 = vpow.pop %v4626
  %v4628 = vmul.f32 %v107, %v4625
  %v4629 = vmul.f32 %v108, %v4627
  %v4630 = vsel %vm97, %v4628, 0.0
  %4631 = vadd.xlane.f32.xlu0 %v4630
  %v4632 = vpop.xlane.xlu0 %4631
  %v4633 = vsel %vm97, %v4629, 0.0
  %4634 = vadd.xlane.f32.xlu0 %v4633
  %v4635 = vpop.xlane.xlu0 %4634
  %vm4636 = vcmp.gt.f32.partialorder %v4632, 0.0
  %vm4637 = vcmp.gt.f32.partialorder %v4635, 0.0
  %v4638 = vsel %vm4636, %v4632, 1.0
  %v4639 = vsel %vm4637, %v4635, 1.0
  %v4640 = vrcp.pop %v4638
  %v4641 = vrcp.pop %v4639
  %v4642 = vmul.f32 %v4628, %v4640
  %v4643 = vmul.f32 %v4629, %v4641
  %4644 = vrot.lane.b32.xlu0 %v4169, 32
  %v4645 = vpop.permute.xlu0 %4644
  %4646 = vrot.lane.b32.xlu0 %v4172, 32
  %v4647 = vpop.permute.xlu0 %4646
  %v4651 = vsel %vm97, %v4642, 0
  %v4654 = vsel %vm97, %v4643, 0
  %4656 = vmatpush.msra.mxu0 0.0
  %4657 = vmatpush.msra.mxu0 0.0
  %4658 = vmatpush.msra.mxu0 0.0
  %4659 = vmatpush.msra.mxu0 0.0
  %4660 = vmatpush.msra.mxu0 0.0
  %4661 = vmatpush.msra.mxu0 0.0
  %4662 = vmatpush.msra.mxu0 0.0
  %4663 = vmatpush.msra.mxu0 0.0
  %4664 = vmatpush.msra.mxu0 0.0
  %4665 = vmatpush.msra.mxu0 0.0
  %4666 = vmatpush.msra.mxu0 0.0
  %4667 = vmatpush.msra.mxu0 0.0
  %4668 = vmatpush.msra.mxu0 0.0
  %4669 = vmatpush.msra.mxu0 0.0
  %4670 = vmatpush.msra.mxu0 %v4647
  %4671 = vmatpush.msra.mxu0 %v4645
  %4672 = vmatmul.f32.gmra.mxu0 %v4651
  %v4673 = vpop.f32.mrf.mxu0
  %v4674 = vadd.f32 0.0, %v4673
  %4675 = vmatmul.f32.gmra.mxu0 %v4654
  %v4676 = vpop.f32.mrf.mxu0
  %v4677 = vadd.f32 0.0, %v4676
  %4678 = vdwg.mxu0
  %v4679 = vadd.f32 %v4555, %v4674
  %v4680 = vadd.f32 %v4556, %v4677
  %v4681 = vmul.f32 %v4679, 0.25
  %v4682 = vmul.f32 %v4680, 0.25
  %v4684 = vperm.slane %v4150, 0
  %v4686 = vadd.f32 %v4681, %v4684
  %v4687 = vadd.f32 %v4682, %v4684
  %s4688 = scalar_lea.vmem %s3, 256
  %v4689 = vld [vmem:[%s4688] sm:$0xff]
  %v4690 = vld [vmem:[%s4688 + $0x8] sm:$0xff]
  %v4691 = vld [vmem:[%s4688 + $0x10] sm:$0xff]
  %v4692 = vld [vmem:[%s4688 + $0x18] sm:$0xff]
  %s4693 = scalar_lea.vmem %s4, 1024
  %v4694 = vld [vmem:[%s4693] sm:$0xff]
  %v4695 = vld [vmem:[%s4693 + $0x8] sm:$0xff]
  %v4696 = vld [vmem:[%s4693 + $0x10] sm:$0xff]
  %v4697 = vld [vmem:[%s4693 + $0x18] sm:$0xff]
  %v4698 = vld [vmem:[%s4693 + $0x20] sm:$0xff]
  %v4699 = vld [vmem:[%s4693 + $0x28] sm:$0xff]
  %v4700 = vld [vmem:[%s4693 + $0x30] sm:$0xff]
  %v4701 = vld [vmem:[%s4693 + $0x38] sm:$0xff]
  %v4702 = vld [vmem:[%s4693 + $0x40] sm:$0xff]
  %v4703 = vld [vmem:[%s4693 + $0x48] sm:$0xff]
  %v4704 = vld [vmem:[%s4693 + $0x50] sm:$0xff]
  %v4705 = vld [vmem:[%s4693 + $0x58] sm:$0xff]
  %v4706 = vld [vmem:[%s4693 + $0x60] sm:$0xff]
  %v4707 = vld [vmem:[%s4693 + $0x68] sm:$0xff]
  %v4708 = vld [vmem:[%s4693 + $0x70] sm:$0xff]
  %v4709 = vld [vmem:[%s4693 + $0x78] sm:$0xff]
  %s4710 = scalar_lea.vmem %s5, 8
  %v4711 = vld [vmem:[%s4710] sm:$0x1]
  %v4713 = vsel %vm157, %v4686, 0
  %v4716 = vsel %vm157, %v4687, 0
  %4718 = vmatpush.msra.mxu0 0.0
  %4719 = vmatpush.msra.mxu0 0.0
  %4720 = vmatpush.msra.mxu0 0.0
  %4721 = vmatpush.msra.mxu0 0.0
  %4722 = vmatpush.msra.mxu0 0.0
  %4723 = vmatpush.msra.mxu0 0.0
  %4724 = vmatpush.msra.mxu0 0.0
  %4725 = vmatpush.msra.mxu0 0.0
  %4726 = vmatpush.msra.mxu0 0.0
  %4727 = vmatpush.msra.mxu0 0.0
  %4728 = vmatpush.msra.mxu0 0.0
  %4729 = vmatpush.msra.mxu0 0.0
  %4730 = vmatpush.msra.mxu0 %v4692
  %4731 = vmatpush.msra.mxu0 %v4691
  %4732 = vmatpush.msra.mxu0 %v4690
  %4733 = vmatpush.msra.mxu0 %v4689
  %4734 = vmatmul.f32.gmra.mxu0 %v4713
  %v4735 = vpop.f32.mrf.mxu0
  %v4736 = vadd.f32 0.0, %v4735
  %4737 = vmatmul.f32.gmra.mxu0 %v4716
  %v4738 = vpop.f32.mrf.mxu0
  %v4739 = vadd.f32 0.0, %v4738
  %4740 = vdwg.mxu0
  %4741 = vmatpush.msra.mxu0 %v4709
  %4742 = vmatpush.msra.mxu0 %v4708
  %4743 = vmatpush.msra.mxu0 %v4707
  %4744 = vmatpush.msra.mxu0 %v4706
  %4745 = vmatpush.msra.mxu0 %v4705
  %4746 = vmatpush.msra.mxu0 %v4704
  %4747 = vmatpush.msra.mxu0 %v4703
  %4748 = vmatpush.msra.mxu0 %v4702
  %4749 = vmatpush.msra.mxu0 %v4701
  %4750 = vmatpush.msra.mxu0 %v4700
  %4751 = vmatpush.msra.mxu0 %v4699
  %4752 = vmatpush.msra.mxu0 %v4698
  %4753 = vmatpush.msra.mxu0 %v4697
  %4754 = vmatpush.msra.mxu0 %v4696
  %4755 = vmatpush.msra.mxu0 %v4695
  %4756 = vmatpush.msra.mxu0 %v4694
  %4757 = vmatmul.f32.gmra.mxu0 %v4736
  %v4758 = vpop.f32.mrf.mxu0
  %v4759 = vadd.f32 0.0, %v4758
  %4760 = vmatmul.f32.gmra.mxu0 %v4739
  %v4761 = vpop.f32.mrf.mxu0
  %v4762 = vadd.f32 0.0, %v4761
  %4763 = vdwg.mxu0
  %4764 = vxpose.xlu0.b32.start [1/16] %v4759, 128
  %4765 = vxpose.xlu0.b32.cont [2/16] %v4762, 128
  %4766 = vxpose.xlu0.b32.cont [3/16] 0.0, 128
  %4767 = vxpose.xlu0.b32.cont [4/16] 0.0, 128
  %4768 = vxpose.xlu0.b32.cont [5/16] 0.0, 128
  %4769 = vxpose.xlu0.b32.cont [6/16] 0.0, 128
  %4770 = vxpose.xlu0.b32.cont [7/16] 0.0, 128
  %4771 = vxpose.xlu0.b32.cont [8/16] 0.0, 128
  %4772 = vxpose.xlu0.b32.cont [9/16] 0.0, 128
  %4773 = vxpose.xlu0.b32.cont [10/16] 0.0, 128
  %4774 = vxpose.xlu0.b32.cont [11/16] 0.0, 128
  %4775 = vxpose.xlu0.b32.cont [12/16] 0.0, 128
  %4776 = vxpose.xlu0.b32.cont [13/16] 0.0, 128
  %4777 = vxpose.xlu0.b32.cont [14/16] 0.0, 128
  %4778 = vxpose.xlu0.b32.cont [15/16] 0.0, 128
  %4779 = vxpose.xlu0.b32.end [16/16] 0.0, 128
  %v4780 = vpop.trf.xlu0
  %v4781 = vpop.trf.xlu0
  %v4782 = vpop.trf.xlu0
  %v4783 = vpop.trf.xlu0
  %v4784 = vpop.trf.xlu0
  %v4785 = vpop.trf.xlu0
  %v4786 = vpop.trf.xlu0
  %v4787 = vpop.trf.xlu0
  %v4788 = vpop.trf.xlu0
  %v4789 = vpop.trf.xlu0
  %v4790 = vpop.trf.xlu0
  %v4791 = vpop.trf.xlu0
  %v4792 = vpop.trf.xlu0
  %v4793 = vpop.trf.xlu0
  %v4794 = vpop.trf.xlu0
  %v4795 = vpop.trf.xlu0
  %4797 = vset.pattern.permute.xlu0 4
  %4798 = vperm.xlu0 %4797, %v4759
  %v4799 = vpop.permute.xlu0 %4798
  %4802 = vset.pattern.permute.xlu0 4
  %4803 = vperm.xlu0 %4802, %v4762
  %v4804 = vpop.permute.xlu0 %4803
  %v4806 = vperm.slane %v4780, 0
  %v4807 = vadd.f32 %v4799, %v4806
  %v4808 = vadd.f32 %v4804, %v4806
  %vm4809 = vcmp.gt.f32.partialorder %v4807, 0.0
  %vm4810 = vcmp.gt.f32.partialorder %v4808, 0.0
  %v4811 = vmul.f32 %v4807, 0.2
  %v4812 = vmul.f32 %v4808, 0.2
  %v4813 = vsel %vm4809, %v4807, %v4811
  %v4814 = vsel %vm4810, %v4808, %v4812
  %v4815 = vadd.f32 %v4813, %v126
  %v4816 = vadd.f32 %v4814, %v127
  %v4817 = vsel %vm97, %v4815, -inf
  %4818 = vmax.xlane.f32.xlu0 %v4817
  %v4819 = vpop.xlane.xlu0 %4818
  %v4820 = vsel %vm97, %v4816, -inf
  %4821 = vmax.xlane.f32.xlu0 %v4820
  %v4822 = vpop.xlane.xlu0 %4821
  %v4823 = vsel %vm134, %v4819, 0.0
  %v4824 = vsel %vm135, %v4822, 0.0
  %v4825 = vsub.f32 %v4815, %v4823
  %v4826 = vsub.f32 %v4816, %v4824
  %v4827 = vmul.f32 %v4825, 1.442695
  %v4828 = vpow.pop %v4827
  %v4829 = vmul.f32 %v4826, 1.442695
  %v4830 = vpow.pop %v4829
  %v4831 = vmul.f32 %v122, %v4828
  %v4832 = vmul.f32 %v123, %v4830
  %v4833 = vsel %vm97, %v4831, 0.0
  %4834 = vadd.xlane.f32.xlu0 %v4833
  %v4835 = vpop.xlane.xlu0 %4834
  %v4836 = vsel %vm97, %v4832, 0.0
  %4837 = vadd.xlane.f32.xlu0 %v4836
  %v4838 = vpop.xlane.xlu0 %4837
  %vm4839 = vcmp.gt.f32.partialorder %v4835, 0.0
  %vm4840 = vcmp.gt.f32.partialorder %v4838, 0.0
  %v4841 = vsel %vm4839, %v4835, 1.0
  %v4842 = vsel %vm4840, %v4838, 1.0
  %v4843 = vrcp.pop %v4841
  %v4844 = vrcp.pop %v4842
  %v4845 = vmul.f32 %v4831, %v4843
  %v4846 = vmul.f32 %v4832, %v4844
  %4847 = vrot.lane.b32.xlu0 %v4759, 127
  %v4848 = vpop.permute.xlu0 %4847
  %4849 = vrot.lane.b32.xlu0 %v4762, 127
  %v4850 = vpop.permute.xlu0 %4849
  %4853 = vxpose.xlu0.b32.start [1/16] %v4848, 128
  %4854 = vxpose.xlu0.b32.cont [2/16] %v4850, 128
  %4855 = vxpose.xlu0.b32.cont [3/16] 0.0, 128
  %4856 = vxpose.xlu0.b32.cont [4/16] 0.0, 128
  %4857 = vxpose.xlu0.b32.cont [5/16] 0.0, 128
  %4858 = vxpose.xlu0.b32.cont [6/16] 0.0, 128
  %4859 = vxpose.xlu0.b32.cont [7/16] 0.0, 128
  %4860 = vxpose.xlu0.b32.cont [8/16] 0.0, 128
  %4861 = vxpose.xlu0.b32.cont [9/16] 0.0, 128
  %4862 = vxpose.xlu0.b32.cont [10/16] 0.0, 128
  %4863 = vxpose.xlu0.b32.cont [11/16] 0.0, 128
  %4864 = vxpose.xlu0.b32.cont [12/16] 0.0, 128
  %4865 = vxpose.xlu0.b32.cont [13/16] 0.0, 128
  %4866 = vxpose.xlu0.b32.cont [14/16] 0.0, 128
  %4867 = vxpose.xlu0.b32.cont [15/16] 0.0, 128
  %4868 = vxpose.xlu0.b32.end [16/16] 0.0, 128
  %v4869 = vpop.trf.xlu0
  %v4870 = vpop.trf.xlu0
  %v4871 = vpop.trf.xlu0
  %v4872 = vpop.trf.xlu0
  %v4873 = vpop.trf.xlu0
  %v4874 = vpop.trf.xlu0
  %v4875 = vpop.trf.xlu0
  %v4876 = vpop.trf.xlu0
  %v4877 = vpop.trf.xlu0
  %v4878 = vpop.trf.xlu0
  %v4879 = vpop.trf.xlu0
  %v4880 = vpop.trf.xlu0
  %v4881 = vpop.trf.xlu0
  %v4882 = vpop.trf.xlu0
  %v4883 = vpop.trf.xlu0
  %v4884 = vpop.trf.xlu0
  %4885 = vset.pattern.permute.xlu0 5
  %4886 = vperm.xlu0 %4885, %v4759
  %v4887 = vpop.permute.xlu0 %4886
  %4889 = vset.pattern.permute.xlu0 5
  %4890 = vperm.xlu0 %4889, %v4762
  %v4891 = vpop.permute.xlu0 %4890
  %v4893 = vperm.slane %v4869, 0
  %v4894 = vadd.f32 %v4887, %v4893
  %v4895 = vadd.f32 %v4891, %v4893
  %vm4896 = vcmp.gt.f32.partialorder %v4894, 0.0
  %vm4897 = vcmp.gt.f32.partialorder %v4895, 0.0
  %v4898 = vmul.f32 %v4894, 0.2
  %v4899 = vmul.f32 %v4895, 0.2
  %v4900 = vsel %vm4896, %v4894, %v4898
  %v4901 = vsel %vm4897, %v4895, %v4899
  %v4902 = vadd.f32 %v4900, %v126
  %v4903 = vadd.f32 %v4901, %v127
  %v4904 = vsel %vm97, %v4902, -inf
  %4905 = vmax.xlane.f32.xlu0 %v4904
  %v4906 = vpop.xlane.xlu0 %4905
  %v4907 = vsel %vm97, %v4903, -inf
  %4908 = vmax.xlane.f32.xlu0 %v4907
  %v4909 = vpop.xlane.xlu0 %4908
  %v4910 = vsel %vm134, %v4906, 0.0
  %v4911 = vsel %vm135, %v4909, 0.0
  %v4912 = vsub.f32 %v4902, %v4910
  %v4913 = vsub.f32 %v4903, %v4911
  %v4914 = vmul.f32 %v4912, 1.442695
  %v4915 = vpow.pop %v4914
  %v4916 = vmul.f32 %v4913, 1.442695
  %v4917 = vpow.pop %v4916
  %v4918 = vmul.f32 %v122, %v4915
  %v4919 = vmul.f32 %v123, %v4917
  %v4920 = vsel %vm97, %v4918, 0.0
  %4921 = vadd.xlane.f32.xlu0 %v4920
  %v4922 = vpop.xlane.xlu0 %4921
  %v4923 = vsel %vm97, %v4919, 0.0
  %4924 = vadd.xlane.f32.xlu0 %v4923
  %v4925 = vpop.xlane.xlu0 %4924
  %vm4926 = vcmp.gt.f32.partialorder %v4922, 0.0
  %vm4927 = vcmp.gt.f32.partialorder %v4925, 0.0
  %v4928 = vsel %vm4926, %v4922, 1.0
  %v4929 = vsel %vm4927, %v4925, 1.0
  %v4930 = vrcp.pop %v4928
  %v4931 = vrcp.pop %v4929
  %v4932 = vmul.f32 %v4918, %v4930
  %v4933 = vmul.f32 %v4919, %v4931
  %4936 = vrot.lane.b32.xlu0 %v4736, 96
  %v4937 = vpop.permute.xlu0 %4936
  %4938 = vrot.lane.b32.xlu0 %v4739, 96
  %v4939 = vpop.permute.xlu0 %4938
  %v4943 = vsel %vm97, %v4932, 0
  %v4946 = vsel %vm97, %v4933, 0
  %4948 = vmatpush.msra.mxu0 0.0
  %4949 = vmatpush.msra.mxu0 0.0
  %4950 = vmatpush.msra.mxu0 0.0
  %4951 = vmatpush.msra.mxu0 0.0
  %4952 = vmatpush.msra.mxu0 0.0
  %4953 = vmatpush.msra.mxu0 0.0
  %4954 = vmatpush.msra.mxu0 0.0
  %4955 = vmatpush.msra.mxu0 0.0
  %4956 = vmatpush.msra.mxu0 0.0
  %4957 = vmatpush.msra.mxu0 0.0
  %4958 = vmatpush.msra.mxu0 0.0
  %4959 = vmatpush.msra.mxu0 0.0
  %4960 = vmatpush.msra.mxu0 0.0
  %4961 = vmatpush.msra.mxu0 0.0
  %4962 = vmatpush.msra.mxu0 %v4939
  %4963 = vmatpush.msra.mxu0 %v4937
  %4964 = vmatmul.f32.gmra.mxu0 %v4943
  %v4965 = vpop.f32.mrf.mxu0
  %v4966 = vadd.f32 0.0, %v4965
  %4967 = vmatmul.f32.gmra.mxu0 %v4946
  %v4968 = vpop.f32.mrf.mxu0
  %v4969 = vadd.f32 0.0, %v4968
  %4970 = vdwg.mxu0
  %v4972 = vsel %vm97, %v4845, 0
  %v4975 = vsel %vm97, %v4846, 0
  %4977 = vmatpush.msra.mxu0 0.0
  %4978 = vmatpush.msra.mxu0 0.0
  %4979 = vmatpush.msra.mxu0 0.0
  %4980 = vmatpush.msra.mxu0 0.0
  %4981 = vmatpush.msra.mxu0 0.0
  %4982 = vmatpush.msra.mxu0 0.0
  %4983 = vmatpush.msra.mxu0 0.0
  %4984 = vmatpush.msra.mxu0 0.0
  %4985 = vmatpush.msra.mxu0 0.0
  %4986 = vmatpush.msra.mxu0 0.0
  %4987 = vmatpush.msra.mxu0 0.0
  %4988 = vmatpush.msra.mxu0 0.0
  %4989 = vmatpush.msra.mxu0 0.0
  %4990 = vmatpush.msra.mxu0 0.0
  %4991 = vmatpush.msra.mxu0 %v4739
  %4992 = vmatpush.msra.mxu0 %v4736
  %4993 = vmatmul.f32.gmra.mxu0 %v4972
  %v4994 = vpop.f32.mrf.mxu0
  %v4995 = vadd.f32 %v4966, %v4994
  %4996 = vmatmul.f32.gmra.mxu0 %v4975
  %v4997 = vpop.f32.mrf.mxu0
  %v4998 = vadd.f32 %v4969, %v4997
  %4999 = vdwg.mxu0
  %5000 = vrot.lane.b32.xlu0 %v4759, 126
  %v5001 = vpop.permute.xlu0 %5000
  %5002 = vrot.lane.b32.xlu0 %v4762, 126
  %v5003 = vpop.permute.xlu0 %5002
  %5006 = vxpose.xlu0.b32.start [1/16] %v5001, 128
  %5007 = vxpose.xlu0.b32.cont [2/16] %v5003, 128
  %5008 = vxpose.xlu0.b32.cont [3/16] 0.0, 128
  %5009 = vxpose.xlu0.b32.cont [4/16] 0.0, 128
  %5010 = vxpose.xlu0.b32.cont [5/16] 0.0, 128
  %5011 = vxpose.xlu0.b32.cont [6/16] 0.0, 128
  %5012 = vxpose.xlu0.b32.cont [7/16] 0.0, 128
  %5013 = vxpose.xlu0.b32.cont [8/16] 0.0, 128
  %5014 = vxpose.xlu0.b32.cont [9/16] 0.0, 128
  %5015 = vxpose.xlu0.b32.cont [10/16] 0.0, 128
  %5016 = vxpose.xlu0.b32.cont [11/16] 0.0, 128
  %5017 = vxpose.xlu0.b32.cont [12/16] 0.0, 128
  %5018 = vxpose.xlu0.b32.cont [13/16] 0.0, 128
  %5019 = vxpose.xlu0.b32.cont [14/16] 0.0, 128
  %5020 = vxpose.xlu0.b32.cont [15/16] 0.0, 128
  %5021 = vxpose.xlu0.b32.end [16/16] 0.0, 128
  %v5022 = vpop.trf.xlu0
  %v5023 = vpop.trf.xlu0
  %v5024 = vpop.trf.xlu0
  %v5025 = vpop.trf.xlu0
  %v5026 = vpop.trf.xlu0
  %v5027 = vpop.trf.xlu0
  %v5028 = vpop.trf.xlu0
  %v5029 = vpop.trf.xlu0
  %v5030 = vpop.trf.xlu0
  %v5031 = vpop.trf.xlu0
  %v5032 = vpop.trf.xlu0
  %v5033 = vpop.trf.xlu0
  %v5034 = vpop.trf.xlu0
  %v5035 = vpop.trf.xlu0
  %v5036 = vpop.trf.xlu0
  %v5037 = vpop.trf.xlu0
  %5038 = vset.pattern.permute.xlu0 6
  %5039 = vperm.xlu0 %5038, %v4759
  %v5040 = vpop.permute.xlu0 %5039
  %5042 = vset.pattern.permute.xlu0 6
  %5043 = vperm.xlu0 %5042, %v4762
  %v5044 = vpop.permute.xlu0 %5043
  %v5046 = vperm.slane %v5022, 0
  %v5047 = vadd.f32 %v5040, %v5046
  %v5048 = vadd.f32 %v5044, %v5046
  %vm5049 = vcmp.gt.f32.partialorder %v5047, 0.0
  %vm5050 = vcmp.gt.f32.partialorder %v5048, 0.0
  %v5051 = vmul.f32 %v5047, 0.2
  %v5052 = vmul.f32 %v5048, 0.2
  %v5053 = vsel %vm5049, %v5047, %v5051
  %v5054 = vsel %vm5050, %v5048, %v5052
  %v5055 = vadd.f32 %v5053, %v126
  %v5056 = vadd.f32 %v5054, %v127
  %v5057 = vsel %vm97, %v5055, -inf
  %5058 = vmax.xlane.f32.xlu0 %v5057
  %v5059 = vpop.xlane.xlu0 %5058
  %v5060 = vsel %vm97, %v5056, -inf
  %5061 = vmax.xlane.f32.xlu0 %v5060
  %v5062 = vpop.xlane.xlu0 %5061
  %v5063 = vsel %vm134, %v5059, 0.0
  %v5064 = vsel %vm135, %v5062, 0.0
  %v5065 = vsub.f32 %v5055, %v5063
  %v5066 = vsub.f32 %v5056, %v5064
  %v5067 = vmul.f32 %v5065, 1.442695
  %v5068 = vpow.pop %v5067
  %v5069 = vmul.f32 %v5066, 1.442695
  %v5070 = vpow.pop %v5069
  %v5071 = vmul.f32 %v122, %v5068
  %v5072 = vmul.f32 %v123, %v5070
  %v5073 = vsel %vm97, %v5071, 0.0
  %5074 = vadd.xlane.f32.xlu0 %v5073
  %v5075 = vpop.xlane.xlu0 %5074
  %v5076 = vsel %vm97, %v5072, 0.0
  %5077 = vadd.xlane.f32.xlu0 %v5076
  %v5078 = vpop.xlane.xlu0 %5077
  %vm5079 = vcmp.gt.f32.partialorder %v5075, 0.0
  %vm5080 = vcmp.gt.f32.partialorder %v5078, 0.0
  %v5081 = vsel %vm5079, %v5075, 1.0
  %v5082 = vsel %vm5080, %v5078, 1.0
  %v5083 = vrcp.pop %v5081
  %v5084 = vrcp.pop %v5082
  %v5085 = vmul.f32 %v5071, %v5083
  %v5086 = vmul.f32 %v5072, %v5084
  %5087 = vrot.lane.b32.xlu0 %v4736, 64
  %v5088 = vpop.permute.xlu0 %5087
  %5089 = vrot.lane.b32.xlu0 %v4739, 64
  %v5090 = vpop.permute.xlu0 %5089
  %v5094 = vsel %vm97, %v5085, 0
  %v5097 = vsel %vm97, %v5086, 0
  %5099 = vmatpush.msra.mxu0 0.0
  %5100 = vmatpush.msra.mxu0 0.0
  %5101 = vmatpush.msra.mxu0 0.0
  %5102 = vmatpush.msra.mxu0 0.0
  %5103 = vmatpush.msra.mxu0 0.0
  %5104 = vmatpush.msra.mxu0 0.0
  %5105 = vmatpush.msra.mxu0 0.0
  %5106 = vmatpush.msra.mxu0 0.0
  %5107 = vmatpush.msra.mxu0 0.0
  %5108 = vmatpush.msra.mxu0 0.0
  %5109 = vmatpush.msra.mxu0 0.0
  %5110 = vmatpush.msra.mxu0 0.0
  %5111 = vmatpush.msra.mxu0 0.0
  %5112 = vmatpush.msra.mxu0 0.0
  %5113 = vmatpush.msra.mxu0 %v5090
  %5114 = vmatpush.msra.mxu0 %v5088
  %5115 = vmatmul.f32.gmra.mxu0 %v5094
  %v5116 = vpop.f32.mrf.mxu0
  %v5117 = vadd.f32 0.0, %v5116
  %5118 = vmatmul.f32.gmra.mxu0 %v5097
  %v5119 = vpop.f32.mrf.mxu0
  %v5120 = vadd.f32 0.0, %v5119
  %5121 = vdwg.mxu0
  %v5122 = vadd.f32 %v4995, %v5117
  %v5123 = vadd.f32 %v4998, %v5120
  %5124 = vrot.lane.b32.xlu0 %v4759, 125
  %v5125 = vpop.permute.xlu0 %5124
  %5126 = vrot.lane.b32.xlu0 %v4762, 125
  %v5127 = vpop.permute.xlu0 %5126
  %5130 = vxpose.xlu0.b32.start [1/16] %v5125, 128
  %5131 = vxpose.xlu0.b32.cont [2/16] %v5127, 128
  %5132 = vxpose.xlu0.b32.cont [3/16] 0.0, 128
  %5133 = vxpose.xlu0.b32.cont [4/16] 0.0, 128
  %5134 = vxpose.xlu0.b32.cont [5/16] 0.0, 128
  %5135 = vxpose.xlu0.b32.cont [6/16] 0.0, 128
  %5136 = vxpose.xlu0.b32.cont [7/16] 0.0, 128
  %5137 = vxpose.xlu0.b32.cont [8/16] 0.0, 128
  %5138 = vxpose.xlu0.b32.cont [9/16] 0.0, 128
  %5139 = vxpose.xlu0.b32.cont [10/16] 0.0, 128
  %5140 = vxpose.xlu0.b32.cont [11/16] 0.0, 128
  %5141 = vxpose.xlu0.b32.cont [12/16] 0.0, 128
  %5142 = vxpose.xlu0.b32.cont [13/16] 0.0, 128
  %5143 = vxpose.xlu0.b32.cont [14/16] 0.0, 128
  %5144 = vxpose.xlu0.b32.cont [15/16] 0.0, 128
  %5145 = vxpose.xlu0.b32.end [16/16] 0.0, 128
  %v5146 = vpop.trf.xlu0
  %v5147 = vpop.trf.xlu0
  %v5148 = vpop.trf.xlu0
  %v5149 = vpop.trf.xlu0
  %v5150 = vpop.trf.xlu0
  %v5151 = vpop.trf.xlu0
  %v5152 = vpop.trf.xlu0
  %v5153 = vpop.trf.xlu0
  %v5154 = vpop.trf.xlu0
  %v5155 = vpop.trf.xlu0
  %v5156 = vpop.trf.xlu0
  %v5157 = vpop.trf.xlu0
  %v5158 = vpop.trf.xlu0
  %v5159 = vpop.trf.xlu0
  %v5160 = vpop.trf.xlu0
  %v5161 = vpop.trf.xlu0
  %5162 = vset.pattern.permute.xlu0 7
  %5163 = vperm.xlu0 %5162, %v4759
  %v5164 = vpop.permute.xlu0 %5163
  %5166 = vset.pattern.permute.xlu0 7
  %5167 = vperm.xlu0 %5166, %v4762
  %v5168 = vpop.permute.xlu0 %5167
  %v5170 = vperm.slane %v5146, 0
  %v5171 = vadd.f32 %v5164, %v5170
  %v5172 = vadd.f32 %v5168, %v5170
  %vm5173 = vcmp.gt.f32.partialorder %v5171, 0.0
  %vm5174 = vcmp.gt.f32.partialorder %v5172, 0.0
  %v5175 = vmul.f32 %v5171, 0.2
  %v5176 = vmul.f32 %v5172, 0.2
  %v5177 = vsel %vm5173, %v5171, %v5175
  %v5178 = vsel %vm5174, %v5172, %v5176
  %v5179 = vadd.f32 %v5177, %v126
  %v5180 = vadd.f32 %v5178, %v127
  %v5181 = vsel %vm97, %v5179, -inf
  %5182 = vmax.xlane.f32.xlu0 %v5181
  %v5183 = vpop.xlane.xlu0 %5182
  %v5184 = vsel %vm97, %v5180, -inf
  %5185 = vmax.xlane.f32.xlu0 %v5184
  %v5186 = vpop.xlane.xlu0 %5185
  %v5187 = vsel %vm134, %v5183, 0.0
  %v5188 = vsel %vm135, %v5186, 0.0
  %v5189 = vsub.f32 %v5179, %v5187
  %v5190 = vsub.f32 %v5180, %v5188
  %v5191 = vmul.f32 %v5189, 1.442695
  %v5192 = vpow.pop %v5191
  %v5193 = vmul.f32 %v5190, 1.442695
  %v5194 = vpow.pop %v5193
  %v5195 = vmul.f32 %v122, %v5192
  %v5196 = vmul.f32 %v123, %v5194
  %v5197 = vsel %vm97, %v5195, 0.0
  %5198 = vadd.xlane.f32.xlu0 %v5197
  %v5199 = vpop.xlane.xlu0 %5198
  %v5200 = vsel %vm97, %v5196, 0.0
  %5201 = vadd.xlane.f32.xlu0 %v5200
  %v5202 = vpop.xlane.xlu0 %5201
  %vm5203 = vcmp.gt.f32.partialorder %v5199, 0.0
  %vm5204 = vcmp.gt.f32.partialorder %v5202, 0.0
  %v5205 = vsel %vm5203, %v5199, 1.0
  %v5206 = vsel %vm5204, %v5202, 1.0
  %v5207 = vrcp.pop %v5205
  %v5208 = vrcp.pop %v5206
  %v5209 = vmul.f32 %v5195, %v5207
  %v5210 = vmul.f32 %v5196, %v5208
  %5211 = vrot.lane.b32.xlu0 %v4736, 32
  %v5212 = vpop.permute.xlu0 %5211
  %5213 = vrot.lane.b32.xlu0 %v4739, 32
  %v5214 = vpop.permute.xlu0 %5213
  %v5218 = vsel %vm97, %v5209, 0
  %v5221 = vsel %vm97, %v5210, 0
  %5223 = vmatpush.msra.mxu0 0.0
  %5224 = vmatpush.msra.mxu0 0.0
  %5225 = vmatpush.msra.mxu0 0.0
  %5226 = vmatpush.msra.mxu0 0.0
  %5227 = vmatpush.msra.mxu0 0.0
  %5228 = vmatpush.msra.mxu0 0.0
  %5229 = vmatpush.msra.mxu0 0.0
  %5230 = vmatpush.msra.mxu0 0.0
  %5231 = vmatpush.msra.mxu0 0.0
  %5232 = vmatpush.msra.mxu0 0.0
  %5233 = vmatpush.msra.mxu0 0.0
  %5234 = vmatpush.msra.mxu0 0.0
  %5235 = vmatpush.msra.mxu0 0.0
  %5236 = vmatpush.msra.mxu0 0.0
  %5237 = vmatpush.msra.mxu0 %v5214
  %5238 = vmatpush.msra.mxu0 %v5212
  %5239 = vmatmul.f32.gmra.mxu0 %v5218
  %v5240 = vpop.f32.mrf.mxu0
  %v5241 = vadd.f32 0.0, %v5240
  %5242 = vmatmul.f32.gmra.mxu0 %v5221
  %v5243 = vpop.f32.mrf.mxu0
  %v5244 = vadd.f32 0.0, %v5243
  %5245 = vdwg.mxu0
  %v5246 = vadd.f32 %v5122, %v5241
  %v5247 = vadd.f32 %v5123, %v5244
  %v5248 = vmul.f32 %v5246, 0.25
  %v5249 = vmul.f32 %v5247, 0.25
  %v5251 = vperm.slane %v4711, 0
  %v5253 = vadd.f32 %v5248, %v5251
  %v5254 = vadd.f32 %v5249, %v5251
  %v5255 = vadd.f32 %v4125, %v5253
  %v5256 = vadd.f32 %v4126, %v5254
  %v5257 = vadd.f32 %v5255, %v3558
  %v5258 = vadd.f32 %v5256, %v3559
  %v5259 = vld [vmem:[%s10] sm:$0xff]
  %v5260 = vld [vmem:[%s10 + $0x8] sm:$0xff]
  %v5261 = vld [vmem:[%s10 + $0x10] sm:$0xff]
  %v5262 = vld [vmem:[%s10 + $0x18] sm:$0xff]
  %v5263 = vld [vmem:[%s11] sm:$0xff]
  %v5264 = vld [vmem:[%s11 + $0x8] sm:$0xff]
  %v5265 = vld [vmem:[%s11 + $0x10] sm:$0xff]
  %v5266 = vld [vmem:[%s11 + $0x18] sm:$0xff]
  %5267 = vmatpush.msra.mxu0 0.0
  %5268 = vmatpush.msra.mxu0 0.0
  %5269 = vmatpush.msra.mxu0 0.0
  %5270 = vmatpush.msra.mxu0 0.0
  %5271 = vmatpush.msra.mxu0 0.0
  %5272 = vmatpush.msra.mxu0 0.0
  %5273 = vmatpush.msra.mxu0 0.0
  %5274 = vmatpush.msra.mxu0 0.0
  %5275 = vmatpush.msra.mxu0 0.0
  %5276 = vmatpush.msra.mxu0 0.0
  %5277 = vmatpush.msra.mxu0 0.0
  %5278 = vmatpush.msra.mxu0 0.0
  %5279 = vmatpush.msra.mxu0 %v5266
  %5280 = vmatpush.msra.mxu0 %v5265
  %5281 = vmatpush.msra.mxu0 %v5264
  %5282 = vmatpush.msra.mxu0 %v5263
  %5283 = vmatmul.f32.gmra.mxu0 %v159
  %v5284 = vpop.f32.mrf.mxu0
  %v5285 = vadd.f32 0.0, %v5284
  %5286 = vmatmul.f32.gmra.mxu0 %v162
  %v5287 = vpop.f32.mrf.mxu0
  %v5288 = vadd.f32 0.0, %v5287
  %5289 = vdwg.mxu0
  %v5291 = vsel %vm157, %v5257, 0
  %v5294 = vsel %vm157, %v5258, 0
  %5296 = vmatpush.msra.mxu0 0.0
  %5297 = vmatpush.msra.mxu0 0.0
  %5298 = vmatpush.msra.mxu0 0.0
  %5299 = vmatpush.msra.mxu0 0.0
  %5300 = vmatpush.msra.mxu0 0.0
  %5301 = vmatpush.msra.mxu0 0.0
  %5302 = vmatpush.msra.mxu0 0.0
  %5303 = vmatpush.msra.mxu0 0.0
  %5304 = vmatpush.msra.mxu0 0.0
  %5305 = vmatpush.msra.mxu0 0.0
  %5306 = vmatpush.msra.mxu0 0.0
  %5307 = vmatpush.msra.mxu0 0.0
  %5308 = vmatpush.msra.mxu0 %v5262
  %5309 = vmatpush.msra.mxu0 %v5261
  %5310 = vmatpush.msra.mxu0 %v5260
  %5311 = vmatpush.msra.mxu0 %v5259
  %5312 = vmatmul.f32.gmra.mxu0 %v5291
  %v5313 = vpop.f32.mrf.mxu0
  %v5314 = vadd.f32 %v5285, %v5313
  %5315 = vmatmul.f32.gmra.mxu0 %v5294
  %v5316 = vpop.f32.mrf.mxu0
  %v5317 = vadd.f32 %v5288, %v5316
  %5318 = vdwg.mxu0
  %v5319 = vld [vmem:[%s12] sm:$0x1]
  %v5321 = vperm.slane %v5319, 0
  %v5323 = vadd.f32 %v5314, %v5321
  %v5324 = vadd.f32 %v5317, %v5321
  %vm5325 = vcmask 64512
  %5326 = vst.msk [vmem:[%s13] sm:$0xff] %vm5325, %v5323
  %5327 = vst.msk [vmem:[%s13 + $0x8] sm:$0xff] %vm5325, %v5324
  // Predicated region
  $region54: #{_forward_jit.1} parent=0 // pred_check
    _
  $region55: #{_forward_jit.1} parent=0 // pred_check_branch
    %5329 = sbr.rel (0) target = $region57
  $region56: #{_forward_jit.1} parent=0 // pred_region
    _
  $region57: #{_forward_jit.1} parent=0 // pred_fallthru
    _
  // Predicated region
  $region58: #{_forward_jit.1} parent=0 // pred_check
    _
  $region59: #{_forward_jit.1} parent=0 // pred_check_branch
    %5331 = sbr.rel (0) target = $region61
  $region60: #{_forward_jit.1} parent=0 // pred_region
    _
  $region61: #{_forward_jit.1} parent=0 // pred_fallthru
    _

</llo_original>
